<compile_context>
chip_gen: v6e
topology: v6e:2x2x1
jax: 0.10.0
libtpu: 0.0.40
codegen_flags: <defaults>
</compile_context>

<pallas_src>
import functools
import math

import jax
import jax.numpy as jnp
from jax.experimental import pallas as pl
from jax.experimental.pallas import tpu as pltpu

LANE = 128      # TPU lane width
SUB = 8         # f32 sublane granularity
C1 = 64         # conv1 out channels (padded to LANE inside the kernels)
C2 = 128        # conv2 out channels
N3 = 1024       # fc1 width
LEAKY = 0.2
BN_EPS = 1e-5


def _round_up(x, m):
    return -(-x // m) * m


def _vmem_limit_bytes(*blocks):
    """Right-sized scoped-VMEM request: 2x (double buffering) of the actual
    block bytes plus headroom, capped well under v7x's 64 MiB physical VMEM."""
    total = 0
    for shape, dtype in blocks:
        total += math.prod(shape) * jnp.dtype(dtype).itemsize
    return int(min(48 << 20, 2 * total + (8 << 20)))


# ----------------------------------------------------------------------------
# Kernel A: conv1 as an im2col matmul:  leaky_relu(x @ w + b)
#   x: (block_m, K) bf16, w: (K, 128) bf16, b: (1, 128) f32, out bf16.
#   Tiled over M with a "parallel" grid axis.
# ----------------------------------------------------------------------------
def _conv1_kernel(x_ref, w_ref, b_ref, o_ref):
    y = jnp.dot(x_ref[...], w_ref[...], preferred_element_type=jnp.float32)
    y = y + b_ref[...]
    y = jnp.where(y >= 0.0, y, LEAKY * y)
    o_ref[...] = y.astype(o_ref.dtype)


def conv1_matmul(patches, w, b):
    m, k = patches.shape
    kw, n = w.shape
    assert k == kw and k % LANE == 0 and n % LANE == 0
    block_m = m
    for cand in (512, 256, 128):
        if m % cand == 0:
            block_m = cand
            break
    vmem = _vmem_limit_bytes(((block_m, k), patches.dtype),
                             ((k, n), w.dtype),
                             ((1, n), b.dtype),
                             ((block_m, n), jnp.bfloat16))
    return pl.pallas_call(
        _conv1_kernel,
        out_shape=jax.ShapeDtypeStruct((m, n), jnp.bfloat16),
        grid=(m // block_m,),
        in_specs=[
            pl.BlockSpec((block_m, k), lambda i: (i, 0)),
            pl.BlockSpec((k, n), lambda i: (0, 0)),
            pl.BlockSpec((1, n), lambda i: (0, 0)),
        ],
        out_specs=pl.BlockSpec((block_m, n), lambda i: (i, 0)),
        compiler_params=pltpu.CompilerParams(
            dimension_semantics=("parallel",),   # shards M across v7x's 2 TCs
            vmem_limit_bytes=vmem,
        ),
    )(patches, w, b)


# ----------------------------------------------------------------------------
# Kernel B: conv2 + BN2d + LeakyReLU + flatten + fc1 + BN1d + LeakyReLU
#           + fc2 + Sigmoid, fused.
#   p2 rows are ordered (spatial position p, padded batch n); `mask` marks the
#   real batch rows (1.0) so BN statistics ignore the zero padding rows.
#   Note: BN needs all rows at once, so this kernel is grid=(1,) on purpose;
#   for very large batches a two-pass / accumulated-stats scheme would be used.
# ----------------------------------------------------------------------------
def _tail_kernel(p2_ref, mask_ref, w2_ref, b2_ref, g2_ref, bt2_ref,
                 w3_ref, b3_ref, g3_ref, bt3_ref, w4_ref, b4_ref,
                 o_ref, *, nb, nbp, npos):
    f32 = jnp.float32
    inv_n2 = 1.0 / float(npos * nb)     # real rows for BatchNorm2d stats
    inv_n3 = 1.0 / float(nb)            # real rows for BatchNorm1d stats
    mask = mask_ref[...]                # (npos*nbp, 1)

    # ---- conv2 (im2col matmul) + BatchNorm2d (batch stats) + LeakyReLU ----
    y2 = jnp.dot(p2_ref[...], w2_ref[...], preferred_element_type=f32)
    y2 = y2 + b2_ref[...]
    mu2 = jnp.sum(y2 * mask, axis=0, keepdims=True) * inv_n2
    var2 = jnp.sum(mask * jnp.square(y2 - mu2), axis=0, keepdims=True) * inv_n2
    y2 = (y2 - mu2) * jax.lax.rsqrt(var2 + BN_EPS) * g2_ref[...] + bt2_ref[...]
    y2 = jnp.where(y2 >= 0.0, y2, LEAKY * y2)
    y2 = y2 * mask                      # zero out the padded batch rows

    # ---- flatten + fc1 ----
    # w3 rows were permuted at init to the same (position, channel) order as
    # y2's rows, so PyTorch's `view(-1, 128*(ndf//4)^2)` becomes a sum of
    # per-position (nbp,128)@(128,1024) matmuls -- no transpose, all slices
    # sublane/lane aligned.
    acc = jnp.zeros((nbp, w3_ref.shape[1]), f32)
    for p in range(npos):
        lhs = y2[p * nbp:(p + 1) * nbp, :].astype(jnp.bfloat16)
        rhs = w3_ref[pl.ds(p * C2, C2), :]
        acc = acc + jnp.dot(lhs, rhs, preferred_element_type=f32)
    y3 = acc + b3_ref[...]

    # ---- BatchNorm1d (batch stats) + LeakyReLU ----
    mask_b = mask[:nbp, :]              # (nbp, 1) real-batch-row mask
    mu3 = jnp.sum(y3 * mask_b, axis=0, keepdims=True) * inv_n3
    var3 = jnp.sum(mask_b * jnp.square(y3 - mu3), axis=0, keepdims=True) * inv_n3
    y3 = (y3 - mu3) * jax.lax.rsqrt(var3 + BN_EPS) * g3_ref[...] + bt3_ref[...]
    y3 = jnp.where(y3 >= 0.0, y3, LEAKY * y3)

    # ---- fc2 + Sigmoid (EUP exp + approx reciprocal) ----
    logits = jnp.dot(y3.astype(jnp.bfloat16), w4_ref[...],
                     preferred_element_type=f32) + b4_ref[...]
    o_ref[...] = pl.reciprocal(1.0 + jnp.exp(-logits), approx=True).astype(o_ref.dtype)


def tail_fused(p2, mask, params, *, nb, nbp, npos):
    operands = [p2, mask,
                params["w2"], params["b2"], params["g2"], params["bt2"],
                params["w3"], params["b3"], params["g3"], params["bt3"],
                params["w4"], params["b4"]]
    n_out = params["w4"].shape[1]
    out_shape = (nbp, n_out)

    def full_spec(shape):
        zeros = (0,) * len(shape)
        return pl.BlockSpec(shape, lambda i, _z=zeros: _z)

    vmem = _vmem_limit_bytes(*[(tuple(a.shape), a.dtype) for a in operands],
                             (out_shape, jnp.float32))
    kern = functools.partial(_tail_kernel, nb=nb, nbp=nbp, npos=npos)
    return pl.pallas_call(
        kern,
        out_shape=jax.ShapeDtypeStruct(out_shape, jnp.float32),
        grid=(1,),
        in_specs=[full_spec(tuple(a.shape)) for a in operands],
        out_specs=full_spec(out_shape),
        compiler_params=pltpu.CompilerParams(
            dimension_semantics=("arbitrary",),
            vmem_limit_bytes=vmem,
        ),
    )(*operands)


# ----------------------------------------------------------------------------
# JAX glue: conv patch extraction (feature order = (kh, kw, cin)).
# ----------------------------------------------------------------------------
# TODO(synk): for large images/batches gather patches inside the kernel (BlockSpec
# index_map over output rows) instead of materializing im2col in HBM.
def im2col(x_nhwc, ksize, stride, pad):
    x = jnp.pad(x_nhwc, ((0, 0), (pad, pad), (pad, pad), (0, 0)))
    n, h, w, c = x.shape
    oh = (h - ksize) // stride + 1
    ow = (w - ksize) // stride + 1
    cols = []
    for i in range(ksize):
        for j in range(ksize):
            cols.append(x[:, i:i + oh * stride:stride, j:j + ow * stride:stride, :])
    p = jnp.stack(cols, axis=3)                      # (n, oh, ow, k*k, c)
    return p.reshape(n, oh, ow, ksize * ksize * c)


# ----------------------------------------------------------------------------
# Synthetic parameters mimicking utils.initialize_weights (weights ~ N(0,0.02),
# biases 0, BN gamma ~ N(1,0.02), beta 0), stored directly in kernel layout.
# ----------------------------------------------------------------------------
def init_params(key, nc, ndf):
    ks = jax.random.split(key, 6)
    npos = (ndf // 4) ** 2
    k1 = 4 * 4 * nc
    k1p = _round_up(k1, LANE)
    feat = C2 * npos

    # conv1: (kh*kw*cin, 64) zero-padded to lane-dense (k1p, 128)
    w1 = jax.random.normal(ks[0], (k1, C1), jnp.float32) * 0.02
    w1 = jnp.zeros((k1p, LANE), jnp.float32).at[:k1, :C1].set(w1)
    b1 = jnp.zeros((1, LANE), jnp.float32)

    # conv2: rows in (kh, kw, cin) order (matches im2col feature order)
    w2 = jax.random.normal(ks[1], (16 * C1, C2), jnp.float32) * 0.02
    b2 = jnp.zeros((1, C2), jnp.float32)
    g2 = 1.0 + jax.random.normal(ks[2], (1, C2), jnp.float32) * 0.02
    bt2 = jnp.zeros((1, C2), jnp.float32)

    # fc1: generated in PyTorch flatten order (feature = c*npos + p), then
    # permuted ONCE to the kernel's (position, channel) order -- this is what
    # removes the runtime NCHW flatten transpose.
    w3_pt = jax.random.normal(ks[3], (feat, N3), jnp.float32) * 0.02
    r = jnp.arange(feat)
    pos, chan = r // C2, r % C2
    w3 = w3_pt[chan * npos + pos]
    b3 = jnp.zeros((1, N3), jnp.float32)
    g3 = 1.0 + jax.random.normal(ks[4], (1, N3), jnp.float32) * 0.02
    bt3 = jnp.zeros((1, N3), jnp.float32)

    # fc2: (1024, nc) zero-padded to lane-dense (1024, 128)
    w4 = jax.random.normal(ks[5], (N3, nc), jnp.float32) * 0.02
    w4 = jnp.zeros((N3, LANE), jnp.float32).at[:, :nc].set(w4)
    b4 = jnp.zeros((1, LANE), jnp.float32)

    return {
        "w1": w1.astype(jnp.bfloat16), "b1": b1,
        "w2": w2.astype(jnp.bfloat16), "b2": b2, "g2": g2, "bt2": bt2,
        "w3": w3.astype(jnp.bfloat16), "b3": b3, "g3": g3, "bt3": bt3,
        "w4": w4.astype(jnp.bfloat16), "b4": b4,
    }


# ----------------------------------------------------------------------------
# Forward pass equivalent to INFOGAN_discriminator.forward (training-mode BN).
# ----------------------------------------------------------------------------
def infogan_discriminator_forward(x_nchw, params, nc, ndf):
    nb, cin, h, w = x_nchw.shape
    assert (h, w) == (ndf, ndf)
    npos = (ndf // 4) ** 2
    nbp = _round_up(nb, SUB)                 # batch padded to a sublane multiple

    x = jnp.transpose(x_nchw, (0, 2, 3, 1)).astype(jnp.bfloat16)   # NCHW -> NHWC

    # ---- Conv2d(nc, 64, 4, 2, 1) + LeakyReLU(0.2)  (kernel A) ----
    k1 = 16 * cin
    p1 = im2col(x, 4, 2, 1).reshape(nb * (h // 2) * (w // 2), k1)
    p1 = jnp.pad(p1, ((0, 0), (0, params["w1"].shape[0] - k1)))    # K 48 -> 128
    y1 = conv1_matmul(p1, params["w1"], params["b1"])              # (M1, 128) bf16
    y1 = y1[:, :C1].reshape(nb, h // 2, w // 2, C1)

    # ---- conv2 + BN + LeakyReLU + flatten + fc stack  (kernel B, fused) ----
    # Patch rows ordered (spatial position, batch), batch zero-padded to nbp so
    # every in-kernel slice is sublane aligned.
    p2 = im2col(y1, 4, 2, 1)                                       # (nb, h/4, w/4, 1024)
    p2 = jnp.transpose(p2, (1, 2, 0, 3)).reshape(npos, nb, 16 * C1)
    p2 = jnp.pad(p2, ((0, 0), (0, nbp - nb), (0, 0))).reshape(npos * nbp, 16 * C1)
    mask = (jnp.arange(npos * nbp) % nbp < nb).astype(jnp.float32).reshape(-1, 1)

    out = tail_fused(p2, mask, params, nb=nb, nbp=nbp, npos=npos)  # (nbp, 128)
    return out[:nb, :nc]


# ----------------------------------------------------------------------------
# Pure-JAX reference with the same arithmetic choices (bf16 matmul inputs, f32
# accumulation, training-mode batch norm) used to validate the Pallas kernels.
# ----------------------------------------------------------------------------
def reference_forward(x_nchw, params, nc, ndf):
    nb, cin, h, w = x_nchw.shape
    npos = (ndf // 4) ** 2
    x = jnp.transpose(x_nchw, (0, 2, 3, 1)).astype(jnp.bfloat16)

    k1 = 16 * cin
    p1 = im2col(x, 4, 2, 1).reshape(nb * (h // 2) * (w // 2), k1)
    p1 = jnp.pad(p1, ((0, 0), (0, params["w1"].shape[0] - k1)))
    y1 = jnp.dot(p1, params["w1"], preferred_element_type=jnp.float32) + params["b1"]
    y1 = jnp.where(y1 >= 0.0, y1, LEAKY * y1).astype(jnp.bfloat16)
    y1 = y1[:, :C1].reshape(nb, h // 2, w // 2, C1)

    p2 = im2col(y1, 4, 2, 1)
    p2 = jnp.transpose(p2, (1, 2, 0, 3)).reshape(npos * nb, 16 * C1)
    y2 = jnp.dot(p2, params["w2"], preferred_element_type=jnp.float32) + params["b2"]
    mu2 = jnp.mean(y2, axis=0, keepdims=True)
    var2 = jnp.mean(jnp.square(y2 - mu2), axis=0, keepdims=True)
    y2 = (y2 - mu2) * jax.lax.rsqrt(var2 + BN_EPS) * params["g2"] + params["bt2"]
    y2 = jnp.where(y2 >= 0.0, y2, LEAKY * y2)

    flat = y2.reshape(npos, nb, C2).transpose(1, 0, 2).reshape(nb, npos * C2)
    y3 = jnp.dot(flat.astype(jnp.bfloat16), params["w3"],
                 preferred_element_type=jnp.float32) + params["b3"]
    mu3 = jnp.mean(y3, axis=0, keepdims=True)
    var3 = jnp.mean(jnp.square(y3 - mu3), axis=0, keepdims=True)
    y3 = (y3 - mu3) * jax.lax.rsqrt(var3 + BN_EPS) * params["g3"] + params["bt3"]
    y3 = jnp.where(y3 >= 0.0, y3, LEAKY * y3)

    logits = jnp.dot(y3.astype(jnp.bfloat16), params["w4"],
                     preferred_element_type=jnp.float32) + params["b4"]
    return jax.nn.sigmoid(logits)[:, :nc]


if __name__ == "__main__":
    nc, ndf, batch = 3, 16, 2            # input is (batch, nc, ndf, ndf)
    key = jax.random.PRNGKey(0)
    k_x, k_p = jax.random.split(key)

    x = jax.random.normal(k_x, (batch, nc, ndf, ndf), jnp.float32)
    params = init_params(k_p, nc, ndf)

    fwd = jax.jit(functools.partial(infogan_discriminator_forward, nc=nc, ndf=ndf))
    out = jax.block_until_ready(fwd(x, params))
    assert out.shape == (batch, nc), out.shape
    assert bool(jnp.all(jnp.isfinite(out)))
    assert bool(jnp.all((out > -1e-3) & (out < 1.0 + 1e-3)))

    ref = jax.block_until_ready(reference_forward(x, params, nc, ndf))
    max_diff = float(jnp.max(jnp.abs(out - ref.astype(out.dtype))))
    assert max_diff < 2e-2, f"kernel vs reference max abs diff = {max_diff}"
    print("KERNEL_OK")
</pallas_src>

<mosaic_0001>
module attributes {stable_mosaic.version = 11 : i64} {
  func.func @_conv1_kernel(%arg0: i32, %arg1: memref<128x128xbf16, #tpu.memory_space<vmem>>, %arg2: memref<128x128xbf16, #tpu.memory_space<vmem>>, %arg3: memref<1x128xf32, #tpu.memory_space<vmem>>, %arg4: memref<128x128xbf16, #tpu.memory_space<vmem>>) attributes {dimension_semantics = [#tpu.dimension_semantics<parallel>], iteration_bounds = array<i64: 1>, scalar_prefetch = 0 : i64, scratch_operands = 0 : i64, tpu.core_type = #tpu.core_type<tc>, window_params = [{transform_indices = @transform_0, window_bounds = array<i64: 128, 128>}, {pipeline_mode = #tpu.pipeline_mode<synchronous>, transform_indices = @transform_1, window_bounds = array<i64: 128, 128>}, {pipeline_mode = #tpu.pipeline_mode<synchronous>, transform_indices = @transform_2, window_bounds = array<i64: 1, 128>}, {transform_indices = @transform_3, window_bounds = array<i64: 128, 128>}]} {
    %c0 = arith.constant 0 : index
    %c0_0 = arith.constant 0 : index
    %0 = vector.load %arg1[%c0, %c0_0] : memref<128x128xbf16, #tpu.memory_space<vmem>>, vector<128x128xbf16>
    %c0_1 = arith.constant 0 : index
    %c0_2 = arith.constant 0 : index
    %1 = vector.load %arg2[%c0_1, %c0_2] : memref<128x128xbf16, #tpu.memory_space<vmem>>, vector<128x128xbf16>
    %cst = arith.constant dense<0.000000e+00> : vector<128x128xf32>
    %2 = tpu.matmul %0, %1, %cst {dimension_numbers = #tpu.dot_dimension_numbers<[1], [0], [0], [1], [0, 0, 1, 1], [], []>} : vector<128x128xbf16>, vector<128x128xbf16>, vector<128x128xf32> -> vector<128x128xf32>
    %c0_3 = arith.constant 0 : index
    %c0_4 = arith.constant 0 : index
    %3 = vector.load %arg3[%c0_3, %c0_4] : memref<1x128xf32, #tpu.memory_space<vmem>>, vector<1x128xf32>
    %4 = vector.broadcast %3 : vector<1x128xf32> to vector<128x128xf32>
    %5 = arith.addf %2, %4 : vector<128x128xf32>
    %cst_5 = arith.constant 0.000000e+00 : f32
    %6 = vector.broadcast %cst_5 : f32 to vector<128x128xf32>
    %7 = arith.cmpf oge, %5, %6 : vector<128x128xf32>
    %cst_6 = arith.constant 2.000000e-01 : f32
    %8 = vector.broadcast %cst_6 : f32 to vector<128x128xf32>
    %9 = arith.mulf %8, %5 : vector<128x128xf32>
    %10 = arith.select %7, %5, %9 : vector<128x128xi1>, vector<128x128xf32>
    %11 = arith.truncf %10 : vector<128x128xf32> to vector<128x128xbf16>
    %c0_7 = arith.constant 0 : index
    %c0_8 = arith.constant 0 : index
    %12 = vector.load %arg4[%c0_7, %c0_8] : memref<128x128xbf16, #tpu.memory_space<vmem>>, vector<128x128xbf16>
    tpu.vector_store %arg4[%c0_7, %c0_8], %11 {strides = array<i32>} : memref<128x128xbf16, #tpu.memory_space<vmem>>, vector<128x128xbf16>,
    return
  }
  func.func @transform_0(%arg0: i32) -> (i32, i32) {
    %c0_i32 = arith.constant 0 : i32
    %c0_i32_0 = arith.constant 0 : i32
    return %arg0, %c0_i32 : i32, i32
  }
  func.func @transform_1(%arg0: i32) -> (i32, i32) {
    %c0_i32 = arith.constant 0 : i32
    %c0_i32_0 = arith.constant 0 : i32
    %c0_i32_1 = arith.constant 0 : i32
    return %c0_i32, %c0_i32_0 : i32, i32
  }
  func.func @transform_2(%arg0: i32) -> (i32, i32) {
    %c0_i32 = arith.constant 0 : i32
    %c0_i32_0 = arith.constant 0 : i32
    %c0_i32_1 = arith.constant 0 : i32
    return %c0_i32, %c0_i32_0 : i32, i32
  }
  func.func @transform_3(%arg0: i32) -> (i32, i32) {
    %c0_i32 = arith.constant 0 : i32
    %c0_i32_0 = arith.constant 0 : i32
    return %arg0, %c0_i32 : i32, i32
  }
}

module attributes {stable_mosaic.version = 11 : i64} {
  func.func @_tail_kernel(%arg0: i32, %arg1: memref<128x1024xbf16, #tpu.memory_space<vmem>>, %arg2: memref<128x1xf32, #tpu.memory_space<vmem>>, %arg3: memref<1024x128xbf16, #tpu.memory_space<vmem>>, %arg4: memref<1x128xf32, #tpu.memory_space<vmem>>, %arg5: memref<1x128xf32, #tpu.memory_space<vmem>>, %arg6: memref<1x128xf32, #tpu.memory_space<vmem>>, %arg7: memref<2048x1024xbf16, #tpu.memory_space<vmem>>, %arg8: memref<1x1024xf32, #tpu.memory_space<vmem>>, %arg9: memref<1x1024xf32, #tpu.memory_space<vmem>>, %arg10: memref<1x1024xf32, #tpu.memory_space<vmem>>, %arg11: memref<1024x128xbf16, #tpu.memory_space<vmem>>, %arg12: memref<1x128xf32, #tpu.memory_space<vmem>>, %arg13: memref<8x128xf32, #tpu.memory_space<vmem>>) attributes {dimension_semantics = [#tpu.dimension_semantics<arbitrary>], iteration_bounds = array<i64: 1>, scalar_prefetch = 0 : i64, scratch_operands = 0 : i64, tpu.core_type = #tpu.core_type<tc>, window_params = [{pipeline_mode = #tpu.pipeline_mode<synchronous>, transform_indices = @transform_0, window_bounds = array<i64: 128, 1024>}, {pipeline_mode = #tpu.pipeline_mode<synchronous>, transform_indices = @transform_1, window_bounds = array<i64: 128, 1>}, {pipeline_mode = #tpu.pipeline_mode<synchronous>, transform_indices = @transform_2, window_bounds = array<i64: 1024, 128>}, {pipeline_mode = #tpu.pipeline_mode<synchronous>, transform_indices = @transform_3, window_bounds = array<i64: 1, 128>}, {pipeline_mode = #tpu.pipeline_mode<synchronous>, transform_indices = @transform_4, window_bounds = array<i64: 1, 128>}, {pipeline_mode = #tpu.pipeline_mode<synchronous>, transform_indices = @transform_5, window_bounds = array<i64: 1, 128>}, {pipeline_mode = #tpu.pipeline_mode<synchronous>, transform_indices = @transform_6, window_bounds = array<i64: 2048, 1024>}, {pipeline_mode = #tpu.pipeline_mode<synchronous>, transform_indices = @transform_7, window_bounds = array<i64: 1, 1024>}, {pipeline_mode = #tpu.pipeline_mode<synchronous>, transform_indices = @transform_8, window_bounds = array<i64: 1, 1024>}, {pipeline_mode = #tpu.pipeline_mode<synchronous>, transform_indices = @transform_9, window_bounds = array<i64: 1, 1024>}, {pipeline_mode = #tpu.pipeline_mode<synchronous>, transform_indices = @transform_10, window_bounds = array<i64: 1024, 128>}, {pipeline_mode = #tpu.pipeline_mode<synchronous>, transform_indices = @transform_11, window_bounds = array<i64: 1, 128>}, {pipeline_mode = #tpu.pipeline_mode<synchronous>, transform_indices = @transform_12, window_bounds = array<i64: 8, 128>}]} {
    %c0 = arith.constant 0 : index
    %c0_0 = arith.constant 0 : index
    %0 = vector.load %arg2[%c0, %c0_0] : memref<128x1xf32, #tpu.memory_space<vmem>>, vector<128x1xf32>
    %c0_1 = arith.constant 0 : index
    %c0_2 = arith.constant 0 : index
    %1 = vector.load %arg1[%c0_1, %c0_2] : memref<128x1024xbf16, #tpu.memory_space<vmem>>, vector<128x1024xbf16>
    %c0_3 = arith.constant 0 : index
    %c0_4 = arith.constant 0 : index
    %2 = vector.load %arg3[%c0_3, %c0_4] : memref<1024x128xbf16, #tpu.memory_space<vmem>>, vector<1024x128xbf16>
    %cst = arith.constant dense<0.000000e+00> : vector<128x128xf32>
    %3 = tpu.matmul %1, %2, %cst {dimension_numbers = #tpu.dot_dimension_numbers<[1], [0], [0], [1], [0, 0, 1, 1], [], []>} : vector<128x1024xbf16>, vector<1024x128xbf16>, vector<128x128xf32> -> vector<128x128xf32>
    %c0_5 = arith.constant 0 : index
    %c0_6 = arith.constant 0 : index
    %4 = vector.load %arg4[%c0_5, %c0_6] : memref<1x128xf32, #tpu.memory_space<vmem>>, vector<1x128xf32>
    %5 = vector.broadcast %4 : vector<1x128xf32> to vector<128x128xf32>
    %6 = arith.addf %3, %5 : vector<128x128xf32>
    %7 = vector.broadcast %0 : vector<128x1xf32> to vector<128x128xf32>
    %8 = arith.mulf %6, %7 : vector<128x128xf32>
    %cst_7 = arith.constant dense<0.000000e+00> : vector<128xf32>
    %9 = vector.multi_reduction <add>, %8, %cst_7 [0] : vector<128x128xf32> to vector<128xf32>
    %10 = vector.shape_cast %9 : vector<128xf32> to vector<1x128xf32>
    %cst_8 = arith.constant 3.125000e-02 : f32
    %11 = vector.broadcast %cst_8 : f32 to vector<1x128xf32>
    %12 = arith.mulf %10, %11 : vector<1x128xf32>
    %13 = vector.broadcast %12 : vector<1x128xf32> to vector<128x128xf32>
    %14 = arith.subf %6, %13 : vector<128x128xf32>
    %15 = arith.mulf %14, %14 : vector<128x128xf32>
    %16 = vector.broadcast %0 : vector<128x1xf32> to vector<128x128xf32>
    %17 = arith.mulf %16, %15 : vector<128x128xf32>
    %cst_9 = arith.constant dense<0.000000e+00> : vector<128xf32>
    %18 = vector.multi_reduction <add>, %17, %cst_9 [0] : vector<128x128xf32> to vector<128xf32>
    %19 = vector.shape_cast %18 : vector<128xf32> to vector<1x128xf32>
    %cst_10 = arith.constant 3.125000e-02 : f32
    %20 = vector.broadcast %cst_10 : f32 to vector<1x128xf32>
    %21 = arith.mulf %19, %20 : vector<1x128xf32>
    %22 = vector.broadcast %12 : vector<1x128xf32> to vector<128x128xf32>
    %23 = arith.subf %6, %22 : vector<128x128xf32>
    %cst_11 = arith.constant 9.99999974E-6 : f32
    %24 = vector.broadcast %cst_11 : f32 to vector<1x128xf32>
    %25 = arith.addf %21, %24 : vector<1x128xf32>
    %26 = math.rsqrt %25 : vector<1x128xf32>
    %27 = vector.broadcast %26 : vector<1x128xf32> to vector<128x128xf32>
    %28 = arith.mulf %23, %27 : vector<128x128xf32>
    %c0_12 = arith.constant 0 : index
    %c0_13 = arith.constant 0 : index
    %29 = vector.load %arg5[%c0_12, %c0_13] : memref<1x128xf32, #tpu.memory_space<vmem>>, vector<1x128xf32>
    %30 = vector.broadcast %29 : vector<1x128xf32> to vector<128x128xf32>
    %31 = arith.mulf %28, %30 : vector<128x128xf32>
    %c0_14 = arith.constant 0 : index
    %c0_15 = arith.constant 0 : index
    %32 = vector.load %arg6[%c0_14, %c0_15] : memref<1x128xf32, #tpu.memory_space<vmem>>, vector<1x128xf32>
    %33 = vector.broadcast %32 : vector<1x128xf32> to vector<128x128xf32>
    %34 = arith.addf %31, %33 : vector<128x128xf32>
    %cst_16 = arith.constant 0.000000e+00 : f32
    %35 = vector.broadcast %cst_16 : f32 to vector<128x128xf32>
    %36 = arith.cmpf oge, %34, %35 : vector<128x128xf32>
    %cst_17 = arith.constant 2.000000e-01 : f32
    %37 = vector.broadcast %cst_17 : f32 to vector<128x128xf32>
    %38 = arith.mulf %37, %34 : vector<128x128xf32>
    %39 = arith.select %36, %34, %38 : vector<128x128xi1>, vector<128x128xf32>
    %40 = vector.broadcast %0 : vector<128x1xf32> to vector<128x128xf32>
    %41 = arith.mulf %39, %40 : vector<128x128xf32>
    %cst_18 = arith.constant 0.000000e+00 : f32
    %42 = vector.broadcast %cst_18 : f32 to vector<8x1024xf32>
    %43 = vector.extract_strided_slice %41 {offsets = [0, 0], sizes = [8, 128], strides = [1, 1]} : vector<128x128xf32> to vector<8x128xf32>
    %44 = arith.truncf %43 : vector<8x128xf32> to vector<8x128xbf16>
    %c0_19 = arith.constant 0 : index
    %c0_20 = arith.constant 0 : index
    %45 = vector.load %arg7[%c0_19, %c0_20] : memref<2048x1024xbf16, #tpu.memory_space<vmem>>, vector<128x1024xbf16>
    %cst_21 = arith.constant dense<0.000000e+00> : vector<8x1024xf32>
    %46 = tpu.matmul %44, %45, %cst_21 {dimension_numbers = #tpu.dot_dimension_numbers<[1], [0], [0], [1], [0, 0, 1, 1], [], []>} : vector<8x128xbf16>, vector<128x1024xbf16>, vector<8x1024xf32> -> vector<8x1024xf32>
    %47 = arith.addf %42, %46 : vector<8x1024xf32>
    %48 = vector.extract_strided_slice %41 {offsets = [8, 0], sizes = [8, 128], strides = [1, 1]} : vector<128x128xf32> to vector<8x128xf32>
    %49 = arith.truncf %48 : vector<8x128xf32> to vector<8x128xbf16>
    %c128 = arith.constant 128 : index
    %c0_22 = arith.constant 0 : index
    %50 = vector.load %arg7[%c128, %c0_22] : memref<2048x1024xbf16, #tpu.memory_space<vmem>>, vector<128x1024xbf16>
    %cst_23 = arith.constant dense<0.000000e+00> : vector<8x1024xf32>
    %51 = tpu.matmul %49, %50, %cst_23 {dimension_numbers = #tpu.dot_dimension_numbers<[1], [0], [0], [1], [0, 0, 1, 1], [], []>} : vector<8x128xbf16>, vector<128x1024xbf16>, vector<8x1024xf32> -> vector<8x1024xf32>
    %52 = arith.addf %47, %51 : vector<8x1024xf32>
    %53 = vector.extract_strided_slice %41 {offsets = [16, 0], sizes = [8, 128], strides = [1, 1]} : vector<128x128xf32> to vector<8x128xf32>
    %54 = arith.truncf %53 : vector<8x128xf32> to vector<8x128xbf16>
    %c256 = arith.constant 256 : index
    %c0_24 = arith.constant 0 : index
    %55 = vector.load %arg7[%c256, %c0_24] : memref<2048x1024xbf16, #tpu.memory_space<vmem>>, vector<128x1024xbf16>
    %cst_25 = arith.constant dense<0.000000e+00> : vector<8x1024xf32>
    %56 = tpu.matmul %54, %55, %cst_25 {dimension_numbers = #tpu.dot_dimension_numbers<[1], [0], [0], [1], [0, 0, 1, 1], [], []>} : vector<8x128xbf16>, vector<128x1024xbf16>, vector<8x1024xf32> -> vector<8x1024xf32>
    %57 = arith.addf %52, %56 : vector<8x1024xf32>
    %58 = vector.extract_strided_slice %41 {offsets = [24, 0], sizes = [8, 128], strides = [1, 1]} : vector<128x128xf32> to vector<8x128xf32>
    %59 = arith.truncf %58 : vector<8x128xf32> to vector<8x128xbf16>
    %c384 = arith.constant 384 : index
    %c0_26 = arith.constant 0 : index
    %60 = vector.load %arg7[%c384, %c0_26] : memref<2048x1024xbf16, #tpu.memory_space<vmem>>, vector<128x1024xbf16>
    %cst_27 = arith.constant dense<0.000000e+00> : vector<8x1024xf32>
    %61 = tpu.matmul %59, %60, %cst_27 {dimension_numbers = #tpu.dot_dimension_numbers<[1], [0], [0], [1], [0, 0, 1, 1], [], []>} : vector<8x128xbf16>, vector<128x1024xbf16>, vector<8x1024xf32> -> vector<8x1024xf32>
    %62 = arith.addf %57, %61 : vector<8x1024xf32>
    %63 = vector.extract_strided_slice %41 {offsets = [32, 0], sizes = [8, 128], strides = [1, 1]} : vector<128x128xf32> to vector<8x128xf32>
    %64 = arith.truncf %63 : vector<8x128xf32> to vector<8x128xbf16>
    %c512 = arith.constant 512 : index
    %c0_28 = arith.constant 0 : index
    %65 = vector.load %arg7[%c512, %c0_28] : memref<2048x1024xbf16, #tpu.memory_space<vmem>>, vector<128x1024xbf16>
    %cst_29 = arith.constant dense<0.000000e+00> : vector<8x1024xf32>
    %66 = tpu.matmul %64, %65, %cst_29 {dimension_numbers = #tpu.dot_dimension_numbers<[1], [0], [0], [1], [0, 0, 1, 1], [], []>} : vector<8x128xbf16>, vector<128x1024xbf16>, vector<8x1024xf32> -> vector<8x1024xf32>
    %67 = arith.addf %62, %66 : vector<8x1024xf32>
    %68 = vector.extract_strided_slice %41 {offsets = [40, 0], sizes = [8, 128], strides = [1, 1]} : vector<128x128xf32> to vector<8x128xf32>
    %69 = arith.truncf %68 : vector<8x128xf32> to vector<8x128xbf16>
    %c640 = arith.constant 640 : index
    %c0_30 = arith.constant 0 : index
    %70 = vector.load %arg7[%c640, %c0_30] : memref<2048x1024xbf16, #tpu.memory_space<vmem>>, vector<128x1024xbf16>
    %cst_31 = arith.constant dense<0.000000e+00> : vector<8x1024xf32>
    %71 = tpu.matmul %69, %70, %cst_31 {dimension_numbers = #tpu.dot_dimension_numbers<[1], [0], [0], [1], [0, 0, 1, 1], [], []>} : vector<8x128xbf16>, vector<128x1024xbf16>, vector<8x1024xf32> -> vector<8x1024xf32>
    %72 = arith.addf %67, %71 : vector<8x1024xf32>
    %73 = vector.extract_strided_slice %41 {offsets = [48, 0], sizes = [8, 128], strides = [1, 1]} : vector<128x128xf32> to vector<8x128xf32>
    %74 = arith.truncf %73 : vector<8x128xf32> to vector<8x128xbf16>
    %c768 = arith.constant 768 : index
    %c0_32 = arith.constant 0 : index
    %75 = vector.load %arg7[%c768, %c0_32] : memref<2048x1024xbf16, #tpu.memory_space<vmem>>, vector<128x1024xbf16>
    %cst_33 = arith.constant dense<0.000000e+00> : vector<8x1024xf32>
    %76 = tpu.matmul %74, %75, %cst_33 {dimension_numbers = #tpu.dot_dimension_numbers<[1], [0], [0], [1], [0, 0, 1, 1], [], []>} : vector<8x128xbf16>, vector<128x1024xbf16>, vector<8x1024xf32> -> vector<8x1024xf32>
    %77 = arith.addf %72, %76 : vector<8x1024xf32>
    %78 = vector.extract_strided_slice %41 {offsets = [56, 0], sizes = [8, 128], strides = [1, 1]} : vector<128x128xf32> to vector<8x128xf32>
    %79 = arith.truncf %78 : vector<8x128xf32> to vector<8x128xbf16>
    %c896 = arith.constant 896 : index
    %c0_34 = arith.constant 0 : index
    %80 = vector.load %arg7[%c896, %c0_34] : memref<2048x1024xbf16, #tpu.memory_space<vmem>>, vector<128x1024xbf16>
    %cst_35 = arith.constant dense<0.000000e+00> : vector<8x1024xf32>
    %81 = tpu.matmul %79, %80, %cst_35 {dimension_numbers = #tpu.dot_dimension_numbers<[1], [0], [0], [1], [0, 0, 1, 1], [], []>} : vector<8x128xbf16>, vector<128x1024xbf16>, vector<8x1024xf32> -> vector<8x1024xf32>
    %82 = arith.addf %77, %81 : vector<8x1024xf32>
    %83 = vector.extract_strided_slice %41 {offsets = [64, 0], sizes = [8, 128], strides = [1, 1]} : vector<128x128xf32> to vector<8x128xf32>
    %84 = arith.truncf %83 : vector<8x128xf32> to vector<8x128xbf16>
    %c1024 = arith.constant 1024 : index
    %c0_36 = arith.constant 0 : index
    %85 = vector.load %arg7[%c1024, %c0_36] : memref<2048x1024xbf16, #tpu.memory_space<vmem>>, vector<128x1024xbf16>
    %cst_37 = arith.constant dense<0.000000e+00> : vector<8x1024xf32>
    %86 = tpu.matmul %84, %85, %cst_37 {dimension_numbers = #tpu.dot_dimension_numbers<[1], [0], [0], [1], [0, 0, 1, 1], [], []>} : vector<8x128xbf16>, vector<128x1024xbf16>, vector<8x1024xf32> -> vector<8x1024xf32>
    %87 = arith.addf %82, %86 : vector<8x1024xf32>
    %88 = vector.extract_strided_slice %41 {offsets = [72, 0], sizes = [8, 128], strides = [1, 1]} : vector<128x128xf32> to vector<8x128xf32>
    %89 = arith.truncf %88 : vector<8x128xf32> to vector<8x128xbf16>
    %c1152 = arith.constant 1152 : index
    %c0_38 = arith.constant 0 : index
    %90 = vector.load %arg7[%c1152, %c0_38] : memref<2048x1024xbf16, #tpu.memory_space<vmem>>, vector<128x1024xbf16>
    %cst_39 = arith.constant dense<0.000000e+00> : vector<8x1024xf32>
    %91 = tpu.matmul %89, %90, %cst_39 {dimension_numbers = #tpu.dot_dimension_numbers<[1], [0], [0], [1], [0, 0, 1, 1], [], []>} : vector<8x128xbf16>, vector<128x1024xbf16>, vector<8x1024xf32> -> vector<8x1024xf32>
    %92 = arith.addf %87, %91 : vector<8x1024xf32>
    %93 = vector.extract_strided_slice %41 {offsets = [80, 0], sizes = [8, 128], strides = [1, 1]} : vector<128x128xf32> to vector<8x128xf32>
    %94 = arith.truncf %93 : vector<8x128xf32> to vector<8x128xbf16>
    %c1280 = arith.constant 1280 : index
    %c0_40 = arith.constant 0 : index
    %95 = vector.load %arg7[%c1280, %c0_40] : memref<2048x1024xbf16, #tpu.memory_space<vmem>>, vector<128x1024xbf16>
    %cst_41 = arith.constant dense<0.000000e+00> : vector<8x1024xf32>
    %96 = tpu.matmul %94, %95, %cst_41 {dimension_numbers = #tpu.dot_dimension_numbers<[1], [0], [0], [1], [0, 0, 1, 1], [], []>} : vector<8x128xbf16>, vector<128x1024xbf16>, vector<8x1024xf32> -> vector<8x1024xf32>
    %97 = arith.addf %92, %96 : vector<8x1024xf32>
    %98 = vector.extract_strided_slice %41 {offsets = [88, 0], sizes = [8, 128], strides = [1, 1]} : vector<128x128xf32> to vector<8x128xf32>
    %99 = arith.truncf %98 : vector<8x128xf32> to vector<8x128xbf16>
    %c1408 = arith.constant 1408 : index
    %c0_42 = arith.constant 0 : index
    %100 = vector.load %arg7[%c1408, %c0_42] : memref<2048x1024xbf16, #tpu.memory_space<vmem>>, vector<128x1024xbf16>
    %cst_43 = arith.constant dense<0.000000e+00> : vector<8x1024xf32>
    %101 = tpu.matmul %99, %100, %cst_43 {dimension_numbers = #tpu.dot_dimension_numbers<[1], [0], [0], [1], [0, 0, 1, 1], [], []>} : vector<8x128xbf16>, vector<128x1024xbf16>, vector<8x1024xf32> -> vector<8x1024xf32>
    %102 = arith.addf %97, %101 : vector<8x1024xf32>
    %103 = vector.extract_strided_slice %41 {offsets = [96, 0], sizes = [8, 128], strides = [1, 1]} : vector<128x128xf32> to vector<8x128xf32>
    %104 = arith.truncf %103 : vector<8x128xf32> to vector<8x128xbf16>
    %c1536 = arith.constant 1536 : index
    %c0_44 = arith.constant 0 : index
    %105 = vector.load %arg7[%c1536, %c0_44] : memref<2048x1024xbf16, #tpu.memory_space<vmem>>, vector<128x1024xbf16>
    %cst_45 = arith.constant dense<0.000000e+00> : vector<8x1024xf32>
    %106 = tpu.matmul %104, %105, %cst_45 {dimension_numbers = #tpu.dot_dimension_numbers<[1], [0], [0], [1], [0, 0, 1, 1], [], []>} : vector<8x128xbf16>, vector<128x1024xbf16>, vector<8x1024xf32> -> vector<8x1024xf32>
    %107 = arith.addf %102, %106 : vector<8x1024xf32>
    %108 = vector.extract_strided_slice %41 {offsets = [104, 0], sizes = [8, 128], strides = [1, 1]} : vector<128x128xf32> to vector<8x128xf32>
    %109 = arith.truncf %108 : vector<8x128xf32> to vector<8x128xbf16>
    %c1664 = arith.constant 1664 : index
    %c0_46 = arith.constant 0 : index
    %110 = vector.load %arg7[%c1664, %c0_46] : memref<2048x1024xbf16, #tpu.memory_space<vmem>>, vector<128x1024xbf16>
    %cst_47 = arith.constant dense<0.000000e+00> : vector<8x1024xf32>
    %111 = tpu.matmul %109, %110, %cst_47 {dimension_numbers = #tpu.dot_dimension_numbers<[1], [0], [0], [1], [0, 0, 1, 1], [], []>} : vector<8x128xbf16>, vector<128x1024xbf16>, vector<8x1024xf32> -> vector<8x1024xf32>
    %112 = arith.addf %107, %111 : vector<8x1024xf32>
    %113 = vector.extract_strided_slice %41 {offsets = [112, 0], sizes = [8, 128], strides = [1, 1]} : vector<128x128xf32> to vector<8x128xf32>
    %114 = arith.truncf %113 : vector<8x128xf32> to vector<8x128xbf16>
    %c1792 = arith.constant 1792 : index
    %c0_48 = arith.constant 0 : index
    %115 = vector.load %arg7[%c1792, %c0_48] : memref<2048x1024xbf16, #tpu.memory_space<vmem>>, vector<128x1024xbf16>
    %cst_49 = arith.constant dense<0.000000e+00> : vector<8x1024xf32>
    %116 = tpu.matmul %114, %115, %cst_49 {dimension_numbers = #tpu.dot_dimension_numbers<[1], [0], [0], [1], [0, 0, 1, 1], [], []>} : vector<8x128xbf16>, vector<128x1024xbf16>, vector<8x1024xf32> -> vector<8x1024xf32>
    %117 = arith.addf %112, %116 : vector<8x1024xf32>
    %118 = vector.extract_strided_slice %41 {offsets = [120, 0], sizes = [8, 128], strides = [1, 1]} : vector<128x128xf32> to vector<8x128xf32>
    %119 = arith.truncf %118 : vector<8x128xf32> to vector<8x128xbf16>
    %c1920 = arith.constant 1920 : index
    %c0_50 = arith.constant 0 : index
    %120 = vector.load %arg7[%c1920, %c0_50] : memref<2048x1024xbf16, #tpu.memory_space<vmem>>, vector<128x1024xbf16>
    %cst_51 = arith.constant dense<0.000000e+00> : vector<8x1024xf32>
    %121 = tpu.matmul %119, %120, %cst_51 {dimension_numbers = #tpu.dot_dimension_numbers<[1], [0], [0], [1], [0, 0, 1, 1], [], []>} : vector<8x128xbf16>, vector<128x1024xbf16>, vector<8x1024xf32> -> vector<8x1024xf32>
    %122 = arith.addf %117, %121 : vector<8x1024xf32>
    %c0_52 = arith.constant 0 : index
    %c0_53 = arith.constant 0 : index
    %123 = vector.load %arg8[%c0_52, %c0_53] : memref<1x1024xf32, #tpu.memory_space<vmem>>, vector<1x1024xf32>
    %124 = vector.broadcast %123 : vector<1x1024xf32> to vector<8x1024xf32>
    %125 = arith.addf %122, %124 : vector<8x1024xf32>
    %126 = vector.extract_strided_slice %0 {offsets = [0, 0], sizes = [8, 1], strides = [1, 1]} : vector<128x1xf32> to vector<8x1xf32>
    %127 = vector.broadcast %126 : vector<8x1xf32> to vector<8x1024xf32>
    %128 = arith.mulf %125, %127 : vector<8x1024xf32>
    %cst_54 = arith.constant dense<0.000000e+00> : vector<1024xf32>
    %129 = vector.multi_reduction <add>, %128, %cst_54 [0] : vector<8x1024xf32> to vector<1024xf32>
    %130 = vector.shape_cast %129 : vector<1024xf32> to vector<1x1024xf32>
    %cst_55 = arith.constant 5.000000e-01 : f32
    %131 = vector.broadcast %cst_55 : f32 to vector<1x1024xf32>
    %132 = arith.mulf %130, %131 : vector<1x1024xf32>
    %133 = vector.broadcast %132 : vector<1x1024xf32> to vector<8x1024xf32>
    %134 = arith.subf %125, %133 : vector<8x1024xf32>
    %135 = arith.mulf %134, %134 : vector<8x1024xf32>
    %136 = vector.broadcast %126 : vector<8x1xf32> to vector<8x1024xf32>
    %137 = arith.mulf %136, %135 : vector<8x1024xf32>
    %cst_56 = arith.constant dense<0.000000e+00> : vector<1024xf32>
    %138 = vector.multi_reduction <add>, %137, %cst_56 [0] : vector<8x1024xf32> to vector<1024xf32>
    %139 = vector.shape_cast %138 : vector<1024xf32> to vector<1x1024xf32>
    %cst_57 = arith.constant 5.000000e-01 : f32
    %140 = vector.broadcast %cst_57 : f32 to vector<1x1024xf32>
    %141 = arith.mulf %139, %140 : vector<1x1024xf32>
    %142 = vector.broadcast %132 : vector<1x1024xf32> to vector<8x1024xf32>
    %143 = arith.subf %125, %142 : vector<8x1024xf32>
    %cst_58 = arith.constant 9.99999974E-6 : f32
    %144 = vector.broadcast %cst_58 : f32 to vector<1x1024xf32>
    %145 = arith.addf %141, %144 : vector<1x1024xf32>
    %146 = math.rsqrt %145 : vector<1x1024xf32>
    %147 = vector.broadcast %146 : vector<1x1024xf32> to vector<8x1024xf32>
    %148 = arith.mulf %143, %147 : vector<8x1024xf32>
    %c0_59 = arith.constant 0 : index
    %c0_60 = arith.constant 0 : index
    %149 = vector.load %arg9[%c0_59, %c0_60] : memref<1x1024xf32, #tpu.memory_space<vmem>>, vector<1x1024xf32>
    %150 = vector.broadcast %149 : vector<1x1024xf32> to vector<8x1024xf32>
    %151 = arith.mulf %148, %150 : vector<8x1024xf32>
    %c0_61 = arith.constant 0 : index
    %c0_62 = arith.constant 0 : index
    %152 = vector.load %arg10[%c0_61, %c0_62] : memref<1x1024xf32, #tpu.memory_space<vmem>>, vector<1x1024xf32>
    %153 = vector.broadcast %152 : vector<1x1024xf32> to vector<8x1024xf32>
    %154 = arith.addf %151, %153 : vector<8x1024xf32>
    %cst_63 = arith.constant 0.000000e+00 : f32
    %155 = vector.broadcast %cst_63 : f32 to vector<8x1024xf32>
    %156 = arith.cmpf oge, %154, %155 : vector<8x1024xf32>
    %cst_64 = arith.constant 2.000000e-01 : f32
    %157 = vector.broadcast %cst_64 : f32 to vector<8x1024xf32>
    %158 = arith.mulf %157, %154 : vector<8x1024xf32>
    %159 = arith.select %156, %154, %158 : vector<8x1024xi1>, vector<8x1024xf32>
    %160 = arith.truncf %159 : vector<8x1024xf32> to vector<8x1024xbf16>
    %c0_65 = arith.constant 0 : index
    %c0_66 = arith.constant 0 : index
    %161 = vector.load %arg11[%c0_65, %c0_66] : memref<1024x128xbf16, #tpu.memory_space<vmem>>, vector<1024x128xbf16>
    %cst_67 = arith.constant dense<0.000000e+00> : vector<8x128xf32>
    %162 = tpu.matmul %160, %161, %cst_67 {dimension_numbers = #tpu.dot_dimension_numbers<[1], [0], [0], [1], [0, 0, 1, 1], [], []>} : vector<8x1024xbf16>, vector<1024x128xbf16>, vector<8x128xf32> -> vector<8x128xf32>
    %c0_68 = arith.constant 0 : index
    %c0_69 = arith.constant 0 : index
    %163 = vector.load %arg12[%c0_68, %c0_69] : memref<1x128xf32, #tpu.memory_space<vmem>>, vector<1x128xf32>
    %164 = vector.broadcast %163 : vector<1x128xf32> to vector<8x128xf32>
    %165 = arith.addf %162, %164 : vector<8x128xf32>
    %cst_70 = arith.constant 0.000000e+00 : f32
    %166 = vector.broadcast %cst_70 : f32 to vector<8x128xf32>
    %167 = arith.subf %166, %165 : vector<8x128xf32>
    %168 = math.exp %167 : vector<8x128xf32>
    %cst_71 = arith.constant 1.000000e+00 : f32
    %169 = vector.broadcast %cst_71 : f32 to vector<8x128xf32>
    %170 = arith.addf %169, %168 : vector<8x128xf32>
    %171 = tpu.reciprocal %170 {approx = true} : vector<8x128xf32> -> vector<8x128xf32>
    %c0_72 = arith.constant 0 : index
    %c0_73 = arith.constant 0 : index
    %172 = vector.load %arg13[%c0_72, %c0_73] : memref<8x128xf32, #tpu.memory_space<vmem>>, vector<8x128xf32>
    tpu.vector_store %arg13[%c0_72, %c0_73], %171 {strides = array<i32>} : memref<8x128xf32, #tpu.memory_space<vmem>>, vector<8x128xf32>,
    return
  }
  func.func @transform_0(%arg0: i32) -> (i32, i32) {
    %c0_i32 = arith.constant 0 : i32
    %c0_i32_0 = arith.constant 0 : i32
    %c0_i32_1 = arith.constant 0 : i32
    return %c0_i32, %c0_i32_0 : i32, i32
  }
  func.func @transform_1(%arg0: i32) -> (i32, i32) {
    %c0_i32 = arith.constant 0 : i32
    %c0_i32_0 = arith.constant 0 : i32
    %c0_i32_1 = arith.constant 0 : i32
    return %c0_i32, %c0_i32_0 : i32, i32
  }
  func.func @transform_2(%arg0: i32) -> (i32, i32) {
    %c0_i32 = arith.constant 0 : i32
    %c0_i32_0 = arith.constant 0 : i32
    %c0_i32_1 = arith.constant 0 : i32
    return %c0_i32, %c0_i32_0 : i32, i32
  }
  func.func @transform_3(%arg0: i32) -> (i32, i32) {
    %c0_i32 = arith.constant 0 : i32
    %c0_i32_0 = arith.constant 0 : i32
    %c0_i32_1 = arith.constant 0 : i32
    return %c0_i32, %c0_i32_0 : i32, i32
  }
  func.func @transform_4(%arg0: i32) -> (i32, i32) {
    %c0_i32 = arith.constant 0 : i32
    %c0_i32_0 = arith.constant 0 : i32
    %c0_i32_1 = arith.constant 0 : i32
    return %c0_i32, %c0_i32_0 : i32, i32
  }
  func.func @transform_5(%arg0: i32) -> (i32, i32) {
    %c0_i32 = arith.constant 0 : i32
    %c0_i32_0 = arith.constant 0 : i32
    %c0_i32_1 = arith.constant 0 : i32
    return %c0_i32, %c0_i32_0 : i32, i32
  }
  func.func @transform_6(%arg0: i32) -> (i32, i32) {
    %c0_i32 = arith.constant 0 : i32
    %c0_i32_0 = arith.constant 0 : i32
    %c0_i32_1 = arith.constant 0 : i32
    return %c0_i32, %c0_i32_0 : i32, i32
  }
  func.func @transform_7(%arg0: i32) -> (i32, i32) {
    %c0_i32 = arith.constant 0 : i32
    %c0_i32_0 = arith.constant 0 : i32
    %c0_i32_1 = arith.constant 0 : i32
    return %c0_i32, %c0_i32_0 : i32, i32
  }
  func.func @transform_8(%arg0: i32) -> (i32, i32) {
    %c0_i32 = arith.constant 0 : i32
    %c0_i32_0 = arith.constant 0 : i32
    %c0_i32_1 = arith.constant 0 : i32
    return %c0_i32, %c0_i32_0 : i32, i32
  }
  func.func @transform_9(%arg0: i32) -> (i32, i32) {
    %c0_i32 = arith.constant 0 : i32
    %c0_i32_0 = arith.constant 0 : i32
    %c0_i32_1 = arith.constant 0 : i32
    return %c0_i32, %c0_i32_0 : i32, i32
  }
  func.func @transform_10(%arg0: i32) -> (i32, i32) {
    %c0_i32 = arith.constant 0 : i32
    %c0_i32_0 = arith.constant 0 : i32
    %c0_i32_1 = arith.constant 0 : i32
    return %c0_i32, %c0_i32_0 : i32, i32
  }
  func.func @transform_11(%arg0: i32) -> (i32, i32) {
    %c0_i32 = arith.constant 0 : i32
    %c0_i32_0 = arith.constant 0 : i32
    %c0_i32_1 = arith.constant 0 : i32
    return %c0_i32, %c0_i32_0 : i32, i32
  }
  func.func @transform_12(%arg0: i32) -> (i32, i32) {
    %c0_i32 = arith.constant 0 : i32
    %c0_i32_0 = arith.constant 0 : i32
    %c0_i32_1 = arith.constant 0 : i32
    return %c0_i32, %c0_i32_0 : i32, i32
  }
}

</mosaic_0001>

<llo_original>
// kernel: infogan_discriminator_forward.2
$region0: #{infogan_discriminator_forward.2}
  #allocation0 [shape = 'u32[]', space=smem, size = 0x4, offset = 0x4, fixed_abs, tag = 'smem constant byte address 0x4 - core index']
  #allocation1 [shape = 'u32[144,128]{1,0:T(1,128)}', space=vmem, size = 0x12000, scoped, tag = 'internal scratch']
  %s0 = inlined_call_operand.vmem [shape: bf16[128,128], index: 0, kind: input, shape index: {}]
  %s1 = inlined_call_operand.hbm [shape: bf16[128,128], index: 1, kind: input, shape index: {}]
  %s2 = inlined_call_operand.hbm [shape: f32[1,128], index: 2, kind: input, shape index: {}]
  %s3 = inlined_call_operand.vmem [shape: bf16[128,128], index: 3, kind: output, shape index: {}]
  %s4 = sld [smem:[#allocation0]]
  $region30: #{infogan_discriminator_forward.2} parent=0
    _
  %s6 = ssub.s32 1, %s4
  %s7 = scalar_select 0, %s6, %s4
  $region1: #{infogan_discriminator_forward.2} parent=0
    #allocation2 [shape = 'u8[32768]{0}', space=vmem, size = 0x8000, scoped, tag = 'input window, operand 1, single buffered']
    #allocation3 [shape = 's32[1]{0}', space=sflag, size = 0x4, scoped, tag = 'scoped memory for infogan_discriminator_forward.2']
    #allocation4 [shape = 'u8[512]{0}', space=vmem, size = 0x400, scoped, tag = 'input window, operand 2, single buffered']
    #allocation5 [shape = 's32[1]{0}', space=sflag, size = 0x4, scoped, tag = 'scoped memory for infogan_discriminator_forward.2']
    %8 = vsyncpa [#allocation3], 0
    %9 = vsyncpa [#allocation5], 0
    // Predicated region
    $region2: #{infogan_discriminator_forward.2} parent=1 // pred_check
      _
    $region3: #{infogan_discriminator_forward.2} parent=1 // pred_check_branch
      %11 = sbr.rel (0) target = $region5
    $region4: #{infogan_discriminator_forward.2} parent=1 // pred_region
      _
    $region5: #{infogan_discriminator_forward.2} parent=1 // pred_fallthru
      _
    // Predicated region
    $region6: #{infogan_discriminator_forward.2} parent=1 // pred_check
      _
    $region7: #{infogan_discriminator_forward.2} parent=1 // pred_check_branch
      %13 = sbr.rel (0) target = $region9
    $region8: #{infogan_discriminator_forward.2} parent=1 // pred_region
      %s15 = ssub.s32 1024, 1024
      %16 = vsyncadd [#allocation3], %s15
      %s17 = sshll.u32 [#allocation2], 4
      %s18 = int_to_ptr.vmem [resolvable:$true] %s17
      %23 = dma.hbm_to_vmem [thread:$0]  %s1, 1024, %s18, [#allocation3], 64, 64, 4
    $region9: #{infogan_discriminator_forward.2} parent=1 // pred_fallthru
      _
    // Predicated region
    $region10: #{infogan_discriminator_forward.2} parent=1 // pred_check
      _
    $region11: #{infogan_discriminator_forward.2} parent=1 // pred_check_branch
      %25 = sbr.rel (0) target = $region13
    $region12: #{infogan_discriminator_forward.2} parent=1 // pred_region
      %s27 = ssub.s32 16, 16
      %28 = vsyncadd [#allocation5], %s27
      %s30 = sshll.u32 [#allocation4], 4
      %s31 = int_to_ptr.vmem [resolvable:$true] %s30
      %33 = dma.hbm_to_vmem [thread:$0]  %s2, 16, %s31, [#allocation5]
    $region13: #{infogan_discriminator_forward.2} parent=1 // pred_fallthru
      _
    // Predicated region
    $region14: #{infogan_discriminator_forward.2} parent=1 // pred_check
      _
    $region15: #{infogan_discriminator_forward.2} parent=1 // pred_check_branch
      %35 = sbr.rel (0) target = $region17
    $region16: #{infogan_discriminator_forward.2} parent=1 // pred_region
      %36 = dma.done [#allocation3], 1024
    $region17: #{infogan_discriminator_forward.2} parent=1 // pred_fallthru
      _
    // Predicated region
    $region18: #{infogan_discriminator_forward.2} parent=1 // pred_check
      _
    $region19: #{infogan_discriminator_forward.2} parent=1 // pred_check_branch
      %38 = sbr.rel (0) target = $region21
    $region20: #{infogan_discriminator_forward.2} parent=1 // pred_region
      %39 = dma.done [#allocation5], 16
    $region21: #{infogan_discriminator_forward.2} parent=1 // pred_fallthru
      _
    %v41 = vld [vmem:[%s0] sm:$0xf]
    %v42 = vld [vmem:[%s0 + $0x4] sm:$0xf]
    %v43 = vld [vmem:[%s0 + $0x8] sm:$0xf]
    %v44 = vld [vmem:[%s0 + $0xc] sm:$0xf]
    %v45 = vld [vmem:[%s0 + $0x10] sm:$0xf]
    %v46 = vld [vmem:[%s0 + $0x14] sm:$0xf]
    %v47 = vld [vmem:[%s0 + $0x18] sm:$0xf]
    %v48 = vld [vmem:[%s0 + $0x1c] sm:$0xf]
    %v49 = vld [vmem:[%s0 + $0x20] sm:$0xf]
    %v50 = vld [vmem:[%s0 + $0x24] sm:$0xf]
    %v51 = vld [vmem:[%s0 + $0x28] sm:$0xf]
    %v52 = vld [vmem:[%s0 + $0x2c] sm:$0xf]
    %v53 = vld [vmem:[%s0 + $0x30] sm:$0xf]
    %v54 = vld [vmem:[%s0 + $0x34] sm:$0xf]
    %v55 = vld [vmem:[%s0 + $0x38] sm:$0xf]
    %v56 = vld [vmem:[%s0 + $0x3c] sm:$0xf]
    %v57 = vld [vmem:[#allocation2] sm:$0xf]
    %v58 = vld [vmem:[#allocation2 + $0x4] sm:$0xf]
    %v59 = vld [vmem:[#allocation2 + $0x8] sm:$0xf]
    %v60 = vld [vmem:[#allocation2 + $0xc] sm:$0xf]
    %v61 = vld [vmem:[#allocation2 + $0x10] sm:$0xf]
    %v62 = vld [vmem:[#allocation2 + $0x14] sm:$0xf]
    %v63 = vld [vmem:[#allocation2 + $0x18] sm:$0xf]
    %v64 = vld [vmem:[#allocation2 + $0x1c] sm:$0xf]
    %v65 = vld [vmem:[#allocation2 + $0x20] sm:$0xf]
    %v66 = vld [vmem:[#allocation2 + $0x24] sm:$0xf]
    %v67 = vld [vmem:[#allocation2 + $0x28] sm:$0xf]
    %v68 = vld [vmem:[#allocation2 + $0x2c] sm:$0xf]
    %v69 = vld [vmem:[#allocation2 + $0x30] sm:$0xf]
    %v70 = vld [vmem:[#allocation2 + $0x34] sm:$0xf]
    %v71 = vld [vmem:[#allocation2 + $0x38] sm:$0xf]
    %v72 = vld [vmem:[#allocation2 + $0x3c] sm:$0xf]
    %v73 = vld [vmem:[#allocation4] sm:$0x1]
    %v75 = vlaneseq
    %v76 = vshrl.u32 %v75, 7
    %v77 = vsub.s32 0, %v76
    %v78 = vrot.slane %v73, %v77
    %v96 = vunpack.c.l.b16 %v41
    %v97 = vunpack.c.l.b16 %v42
    %v98 = vunpack.c.l.b16 %v43
    %v99 = vunpack.c.l.b16 %v44
    %v100 = vunpack.c.l.b16 %v45
    %v101 = vunpack.c.l.b16 %v46
    %v102 = vunpack.c.l.b16 %v47
    %v103 = vunpack.c.l.b16 %v48
    %v104 = vunpack.c.l.b16 %v49
    %v105 = vunpack.c.l.b16 %v50
    %v106 = vunpack.c.l.b16 %v51
    %v107 = vunpack.c.l.b16 %v52
    %v108 = vunpack.c.l.b16 %v53
    %v109 = vunpack.c.l.b16 %v54
    %v110 = vunpack.c.l.b16 %v55
    %v111 = vunpack.c.l.b16 %v56
    %v112 = vpack.c.b16 %v97, %v96
    %v113 = vpack.c.b16 %v99, %v98
    %v114 = vpack.c.b16 %v101, %v100
    %v115 = vpack.c.b16 %v103, %v102
    %v116 = vpack.c.b16 %v105, %v104
    %v117 = vpack.c.b16 %v107, %v106
    %v118 = vpack.c.b16 %v109, %v108
    %v119 = vpack.c.b16 %v111, %v110
    %v144 = vunpack.c.l.b16 %v57
    %v145 = vunpack.c.l.b16 %v58
    %v146 = vunpack.c.l.b16 %v59
    %v147 = vunpack.c.l.b16 %v60
    %v148 = vunpack.c.l.b16 %v61
    %v149 = vunpack.c.l.b16 %v62
    %v150 = vunpack.c.l.b16 %v63
    %v151 = vunpack.c.l.b16 %v64
    %v152 = vunpack.c.l.b16 %v65
    %v153 = vunpack.c.l.b16 %v66
    %v154 = vunpack.c.l.b16 %v67
    %v155 = vunpack.c.l.b16 %v68
    %v156 = vunpack.c.l.b16 %v69
    %v157 = vunpack.c.l.b16 %v70
    %v158 = vunpack.c.l.b16 %v71
    %v159 = vunpack.c.l.b16 %v72
    %v160 = vpack.c.b16 %v145, %v144
    %v161 = vpack.c.b16 %v147, %v146
    %v162 = vpack.c.b16 %v149, %v148
    %v163 = vpack.c.b16 %v151, %v150
    %v164 = vpack.c.b16 %v153, %v152
    %v165 = vpack.c.b16 %v155, %v154
    %v166 = vpack.c.b16 %v157, %v156
    %v167 = vpack.c.b16 %v159, %v158
    %176 = vmatprep.subr.bf16.mxu0 0
    %177 = vmatpush1.bf16.msra.mxu0 %v167
    %178 = vmatprep.subr.bf16.mxu0 0
    %179 = vmatpush1.bf16.msra.mxu0 %v166
    %180 = vmatprep.subr.bf16.mxu0 0
    %181 = vmatpush1.bf16.msra.mxu0 %v165
    %182 = vmatprep.subr.bf16.mxu0 0
    %183 = vmatpush1.bf16.msra.mxu0 %v164
    %184 = vmatprep.subr.bf16.mxu0 0
    %185 = vmatpush1.bf16.msra.mxu0 %v163
    %186 = vmatprep.subr.bf16.mxu0 0
    %187 = vmatpush1.bf16.msra.mxu0 %v162
    %188 = vmatprep.subr.bf16.mxu0 0
    %189 = vmatpush1.bf16.msra.mxu0 %v161
    %190 = vmatprep.subr.bf16.mxu0 0
    %191 = vmatpush1.bf16.msra.mxu0 %v160
    %192 = vmatprep.subr.bf16.mxu0 0
    %193 = vmatpush2.bf16.msra.mxu0 0
    %194 = vmatprep.subr.bf16.mxu0 0
    %195 = vmatpush2.bf16.msra.mxu0 0
    %196 = vmatprep.subr.bf16.mxu0 0
    %197 = vmatpush2.bf16.msra.mxu0 0
    %198 = vmatprep.subr.bf16.mxu0 0
    %199 = vmatpush2.bf16.msra.mxu0 0
    %200 = vmatprep.subr.bf16.mxu0 0
    %201 = vmatpush2.bf16.msra.mxu0 0
    %202 = vmatprep.subr.bf16.mxu0 0
    %203 = vmatpush2.bf16.msra.mxu0 0
    %204 = vmatprep.subr.bf16.mxu0 0
    %205 = vmatpush2.bf16.msra.mxu0 0
    %206 = vmatprep.subr.bf16.mxu0 0
    %207 = vmatpush2.bf16.msra.mxu0 0
    %208 = vmatprep.mubr.bf16.mxu0 0
    %209 = vmatmul.mubr.bf16.gmra.mxu0 %v112
    %v210 = vpop.f32.mrf.mxu0
    %v211 = vadd.f32 %v78, %v210
    %v212 = vpop.f32.mrf.mxu0
    %v213 = vpop.f32.mrf.mxu0
    %v214 = vadd.f32 %v78, %v213
    %v215 = vpop.f32.mrf.mxu0
    %216 = vmatprep.mubr.bf16.mxu0 0
    %217 = vmatmul.mubr.bf16.gmra.mxu0 %v113
    %v218 = vpop.f32.mrf.mxu0
    %v219 = vadd.f32 %v78, %v218
    %v220 = vpop.f32.mrf.mxu0
    %v221 = vpop.f32.mrf.mxu0
    %v222 = vadd.f32 %v78, %v221
    %v223 = vpop.f32.mrf.mxu0
    %224 = vmatprep.mubr.bf16.mxu0 0
    %225 = vmatmul.mubr.bf16.gmra.mxu0 %v114
    %v226 = vpop.f32.mrf.mxu0
    %v227 = vadd.f32 %v78, %v226
    %v228 = vpop.f32.mrf.mxu0
    %v229 = vpop.f32.mrf.mxu0
    %v230 = vadd.f32 %v78, %v229
    %v231 = vpop.f32.mrf.mxu0
    %232 = vmatprep.mubr.bf16.mxu0 0
    %233 = vmatmul.mubr.bf16.gmra.mxu0 %v115
    %v234 = vpop.f32.mrf.mxu0
    %v235 = vadd.f32 %v78, %v234
    %v236 = vpop.f32.mrf.mxu0
    %v237 = vpop.f32.mrf.mxu0
    %v238 = vadd.f32 %v78, %v237
    %v239 = vpop.f32.mrf.mxu0
    %240 = vmatprep.mubr.bf16.mxu0 0
    %241 = vmatmul.mubr.bf16.gmra.mxu0 %v116
    %v242 = vpop.f32.mrf.mxu0
    %v243 = vadd.f32 %v78, %v242
    %v244 = vpop.f32.mrf.mxu0
    %v245 = vpop.f32.mrf.mxu0
    %v246 = vadd.f32 %v78, %v245
    %v247 = vpop.f32.mrf.mxu0
    %248 = vmatprep.mubr.bf16.mxu0 0
    %249 = vmatmul.mubr.bf16.gmra.mxu0 %v117
    %v250 = vpop.f32.mrf.mxu0
    %v251 = vadd.f32 %v78, %v250
    %v252 = vpop.f32.mrf.mxu0
    %v253 = vpop.f32.mrf.mxu0
    %v254 = vadd.f32 %v78, %v253
    %v255 = vpop.f32.mrf.mxu0
    %256 = vmatprep.mubr.bf16.mxu0 0
    %257 = vmatmul.mubr.bf16.gmra.mxu0 %v118
    %v258 = vpop.f32.mrf.mxu0
    %v259 = vadd.f32 %v78, %v258
    %v260 = vpop.f32.mrf.mxu0
    %v261 = vpop.f32.mrf.mxu0
    %v262 = vadd.f32 %v78, %v261
    %v263 = vpop.f32.mrf.mxu0
    %264 = vmatprep.mubr.bf16.mxu0 0
    %265 = vmatmul.mubr.bf16.gmra.mxu0 %v119
    %v266 = vpop.f32.mrf.mxu0
    %v267 = vadd.f32 %v78, %v266
    %v268 = vpop.f32.mrf.mxu0
    %v269 = vpop.f32.mrf.mxu0
    %v270 = vadd.f32 %v78, %v269
    %v271 = vpop.f32.mrf.mxu0
    %272 = vdwg.mxu0
    %vm273 = vcmp.ge.f32.partialorder %v211, 0.0
    %vm274 = vcmp.ge.f32.partialorder %v214, 0.0
    %vm275 = vcmp.ge.f32.partialorder %v219, 0.0
    %vm276 = vcmp.ge.f32.partialorder %v222, 0.0
    %vm277 = vcmp.ge.f32.partialorder %v227, 0.0
    %vm278 = vcmp.ge.f32.partialorder %v230, 0.0
    %vm279 = vcmp.ge.f32.partialorder %v235, 0.0
    %vm280 = vcmp.ge.f32.partialorder %v238, 0.0
    %vm281 = vcmp.ge.f32.partialorder %v243, 0.0
    %vm282 = vcmp.ge.f32.partialorder %v246, 0.0
    %vm283 = vcmp.ge.f32.partialorder %v251, 0.0
    %vm284 = vcmp.ge.f32.partialorder %v254, 0.0
    %vm285 = vcmp.ge.f32.partialorder %v259, 0.0
    %vm286 = vcmp.ge.f32.partialorder %v262, 0.0
    %vm287 = vcmp.ge.f32.partialorder %v267, 0.0
    %vm288 = vcmp.ge.f32.partialorder %v270, 0.0
    %v289 = vmul.f32 %v211, 0.2
    %v290 = vmul.f32 %v214, 0.2
    %v291 = vmul.f32 %v219, 0.2
    %v292 = vmul.f32 %v222, 0.2
    %v293 = vmul.f32 %v227, 0.2
    %v294 = vmul.f32 %v230, 0.2
    %v295 = vmul.f32 %v235, 0.2
    %v296 = vmul.f32 %v238, 0.2
    %v297 = vmul.f32 %v243, 0.2
    %v298 = vmul.f32 %v246, 0.2
    %v299 = vmul.f32 %v251, 0.2
    %v300 = vmul.f32 %v254, 0.2
    %v301 = vmul.f32 %v259, 0.2
    %v302 = vmul.f32 %v262, 0.2
    %v303 = vmul.f32 %v267, 0.2
    %v304 = vmul.f32 %v270, 0.2
    %v305 = vsel %vm273, %v211, %v289
    %v306 = vsel %vm274, %v214, %v290
    %v307 = vsel %vm275, %v219, %v291
    %v308 = vsel %vm276, %v222, %v292
    %v309 = vsel %vm277, %v227, %v293
    %v310 = vsel %vm278, %v230, %v294
    %v311 = vsel %vm279, %v235, %v295
    %v312 = vsel %vm280, %v238, %v296
    %v313 = vsel %vm281, %v243, %v297
    %v314 = vsel %vm282, %v246, %v298
    %v315 = vsel %vm283, %v251, %v299
    %v316 = vsel %vm284, %v254, %v300
    %v317 = vsel %vm285, %v259, %v301
    %v318 = vsel %vm286, %v262, %v302
    %v319 = vsel %vm287, %v267, %v303
    %v320 = vsel %vm288, %v270, %v304
    %v321 = vpack.c.bf16 %v306, %v305
    %v322 = vpack.c.bf16 %v308, %v307
    %v323 = vpack.c.bf16 %v310, %v309
    %v324 = vpack.c.bf16 %v312, %v311
    %v325 = vpack.c.bf16 %v314, %v313
    %v326 = vpack.c.bf16 %v316, %v315
    %v327 = vpack.c.bf16 %v318, %v317
    %v328 = vpack.c.bf16 %v320, %v319
    %v337 = vunpack.c.l.b16 %v321
    %v338 = vunpack.c.h.b16 %v321
    %v339 = vunpack.c.l.b16 %v322
    %v340 = vunpack.c.h.b16 %v322
    %v341 = vunpack.c.l.b16 %v323
    %v342 = vunpack.c.h.b16 %v323
    %v343 = vunpack.c.l.b16 %v324
    %v344 = vunpack.c.h.b16 %v324
    %v345 = vunpack.c.l.b16 %v325
    %v346 = vunpack.c.h.b16 %v325
    %v347 = vunpack.c.l.b16 %v326
    %v348 = vunpack.c.h.b16 %v326
    %v349 = vunpack.c.l.b16 %v327
    %v350 = vunpack.c.h.b16 %v327
    %v351 = vunpack.c.l.b16 %v328
    %v352 = vunpack.c.h.b16 %v328
    %v353 = vpack.c.b16 %v337, %v337
    %v354 = vpack.c.b16 %v338, %v338
    %v355 = vpack.c.b16 %v339, %v339
    %v356 = vpack.c.b16 %v340, %v340
    %v357 = vpack.c.b16 %v341, %v341
    %v358 = vpack.c.b16 %v342, %v342
    %v359 = vpack.c.b16 %v343, %v343
    %v360 = vpack.c.b16 %v344, %v344
    %v361 = vpack.c.b16 %v345, %v345
    %v362 = vpack.c.b16 %v346, %v346
    %v363 = vpack.c.b16 %v347, %v347
    %v364 = vpack.c.b16 %v348, %v348
    %v365 = vpack.c.b16 %v349, %v349
    %v366 = vpack.c.b16 %v350, %v350
    %v367 = vpack.c.b16 %v351, %v351
    %v368 = vpack.c.b16 %v352, %v352
    %385 = vst [vmem:[%s3] sm:$0xf] %v353
    %386 = vst [vmem:[%s3 + $0x4] sm:$0xf] %v354
    %387 = vst [vmem:[%s3 + $0x8] sm:$0xf] %v355
    %388 = vst [vmem:[%s3 + $0xc] sm:$0xf] %v356
    %389 = vst [vmem:[%s3 + $0x10] sm:$0xf] %v357
    %390 = vst [vmem:[%s3 + $0x14] sm:$0xf] %v358
    %391 = vst [vmem:[%s3 + $0x18] sm:$0xf] %v359
    %392 = vst [vmem:[%s3 + $0x1c] sm:$0xf] %v360
    %393 = vst [vmem:[%s3 + $0x20] sm:$0xf] %v361
    %394 = vst [vmem:[%s3 + $0x24] sm:$0xf] %v362
    %395 = vst [vmem:[%s3 + $0x28] sm:$0xf] %v363
    %396 = vst [vmem:[%s3 + $0x2c] sm:$0xf] %v364
    %397 = vst [vmem:[%s3 + $0x30] sm:$0xf] %v365
    %398 = vst [vmem:[%s3 + $0x34] sm:$0xf] %v366
    %399 = vst [vmem:[%s3 + $0x38] sm:$0xf] %v367
    %400 = vst [vmem:[%s3 + $0x3c] sm:$0xf] %v368
    // Predicated region
    $region22: #{infogan_discriminator_forward.2} parent=1 // pred_check
      _
    $region23: #{infogan_discriminator_forward.2} parent=1 // pred_check_branch
      %402 = sbr.rel (0) target = $region25
    $region24: #{infogan_discriminator_forward.2} parent=1 // pred_region
      _
    $region25: #{infogan_discriminator_forward.2} parent=1 // pred_fallthru
      _
    // Predicated region
    $region26: #{infogan_discriminator_forward.2} parent=1 // pred_check
      _
    $region27: #{infogan_discriminator_forward.2} parent=1 // pred_check_branch
      %404 = sbr.rel (0) target = $region29
    $region28: #{infogan_discriminator_forward.2} parent=1 // pred_region
      _
    $region29: #{infogan_discriminator_forward.2} parent=1 // pred_fallthru
      _
    %405 = vsyncpa [#allocation3], 1
    %406 = vsyncpa [#allocation5], 1

// kernel: infogan_discriminator_forward.3
$region0: #{infogan_discriminator_forward.3}
  #allocation0 [shape = 'u32[]', space=smem, size = 0x4, offset = 0x4, fixed_abs, tag = 'smem constant byte address 0x4 - core index']
  #allocation1 [shape = 'u32[144,128]{1,0:T(1,128)}', space=vmem, size = 0x12000, scoped, tag = 'internal scratch']
  %s0 = inlined_call_operand.vmem [shape: bf16[128,1024], index: 0, kind: input, shape index: {}]
  %s1 = inlined_call_operand.vmem [shape: f32[128,1], index: 1, kind: input, shape index: {}]
  %s2 = inlined_call_operand.hbm [shape: bf16[1024,128], index: 2, kind: input, shape index: {}]
  %s3 = inlined_call_operand.hbm [shape: f32[1,128], index: 3, kind: input, shape index: {}]
  %s4 = inlined_call_operand.hbm [shape: f32[1,128], index: 4, kind: input, shape index: {}]
  %s5 = inlined_call_operand.hbm [shape: f32[1,128], index: 5, kind: input, shape index: {}]
  %s6 = inlined_call_operand.hbm [shape: bf16[2048,1024], index: 6, kind: input, shape index: {}]
  %s7 = inlined_call_operand.hbm [shape: f32[1,1024], index: 7, kind: input, shape index: {}]
  %s8 = inlined_call_operand.hbm [shape: f32[1,1024], index: 8, kind: input, shape index: {}]
  %s9 = inlined_call_operand.hbm [shape: f32[1,1024], index: 9, kind: input, shape index: {}]
  %s10 = inlined_call_operand.hbm [shape: bf16[1024,128], index: 10, kind: input, shape index: {}]
  %s11 = inlined_call_operand.hbm [shape: f32[1,128], index: 11, kind: input, shape index: {}]
  %s12 = inlined_call_operand.vmem [shape: f32[8,128], index: 12, kind: output, shape index: {}]
  %s13 = sld [smem:[#allocation0]]
  $region98: #{infogan_discriminator_forward.3} parent=0
    _
  %s15 = ssub.s32 1, %s13
  %s16 = scalar_select 0, %s15, %s13
  $region1: #{infogan_discriminator_forward.3} parent=0
    #allocation2 [shape = 'u8[262144]{0}', space=vmem, size = 0x40000, scoped, tag = 'input window, operand 2, single buffered']
    #allocation3 [shape = 's32[1]{0}', space=sflag, size = 0x4, scoped, tag = 'scoped memory for infogan_discriminator_forward.3']
    #allocation4 [shape = 'u8[512]{0}', space=vmem, size = 0x400, scoped, tag = 'input window, operand 3, single buffered']
    #allocation5 [shape = 's32[1]{0}', space=sflag, size = 0x4, scoped, tag = 'scoped memory for infogan_discriminator_forward.3']
    #allocation6 [shape = 'u8[512]{0}', space=vmem, size = 0x400, scoped, tag = 'input window, operand 4, single buffered']
    #allocation7 [shape = 'u8[512]{0}', space=vmem, size = 0x400, scoped, tag = 'input window, operand 5, single buffered']
    #allocation8 [shape = 's32[1]{0}', space=sflag, size = 0x4, scoped, tag = 'scoped memory for infogan_discriminator_forward.3']
    #allocation9 [shape = 'u8[4194304]{0}', space=vmem, size = 0x400000, scoped, tag = 'input window, operand 6, single buffered']
    #allocation10 [shape = 'u8[4096]{0}', space=vmem, size = 0x1000, scoped, tag = 'input window, operand 7, single buffered']
    #allocation11 [shape = 's32[1]{0}', space=sflag, size = 0x4, scoped, tag = 'scoped memory for infogan_discriminator_forward.3']
    #allocation12 [shape = 'u8[4096]{0}', space=vmem, size = 0x1000, scoped, tag = 'input window, operand 8, single buffered']
    #allocation13 [shape = 'u8[4096]{0}', space=vmem, size = 0x1000, scoped, tag = 'input window, operand 9, single buffered']
    #allocation14 [shape = 's32[1]{0}', space=sflag, size = 0x4, scoped, tag = 'scoped memory for infogan_discriminator_forward.3']
    #allocation15 [shape = 'u8[262144]{0}', space=vmem, size = 0x40000, scoped, tag = 'input window, operand 10, single buffered']
    #allocation16 [shape = 'u8[512]{0}', space=vmem, size = 0x400, scoped, tag = 'input window, operand 11, single buffered']
    #allocation17 [shape = 's32[1]{0}', space=sflag, size = 0x4, scoped, tag = 'scoped memory for infogan_discriminator_forward.3']
    %17 = vsyncpa [#allocation3], 0
    %18 = vsyncpa [#allocation5], 0
    %19 = vsyncpa [#allocation8], 0
    %20 = vsyncpa [#allocation11], 0
    %21 = vsyncpa [#allocation14], 0
    %22 = vsyncpa [#allocation17], 0
    // Predicated region
    $region2: #{infogan_discriminator_forward.3} parent=1 // pred_check
      _
    $region3: #{infogan_discriminator_forward.3} parent=1 // pred_check_branch
      %24 = sbr.rel (0) target = $region5
    $region4: #{infogan_discriminator_forward.3} parent=1 // pred_region
      _
    $region5: #{infogan_discriminator_forward.3} parent=1 // pred_fallthru
      _
    // Predicated region
    $region6: #{infogan_discriminator_forward.3} parent=1 // pred_check
      _
    $region7: #{infogan_discriminator_forward.3} parent=1 // pred_check_branch
      %26 = sbr.rel (0) target = $region9
    $region8: #{infogan_discriminator_forward.3} parent=1 // pred_region
      _
    $region9: #{infogan_discriminator_forward.3} parent=1 // pred_fallthru
      _
    // Predicated region
    $region10: #{infogan_discriminator_forward.3} parent=1 // pred_check
      _
    $region11: #{infogan_discriminator_forward.3} parent=1 // pred_check_branch
      %28 = sbr.rel (0) target = $region13
    $region12: #{infogan_discriminator_forward.3} parent=1 // pred_region
      %s30 = ssub.s32 8192, 8192
      %31 = vsyncadd [#allocation3], %s30
      %s32 = sshll.u32 [#allocation2], 4
      %s33 = int_to_ptr.vmem [resolvable:$true] %s32
      %38 = dma.hbm_to_vmem [thread:$0]  %s2, 8192, %s33, [#allocation3], 64, 64, 4
    $region13: #{infogan_discriminator_forward.3} parent=1 // pred_fallthru
      _
    // Predicated region
    $region14: #{infogan_discriminator_forward.3} parent=1 // pred_check
      _
    $region15: #{infogan_discriminator_forward.3} parent=1 // pred_check_branch
      %40 = sbr.rel (0) target = $region17
    $region16: #{infogan_discriminator_forward.3} parent=1 // pred_region
      %s42 = ssub.s32 16, 16
      %43 = vsyncadd [#allocation5], %s42
      %s45 = sshll.u32 [#allocation4], 4
      %s46 = int_to_ptr.vmem [resolvable:$true] %s45
      %48 = dma.hbm_to_vmem [thread:$0]  %s3, 16, %s46, [#allocation5]
    $region17: #{infogan_discriminator_forward.3} parent=1 // pred_fallthru
      _
    // Predicated region
    $region18: #{infogan_discriminator_forward.3} parent=1 // pred_check
      _
    $region19: #{infogan_discriminator_forward.3} parent=1 // pred_check_branch
      %50 = sbr.rel (0) target = $region21
    $region20: #{infogan_discriminator_forward.3} parent=1 // pred_region
      %s52 = ssub.s32 16, 16
      %53 = vsyncadd [#allocation5], %s52
      %s55 = sshll.u32 [#allocation6], 4
      %s56 = int_to_ptr.vmem [resolvable:$true] %s55
      %58 = dma.hbm_to_vmem [thread:$0]  %s4, 16, %s56, [#allocation5]
    $region21: #{infogan_discriminator_forward.3} parent=1 // pred_fallthru
      _
    // Predicated region
    $region22: #{infogan_discriminator_forward.3} parent=1 // pred_check
      _
    $region23: #{infogan_discriminator_forward.3} parent=1 // pred_check_branch
      %60 = sbr.rel (0) target = $region25
    $region24: #{infogan_discriminator_forward.3} parent=1 // pred_region
      %s62 = ssub.s32 16, 16
      %63 = vsyncadd [#allocation8], %s62
      %s65 = sshll.u32 [#allocation7], 4
      %s66 = int_to_ptr.vmem [resolvable:$true] %s65
      %68 = dma.hbm_to_vmem [thread:$0]  %s5, 16, %s66, [#allocation8]
    $region25: #{infogan_discriminator_forward.3} parent=1 // pred_fallthru
      _
    // Predicated region
    $region26: #{infogan_discriminator_forward.3} parent=1 // pred_check
      _
    $region27: #{infogan_discriminator_forward.3} parent=1 // pred_check_branch
      %70 = sbr.rel (0) target = $region29
    $region28: #{infogan_discriminator_forward.3} parent=1 // pred_region
      %s72 = ssub.s32 131072, 131072
      %73 = vsyncadd [#allocation8], %s72
      %s74 = sshll.u32 [#allocation9], 4
      %s75 = int_to_ptr.vmem [resolvable:$true] %s74
      %80 = dma.hbm_to_vmem [thread:$0]  %s6, 131072, %s75, [#allocation8], 512, 512, 32
    $region29: #{infogan_discriminator_forward.3} parent=1 // pred_fallthru
      _
    // Predicated region
    $region30: #{infogan_discriminator_forward.3} parent=1 // pred_check
      _
    $region31: #{infogan_discriminator_forward.3} parent=1 // pred_check_branch
      %82 = sbr.rel (0) target = $region33
    $region32: #{infogan_discriminator_forward.3} parent=1 // pred_region
      %s84 = ssub.s32 128, 128
      %85 = vsyncadd [#allocation11], %s84
      %s87 = sshll.u32 [#allocation10], 4
      %s88 = int_to_ptr.vmem [resolvable:$true] %s87
      %90 = dma.hbm_to_vmem [thread:$0]  %s7, 128, %s88, [#allocation11]
    $region33: #{infogan_discriminator_forward.3} parent=1 // pred_fallthru
      _
    // Predicated region
    $region34: #{infogan_discriminator_forward.3} parent=1 // pred_check
      _
    $region35: #{infogan_discriminator_forward.3} parent=1 // pred_check_branch
      %92 = sbr.rel (0) target = $region37
    $region36: #{infogan_discriminator_forward.3} parent=1 // pred_region
      %s94 = ssub.s32 128, 128
      %95 = vsyncadd [#allocation11], %s94
      %s97 = sshll.u32 [#allocation12], 4
      %s98 = int_to_ptr.vmem [resolvable:$true] %s97
      %100 = dma.hbm_to_vmem [thread:$0]  %s8, 128, %s98, [#allocation11]
    $region37: #{infogan_discriminator_forward.3} parent=1 // pred_fallthru
      _
    // Predicated region
    $region38: #{infogan_discriminator_forward.3} parent=1 // pred_check
      _
    $region39: #{infogan_discriminator_forward.3} parent=1 // pred_check_branch
      %102 = sbr.rel (0) target = $region41
    $region40: #{infogan_discriminator_forward.3} parent=1 // pred_region
      %s104 = ssub.s32 128, 128
      %105 = vsyncadd [#allocation14], %s104
      %s107 = sshll.u32 [#allocation13], 4
      %s108 = int_to_ptr.vmem [resolvable:$true] %s107
      %110 = dma.hbm_to_vmem [thread:$0]  %s9, 128, %s108, [#allocation14]
    $region41: #{infogan_discriminator_forward.3} parent=1 // pred_fallthru
      _
    // Predicated region
    $region42: #{infogan_discriminator_forward.3} parent=1 // pred_check
      _
    $region43: #{infogan_discriminator_forward.3} parent=1 // pred_check_branch
      %112 = sbr.rel (0) target = $region45
    $region44: #{infogan_discriminator_forward.3} parent=1 // pred_region
      %s114 = ssub.s32 8192, 8192
      %115 = vsyncadd [#allocation14], %s114
      %s116 = sshll.u32 [#allocation15], 4
      %s117 = int_to_ptr.vmem [resolvable:$true] %s116
      %122 = dma.hbm_to_vmem [thread:$0]  %s10, 8192, %s117, [#allocation14], 64, 64, 4
    $region45: #{infogan_discriminator_forward.3} parent=1 // pred_fallthru
      _
    // Predicated region
    $region46: #{infogan_discriminator_forward.3} parent=1 // pred_check
      _
    $region47: #{infogan_discriminator_forward.3} parent=1 // pred_check_branch
      %124 = sbr.rel (0) target = $region49
    $region48: #{infogan_discriminator_forward.3} parent=1 // pred_region
      %s126 = ssub.s32 16, 16
      %127 = vsyncadd [#allocation17], %s126
      %s129 = sshll.u32 [#allocation16], 4
      %s130 = int_to_ptr.vmem [resolvable:$true] %s129
      %132 = dma.hbm_to_vmem [thread:$0]  %s11, 16, %s130, [#allocation17]
    $region49: #{infogan_discriminator_forward.3} parent=1 // pred_fallthru
      _
    // Predicated region
    $region50: #{infogan_discriminator_forward.3} parent=1 // pred_check
      _
    $region51: #{infogan_discriminator_forward.3} parent=1 // pred_check_branch
      %134 = sbr.rel (0) target = $region53
    $region52: #{infogan_discriminator_forward.3} parent=1 // pred_region
      %135 = dma.done [#allocation3], 8192
    $region53: #{infogan_discriminator_forward.3} parent=1 // pred_fallthru
      _
    // Predicated region
    $region54: #{infogan_discriminator_forward.3} parent=1 // pred_check
      _
    $region55: #{infogan_discriminator_forward.3} parent=1 // pred_check_branch
      %137 = sbr.rel (0) target = $region57
    $region56: #{infogan_discriminator_forward.3} parent=1 // pred_region
      %138 = dma.done [#allocation5], 16
    $region57: #{infogan_discriminator_forward.3} parent=1 // pred_fallthru
      _
    // Predicated region
    $region58: #{infogan_discriminator_forward.3} parent=1 // pred_check
      _
    $region59: #{infogan_discriminator_forward.3} parent=1 // pred_check_branch
      %140 = sbr.rel (0) target = $region61
    $region60: #{infogan_discriminator_forward.3} parent=1 // pred_region
      %141 = dma.done [#allocation5], 16
    $region61: #{infogan_discriminator_forward.3} parent=1 // pred_fallthru
      _
    // Predicated region
    $region62: #{infogan_discriminator_forward.3} parent=1 // pred_check
      _
    $region63: #{infogan_discriminator_forward.3} parent=1 // pred_check_branch
      %143 = sbr.rel (0) target = $region65
    $region64: #{infogan_discriminator_forward.3} parent=1 // pred_region
      %144 = dma.done [#allocation8], 16
    $region65: #{infogan_discriminator_forward.3} parent=1 // pred_fallthru
      _
    // Predicated region
    $region66: #{infogan_discriminator_forward.3} parent=1 // pred_check
      _
    $region67: #{infogan_discriminator_forward.3} parent=1 // pred_check_branch
      %146 = sbr.rel (0) target = $region69
    $region68: #{infogan_discriminator_forward.3} parent=1 // pred_region
      %147 = dma.done [#allocation8], 131072
    $region69: #{infogan_discriminator_forward.3} parent=1 // pred_fallthru
      _
    // Predicated region
    $region70: #{infogan_discriminator_forward.3} parent=1 // pred_check
      _
    $region71: #{infogan_discriminator_forward.3} parent=1 // pred_check_branch
      %149 = sbr.rel (0) target = $region73
    $region72: #{infogan_discriminator_forward.3} parent=1 // pred_region
      %150 = dma.done [#allocation11], 128
    $region73: #{infogan_discriminator_forward.3} parent=1 // pred_fallthru
      _
    // Predicated region
    $region74: #{infogan_discriminator_forward.3} parent=1 // pred_check
      _
    $region75: #{infogan_discriminator_forward.3} parent=1 // pred_check_branch
      %152 = sbr.rel (0) target = $region77
    $region76: #{infogan_discriminator_forward.3} parent=1 // pred_region
      %153 = dma.done [#allocation11], 128
    $region77: #{infogan_discriminator_forward.3} parent=1 // pred_fallthru
      _
    // Predicated region
    $region78: #{infogan_discriminator_forward.3} parent=1 // pred_check
      _
    $region79: #{infogan_discriminator_forward.3} parent=1 // pred_check_branch
      %155 = sbr.rel (0) target = $region81
    $region80: #{infogan_discriminator_forward.3} parent=1 // pred_region
      %156 = dma.done [#allocation14], 128
    $region81: #{infogan_discriminator_forward.3} parent=1 // pred_fallthru
      _
    // Predicated region
    $region82: #{infogan_discriminator_forward.3} parent=1 // pred_check
      _
    $region83: #{infogan_discriminator_forward.3} parent=1 // pred_check_branch
      %158 = sbr.rel (0) target = $region85
    $region84: #{infogan_discriminator_forward.3} parent=1 // pred_region
      %159 = dma.done [#allocation14], 8192
    $region85: #{infogan_discriminator_forward.3} parent=1 // pred_fallthru
      _
    // Predicated region
    $region86: #{infogan_discriminator_forward.3} parent=1 // pred_check
      _
    $region87: #{infogan_discriminator_forward.3} parent=1 // pred_check_branch
      %161 = sbr.rel (0) target = $region89
    $region88: #{infogan_discriminator_forward.3} parent=1 // pred_region
      %162 = dma.done [#allocation17], 16
    $region89: #{infogan_discriminator_forward.3} parent=1 // pred_fallthru
      _
    %v164 = vld [vmem:[%s1] sm:$0xff]
    %v165 = vld [vmem:[%s1 + $0x8] sm:$0xff]
    %v166 = vld [vmem:[%s1 + $0x10] sm:$0xff]
    %v167 = vld [vmem:[%s1 + $0x18] sm:$0xff]
    %v168 = vld [vmem:[%s1 + $0x20] sm:$0xff]
    %v169 = vld [vmem:[%s1 + $0x28] sm:$0xff]
    %v170 = vld [vmem:[%s1 + $0x30] sm:$0xff]
    %v171 = vld [vmem:[%s1 + $0x38] sm:$0xff]
    %v172 = vld [vmem:[%s1 + $0x40] sm:$0xff]
    %v173 = vld [vmem:[%s1 + $0x48] sm:$0xff]
    %v174 = vld [vmem:[%s1 + $0x50] sm:$0xff]
    %v175 = vld [vmem:[%s1 + $0x58] sm:$0xff]
    %v176 = vld [vmem:[%s1 + $0x60] sm:$0xff]
    %v177 = vld [vmem:[%s1 + $0x68] sm:$0xff]
    %v178 = vld [vmem:[%s1 + $0x70] sm:$0xff]
    %v179 = vld [vmem:[%s1 + $0x78] sm:$0xff]
    %v180 = vld [vmem:[%s0] sm:$0xff]
    %v181 = vld [vmem:[%s0 + $0x8] sm:$0xff]
    %v182 = vld [vmem:[%s0 + $0x10] sm:$0xff]
    %v183 = vld [vmem:[%s0 + $0x18] sm:$0xff]
    %v184 = vld [vmem:[%s0 + $0x20] sm:$0xff]
    %v185 = vld [vmem:[%s0 + $0x28] sm:$0xff]
    %v186 = vld [vmem:[%s0 + $0x30] sm:$0xff]
    %v187 = vld [vmem:[%s0 + $0x38] sm:$0xff]
    %v188 = vld [vmem:[%s0 + $0x40] sm:$0xff]
    %v189 = vld [vmem:[%s0 + $0x48] sm:$0xff]
    %v190 = vld [vmem:[%s0 + $0x50] sm:$0xff]
    %v191 = vld [vmem:[%s0 + $0x58] sm:$0xff]
    %v192 = vld [vmem:[%s0 + $0x60] sm:$0xff]
    %v193 = vld [vmem:[%s0 + $0x68] sm:$0xff]
    %v194 = vld [vmem:[%s0 + $0x70] sm:$0xff]
    %v195 = vld [vmem:[%s0 + $0x78] sm:$0xff]
    %v196 = vld [vmem:[%s0 + $0x80] sm:$0xff]
    %v197 = vld [vmem:[%s0 + $0x88] sm:$0xff]
    %v198 = vld [vmem:[%s0 + $0x90] sm:$0xff]
    %v199 = vld [vmem:[%s0 + $0x98] sm:$0xff]
    %v200 = vld [vmem:[%s0 + $0xa0] sm:$0xff]
    %v201 = vld [vmem:[%s0 + $0xa8] sm:$0xff]
    %v202 = vld [vmem:[%s0 + $0xb0] sm:$0xff]
    %v203 = vld [vmem:[%s0 + $0xb8] sm:$0xff]
    %v204 = vld [vmem:[%s0 + $0xc0] sm:$0xff]
    %v205 = vld [vmem:[%s0 + $0xc8] sm:$0xff]
    %v206 = vld [vmem:[%s0 + $0xd0] sm:$0xff]
    %v207 = vld [vmem:[%s0 + $0xd8] sm:$0xff]
    %v208 = vld [vmem:[%s0 + $0xe0] sm:$0xff]
    %v209 = vld [vmem:[%s0 + $0xe8] sm:$0xff]
    %v210 = vld [vmem:[%s0 + $0xf0] sm:$0xff]
    %v211 = vld [vmem:[%s0 + $0xf8] sm:$0xff]
    %v212 = vld [vmem:[%s0 + $0x100] sm:$0xff]
    %v213 = vld [vmem:[%s0 + $0x108] sm:$0xff]
    %v214 = vld [vmem:[%s0 + $0x110] sm:$0xff]
    %v215 = vld [vmem:[%s0 + $0x118] sm:$0xff]
    %v216 = vld [vmem:[%s0 + $0x120] sm:$0xff]
    %v217 = vld [vmem:[%s0 + $0x128] sm:$0xff]
    %v218 = vld [vmem:[%s0 + $0x130] sm:$0xff]
    %v219 = vld [vmem:[%s0 + $0x138] sm:$0xff]
    %v220 = vld [vmem:[%s0 + $0x140] sm:$0xff]
    %v221 = vld [vmem:[%s0 + $0x148] sm:$0xff]
    %v222 = vld [vmem:[%s0 + $0x150] sm:$0xff]
    %v223 = vld [vmem:[%s0 + $0x158] sm:$0xff]
    %v224 = vld [vmem:[%s0 + $0x160] sm:$0xff]
    %v225 = vld [vmem:[%s0 + $0x168] sm:$0xff]
    %v226 = vld [vmem:[%s0 + $0x170] sm:$0xff]
    %v227 = vld [vmem:[%s0 + $0x178] sm:$0xff]
    %v228 = vld [vmem:[%s0 + $0x180] sm:$0xff]
    %v229 = vld [vmem:[%s0 + $0x188] sm:$0xff]
    %v230 = vld [vmem:[%s0 + $0x190] sm:$0xff]
    %v231 = vld [vmem:[%s0 + $0x198] sm:$0xff]
    %v232 = vld [vmem:[%s0 + $0x1a0] sm:$0xff]
    %v233 = vld [vmem:[%s0 + $0x1a8] sm:$0xff]
    %v234 = vld [vmem:[%s0 + $0x1b0] sm:$0xff]
    %v235 = vld [vmem:[%s0 + $0x1b8] sm:$0xff]
    %v236 = vld [vmem:[%s0 + $0x1c0] sm:$0xff]
    %v237 = vld [vmem:[%s0 + $0x1c8] sm:$0xff]
    %v238 = vld [vmem:[%s0 + $0x1d0] sm:$0xff]
    %v239 = vld [vmem:[%s0 + $0x1d8] sm:$0xff]
    %v240 = vld [vmem:[%s0 + $0x1e0] sm:$0xff]
    %v241 = vld [vmem:[%s0 + $0x1e8] sm:$0xff]
    %v242 = vld [vmem:[%s0 + $0x1f0] sm:$0xff]
    %v243 = vld [vmem:[%s0 + $0x1f8] sm:$0xff]
    %v244 = vld [vmem:[#allocation2] sm:$0xf]
    %v245 = vld [vmem:[#allocation2 + $0x4] sm:$0xf]
    %v246 = vld [vmem:[#allocation2 + $0x8] sm:$0xf]
    %v247 = vld [vmem:[#allocation2 + $0xc] sm:$0xf]
    %v248 = vld [vmem:[#allocation2 + $0x10] sm:$0xf]
    %v249 = vld [vmem:[#allocation2 + $0x14] sm:$0xf]
    %v250 = vld [vmem:[#allocation2 + $0x18] sm:$0xf]
    %v251 = vld [vmem:[#allocation2 + $0x1c] sm:$0xf]
    %v252 = vld [vmem:[#allocation2 + $0x20] sm:$0xf]
    %v253 = vld [vmem:[#allocation2 + $0x24] sm:$0xf]
    %v254 = vld [vmem:[#allocation2 + $0x28] sm:$0xf]
    %v255 = vld [vmem:[#allocation2 + $0x2c] sm:$0xf]
    %v256 = vld [vmem:[#allocation2 + $0x30] sm:$0xf]
    %v257 = vld [vmem:[#allocation2 + $0x34] sm:$0xf]
    %v258 = vld [vmem:[#allocation2 + $0x38] sm:$0xf]
    %v259 = vld [vmem:[#allocation2 + $0x3c] sm:$0xf]
    %v260 = vld [vmem:[#allocation2 + $0x40] sm:$0xf]
    %v261 = vld [vmem:[#allocation2 + $0x44] sm:$0xf]
    %v262 = vld [vmem:[#allocation2 + $0x48] sm:$0xf]
    %v263 = vld [vmem:[#allocation2 + $0x4c] sm:$0xf]
    %v264 = vld [vmem:[#allocation2 + $0x50] sm:$0xf]
    %v265 = vld [vmem:[#allocation2 + $0x54] sm:$0xf]
    %v266 = vld [vmem:[#allocation2 + $0x58] sm:$0xf]
    %v267 = vld [vmem:[#allocation2 + $0x5c] sm:$0xf]
    %v268 = vld [vmem:[#allocation2 + $0x60] sm:$0xf]
    %v269 = vld [vmem:[#allocation2 + $0x64] sm:$0xf]
    %v270 = vld [vmem:[#allocation2 + $0x68] sm:$0xf]
    %v271 = vld [vmem:[#allocation2 + $0x6c] sm:$0xf]
    %v272 = vld [vmem:[#allocation2 + $0x70] sm:$0xf]
    %v273 = vld [vmem:[#allocation2 + $0x74] sm:$0xf]
    %v274 = vld [vmem:[#allocation2 + $0x78] sm:$0xf]
    %v275 = vld [vmem:[#allocation2 + $0x7c] sm:$0xf]
    %v276 = vld [vmem:[#allocation2 + $0x80] sm:$0xf]
    %v277 = vld [vmem:[#allocation2 + $0x84] sm:$0xf]
    %v278 = vld [vmem:[#allocation2 + $0x88] sm:$0xf]
    %v279 = vld [vmem:[#allocation2 + $0x8c] sm:$0xf]
    %v280 = vld [vmem:[#allocation2 + $0x90] sm:$0xf]
    %v281 = vld [vmem:[#allocation2 + $0x94] sm:$0xf]
    %v282 = vld [vmem:[#allocation2 + $0x98] sm:$0xf]
    %v283 = vld [vmem:[#allocation2 + $0x9c] sm:$0xf]
    %v284 = vld [vmem:[#allocation2 + $0xa0] sm:$0xf]
    %v285 = vld [vmem:[#allocation2 + $0xa4] sm:$0xf]
    %v286 = vld [vmem:[#allocation2 + $0xa8] sm:$0xf]
    %v287 = vld [vmem:[#allocation2 + $0xac] sm:$0xf]
    %v288 = vld [vmem:[#allocation2 + $0xb0] sm:$0xf]
    %v289 = vld [vmem:[#allocation2 + $0xb4] sm:$0xf]
    %v290 = vld [vmem:[#allocation2 + $0xb8] sm:$0xf]
    %v291 = vld [vmem:[#allocation2 + $0xbc] sm:$0xf]
    %v292 = vld [vmem:[#allocation2 + $0xc0] sm:$0xf]
    %v293 = vld [vmem:[#allocation2 + $0xc4] sm:$0xf]
    %v294 = vld [vmem:[#allocation2 + $0xc8] sm:$0xf]
    %v295 = vld [vmem:[#allocation2 + $0xcc] sm:$0xf]
    %v296 = vld [vmem:[#allocation2 + $0xd0] sm:$0xf]
    %v297 = vld [vmem:[#allocation2 + $0xd4] sm:$0xf]
    %v298 = vld [vmem:[#allocation2 + $0xd8] sm:$0xf]
    %v299 = vld [vmem:[#allocation2 + $0xdc] sm:$0xf]
    %v300 = vld [vmem:[#allocation2 + $0xe0] sm:$0xf]
    %v301 = vld [vmem:[#allocation2 + $0xe4] sm:$0xf]
    %v302 = vld [vmem:[#allocation2 + $0xe8] sm:$0xf]
    %v303 = vld [vmem:[#allocation2 + $0xec] sm:$0xf]
    %v304 = vld [vmem:[#allocation2 + $0xf0] sm:$0xf]
    %v305 = vld [vmem:[#allocation2 + $0xf4] sm:$0xf]
    %v306 = vld [vmem:[#allocation2 + $0xf8] sm:$0xf]
    %v307 = vld [vmem:[#allocation2 + $0xfc] sm:$0xf]
    %v308 = vld [vmem:[#allocation2 + $0x100] sm:$0xf]
    %v309 = vld [vmem:[#allocation2 + $0x104] sm:$0xf]
    %v310 = vld [vmem:[#allocation2 + $0x108] sm:$0xf]
    %v311 = vld [vmem:[#allocation2 + $0x10c] sm:$0xf]
    %v312 = vld [vmem:[#allocation2 + $0x110] sm:$0xf]
    %v313 = vld [vmem:[#allocation2 + $0x114] sm:$0xf]
    %v314 = vld [vmem:[#allocation2 + $0x118] sm:$0xf]
    %v315 = vld [vmem:[#allocation2 + $0x11c] sm:$0xf]
    %v316 = vld [vmem:[#allocation2 + $0x120] sm:$0xf]
    %v317 = vld [vmem:[#allocation2 + $0x124] sm:$0xf]
    %v318 = vld [vmem:[#allocation2 + $0x128] sm:$0xf]
    %v319 = vld [vmem:[#allocation2 + $0x12c] sm:$0xf]
    %v320 = vld [vmem:[#allocation2 + $0x130] sm:$0xf]
    %v321 = vld [vmem:[#allocation2 + $0x134] sm:$0xf]
    %v322 = vld [vmem:[#allocation2 + $0x138] sm:$0xf]
    %v323 = vld [vmem:[#allocation2 + $0x13c] sm:$0xf]
    %v324 = vld [vmem:[#allocation2 + $0x140] sm:$0xf]
    %v325 = vld [vmem:[#allocation2 + $0x144] sm:$0xf]
    %v326 = vld [vmem:[#allocation2 + $0x148] sm:$0xf]
    %v327 = vld [vmem:[#allocation2 + $0x14c] sm:$0xf]
    %v328 = vld [vmem:[#allocation2 + $0x150] sm:$0xf]
    %v329 = vld [vmem:[#allocation2 + $0x154] sm:$0xf]
    %v330 = vld [vmem:[#allocation2 + $0x158] sm:$0xf]
    %v331 = vld [vmem:[#allocation2 + $0x15c] sm:$0xf]
    %v332 = vld [vmem:[#allocation2 + $0x160] sm:$0xf]
    %v333 = vld [vmem:[#allocation2 + $0x164] sm:$0xf]
    %v334 = vld [vmem:[#allocation2 + $0x168] sm:$0xf]
    %v335 = vld [vmem:[#allocation2 + $0x16c] sm:$0xf]
    %v336 = vld [vmem:[#allocation2 + $0x170] sm:$0xf]
    %v337 = vld [vmem:[#allocation2 + $0x174] sm:$0xf]
    %v338 = vld [vmem:[#allocation2 + $0x178] sm:$0xf]
    %v339 = vld [vmem:[#allocation2 + $0x17c] sm:$0xf]
    %v340 = vld [vmem:[#allocation2 + $0x180] sm:$0xf]
    %v341 = vld [vmem:[#allocation2 + $0x184] sm:$0xf]
    %v342 = vld [vmem:[#allocation2 + $0x188] sm:$0xf]
    %v343 = vld [vmem:[#allocation2 + $0x18c] sm:$0xf]
    %v344 = vld [vmem:[#allocation2 + $0x190] sm:$0xf]
    %v345 = vld [vmem:[#allocation2 + $0x194] sm:$0xf]
    %v346 = vld [vmem:[#allocation2 + $0x198] sm:$0xf]
    %v347 = vld [vmem:[#allocation2 + $0x19c] sm:$0xf]
    %v348 = vld [vmem:[#allocation2 + $0x1a0] sm:$0xf]
    %v349 = vld [vmem:[#allocation2 + $0x1a4] sm:$0xf]
    %v350 = vld [vmem:[#allocation2 + $0x1a8] sm:$0xf]
    %v351 = vld [vmem:[#allocation2 + $0x1ac] sm:$0xf]
    %v352 = vld [vmem:[#allocation2 + $0x1b0] sm:$0xf]
    %v353 = vld [vmem:[#allocation2 + $0x1b4] sm:$0xf]
    %v354 = vld [vmem:[#allocation2 + $0x1b8] sm:$0xf]
    %v355 = vld [vmem:[#allocation2 + $0x1bc] sm:$0xf]
    %v356 = vld [vmem:[#allocation2 + $0x1c0] sm:$0xf]
    %v357 = vld [vmem:[#allocation2 + $0x1c4] sm:$0xf]
    %v358 = vld [vmem:[#allocation2 + $0x1c8] sm:$0xf]
    %v359 = vld [vmem:[#allocation2 + $0x1cc] sm:$0xf]
    %v360 = vld [vmem:[#allocation2 + $0x1d0] sm:$0xf]
    %v361 = vld [vmem:[#allocation2 + $0x1d4] sm:$0xf]
    %v362 = vld [vmem:[#allocation2 + $0x1d8] sm:$0xf]
    %v363 = vld [vmem:[#allocation2 + $0x1dc] sm:$0xf]
    %v364 = vld [vmem:[#allocation2 + $0x1e0] sm:$0xf]
    %v365 = vld [vmem:[#allocation2 + $0x1e4] sm:$0xf]
    %v366 = vld [vmem:[#allocation2 + $0x1e8] sm:$0xf]
    %v367 = vld [vmem:[#allocation2 + $0x1ec] sm:$0xf]
    %v368 = vld [vmem:[#allocation2 + $0x1f0] sm:$0xf]
    %v369 = vld [vmem:[#allocation2 + $0x1f4] sm:$0xf]
    %v370 = vld [vmem:[#allocation2 + $0x1f8] sm:$0xf]
    %v371 = vld [vmem:[#allocation2 + $0x1fc] sm:$0xf]
    %v372 = vld [vmem:[#allocation4] sm:$0x1]
    %v374 = vlaneseq
    %v375 = vshrl.u32 %v374, 7
    %v376 = vsub.s32 0, %v375
    %v377 = vrot.slane %v372, %v376
    %v443 = vunpack.c.l.b16 %v180
    %v444 = vunpack.c.h.b16 %v180
    %v445 = vunpack.c.l.b16 %v181
    %v446 = vunpack.c.h.b16 %v181
    %v447 = vunpack.c.l.b16 %v182
    %v448 = vunpack.c.h.b16 %v182
    %v449 = vunpack.c.l.b16 %v183
    %v450 = vunpack.c.h.b16 %v183
    %v451 = vunpack.c.l.b16 %v184
    %v452 = vunpack.c.h.b16 %v184
    %v453 = vunpack.c.l.b16 %v185
    %v454 = vunpack.c.h.b16 %v185
    %v455 = vunpack.c.l.b16 %v186
    %v456 = vunpack.c.h.b16 %v186
    %v457 = vunpack.c.l.b16 %v187
    %v458 = vunpack.c.h.b16 %v187
    %v459 = vunpack.c.l.b16 %v188
    %v460 = vunpack.c.h.b16 %v188
    %v461 = vunpack.c.l.b16 %v189
    %v462 = vunpack.c.h.b16 %v189
    %v463 = vunpack.c.l.b16 %v190
    %v464 = vunpack.c.h.b16 %v190
    %v465 = vunpack.c.l.b16 %v191
    %v466 = vunpack.c.h.b16 %v191
    %v467 = vunpack.c.l.b16 %v192
    %v468 = vunpack.c.h.b16 %v192
    %v469 = vunpack.c.l.b16 %v193
    %v470 = vunpack.c.h.b16 %v193
    %v471 = vunpack.c.l.b16 %v194
    %v472 = vunpack.c.h.b16 %v194
    %v473 = vunpack.c.l.b16 %v195
    %v474 = vunpack.c.h.b16 %v195
    %v475 = vunpack.c.l.b16 %v196
    %v476 = vunpack.c.h.b16 %v196
    %v477 = vunpack.c.l.b16 %v197
    %v478 = vunpack.c.h.b16 %v197
    %v479 = vunpack.c.l.b16 %v198
    %v480 = vunpack.c.h.b16 %v198
    %v481 = vunpack.c.l.b16 %v199
    %v482 = vunpack.c.h.b16 %v199
    %v483 = vunpack.c.l.b16 %v200
    %v484 = vunpack.c.h.b16 %v200
    %v485 = vunpack.c.l.b16 %v201
    %v486 = vunpack.c.h.b16 %v201
    %v487 = vunpack.c.l.b16 %v202
    %v488 = vunpack.c.h.b16 %v202
    %v489 = vunpack.c.l.b16 %v203
    %v490 = vunpack.c.h.b16 %v203
    %v491 = vunpack.c.l.b16 %v204
    %v492 = vunpack.c.h.b16 %v204
    %v493 = vunpack.c.l.b16 %v205
    %v494 = vunpack.c.h.b16 %v205
    %v495 = vunpack.c.l.b16 %v206
    %v496 = vunpack.c.h.b16 %v206
    %v497 = vunpack.c.l.b16 %v207
    %v498 = vunpack.c.h.b16 %v207
    %v499 = vunpack.c.l.b16 %v208
    %v500 = vunpack.c.h.b16 %v208
    %v501 = vunpack.c.l.b16 %v209
    %v502 = vunpack.c.h.b16 %v209
    %v503 = vunpack.c.l.b16 %v210
    %v504 = vunpack.c.h.b16 %v210
    %v505 = vunpack.c.l.b16 %v211
    %v506 = vunpack.c.h.b16 %v211
    %v507 = vunpack.c.l.b16 %v212
    %v508 = vunpack.c.h.b16 %v212
    %v509 = vunpack.c.l.b16 %v213
    %v510 = vunpack.c.h.b16 %v213
    %v511 = vunpack.c.l.b16 %v214
    %v512 = vunpack.c.h.b16 %v214
    %v513 = vunpack.c.l.b16 %v215
    %v514 = vunpack.c.h.b16 %v215
    %v515 = vunpack.c.l.b16 %v216
    %v516 = vunpack.c.h.b16 %v216
    %v517 = vunpack.c.l.b16 %v217
    %v518 = vunpack.c.h.b16 %v217
    %v519 = vunpack.c.l.b16 %v218
    %v520 = vunpack.c.h.b16 %v218
    %v521 = vunpack.c.l.b16 %v219
    %v522 = vunpack.c.h.b16 %v219
    %v523 = vunpack.c.l.b16 %v220
    %v524 = vunpack.c.h.b16 %v220
    %v525 = vunpack.c.l.b16 %v221
    %v526 = vunpack.c.h.b16 %v221
    %v527 = vunpack.c.l.b16 %v222
    %v528 = vunpack.c.h.b16 %v222
    %v529 = vunpack.c.l.b16 %v223
    %v530 = vunpack.c.h.b16 %v223
    %v531 = vunpack.c.l.b16 %v224
    %v532 = vunpack.c.h.b16 %v224
    %v533 = vunpack.c.l.b16 %v225
    %v534 = vunpack.c.h.b16 %v225
    %v535 = vunpack.c.l.b16 %v226
    %v536 = vunpack.c.h.b16 %v226
    %v537 = vunpack.c.l.b16 %v227
    %v538 = vunpack.c.h.b16 %v227
    %v539 = vunpack.c.l.b16 %v228
    %v540 = vunpack.c.h.b16 %v228
    %v541 = vunpack.c.l.b16 %v229
    %v542 = vunpack.c.h.b16 %v229
    %v543 = vunpack.c.l.b16 %v230
    %v544 = vunpack.c.h.b16 %v230
    %v545 = vunpack.c.l.b16 %v231
    %v546 = vunpack.c.h.b16 %v231
    %v547 = vunpack.c.l.b16 %v232
    %v548 = vunpack.c.h.b16 %v232
    %v549 = vunpack.c.l.b16 %v233
    %v550 = vunpack.c.h.b16 %v233
    %v551 = vunpack.c.l.b16 %v234
    %v552 = vunpack.c.h.b16 %v234
    %v553 = vunpack.c.l.b16 %v235
    %v554 = vunpack.c.h.b16 %v235
    %v555 = vunpack.c.l.b16 %v236
    %v556 = vunpack.c.h.b16 %v236
    %v557 = vunpack.c.l.b16 %v237
    %v558 = vunpack.c.h.b16 %v237
    %v559 = vunpack.c.l.b16 %v238
    %v560 = vunpack.c.h.b16 %v238
    %v561 = vunpack.c.l.b16 %v239
    %v562 = vunpack.c.h.b16 %v239
    %v563 = vunpack.c.l.b16 %v240
    %v564 = vunpack.c.h.b16 %v240
    %v565 = vunpack.c.l.b16 %v241
    %v566 = vunpack.c.h.b16 %v241
    %v567 = vunpack.c.l.b16 %v242
    %v568 = vunpack.c.h.b16 %v242
    %v569 = vunpack.c.l.b16 %v243
    %v570 = vunpack.c.h.b16 %v243
    %v571 = vpack.c.b16 %v451, %v443
    %v572 = vpack.c.b16 %v452, %v444
    %v573 = vpack.c.b16 %v453, %v445
    %v574 = vpack.c.b16 %v454, %v446
    %v575 = vpack.c.b16 %v455, %v447
    %v576 = vpack.c.b16 %v456, %v448
    %v577 = vpack.c.b16 %v457, %v449
    %v578 = vpack.c.b16 %v458, %v450
    %v579 = vpack.c.b16 %v467, %v459
    %v580 = vpack.c.b16 %v468, %v460
    %v581 = vpack.c.b16 %v469, %v461
    %v582 = vpack.c.b16 %v470, %v462
    %v583 = vpack.c.b16 %v471, %v463
    %v584 = vpack.c.b16 %v472, %v464
    %v585 = vpack.c.b16 %v473, %v465
    %v586 = vpack.c.b16 %v474, %v466
    %v587 = vpack.c.b16 %v483, %v475
    %v588 = vpack.c.b16 %v484, %v476
    %v589 = vpack.c.b16 %v485, %v477
    %v590 = vpack.c.b16 %v486, %v478
    %v591 = vpack.c.b16 %v487, %v479
    %v592 = vpack.c.b16 %v488, %v480
    %v593 = vpack.c.b16 %v489, %v481
    %v594 = vpack.c.b16 %v490, %v482
    %v595 = vpack.c.b16 %v499, %v491
    %v596 = vpack.c.b16 %v500, %v492
    %v597 = vpack.c.b16 %v501, %v493
    %v598 = vpack.c.b16 %v502, %v494
    %v599 = vpack.c.b16 %v503, %v495
    %v600 = vpack.c.b16 %v504, %v496
    %v601 = vpack.c.b16 %v505, %v497
    %v602 = vpack.c.b16 %v506, %v498
    %v603 = vpack.c.b16 %v515, %v507
    %v604 = vpack.c.b16 %v516, %v508
    %v605 = vpack.c.b16 %v517, %v509
    %v606 = vpack.c.b16 %v518, %v510
    %v607 = vpack.c.b16 %v519, %v511
    %v608 = vpack.c.b16 %v520, %v512
    %v609 = vpack.c.b16 %v521, %v513
    %v610 = vpack.c.b16 %v522, %v514
    %v611 = vpack.c.b16 %v531, %v523
    %v612 = vpack.c.b16 %v532, %v524
    %v613 = vpack.c.b16 %v533, %v525
    %v614 = vpack.c.b16 %v534, %v526
    %v615 = vpack.c.b16 %v535, %v527
    %v616 = vpack.c.b16 %v536, %v528
    %v617 = vpack.c.b16 %v537, %v529
    %v618 = vpack.c.b16 %v538, %v530
    %v619 = vpack.c.b16 %v547, %v539
    %v620 = vpack.c.b16 %v548, %v540
    %v621 = vpack.c.b16 %v549, %v541
    %v622 = vpack.c.b16 %v550, %v542
    %v623 = vpack.c.b16 %v551, %v543
    %v624 = vpack.c.b16 %v552, %v544
    %v625 = vpack.c.b16 %v553, %v545
    %v626 = vpack.c.b16 %v554, %v546
    %v627 = vpack.c.b16 %v563, %v555
    %v628 = vpack.c.b16 %v564, %v556
    %v629 = vpack.c.b16 %v565, %v557
    %v630 = vpack.c.b16 %v566, %v558
    %v631 = vpack.c.b16 %v567, %v559
    %v632 = vpack.c.b16 %v568, %v560
    %v633 = vpack.c.b16 %v569, %v561
    %v634 = vpack.c.b16 %v570, %v562
    %v827 = vunpack.c.l.b16 %v244
    %v828 = vunpack.c.l.b16 %v245
    %v829 = vunpack.c.l.b16 %v246
    %v830 = vunpack.c.l.b16 %v247
    %v831 = vunpack.c.l.b16 %v248
    %v832 = vunpack.c.l.b16 %v249
    %v833 = vunpack.c.l.b16 %v250
    %v834 = vunpack.c.l.b16 %v251
    %v835 = vunpack.c.l.b16 %v252
    %v836 = vunpack.c.l.b16 %v253
    %v837 = vunpack.c.l.b16 %v254
    %v838 = vunpack.c.l.b16 %v255
    %v839 = vunpack.c.l.b16 %v256
    %v840 = vunpack.c.l.b16 %v257
    %v841 = vunpack.c.l.b16 %v258
    %v842 = vunpack.c.l.b16 %v259
    %v843 = vunpack.c.l.b16 %v260
    %v844 = vunpack.c.l.b16 %v261
    %v845 = vunpack.c.l.b16 %v262
    %v846 = vunpack.c.l.b16 %v263
    %v847 = vunpack.c.l.b16 %v264
    %v848 = vunpack.c.l.b16 %v265
    %v849 = vunpack.c.l.b16 %v266
    %v850 = vunpack.c.l.b16 %v267
    %v851 = vunpack.c.l.b16 %v268
    %v852 = vunpack.c.l.b16 %v269
    %v853 = vunpack.c.l.b16 %v270
    %v854 = vunpack.c.l.b16 %v271
    %v855 = vunpack.c.l.b16 %v272
    %v856 = vunpack.c.l.b16 %v273
    %v857 = vunpack.c.l.b16 %v274
    %v858 = vunpack.c.l.b16 %v275
    %v859 = vunpack.c.l.b16 %v276
    %v860 = vunpack.c.l.b16 %v277
    %v861 = vunpack.c.l.b16 %v278
    %v862 = vunpack.c.l.b16 %v279
    %v863 = vunpack.c.l.b16 %v280
    %v864 = vunpack.c.l.b16 %v281
    %v865 = vunpack.c.l.b16 %v282
    %v866 = vunpack.c.l.b16 %v283
    %v867 = vunpack.c.l.b16 %v284
    %v868 = vunpack.c.l.b16 %v285
    %v869 = vunpack.c.l.b16 %v286
    %v870 = vunpack.c.l.b16 %v287
    %v871 = vunpack.c.l.b16 %v288
    %v872 = vunpack.c.l.b16 %v289
    %v873 = vunpack.c.l.b16 %v290
    %v874 = vunpack.c.l.b16 %v291
    %v875 = vunpack.c.l.b16 %v292
    %v876 = vunpack.c.l.b16 %v293
    %v877 = vunpack.c.l.b16 %v294
    %v878 = vunpack.c.l.b16 %v295
    %v879 = vunpack.c.l.b16 %v296
    %v880 = vunpack.c.l.b16 %v297
    %v881 = vunpack.c.l.b16 %v298
    %v882 = vunpack.c.l.b16 %v299
    %v883 = vunpack.c.l.b16 %v300
    %v884 = vunpack.c.l.b16 %v301
    %v885 = vunpack.c.l.b16 %v302
    %v886 = vunpack.c.l.b16 %v303
    %v887 = vunpack.c.l.b16 %v304
    %v888 = vunpack.c.l.b16 %v305
    %v889 = vunpack.c.l.b16 %v306
    %v890 = vunpack.c.l.b16 %v307
    %v891 = vunpack.c.l.b16 %v308
    %v892 = vunpack.c.l.b16 %v309
    %v893 = vunpack.c.l.b16 %v310
    %v894 = vunpack.c.l.b16 %v311
    %v895 = vunpack.c.l.b16 %v312
    %v896 = vunpack.c.l.b16 %v313
    %v897 = vunpack.c.l.b16 %v314
    %v898 = vunpack.c.l.b16 %v315
    %v899 = vunpack.c.l.b16 %v316
    %v900 = vunpack.c.l.b16 %v317
    %v901 = vunpack.c.l.b16 %v318
    %v902 = vunpack.c.l.b16 %v319
    %v903 = vunpack.c.l.b16 %v320
    %v904 = vunpack.c.l.b16 %v321
    %v905 = vunpack.c.l.b16 %v322
    %v906 = vunpack.c.l.b16 %v323
    %v907 = vunpack.c.l.b16 %v324
    %v908 = vunpack.c.l.b16 %v325
    %v909 = vunpack.c.l.b16 %v326
    %v910 = vunpack.c.l.b16 %v327
    %v911 = vunpack.c.l.b16 %v328
    %v912 = vunpack.c.l.b16 %v329
    %v913 = vunpack.c.l.b16 %v330
    %v914 = vunpack.c.l.b16 %v331
    %v915 = vunpack.c.l.b16 %v332
    %v916 = vunpack.c.l.b16 %v333
    %v917 = vunpack.c.l.b16 %v334
    %v918 = vunpack.c.l.b16 %v335
    %v919 = vunpack.c.l.b16 %v336
    %v920 = vunpack.c.l.b16 %v337
    %v921 = vunpack.c.l.b16 %v338
    %v922 = vunpack.c.l.b16 %v339
    %v923 = vunpack.c.l.b16 %v340
    %v924 = vunpack.c.l.b16 %v341
    %v925 = vunpack.c.l.b16 %v342
    %v926 = vunpack.c.l.b16 %v343
    %v927 = vunpack.c.l.b16 %v344
    %v928 = vunpack.c.l.b16 %v345
    %v929 = vunpack.c.l.b16 %v346
    %v930 = vunpack.c.l.b16 %v347
    %v931 = vunpack.c.l.b16 %v348
    %v932 = vunpack.c.l.b16 %v349
    %v933 = vunpack.c.l.b16 %v350
    %v934 = vunpack.c.l.b16 %v351
    %v935 = vunpack.c.l.b16 %v352
    %v936 = vunpack.c.l.b16 %v353
    %v937 = vunpack.c.l.b16 %v354
    %v938 = vunpack.c.l.b16 %v355
    %v939 = vunpack.c.l.b16 %v356
    %v940 = vunpack.c.l.b16 %v357
    %v941 = vunpack.c.l.b16 %v358
    %v942 = vunpack.c.l.b16 %v359
    %v943 = vunpack.c.l.b16 %v360
    %v944 = vunpack.c.l.b16 %v361
    %v945 = vunpack.c.l.b16 %v362
    %v946 = vunpack.c.l.b16 %v363
    %v947 = vunpack.c.l.b16 %v364
    %v948 = vunpack.c.l.b16 %v365
    %v949 = vunpack.c.l.b16 %v366
    %v950 = vunpack.c.l.b16 %v367
    %v951 = vunpack.c.l.b16 %v368
    %v952 = vunpack.c.l.b16 %v369
    %v953 = vunpack.c.l.b16 %v370
    %v954 = vunpack.c.l.b16 %v371
    %v955 = vpack.c.b16 %v828, %v827
    %v956 = vpack.c.b16 %v830, %v829
    %v957 = vpack.c.b16 %v832, %v831
    %v958 = vpack.c.b16 %v834, %v833
    %v959 = vpack.c.b16 %v836, %v835
    %v960 = vpack.c.b16 %v838, %v837
    %v961 = vpack.c.b16 %v840, %v839
    %v962 = vpack.c.b16 %v842, %v841
    %v963 = vpack.c.b16 %v844, %v843
    %v964 = vpack.c.b16 %v846, %v845
    %v965 = vpack.c.b16 %v848, %v847
    %v966 = vpack.c.b16 %v850, %v849
    %v967 = vpack.c.b16 %v852, %v851
    %v968 = vpack.c.b16 %v854, %v853
    %v969 = vpack.c.b16 %v856, %v855
    %v970 = vpack.c.b16 %v858, %v857
    %v971 = vpack.c.b16 %v860, %v859
    %v972 = vpack.c.b16 %v862, %v861
    %v973 = vpack.c.b16 %v864, %v863
    %v974 = vpack.c.b16 %v866, %v865
    %v975 = vpack.c.b16 %v868, %v867
    %v976 = vpack.c.b16 %v870, %v869
    %v977 = vpack.c.b16 %v872, %v871
    %v978 = vpack.c.b16 %v874, %v873
    %v979 = vpack.c.b16 %v876, %v875
    %v980 = vpack.c.b16 %v878, %v877
    %v981 = vpack.c.b16 %v880, %v879
    %v982 = vpack.c.b16 %v882, %v881
    %v983 = vpack.c.b16 %v884, %v883
    %v984 = vpack.c.b16 %v886, %v885
    %v985 = vpack.c.b16 %v888, %v887
    %v986 = vpack.c.b16 %v890, %v889
    %v987 = vpack.c.b16 %v892, %v891
    %v988 = vpack.c.b16 %v894, %v893
    %v989 = vpack.c.b16 %v896, %v895
    %v990 = vpack.c.b16 %v898, %v897
    %v991 = vpack.c.b16 %v900, %v899
    %v992 = vpack.c.b16 %v902, %v901
    %v993 = vpack.c.b16 %v904, %v903
    %v994 = vpack.c.b16 %v906, %v905
    %v995 = vpack.c.b16 %v908, %v907
    %v996 = vpack.c.b16 %v910, %v909
    %v997 = vpack.c.b16 %v912, %v911
    %v998 = vpack.c.b16 %v914, %v913
    %v999 = vpack.c.b16 %v916, %v915
    %v1000 = vpack.c.b16 %v918, %v917
    %v1001 = vpack.c.b16 %v920, %v919
    %v1002 = vpack.c.b16 %v922, %v921
    %v1003 = vpack.c.b16 %v924, %v923
    %v1004 = vpack.c.b16 %v926, %v925
    %v1005 = vpack.c.b16 %v928, %v927
    %v1006 = vpack.c.b16 %v930, %v929
    %v1007 = vpack.c.b16 %v932, %v931
    %v1008 = vpack.c.b16 %v934, %v933
    %v1009 = vpack.c.b16 %v936, %v935
    %v1010 = vpack.c.b16 %v938, %v937
    %v1011 = vpack.c.b16 %v940, %v939
    %v1012 = vpack.c.b16 %v942, %v941
    %v1013 = vpack.c.b16 %v944, %v943
    %v1014 = vpack.c.b16 %v946, %v945
    %v1015 = vpack.c.b16 %v948, %v947
    %v1016 = vpack.c.b16 %v950, %v949
    %v1017 = vpack.c.b16 %v952, %v951
    %v1018 = vpack.c.b16 %v954, %v953
    %1083 = vmatprep.subr.bf16.mxu0 0
    %1084 = vmatpush1.bf16.msra.mxu0 %v962
    %1085 = vmatprep.subr.bf16.mxu0 0
    %1086 = vmatpush1.bf16.msra.mxu0 %v961
    %1087 = vmatprep.subr.bf16.mxu0 0
    %1088 = vmatpush1.bf16.msra.mxu0 %v960
    %1089 = vmatprep.subr.bf16.mxu0 0
    %1090 = vmatpush1.bf16.msra.mxu0 %v959
    %1091 = vmatprep.subr.bf16.mxu0 0
    %1092 = vmatpush1.bf16.msra.mxu0 %v958
    %1093 = vmatprep.subr.bf16.mxu0 0
    %1094 = vmatpush1.bf16.msra.mxu0 %v957
    %1095 = vmatprep.subr.bf16.mxu0 0
    %1096 = vmatpush1.bf16.msra.mxu0 %v956
    %1097 = vmatprep.subr.bf16.mxu0 0
    %1098 = vmatpush1.bf16.msra.mxu0 %v955
    %1099 = vmatprep.subr.bf16.mxu0 0
    %1100 = vmatpush2.bf16.msra.mxu0 %v970
    %1101 = vmatprep.subr.bf16.mxu0 0
    %1102 = vmatpush2.bf16.msra.mxu0 %v969
    %1103 = vmatprep.subr.bf16.mxu0 0
    %1104 = vmatpush2.bf16.msra.mxu0 %v968
    %1105 = vmatprep.subr.bf16.mxu0 0
    %1106 = vmatpush2.bf16.msra.mxu0 %v967
    %1107 = vmatprep.subr.bf16.mxu0 0
    %1108 = vmatpush2.bf16.msra.mxu0 %v966
    %1109 = vmatprep.subr.bf16.mxu0 0
    %1110 = vmatpush2.bf16.msra.mxu0 %v965
    %1111 = vmatprep.subr.bf16.mxu0 0
    %1112 = vmatpush2.bf16.msra.mxu0 %v964
    %1113 = vmatprep.subr.bf16.mxu0 0
    %1114 = vmatpush2.bf16.msra.mxu0 %v963
    %1115 = vmatprep.mubr.bf16.mxu0 %v572
    %1116 = vmatmul.mubr.bf16.gmra.mxu0 %v571
    %v1117 = vpop.f32.mrf.mxu0
    %v1118 = vadd.f32 %v377, %v1117
    %v1119 = vpop.f32.mrf.mxu0
    %v1120 = vpop.f32.mrf.mxu0
    %v1121 = vadd.f32 %v377, %v1120
    %v1122 = vpop.f32.mrf.mxu0
    %1123 = vmatprep.mubr.bf16.mxu0 %v580
    %1124 = vmatmul.mubr.bf16.gmra.mxu0 %v579
    %v1125 = vpop.f32.mrf.mxu0
    %v1126 = vadd.f32 %v377, %v1125
    %v1127 = vpop.f32.mrf.mxu0
    %v1128 = vpop.f32.mrf.mxu0
    %v1129 = vadd.f32 %v377, %v1128
    %v1130 = vpop.f32.mrf.mxu0
    %1131 = vmatprep.mubr.bf16.mxu0 %v588
    %1132 = vmatmul.mubr.bf16.gmra.mxu0 %v587
    %v1133 = vpop.f32.mrf.mxu0
    %v1134 = vadd.f32 %v377, %v1133
    %v1135 = vpop.f32.mrf.mxu0
    %v1136 = vpop.f32.mrf.mxu0
    %v1137 = vadd.f32 %v377, %v1136
    %v1138 = vpop.f32.mrf.mxu0
    %1139 = vmatprep.mubr.bf16.mxu0 %v596
    %1140 = vmatmul.mubr.bf16.gmra.mxu0 %v595
    %v1141 = vpop.f32.mrf.mxu0
    %v1142 = vadd.f32 %v377, %v1141
    %v1143 = vpop.f32.mrf.mxu0
    %v1144 = vpop.f32.mrf.mxu0
    %v1145 = vadd.f32 %v377, %v1144
    %v1146 = vpop.f32.mrf.mxu0
    %1147 = vmatprep.mubr.bf16.mxu0 %v604
    %1148 = vmatmul.mubr.bf16.gmra.mxu0 %v603
    %v1149 = vpop.f32.mrf.mxu0
    %v1150 = vadd.f32 %v377, %v1149
    %v1151 = vpop.f32.mrf.mxu0
    %v1152 = vpop.f32.mrf.mxu0
    %v1153 = vadd.f32 %v377, %v1152
    %v1154 = vpop.f32.mrf.mxu0
    %1155 = vmatprep.mubr.bf16.mxu0 %v612
    %1156 = vmatmul.mubr.bf16.gmra.mxu0 %v611
    %v1157 = vpop.f32.mrf.mxu0
    %v1158 = vadd.f32 %v377, %v1157
    %v1159 = vpop.f32.mrf.mxu0
    %v1160 = vpop.f32.mrf.mxu0
    %v1161 = vadd.f32 %v377, %v1160
    %v1162 = vpop.f32.mrf.mxu0
    %1163 = vmatprep.mubr.bf16.mxu0 %v620
    %1164 = vmatmul.mubr.bf16.gmra.mxu0 %v619
    %v1165 = vpop.f32.mrf.mxu0
    %v1166 = vadd.f32 %v377, %v1165
    %v1167 = vpop.f32.mrf.mxu0
    %v1168 = vpop.f32.mrf.mxu0
    %v1169 = vadd.f32 %v377, %v1168
    %v1170 = vpop.f32.mrf.mxu0
    %1171 = vmatprep.mubr.bf16.mxu0 %v628
    %1172 = vmatmul.mubr.bf16.gmra.mxu0 %v627
    %v1173 = vpop.f32.mrf.mxu0
    %v1174 = vadd.f32 %v377, %v1173
    %v1175 = vpop.f32.mrf.mxu0
    %v1176 = vpop.f32.mrf.mxu0
    %v1177 = vadd.f32 %v377, %v1176
    %v1178 = vpop.f32.mrf.mxu0
    %1179 = vdwg.mxu0
    %1180 = vmatprep.subr.bf16.mxu0 0
    %1181 = vmatpush1.bf16.msra.mxu0 %v978
    %1182 = vmatprep.subr.bf16.mxu0 0
    %1183 = vmatpush1.bf16.msra.mxu0 %v977
    %1184 = vmatprep.subr.bf16.mxu0 0
    %1185 = vmatpush1.bf16.msra.mxu0 %v976
    %1186 = vmatprep.subr.bf16.mxu0 0
    %1187 = vmatpush1.bf16.msra.mxu0 %v975
    %1188 = vmatprep.subr.bf16.mxu0 0
    %1189 = vmatpush1.bf16.msra.mxu0 %v974
    %1190 = vmatprep.subr.bf16.mxu0 0
    %1191 = vmatpush1.bf16.msra.mxu0 %v973
    %1192 = vmatprep.subr.bf16.mxu0 0
    %1193 = vmatpush1.bf16.msra.mxu0 %v972
    %1194 = vmatprep.subr.bf16.mxu0 0
    %1195 = vmatpush1.bf16.msra.mxu0 %v971
    %1196 = vmatprep.subr.bf16.mxu0 0
    %1197 = vmatpush2.bf16.msra.mxu0 %v986
    %1198 = vmatprep.subr.bf16.mxu0 0
    %1199 = vmatpush2.bf16.msra.mxu0 %v985
    %1200 = vmatprep.subr.bf16.mxu0 0
    %1201 = vmatpush2.bf16.msra.mxu0 %v984
    %1202 = vmatprep.subr.bf16.mxu0 0
    %1203 = vmatpush2.bf16.msra.mxu0 %v983
    %1204 = vmatprep.subr.bf16.mxu0 0
    %1205 = vmatpush2.bf16.msra.mxu0 %v982
    %1206 = vmatprep.subr.bf16.mxu0 0
    %1207 = vmatpush2.bf16.msra.mxu0 %v981
    %1208 = vmatprep.subr.bf16.mxu0 0
    %1209 = vmatpush2.bf16.msra.mxu0 %v980
    %1210 = vmatprep.subr.bf16.mxu0 0
    %1211 = vmatpush2.bf16.msra.mxu0 %v979
    %1212 = vmatprep.mubr.bf16.mxu0 %v574
    %1213 = vmatmul.mubr.bf16.gmra.mxu0 %v573
    %v1214 = vpop.f32.mrf.mxu0
    %v1215 = vadd.f32 %v1118, %v1214
    %v1216 = vpop.f32.mrf.mxu0
    %v1217 = vpop.f32.mrf.mxu0
    %v1218 = vadd.f32 %v1121, %v1217
    %v1219 = vpop.f32.mrf.mxu0
    %1220 = vmatprep.mubr.bf16.mxu0 %v582
    %1221 = vmatmul.mubr.bf16.gmra.mxu0 %v581
    %v1222 = vpop.f32.mrf.mxu0
    %v1223 = vadd.f32 %v1126, %v1222
    %v1224 = vpop.f32.mrf.mxu0
    %v1225 = vpop.f32.mrf.mxu0
    %v1226 = vadd.f32 %v1129, %v1225
    %v1227 = vpop.f32.mrf.mxu0
    %1228 = vmatprep.mubr.bf16.mxu0 %v590
    %1229 = vmatmul.mubr.bf16.gmra.mxu0 %v589
    %v1230 = vpop.f32.mrf.mxu0
    %v1231 = vadd.f32 %v1134, %v1230
    %v1232 = vpop.f32.mrf.mxu0
    %v1233 = vpop.f32.mrf.mxu0
    %v1234 = vadd.f32 %v1137, %v1233
    %v1235 = vpop.f32.mrf.mxu0
    %1236 = vmatprep.mubr.bf16.mxu0 %v598
    %1237 = vmatmul.mubr.bf16.gmra.mxu0 %v597
    %v1238 = vpop.f32.mrf.mxu0
    %v1239 = vadd.f32 %v1142, %v1238
    %v1240 = vpop.f32.mrf.mxu0
    %v1241 = vpop.f32.mrf.mxu0
    %v1242 = vadd.f32 %v1145, %v1241
    %v1243 = vpop.f32.mrf.mxu0
    %1244 = vmatprep.mubr.bf16.mxu0 %v606
    %1245 = vmatmul.mubr.bf16.gmra.mxu0 %v605
    %v1246 = vpop.f32.mrf.mxu0
    %v1247 = vadd.f32 %v1150, %v1246
    %v1248 = vpop.f32.mrf.mxu0
    %v1249 = vpop.f32.mrf.mxu0
    %v1250 = vadd.f32 %v1153, %v1249
    %v1251 = vpop.f32.mrf.mxu0
    %1252 = vmatprep.mubr.bf16.mxu0 %v614
    %1253 = vmatmul.mubr.bf16.gmra.mxu0 %v613
    %v1254 = vpop.f32.mrf.mxu0
    %v1255 = vadd.f32 %v1158, %v1254
    %v1256 = vpop.f32.mrf.mxu0
    %v1257 = vpop.f32.mrf.mxu0
    %v1258 = vadd.f32 %v1161, %v1257
    %v1259 = vpop.f32.mrf.mxu0
    %1260 = vmatprep.mubr.bf16.mxu0 %v622
    %1261 = vmatmul.mubr.bf16.gmra.mxu0 %v621
    %v1262 = vpop.f32.mrf.mxu0
    %v1263 = vadd.f32 %v1166, %v1262
    %v1264 = vpop.f32.mrf.mxu0
    %v1265 = vpop.f32.mrf.mxu0
    %v1266 = vadd.f32 %v1169, %v1265
    %v1267 = vpop.f32.mrf.mxu0
    %1268 = vmatprep.mubr.bf16.mxu0 %v630
    %1269 = vmatmul.mubr.bf16.gmra.mxu0 %v629
    %v1270 = vpop.f32.mrf.mxu0
    %v1271 = vadd.f32 %v1174, %v1270
    %v1272 = vpop.f32.mrf.mxu0
    %v1273 = vpop.f32.mrf.mxu0
    %v1274 = vadd.f32 %v1177, %v1273
    %v1275 = vpop.f32.mrf.mxu0
    %1276 = vdwg.mxu0
    %1277 = vmatprep.subr.bf16.mxu0 0
    %1278 = vmatpush1.bf16.msra.mxu0 %v994
    %1279 = vmatprep.subr.bf16.mxu0 0
    %1280 = vmatpush1.bf16.msra.mxu0 %v993
    %1281 = vmatprep.subr.bf16.mxu0 0
    %1282 = vmatpush1.bf16.msra.mxu0 %v992
    %1283 = vmatprep.subr.bf16.mxu0 0
    %1284 = vmatpush1.bf16.msra.mxu0 %v991
    %1285 = vmatprep.subr.bf16.mxu0 0
    %1286 = vmatpush1.bf16.msra.mxu0 %v990
    %1287 = vmatprep.subr.bf16.mxu0 0
    %1288 = vmatpush1.bf16.msra.mxu0 %v989
    %1289 = vmatprep.subr.bf16.mxu0 0
    %1290 = vmatpush1.bf16.msra.mxu0 %v988
    %1291 = vmatprep.subr.bf16.mxu0 0
    %1292 = vmatpush1.bf16.msra.mxu0 %v987
    %1293 = vmatprep.subr.bf16.mxu0 0
    %1294 = vmatpush2.bf16.msra.mxu0 %v1002
    %1295 = vmatprep.subr.bf16.mxu0 0
    %1296 = vmatpush2.bf16.msra.mxu0 %v1001
    %1297 = vmatprep.subr.bf16.mxu0 0
    %1298 = vmatpush2.bf16.msra.mxu0 %v1000
    %1299 = vmatprep.subr.bf16.mxu0 0
    %1300 = vmatpush2.bf16.msra.mxu0 %v999
    %1301 = vmatprep.subr.bf16.mxu0 0
    %1302 = vmatpush2.bf16.msra.mxu0 %v998
    %1303 = vmatprep.subr.bf16.mxu0 0
    %1304 = vmatpush2.bf16.msra.mxu0 %v997
    %1305 = vmatprep.subr.bf16.mxu0 0
    %1306 = vmatpush2.bf16.msra.mxu0 %v996
    %1307 = vmatprep.subr.bf16.mxu0 0
    %1308 = vmatpush2.bf16.msra.mxu0 %v995
    %1309 = vmatprep.mubr.bf16.mxu0 %v576
    %1310 = vmatmul.mubr.bf16.gmra.mxu0 %v575
    %v1311 = vpop.f32.mrf.mxu0
    %v1312 = vadd.f32 %v1215, %v1311
    %v1313 = vpop.f32.mrf.mxu0
    %v1314 = vpop.f32.mrf.mxu0
    %v1315 = vadd.f32 %v1218, %v1314
    %v1316 = vpop.f32.mrf.mxu0
    %1317 = vmatprep.mubr.bf16.mxu0 %v584
    %1318 = vmatmul.mubr.bf16.gmra.mxu0 %v583
    %v1319 = vpop.f32.mrf.mxu0
    %v1320 = vadd.f32 %v1223, %v1319
    %v1321 = vpop.f32.mrf.mxu0
    %v1322 = vpop.f32.mrf.mxu0
    %v1323 = vadd.f32 %v1226, %v1322
    %v1324 = vpop.f32.mrf.mxu0
    %1325 = vmatprep.mubr.bf16.mxu0 %v592
    %1326 = vmatmul.mubr.bf16.gmra.mxu0 %v591
    %v1327 = vpop.f32.mrf.mxu0
    %v1328 = vadd.f32 %v1231, %v1327
    %v1329 = vpop.f32.mrf.mxu0
    %v1330 = vpop.f32.mrf.mxu0
    %v1331 = vadd.f32 %v1234, %v1330
    %v1332 = vpop.f32.mrf.mxu0
    %1333 = vmatprep.mubr.bf16.mxu0 %v600
    %1334 = vmatmul.mubr.bf16.gmra.mxu0 %v599
    %v1335 = vpop.f32.mrf.mxu0
    %v1336 = vadd.f32 %v1239, %v1335
    %v1337 = vpop.f32.mrf.mxu0
    %v1338 = vpop.f32.mrf.mxu0
    %v1339 = vadd.f32 %v1242, %v1338
    %v1340 = vpop.f32.mrf.mxu0
    %1341 = vmatprep.mubr.bf16.mxu0 %v608
    %1342 = vmatmul.mubr.bf16.gmra.mxu0 %v607
    %v1343 = vpop.f32.mrf.mxu0
    %v1344 = vadd.f32 %v1247, %v1343
    %v1345 = vpop.f32.mrf.mxu0
    %v1346 = vpop.f32.mrf.mxu0
    %v1347 = vadd.f32 %v1250, %v1346
    %v1348 = vpop.f32.mrf.mxu0
    %1349 = vmatprep.mubr.bf16.mxu0 %v616
    %1350 = vmatmul.mubr.bf16.gmra.mxu0 %v615
    %v1351 = vpop.f32.mrf.mxu0
    %v1352 = vadd.f32 %v1255, %v1351
    %v1353 = vpop.f32.mrf.mxu0
    %v1354 = vpop.f32.mrf.mxu0
    %v1355 = vadd.f32 %v1258, %v1354
    %v1356 = vpop.f32.mrf.mxu0
    %1357 = vmatprep.mubr.bf16.mxu0 %v624
    %1358 = vmatmul.mubr.bf16.gmra.mxu0 %v623
    %v1359 = vpop.f32.mrf.mxu0
    %v1360 = vadd.f32 %v1263, %v1359
    %v1361 = vpop.f32.mrf.mxu0
    %v1362 = vpop.f32.mrf.mxu0
    %v1363 = vadd.f32 %v1266, %v1362
    %v1364 = vpop.f32.mrf.mxu0
    %1365 = vmatprep.mubr.bf16.mxu0 %v632
    %1366 = vmatmul.mubr.bf16.gmra.mxu0 %v631
    %v1367 = vpop.f32.mrf.mxu0
    %v1368 = vadd.f32 %v1271, %v1367
    %v1369 = vpop.f32.mrf.mxu0
    %v1370 = vpop.f32.mrf.mxu0
    %v1371 = vadd.f32 %v1274, %v1370
    %v1372 = vpop.f32.mrf.mxu0
    %1373 = vdwg.mxu0
    %1374 = vmatprep.subr.bf16.mxu0 0
    %1375 = vmatpush1.bf16.msra.mxu0 %v1010
    %1376 = vmatprep.subr.bf16.mxu0 0
    %1377 = vmatpush1.bf16.msra.mxu0 %v1009
    %1378 = vmatprep.subr.bf16.mxu0 0
    %1379 = vmatpush1.bf16.msra.mxu0 %v1008
    %1380 = vmatprep.subr.bf16.mxu0 0
    %1381 = vmatpush1.bf16.msra.mxu0 %v1007
    %1382 = vmatprep.subr.bf16.mxu0 0
    %1383 = vmatpush1.bf16.msra.mxu0 %v1006
    %1384 = vmatprep.subr.bf16.mxu0 0
    %1385 = vmatpush1.bf16.msra.mxu0 %v1005
    %1386 = vmatprep.subr.bf16.mxu0 0
    %1387 = vmatpush1.bf16.msra.mxu0 %v1004
    %1388 = vmatprep.subr.bf16.mxu0 0
    %1389 = vmatpush1.bf16.msra.mxu0 %v1003
    %1390 = vmatprep.subr.bf16.mxu0 0
    %1391 = vmatpush2.bf16.msra.mxu0 %v1018
    %1392 = vmatprep.subr.bf16.mxu0 0
    %1393 = vmatpush2.bf16.msra.mxu0 %v1017
    %1394 = vmatprep.subr.bf16.mxu0 0
    %1395 = vmatpush2.bf16.msra.mxu0 %v1016
    %1396 = vmatprep.subr.bf16.mxu0 0
    %1397 = vmatpush2.bf16.msra.mxu0 %v1015
    %1398 = vmatprep.subr.bf16.mxu0 0
    %1399 = vmatpush2.bf16.msra.mxu0 %v1014
    %1400 = vmatprep.subr.bf16.mxu0 0
    %1401 = vmatpush2.bf16.msra.mxu0 %v1013
    %1402 = vmatprep.subr.bf16.mxu0 0
    %1403 = vmatpush2.bf16.msra.mxu0 %v1012
    %1404 = vmatprep.subr.bf16.mxu0 0
    %1405 = vmatpush2.bf16.msra.mxu0 %v1011
    %1406 = vmatprep.mubr.bf16.mxu0 %v578
    %1407 = vmatmul.mubr.bf16.gmra.mxu0 %v577
    %v1408 = vpop.f32.mrf.mxu0
    %v1409 = vadd.f32 %v1312, %v1408
    %v1410 = vpop.f32.mrf.mxu0
    %v1411 = vpop.f32.mrf.mxu0
    %v1412 = vadd.f32 %v1315, %v1411
    %v1413 = vpop.f32.mrf.mxu0
    %1414 = vmatprep.mubr.bf16.mxu0 %v586
    %1415 = vmatmul.mubr.bf16.gmra.mxu0 %v585
    %v1416 = vpop.f32.mrf.mxu0
    %v1417 = vadd.f32 %v1320, %v1416
    %v1418 = vpop.f32.mrf.mxu0
    %v1419 = vpop.f32.mrf.mxu0
    %v1420 = vadd.f32 %v1323, %v1419
    %v1421 = vpop.f32.mrf.mxu0
    %1422 = vmatprep.mubr.bf16.mxu0 %v594
    %1423 = vmatmul.mubr.bf16.gmra.mxu0 %v593
    %v1424 = vpop.f32.mrf.mxu0
    %v1425 = vadd.f32 %v1328, %v1424
    %v1426 = vpop.f32.mrf.mxu0
    %v1427 = vpop.f32.mrf.mxu0
    %v1428 = vadd.f32 %v1331, %v1427
    %v1429 = vpop.f32.mrf.mxu0
    %1430 = vmatprep.mubr.bf16.mxu0 %v602
    %1431 = vmatmul.mubr.bf16.gmra.mxu0 %v601
    %v1432 = vpop.f32.mrf.mxu0
    %v1433 = vadd.f32 %v1336, %v1432
    %v1434 = vpop.f32.mrf.mxu0
    %v1435 = vpop.f32.mrf.mxu0
    %v1436 = vadd.f32 %v1339, %v1435
    %v1437 = vpop.f32.mrf.mxu0
    %1438 = vmatprep.mubr.bf16.mxu0 %v610
    %1439 = vmatmul.mubr.bf16.gmra.mxu0 %v609
    %v1440 = vpop.f32.mrf.mxu0
    %v1441 = vadd.f32 %v1344, %v1440
    %v1442 = vpop.f32.mrf.mxu0
    %v1443 = vpop.f32.mrf.mxu0
    %v1444 = vadd.f32 %v1347, %v1443
    %v1445 = vpop.f32.mrf.mxu0
    %1446 = vmatprep.mubr.bf16.mxu0 %v618
    %1447 = vmatmul.mubr.bf16.gmra.mxu0 %v617
    %v1448 = vpop.f32.mrf.mxu0
    %v1449 = vadd.f32 %v1352, %v1448
    %v1450 = vpop.f32.mrf.mxu0
    %v1451 = vpop.f32.mrf.mxu0
    %v1452 = vadd.f32 %v1355, %v1451
    %v1453 = vpop.f32.mrf.mxu0
    %1454 = vmatprep.mubr.bf16.mxu0 %v626
    %1455 = vmatmul.mubr.bf16.gmra.mxu0 %v625
    %v1456 = vpop.f32.mrf.mxu0
    %v1457 = vadd.f32 %v1360, %v1456
    %v1458 = vpop.f32.mrf.mxu0
    %v1459 = vpop.f32.mrf.mxu0
    %v1460 = vadd.f32 %v1363, %v1459
    %v1461 = vpop.f32.mrf.mxu0
    %1462 = vmatprep.mubr.bf16.mxu0 %v634
    %1463 = vmatmul.mubr.bf16.gmra.mxu0 %v633
    %v1464 = vpop.f32.mrf.mxu0
    %v1465 = vadd.f32 %v1368, %v1464
    %v1466 = vpop.f32.mrf.mxu0
    %v1467 = vpop.f32.mrf.mxu0
    %v1468 = vadd.f32 %v1371, %v1467
    %v1469 = vpop.f32.mrf.mxu0
    %1470 = vdwg.mxu0
    %1472 = vset.pattern.permute.xlu0 0
    %1473 = vperm.xlu0 %1472, %v164
    %v1474 = vpop.permute.xlu0 %1473
    %1477 = vset.pattern.permute.xlu0 0
    %1478 = vperm.xlu0 %1477, %v165
    %v1479 = vpop.permute.xlu0 %1478
    %1482 = vset.pattern.permute.xlu0 0
    %1483 = vperm.xlu0 %1482, %v166
    %v1484 = vpop.permute.xlu0 %1483
    %1487 = vset.pattern.permute.xlu0 0
    %1488 = vperm.xlu0 %1487, %v167
    %v1489 = vpop.permute.xlu0 %1488
    %1492 = vset.pattern.permute.xlu0 0
    %1493 = vperm.xlu0 %1492, %v168
    %v1494 = vpop.permute.xlu0 %1493
    %1497 = vset.pattern.permute.xlu0 0
    %1498 = vperm.xlu0 %1497, %v169
    %v1499 = vpop.permute.xlu0 %1498
    %1502 = vset.pattern.permute.xlu0 0
    %1503 = vperm.xlu0 %1502, %v170
    %v1504 = vpop.permute.xlu0 %1503
    %1507 = vset.pattern.permute.xlu0 0
    %1508 = vperm.xlu0 %1507, %v171
    %v1509 = vpop.permute.xlu0 %1508
    %1512 = vset.pattern.permute.xlu0 0
    %1513 = vperm.xlu0 %1512, %v172
    %v1514 = vpop.permute.xlu0 %1513
    %1517 = vset.pattern.permute.xlu0 0
    %1518 = vperm.xlu0 %1517, %v173
    %v1519 = vpop.permute.xlu0 %1518
    %1522 = vset.pattern.permute.xlu0 0
    %1523 = vperm.xlu0 %1522, %v174
    %v1524 = vpop.permute.xlu0 %1523
    %1527 = vset.pattern.permute.xlu0 0
    %1528 = vperm.xlu0 %1527, %v175
    %v1529 = vpop.permute.xlu0 %1528
    %1532 = vset.pattern.permute.xlu0 0
    %1533 = vperm.xlu0 %1532, %v176
    %v1534 = vpop.permute.xlu0 %1533
    %1537 = vset.pattern.permute.xlu0 0
    %1538 = vperm.xlu0 %1537, %v177
    %v1539 = vpop.permute.xlu0 %1538
    %1542 = vset.pattern.permute.xlu0 0
    %1543 = vperm.xlu0 %1542, %v178
    %v1544 = vpop.permute.xlu0 %1543
    %1547 = vset.pattern.permute.xlu0 0
    %1548 = vperm.xlu0 %1547, %v179
    %v1549 = vpop.permute.xlu0 %1548
    %v1551 = vmul.f32 %v1409, %v1474
    %v1552 = vmul.f32 %v1412, %v1479
    %v1553 = vmul.f32 %v1417, %v1484
    %v1554 = vmul.f32 %v1420, %v1489
    %v1555 = vmul.f32 %v1425, %v1494
    %v1556 = vmul.f32 %v1428, %v1499
    %v1557 = vmul.f32 %v1433, %v1504
    %v1558 = vmul.f32 %v1436, %v1509
    %v1559 = vmul.f32 %v1441, %v1514
    %v1560 = vmul.f32 %v1444, %v1519
    %v1561 = vmul.f32 %v1449, %v1524
    %v1562 = vmul.f32 %v1452, %v1529
    %v1563 = vmul.f32 %v1457, %v1534
    %v1564 = vmul.f32 %v1460, %v1539
    %v1565 = vmul.f32 %v1465, %v1544
    %v1566 = vmul.f32 %v1468, %v1549
    %v1567 = vadd.f32 %v1551, %v1552
    %v1568 = vadd.f32 %v1567, %v1553
    %v1569 = vadd.f32 %v1568, %v1554
    %v1570 = vadd.f32 %v1569, %v1555
    %v1571 = vadd.f32 %v1570, %v1556
    %v1572 = vadd.f32 %v1571, %v1557
    %v1573 = vadd.f32 %v1572, %v1558
    %v1574 = vadd.f32 %v1573, %v1559
    %v1575 = vadd.f32 %v1574, %v1560
    %v1576 = vadd.f32 %v1575, %v1561
    %v1577 = vadd.f32 %v1576, %v1562
    %v1578 = vadd.f32 %v1577, %v1563
    %v1579 = vadd.f32 %v1578, %v1564
    %v1580 = vadd.f32 %v1579, %v1565
    %v1581 = vadd.f32 %v1580, %v1566
    %v1582 = vrot.slane %v1581, 4
    %v1583 = vadd.f32 %v1581, %v1582
    %v1584 = vrot.slane %v1583, 2
    %v1585 = vadd.f32 %v1583, %v1584
    %v1586 = vrot.slane %v1585, 1
    %v1587 = vadd.f32 %v1585, %v1586
    %v1588 = vmul.f32 %v1587, 0.03125
    %v1589 = vsub.f32 %v1409, %v1588
    %v1590 = vsub.f32 %v1412, %v1588
    %v1591 = vsub.f32 %v1417, %v1588
    %v1592 = vsub.f32 %v1420, %v1588
    %v1593 = vsub.f32 %v1425, %v1588
    %v1594 = vsub.f32 %v1428, %v1588
    %v1595 = vsub.f32 %v1433, %v1588
    %v1596 = vsub.f32 %v1436, %v1588
    %v1597 = vsub.f32 %v1441, %v1588
    %v1598 = vsub.f32 %v1444, %v1588
    %v1599 = vsub.f32 %v1449, %v1588
    %v1600 = vsub.f32 %v1452, %v1588
    %v1601 = vsub.f32 %v1457, %v1588
    %v1602 = vsub.f32 %v1460, %v1588
    %v1603 = vsub.f32 %v1465, %v1588
    %v1604 = vsub.f32 %v1468, %v1588
    %v1605 = vmul.f32 %v1589, %v1589
    %v1606 = vmul.f32 %v1590, %v1590
    %v1607 = vmul.f32 %v1591, %v1591
    %v1608 = vmul.f32 %v1592, %v1592
    %v1609 = vmul.f32 %v1593, %v1593
    %v1610 = vmul.f32 %v1594, %v1594
    %v1611 = vmul.f32 %v1595, %v1595
    %v1612 = vmul.f32 %v1596, %v1596
    %v1613 = vmul.f32 %v1597, %v1597
    %v1614 = vmul.f32 %v1598, %v1598
    %v1615 = vmul.f32 %v1599, %v1599
    %v1616 = vmul.f32 %v1600, %v1600
    %v1617 = vmul.f32 %v1601, %v1601
    %v1618 = vmul.f32 %v1602, %v1602
    %v1619 = vmul.f32 %v1603, %v1603
    %v1620 = vmul.f32 %v1604, %v1604
    %v1621 = vmul.f32 %v1474, %v1605
    %v1622 = vmul.f32 %v1479, %v1606
    %v1623 = vmul.f32 %v1484, %v1607
    %v1624 = vmul.f32 %v1489, %v1608
    %v1625 = vmul.f32 %v1494, %v1609
    %v1626 = vmul.f32 %v1499, %v1610
    %v1627 = vmul.f32 %v1504, %v1611
    %v1628 = vmul.f32 %v1509, %v1612
    %v1629 = vmul.f32 %v1514, %v1613
    %v1630 = vmul.f32 %v1519, %v1614
    %v1631 = vmul.f32 %v1524, %v1615
    %v1632 = vmul.f32 %v1529, %v1616
    %v1633 = vmul.f32 %v1534, %v1617
    %v1634 = vmul.f32 %v1539, %v1618
    %v1635 = vmul.f32 %v1544, %v1619
    %v1636 = vmul.f32 %v1549, %v1620
    %v1637 = vadd.f32 %v1621, %v1622
    %v1638 = vadd.f32 %v1637, %v1623
    %v1639 = vadd.f32 %v1638, %v1624
    %v1640 = vadd.f32 %v1639, %v1625
    %v1641 = vadd.f32 %v1640, %v1626
    %v1642 = vadd.f32 %v1641, %v1627
    %v1643 = vadd.f32 %v1642, %v1628
    %v1644 = vadd.f32 %v1643, %v1629
    %v1645 = vadd.f32 %v1644, %v1630
    %v1646 = vadd.f32 %v1645, %v1631
    %v1647 = vadd.f32 %v1646, %v1632
    %v1648 = vadd.f32 %v1647, %v1633
    %v1649 = vadd.f32 %v1648, %v1634
    %v1650 = vadd.f32 %v1649, %v1635
    %v1651 = vadd.f32 %v1650, %v1636
    %v1652 = vrot.slane %v1651, 4
    %v1653 = vadd.f32 %v1651, %v1652
    %v1654 = vrot.slane %v1653, 2
    %v1655 = vadd.f32 %v1653, %v1654
    %v1656 = vrot.slane %v1655, 1
    %v1657 = vadd.f32 %v1655, %v1656
    %v1658 = vmul.f32 %v1657, 0.03125
    %v1659 = vadd.f32 %v1658, 1e-05
    %v1660 = vrsqrt.pop %v1659
    %v1661 = vmul.f32 %v1589, %v1660
    %v1662 = vmul.f32 %v1590, %v1660
    %v1663 = vmul.f32 %v1591, %v1660
    %v1664 = vmul.f32 %v1592, %v1660
    %v1665 = vmul.f32 %v1593, %v1660
    %v1666 = vmul.f32 %v1594, %v1660
    %v1667 = vmul.f32 %v1595, %v1660
    %v1668 = vmul.f32 %v1596, %v1660
    %v1669 = vmul.f32 %v1597, %v1660
    %v1670 = vmul.f32 %v1598, %v1660
    %v1671 = vmul.f32 %v1599, %v1660
    %v1672 = vmul.f32 %v1600, %v1660
    %v1673 = vmul.f32 %v1601, %v1660
    %v1674 = vmul.f32 %v1602, %v1660
    %v1675 = vmul.f32 %v1603, %v1660
    %v1676 = vmul.f32 %v1604, %v1660
    %v1677 = vld [vmem:[#allocation6] sm:$0x1]
    %v1679 = vlaneseq
    %v1680 = vshrl.u32 %v1679, 7
    %v1681 = vsub.s32 0, %v1680
    %v1682 = vrot.slane %v1677, %v1681
    %v1684 = vmul.f32 %v1661, %v1682
    %v1685 = vmul.f32 %v1662, %v1682
    %v1686 = vmul.f32 %v1663, %v1682
    %v1687 = vmul.f32 %v1664, %v1682
    %v1688 = vmul.f32 %v1665, %v1682
    %v1689 = vmul.f32 %v1666, %v1682
    %v1690 = vmul.f32 %v1667, %v1682
    %v1691 = vmul.f32 %v1668, %v1682
    %v1692 = vmul.f32 %v1669, %v1682
    %v1693 = vmul.f32 %v1670, %v1682
    %v1694 = vmul.f32 %v1671, %v1682
    %v1695 = vmul.f32 %v1672, %v1682
    %v1696 = vmul.f32 %v1673, %v1682
    %v1697 = vmul.f32 %v1674, %v1682
    %v1698 = vmul.f32 %v1675, %v1682
    %v1699 = vmul.f32 %v1676, %v1682
    %v1700 = vld [vmem:[#allocation7] sm:$0x1]
    %v1702 = vlaneseq
    %v1703 = vshrl.u32 %v1702, 7
    %v1704 = vsub.s32 0, %v1703
    %v1705 = vrot.slane %v1700, %v1704
    %v1707 = vadd.f32 %v1684, %v1705
    %v1708 = vadd.f32 %v1685, %v1705
    %v1709 = vadd.f32 %v1686, %v1705
    %v1710 = vadd.f32 %v1687, %v1705
    %v1711 = vadd.f32 %v1688, %v1705
    %v1712 = vadd.f32 %v1689, %v1705
    %v1713 = vadd.f32 %v1690, %v1705
    %v1714 = vadd.f32 %v1691, %v1705
    %v1715 = vadd.f32 %v1692, %v1705
    %v1716 = vadd.f32 %v1693, %v1705
    %v1717 = vadd.f32 %v1694, %v1705
    %v1718 = vadd.f32 %v1695, %v1705
    %v1719 = vadd.f32 %v1696, %v1705
    %v1720 = vadd.f32 %v1697, %v1705
    %v1721 = vadd.f32 %v1698, %v1705
    %v1722 = vadd.f32 %v1699, %v1705
    %vm1723 = vcmp.ge.f32.partialorder %v1707, 0.0
    %vm1724 = vcmp.ge.f32.partialorder %v1708, 0.0
    %vm1725 = vcmp.ge.f32.partialorder %v1709, 0.0
    %vm1726 = vcmp.ge.f32.partialorder %v1710, 0.0
    %vm1727 = vcmp.ge.f32.partialorder %v1711, 0.0
    %vm1728 = vcmp.ge.f32.partialorder %v1712, 0.0
    %vm1729 = vcmp.ge.f32.partialorder %v1713, 0.0
    %vm1730 = vcmp.ge.f32.partialorder %v1714, 0.0
    %vm1731 = vcmp.ge.f32.partialorder %v1715, 0.0
    %vm1732 = vcmp.ge.f32.partialorder %v1716, 0.0
    %vm1733 = vcmp.ge.f32.partialorder %v1717, 0.0
    %vm1734 = vcmp.ge.f32.partialorder %v1718, 0.0
    %vm1735 = vcmp.ge.f32.partialorder %v1719, 0.0
    %vm1736 = vcmp.ge.f32.partialorder %v1720, 0.0
    %vm1737 = vcmp.ge.f32.partialorder %v1721, 0.0
    %vm1738 = vcmp.ge.f32.partialorder %v1722, 0.0
    %v1739 = vmul.f32 %v1707, 0.2
    %v1740 = vmul.f32 %v1708, 0.2
    %v1741 = vmul.f32 %v1709, 0.2
    %v1742 = vmul.f32 %v1710, 0.2
    %v1743 = vmul.f32 %v1711, 0.2
    %v1744 = vmul.f32 %v1712, 0.2
    %v1745 = vmul.f32 %v1713, 0.2
    %v1746 = vmul.f32 %v1714, 0.2
    %v1747 = vmul.f32 %v1715, 0.2
    %v1748 = vmul.f32 %v1716, 0.2
    %v1749 = vmul.f32 %v1717, 0.2
    %v1750 = vmul.f32 %v1718, 0.2
    %v1751 = vmul.f32 %v1719, 0.2
    %v1752 = vmul.f32 %v1720, 0.2
    %v1753 = vmul.f32 %v1721, 0.2
    %v1754 = vmul.f32 %v1722, 0.2
    %v1755 = vsel %vm1723, %v1707, %v1739
    %v1756 = vsel %vm1724, %v1708, %v1740
    %v1757 = vsel %vm1725, %v1709, %v1741
    %v1758 = vsel %vm1726, %v1710, %v1742
    %v1759 = vsel %vm1727, %v1711, %v1743
    %v1760 = vsel %vm1728, %v1712, %v1744
    %v1761 = vsel %vm1729, %v1713, %v1745
    %v1762 = vsel %vm1730, %v1714, %v1746
    %v1763 = vsel %vm1731, %v1715, %v1747
    %v1764 = vsel %vm1732, %v1716, %v1748
    %v1765 = vsel %vm1733, %v1717, %v1749
    %v1766 = vsel %vm1734, %v1718, %v1750
    %v1767 = vsel %vm1735, %v1719, %v1751
    %v1768 = vsel %vm1736, %v1720, %v1752
    %v1769 = vsel %vm1737, %v1721, %v1753
    %v1770 = vsel %vm1738, %v1722, %v1754
    %v1771 = vmul.f32 %v1755, %v1474
    %v1772 = vmul.f32 %v1756, %v1479
    %v1773 = vmul.f32 %v1757, %v1484
    %v1774 = vmul.f32 %v1758, %v1489
    %v1775 = vmul.f32 %v1759, %v1494
    %v1776 = vmul.f32 %v1760, %v1499
    %v1777 = vmul.f32 %v1761, %v1504
    %v1778 = vmul.f32 %v1762, %v1509
    %v1779 = vmul.f32 %v1763, %v1514
    %v1780 = vmul.f32 %v1764, %v1519
    %v1781 = vmul.f32 %v1765, %v1524
    %v1782 = vmul.f32 %v1766, %v1529
    %v1783 = vmul.f32 %v1767, %v1534
    %v1784 = vmul.f32 %v1768, %v1539
    %v1785 = vmul.f32 %v1769, %v1544
    %v1786 = vmul.f32 %v1770, %v1549
    %v1787 = vpack.c.bf16 %v1771, %v1771
    %v1788 = vld [vmem:[#allocation9] sm:$0xff]
    %v1789 = vld [vmem:[#allocation9 + $0x8] sm:$0xff]
    %v1790 = vld [vmem:[#allocation9 + $0x10] sm:$0xff]
    %v1791 = vld [vmem:[#allocation9 + $0x18] sm:$0xff]
    %v1792 = vld [vmem:[#allocation9 + $0x20] sm:$0xff]
    %v1793 = vld [vmem:[#allocation9 + $0x28] sm:$0xff]
    %v1794 = vld [vmem:[#allocation9 + $0x30] sm:$0xff]
    %v1795 = vld [vmem:[#allocation9 + $0x38] sm:$0xff]
    %v1796 = vld [vmem:[#allocation9 + $0x40] sm:$0xff]
    %v1797 = vld [vmem:[#allocation9 + $0x48] sm:$0xff]
    %v1798 = vld [vmem:[#allocation9 + $0x50] sm:$0xff]
    %v1799 = vld [vmem:[#allocation9 + $0x58] sm:$0xff]
    %v1800 = vld [vmem:[#allocation9 + $0x60] sm:$0xff]
    %v1801 = vld [vmem:[#allocation9 + $0x68] sm:$0xff]
    %v1802 = vld [vmem:[#allocation9 + $0x70] sm:$0xff]
    %v1803 = vld [vmem:[#allocation9 + $0x78] sm:$0xff]
    %v1804 = vld [vmem:[#allocation9 + $0x80] sm:$0xff]
    %v1805 = vld [vmem:[#allocation9 + $0x88] sm:$0xff]
    %v1806 = vld [vmem:[#allocation9 + $0x90] sm:$0xff]
    %v1807 = vld [vmem:[#allocation9 + $0x98] sm:$0xff]
    %v1808 = vld [vmem:[#allocation9 + $0xa0] sm:$0xff]
    %v1809 = vld [vmem:[#allocation9 + $0xa8] sm:$0xff]
    %v1810 = vld [vmem:[#allocation9 + $0xb0] sm:$0xff]
    %v1811 = vld [vmem:[#allocation9 + $0xb8] sm:$0xff]
    %v1812 = vld [vmem:[#allocation9 + $0xc0] sm:$0xff]
    %v1813 = vld [vmem:[#allocation9 + $0xc8] sm:$0xff]
    %v1814 = vld [vmem:[#allocation9 + $0xd0] sm:$0xff]
    %v1815 = vld [vmem:[#allocation9 + $0xd8] sm:$0xff]
    %v1816 = vld [vmem:[#allocation9 + $0xe0] sm:$0xff]
    %v1817 = vld [vmem:[#allocation9 + $0xe8] sm:$0xff]
    %v1818 = vld [vmem:[#allocation9 + $0xf0] sm:$0xff]
    %v1819 = vld [vmem:[#allocation9 + $0xf8] sm:$0xff]
    %v1820 = vld [vmem:[#allocation9 + $0x100] sm:$0xff]
    %v1821 = vld [vmem:[#allocation9 + $0x108] sm:$0xff]
    %v1822 = vld [vmem:[#allocation9 + $0x110] sm:$0xff]
    %v1823 = vld [vmem:[#allocation9 + $0x118] sm:$0xff]
    %v1824 = vld [vmem:[#allocation9 + $0x120] sm:$0xff]
    %v1825 = vld [vmem:[#allocation9 + $0x128] sm:$0xff]
    %v1826 = vld [vmem:[#allocation9 + $0x130] sm:$0xff]
    %v1827 = vld [vmem:[#allocation9 + $0x138] sm:$0xff]
    %v1828 = vld [vmem:[#allocation9 + $0x140] sm:$0xff]
    %v1829 = vld [vmem:[#allocation9 + $0x148] sm:$0xff]
    %v1830 = vld [vmem:[#allocation9 + $0x150] sm:$0xff]
    %v1831 = vld [vmem:[#allocation9 + $0x158] sm:$0xff]
    %v1832 = vld [vmem:[#allocation9 + $0x160] sm:$0xff]
    %v1833 = vld [vmem:[#allocation9 + $0x168] sm:$0xff]
    %v1834 = vld [vmem:[#allocation9 + $0x170] sm:$0xff]
    %v1835 = vld [vmem:[#allocation9 + $0x178] sm:$0xff]
    %v1836 = vld [vmem:[#allocation9 + $0x180] sm:$0xff]
    %v1837 = vld [vmem:[#allocation9 + $0x188] sm:$0xff]
    %v1838 = vld [vmem:[#allocation9 + $0x190] sm:$0xff]
    %v1839 = vld [vmem:[#allocation9 + $0x198] sm:$0xff]
    %v1840 = vld [vmem:[#allocation9 + $0x1a0] sm:$0xff]
    %v1841 = vld [vmem:[#allocation9 + $0x1a8] sm:$0xff]
    %v1842 = vld [vmem:[#allocation9 + $0x1b0] sm:$0xff]
    %v1843 = vld [vmem:[#allocation9 + $0x1b8] sm:$0xff]
    %v1844 = vld [vmem:[#allocation9 + $0x1c0] sm:$0xff]
    %v1845 = vld [vmem:[#allocation9 + $0x1c8] sm:$0xff]
    %v1846 = vld [vmem:[#allocation9 + $0x1d0] sm:$0xff]
    %v1847 = vld [vmem:[#allocation9 + $0x1d8] sm:$0xff]
    %v1848 = vld [vmem:[#allocation9 + $0x1e0] sm:$0xff]
    %v1849 = vld [vmem:[#allocation9 + $0x1e8] sm:$0xff]
    %v1850 = vld [vmem:[#allocation9 + $0x1f0] sm:$0xff]
    %v1851 = vld [vmem:[#allocation9 + $0x1f8] sm:$0xff]
    %v1852 = vpack.c.bf16 %v1772, %v1772
    %v1853 = vld [vmem:[#allocation9 + $0x200] sm:$0xff]
    %v1854 = vld [vmem:[#allocation9 + $0x208] sm:$0xff]
    %v1855 = vld [vmem:[#allocation9 + $0x210] sm:$0xff]
    %v1856 = vld [vmem:[#allocation9 + $0x218] sm:$0xff]
    %v1857 = vld [vmem:[#allocation9 + $0x220] sm:$0xff]
    %v1858 = vld [vmem:[#allocation9 + $0x228] sm:$0xff]
    %v1859 = vld [vmem:[#allocation9 + $0x230] sm:$0xff]
    %v1860 = vld [vmem:[#allocation9 + $0x238] sm:$0xff]
    %v1861 = vld [vmem:[#allocation9 + $0x240] sm:$0xff]
    %v1862 = vld [vmem:[#allocation9 + $0x248] sm:$0xff]
    %v1863 = vld [vmem:[#allocation9 + $0x250] sm:$0xff]
    %v1864 = vld [vmem:[#allocation9 + $0x258] sm:$0xff]
    %v1865 = vld [vmem:[#allocation9 + $0x260] sm:$0xff]
    %v1866 = vld [vmem:[#allocation9 + $0x268] sm:$0xff]
    %v1867 = vld [vmem:[#allocation9 + $0x270] sm:$0xff]
    %v1868 = vld [vmem:[#allocation9 + $0x278] sm:$0xff]
    %v1869 = vld [vmem:[#allocation9 + $0x280] sm:$0xff]
    %v1870 = vld [vmem:[#allocation9 + $0x288] sm:$0xff]
    %v1871 = vld [vmem:[#allocation9 + $0x290] sm:$0xff]
    %v1872 = vld [vmem:[#allocation9 + $0x298] sm:$0xff]
    %v1873 = vld [vmem:[#allocation9 + $0x2a0] sm:$0xff]
    %v1874 = vld [vmem:[#allocation9 + $0x2a8] sm:$0xff]
    %v1875 = vld [vmem:[#allocation9 + $0x2b0] sm:$0xff]
    %v1876 = vld [vmem:[#allocation9 + $0x2b8] sm:$0xff]
    %v1877 = vld [vmem:[#allocation9 + $0x2c0] sm:$0xff]
    %v1878 = vld [vmem:[#allocation9 + $0x2c8] sm:$0xff]
    %v1879 = vld [vmem:[#allocation9 + $0x2d0] sm:$0xff]
    %v1880 = vld [vmem:[#allocation9 + $0x2d8] sm:$0xff]
    %v1881 = vld [vmem:[#allocation9 + $0x2e0] sm:$0xff]
    %v1882 = vld [vmem:[#allocation9 + $0x2e8] sm:$0xff]
    %v1883 = vld [vmem:[#allocation9 + $0x2f0] sm:$0xff]
    %v1884 = vld [vmem:[#allocation9 + $0x2f8] sm:$0xff]
    %v1885 = vld [vmem:[#allocation9 + $0x300] sm:$0xff]
    %v1886 = vld [vmem:[#allocation9 + $0x308] sm:$0xff]
    %v1887 = vld [vmem:[#allocation9 + $0x310] sm:$0xff]
    %v1888 = vld [vmem:[#allocation9 + $0x318] sm:$0xff]
    %v1889 = vld [vmem:[#allocation9 + $0x320] sm:$0xff]
    %v1890 = vld [vmem:[#allocation9 + $0x328] sm:$0xff]
    %v1891 = vld [vmem:[#allocation9 + $0x330] sm:$0xff]
    %v1892 = vld [vmem:[#allocation9 + $0x338] sm:$0xff]
    %v1893 = vld [vmem:[#allocation9 + $0x340] sm:$0xff]
    %v1894 = vld [vmem:[#allocation9 + $0x348] sm:$0xff]
    %v1895 = vld [vmem:[#allocation9 + $0x350] sm:$0xff]
    %v1896 = vld [vmem:[#allocation9 + $0x358] sm:$0xff]
    %v1897 = vld [vmem:[#allocation9 + $0x360] sm:$0xff]
    %v1898 = vld [vmem:[#allocation9 + $0x368] sm:$0xff]
    %v1899 = vld [vmem:[#allocation9 + $0x370] sm:$0xff]
    %v1900 = vld [vmem:[#allocation9 + $0x378] sm:$0xff]
    %v1901 = vld [vmem:[#allocation9 + $0x380] sm:$0xff]
    %v1902 = vld [vmem:[#allocation9 + $0x388] sm:$0xff]
    %v1903 = vld [vmem:[#allocation9 + $0x390] sm:$0xff]
    %v1904 = vld [vmem:[#allocation9 + $0x398] sm:$0xff]
    %v1905 = vld [vmem:[#allocation9 + $0x3a0] sm:$0xff]
    %v1906 = vld [vmem:[#allocation9 + $0x3a8] sm:$0xff]
    %v1907 = vld [vmem:[#allocation9 + $0x3b0] sm:$0xff]
    %v1908 = vld [vmem:[#allocation9 + $0x3b8] sm:$0xff]
    %v1909 = vld [vmem:[#allocation9 + $0x3c0] sm:$0xff]
    %v1910 = vld [vmem:[#allocation9 + $0x3c8] sm:$0xff]
    %v1911 = vld [vmem:[#allocation9 + $0x3d0] sm:$0xff]
    %v1912 = vld [vmem:[#allocation9 + $0x3d8] sm:$0xff]
    %v1913 = vld [vmem:[#allocation9 + $0x3e0] sm:$0xff]
    %v1914 = vld [vmem:[#allocation9 + $0x3e8] sm:$0xff]
    %v1915 = vld [vmem:[#allocation9 + $0x3f0] sm:$0xff]
    %v1916 = vld [vmem:[#allocation9 + $0x3f8] sm:$0xff]
    %v1981 = vunpack.c.l.b16 %v1853
    %v1982 = vunpack.c.h.b16 %v1853
    %v1983 = vunpack.c.l.b16 %v1854
    %v1984 = vunpack.c.h.b16 %v1854
    %v1985 = vunpack.c.l.b16 %v1855
    %v1986 = vunpack.c.h.b16 %v1855
    %v1987 = vunpack.c.l.b16 %v1856
    %v1988 = vunpack.c.h.b16 %v1856
    %v1989 = vunpack.c.l.b16 %v1857
    %v1990 = vunpack.c.h.b16 %v1857
    %v1991 = vunpack.c.l.b16 %v1858
    %v1992 = vunpack.c.h.b16 %v1858
    %v1993 = vunpack.c.l.b16 %v1859
    %v1994 = vunpack.c.h.b16 %v1859
    %v1995 = vunpack.c.l.b16 %v1860
    %v1996 = vunpack.c.h.b16 %v1860
    %v1997 = vunpack.c.l.b16 %v1861
    %v1998 = vunpack.c.h.b16 %v1861
    %v1999 = vunpack.c.l.b16 %v1862
    %v2000 = vunpack.c.h.b16 %v1862
    %v2001 = vunpack.c.l.b16 %v1863
    %v2002 = vunpack.c.h.b16 %v1863
    %v2003 = vunpack.c.l.b16 %v1864
    %v2004 = vunpack.c.h.b16 %v1864
    %v2005 = vunpack.c.l.b16 %v1865
    %v2006 = vunpack.c.h.b16 %v1865
    %v2007 = vunpack.c.l.b16 %v1866
    %v2008 = vunpack.c.h.b16 %v1866
    %v2009 = vunpack.c.l.b16 %v1867
    %v2010 = vunpack.c.h.b16 %v1867
    %v2011 = vunpack.c.l.b16 %v1868
    %v2012 = vunpack.c.h.b16 %v1868
    %v2013 = vunpack.c.l.b16 %v1869
    %v2014 = vunpack.c.h.b16 %v1869
    %v2015 = vunpack.c.l.b16 %v1870
    %v2016 = vunpack.c.h.b16 %v1870
    %v2017 = vunpack.c.l.b16 %v1871
    %v2018 = vunpack.c.h.b16 %v1871
    %v2019 = vunpack.c.l.b16 %v1872
    %v2020 = vunpack.c.h.b16 %v1872
    %v2021 = vunpack.c.l.b16 %v1873
    %v2022 = vunpack.c.h.b16 %v1873
    %v2023 = vunpack.c.l.b16 %v1874
    %v2024 = vunpack.c.h.b16 %v1874
    %v2025 = vunpack.c.l.b16 %v1875
    %v2026 = vunpack.c.h.b16 %v1875
    %v2027 = vunpack.c.l.b16 %v1876
    %v2028 = vunpack.c.h.b16 %v1876
    %v2029 = vunpack.c.l.b16 %v1877
    %v2030 = vunpack.c.h.b16 %v1877
    %v2031 = vunpack.c.l.b16 %v1878
    %v2032 = vunpack.c.h.b16 %v1878
    %v2033 = vunpack.c.l.b16 %v1879
    %v2034 = vunpack.c.h.b16 %v1879
    %v2035 = vunpack.c.l.b16 %v1880
    %v2036 = vunpack.c.h.b16 %v1880
    %v2037 = vunpack.c.l.b16 %v1881
    %v2038 = vunpack.c.h.b16 %v1881
    %v2039 = vunpack.c.l.b16 %v1882
    %v2040 = vunpack.c.h.b16 %v1882
    %v2041 = vunpack.c.l.b16 %v1883
    %v2042 = vunpack.c.h.b16 %v1883
    %v2043 = vunpack.c.l.b16 %v1884
    %v2044 = vunpack.c.h.b16 %v1884
    %v2045 = vunpack.c.l.b16 %v1885
    %v2046 = vunpack.c.h.b16 %v1885
    %v2047 = vunpack.c.l.b16 %v1886
    %v2048 = vunpack.c.h.b16 %v1886
    %v2049 = vunpack.c.l.b16 %v1887
    %v2050 = vunpack.c.h.b16 %v1887
    %v2051 = vunpack.c.l.b16 %v1888
    %v2052 = vunpack.c.h.b16 %v1888
    %v2053 = vunpack.c.l.b16 %v1889
    %v2054 = vunpack.c.h.b16 %v1889
    %v2055 = vunpack.c.l.b16 %v1890
    %v2056 = vunpack.c.h.b16 %v1890
    %v2057 = vunpack.c.l.b16 %v1891
    %v2058 = vunpack.c.h.b16 %v1891
    %v2059 = vunpack.c.l.b16 %v1892
    %v2060 = vunpack.c.h.b16 %v1892
    %v2061 = vunpack.c.l.b16 %v1893
    %v2062 = vunpack.c.h.b16 %v1893
    %v2063 = vunpack.c.l.b16 %v1894
    %v2064 = vunpack.c.h.b16 %v1894
    %v2065 = vunpack.c.l.b16 %v1895
    %v2066 = vunpack.c.h.b16 %v1895
    %v2067 = vunpack.c.l.b16 %v1896
    %v2068 = vunpack.c.h.b16 %v1896
    %v2069 = vunpack.c.l.b16 %v1897
    %v2070 = vunpack.c.h.b16 %v1897
    %v2071 = vunpack.c.l.b16 %v1898
    %v2072 = vunpack.c.h.b16 %v1898
    %v2073 = vunpack.c.l.b16 %v1899
    %v2074 = vunpack.c.h.b16 %v1899
    %v2075 = vunpack.c.l.b16 %v1900
    %v2076 = vunpack.c.h.b16 %v1900
    %v2077 = vunpack.c.l.b16 %v1901
    %v2078 = vunpack.c.h.b16 %v1901
    %v2079 = vunpack.c.l.b16 %v1902
    %v2080 = vunpack.c.h.b16 %v1902
    %v2081 = vunpack.c.l.b16 %v1903
    %v2082 = vunpack.c.h.b16 %v1903
    %v2083 = vunpack.c.l.b16 %v1904
    %v2084 = vunpack.c.h.b16 %v1904
    %v2085 = vunpack.c.l.b16 %v1905
    %v2086 = vunpack.c.h.b16 %v1905
    %v2087 = vunpack.c.l.b16 %v1906
    %v2088 = vunpack.c.h.b16 %v1906
    %v2089 = vunpack.c.l.b16 %v1907
    %v2090 = vunpack.c.h.b16 %v1907
    %v2091 = vunpack.c.l.b16 %v1908
    %v2092 = vunpack.c.h.b16 %v1908
    %v2093 = vunpack.c.l.b16 %v1909
    %v2094 = vunpack.c.h.b16 %v1909
    %v2095 = vunpack.c.l.b16 %v1910
    %v2096 = vunpack.c.h.b16 %v1910
    %v2097 = vunpack.c.l.b16 %v1911
    %v2098 = vunpack.c.h.b16 %v1911
    %v2099 = vunpack.c.l.b16 %v1912
    %v2100 = vunpack.c.h.b16 %v1912
    %v2101 = vunpack.c.l.b16 %v1913
    %v2102 = vunpack.c.h.b16 %v1913
    %v2103 = vunpack.c.l.b16 %v1914
    %v2104 = vunpack.c.h.b16 %v1914
    %v2105 = vunpack.c.l.b16 %v1915
    %v2106 = vunpack.c.h.b16 %v1915
    %v2107 = vunpack.c.l.b16 %v1916
    %v2108 = vunpack.c.h.b16 %v1916
    %v2109 = vpack.c.b16 %v1989, %v1981
    %v2110 = vpack.c.b16 %v1990, %v1982
    %v2111 = vpack.c.b16 %v1991, %v1983
    %v2112 = vpack.c.b16 %v1992, %v1984
    %v2113 = vpack.c.b16 %v1993, %v1985
    %v2114 = vpack.c.b16 %v1994, %v1986
    %v2115 = vpack.c.b16 %v1995, %v1987
    %v2116 = vpack.c.b16 %v1996, %v1988
    %v2117 = vpack.c.b16 %v2005, %v1997
    %v2118 = vpack.c.b16 %v2006, %v1998
    %v2119 = vpack.c.b16 %v2007, %v1999
    %v2120 = vpack.c.b16 %v2008, %v2000
    %v2121 = vpack.c.b16 %v2009, %v2001
    %v2122 = vpack.c.b16 %v2010, %v2002
    %v2123 = vpack.c.b16 %v2011, %v2003
    %v2124 = vpack.c.b16 %v2012, %v2004
    %v2125 = vpack.c.b16 %v2021, %v2013
    %v2126 = vpack.c.b16 %v2022, %v2014
    %v2127 = vpack.c.b16 %v2023, %v2015
    %v2128 = vpack.c.b16 %v2024, %v2016
    %v2129 = vpack.c.b16 %v2025, %v2017
    %v2130 = vpack.c.b16 %v2026, %v2018
    %v2131 = vpack.c.b16 %v2027, %v2019
    %v2132 = vpack.c.b16 %v2028, %v2020
    %v2133 = vpack.c.b16 %v2037, %v2029
    %v2134 = vpack.c.b16 %v2038, %v2030
    %v2135 = vpack.c.b16 %v2039, %v2031
    %v2136 = vpack.c.b16 %v2040, %v2032
    %v2137 = vpack.c.b16 %v2041, %v2033
    %v2138 = vpack.c.b16 %v2042, %v2034
    %v2139 = vpack.c.b16 %v2043, %v2035
    %v2140 = vpack.c.b16 %v2044, %v2036
    %v2141 = vpack.c.b16 %v2053, %v2045
    %v2142 = vpack.c.b16 %v2054, %v2046
    %v2143 = vpack.c.b16 %v2055, %v2047
    %v2144 = vpack.c.b16 %v2056, %v2048
    %v2145 = vpack.c.b16 %v2057, %v2049
    %v2146 = vpack.c.b16 %v2058, %v2050
    %v2147 = vpack.c.b16 %v2059, %v2051
    %v2148 = vpack.c.b16 %v2060, %v2052
    %v2149 = vpack.c.b16 %v2069, %v2061
    %v2150 = vpack.c.b16 %v2070, %v2062
    %v2151 = vpack.c.b16 %v2071, %v2063
    %v2152 = vpack.c.b16 %v2072, %v2064
    %v2153 = vpack.c.b16 %v2073, %v2065
    %v2154 = vpack.c.b16 %v2074, %v2066
    %v2155 = vpack.c.b16 %v2075, %v2067
    %v2156 = vpack.c.b16 %v2076, %v2068
    %v2157 = vpack.c.b16 %v2085, %v2077
    %v2158 = vpack.c.b16 %v2086, %v2078
    %v2159 = vpack.c.b16 %v2087, %v2079
    %v2160 = vpack.c.b16 %v2088, %v2080
    %v2161 = vpack.c.b16 %v2089, %v2081
    %v2162 = vpack.c.b16 %v2090, %v2082
    %v2163 = vpack.c.b16 %v2091, %v2083
    %v2164 = vpack.c.b16 %v2092, %v2084
    %v2165 = vpack.c.b16 %v2101, %v2093
    %v2166 = vpack.c.b16 %v2102, %v2094
    %v2167 = vpack.c.b16 %v2103, %v2095
    %v2168 = vpack.c.b16 %v2104, %v2096
    %v2169 = vpack.c.b16 %v2105, %v2097
    %v2170 = vpack.c.b16 %v2106, %v2098
    %v2171 = vpack.c.b16 %v2107, %v2099
    %v2172 = vpack.c.b16 %v2108, %v2100
    %2237 = vmatprep.subr.bf16.mxu0 %v2166
    %2238 = vmatpush1.bf16.msra.mxu0 %v2165
    %2239 = vmatprep.subr.bf16.mxu0 %v2158
    %2240 = vmatpush1.bf16.msra.mxu0 %v2157
    %2241 = vmatprep.subr.bf16.mxu0 %v2150
    %2242 = vmatpush1.bf16.msra.mxu0 %v2149
    %2243 = vmatprep.subr.bf16.mxu0 %v2142
    %2244 = vmatpush1.bf16.msra.mxu0 %v2141
    %2245 = vmatprep.subr.bf16.mxu0 %v2134
    %2246 = vmatpush1.bf16.msra.mxu0 %v2133
    %2247 = vmatprep.subr.bf16.mxu0 %v2126
    %2248 = vmatpush1.bf16.msra.mxu0 %v2125
    %2249 = vmatprep.subr.bf16.mxu0 %v2118
    %2250 = vmatpush1.bf16.msra.mxu0 %v2117
    %2251 = vmatprep.subr.bf16.mxu0 %v2110
    %2252 = vmatpush1.bf16.msra.mxu0 %v2109
    %2253 = vmatprep.subr.bf16.mxu0 0
    %2254 = vmatpush2.bf16.msra.mxu0 0
    %2255 = vmatprep.subr.bf16.mxu0 0
    %2256 = vmatpush2.bf16.msra.mxu0 0
    %2257 = vmatprep.subr.bf16.mxu0 0
    %2258 = vmatpush2.bf16.msra.mxu0 0
    %2259 = vmatprep.subr.bf16.mxu0 0
    %2260 = vmatpush2.bf16.msra.mxu0 0
    %2261 = vmatprep.subr.bf16.mxu0 0
    %2262 = vmatpush2.bf16.msra.mxu0 0
    %2263 = vmatprep.subr.bf16.mxu0 0
    %2264 = vmatpush2.bf16.msra.mxu0 0
    %2265 = vmatprep.subr.bf16.mxu0 0
    %2266 = vmatpush2.bf16.msra.mxu0 0
    %2267 = vmatprep.subr.bf16.mxu0 0
    %2268 = vmatpush2.bf16.msra.mxu0 0
    %2269 = vmatprep.mubr.bf16.mxu0 0
    %2270 = vmatmul.mubr.bf16.gmra.mxu0 %v1852
    %v2271 = vpop.f32.mrf.mxu0
    %v2272 = vadd.f32 0.0, %v2271
    %v2273 = vpop.f32.mrf.mxu0
    %v2274 = vadd.f32 0.0, %v2273
    %v2275 = vpop.f32.mrf.mxu0
    %v2276 = vpop.f32.mrf.mxu0
    %2277 = vdwg.mxu0
    %2278 = vmatprep.subr.bf16.mxu0 %v2168
    %2279 = vmatpush1.bf16.msra.mxu0 %v2167
    %2280 = vmatprep.subr.bf16.mxu0 %v2160
    %2281 = vmatpush1.bf16.msra.mxu0 %v2159
    %2282 = vmatprep.subr.bf16.mxu0 %v2152
    %2283 = vmatpush1.bf16.msra.mxu0 %v2151
    %2284 = vmatprep.subr.bf16.mxu0 %v2144
    %2285 = vmatpush1.bf16.msra.mxu0 %v2143
    %2286 = vmatprep.subr.bf16.mxu0 %v2136
    %2287 = vmatpush1.bf16.msra.mxu0 %v2135
    %2288 = vmatprep.subr.bf16.mxu0 %v2128
    %2289 = vmatpush1.bf16.msra.mxu0 %v2127
    %2290 = vmatprep.subr.bf16.mxu0 %v2120
    %2291 = vmatpush1.bf16.msra.mxu0 %v2119
    %2292 = vmatprep.subr.bf16.mxu0 %v2112
    %2293 = vmatpush1.bf16.msra.mxu0 %v2111
    %2294 = vmatprep.subr.bf16.mxu0 0
    %2295 = vmatpush2.bf16.msra.mxu0 0
    %2296 = vmatprep.subr.bf16.mxu0 0
    %2297 = vmatpush2.bf16.msra.mxu0 0
    %2298 = vmatprep.subr.bf16.mxu0 0
    %2299 = vmatpush2.bf16.msra.mxu0 0
    %2300 = vmatprep.subr.bf16.mxu0 0
    %2301 = vmatpush2.bf16.msra.mxu0 0
    %2302 = vmatprep.subr.bf16.mxu0 0
    %2303 = vmatpush2.bf16.msra.mxu0 0
    %2304 = vmatprep.subr.bf16.mxu0 0
    %2305 = vmatpush2.bf16.msra.mxu0 0
    %2306 = vmatprep.subr.bf16.mxu0 0
    %2307 = vmatpush2.bf16.msra.mxu0 0
    %2308 = vmatprep.subr.bf16.mxu0 0
    %2309 = vmatpush2.bf16.msra.mxu0 0
    %2310 = vmatprep.mubr.bf16.mxu0 0
    %2311 = vmatmul.mubr.bf16.gmra.mxu0 %v1852
    %v2312 = vpop.f32.mrf.mxu0
    %v2313 = vadd.f32 0.0, %v2312
    %v2314 = vpop.f32.mrf.mxu0
    %v2315 = vadd.f32 0.0, %v2314
    %v2316 = vpop.f32.mrf.mxu0
    %v2317 = vpop.f32.mrf.mxu0
    %2318 = vdwg.mxu0
    %2319 = vmatprep.subr.bf16.mxu0 %v2170
    %2320 = vmatpush1.bf16.msra.mxu0 %v2169
    %2321 = vmatprep.subr.bf16.mxu0 %v2162
    %2322 = vmatpush1.bf16.msra.mxu0 %v2161
    %2323 = vmatprep.subr.bf16.mxu0 %v2154
    %2324 = vmatpush1.bf16.msra.mxu0 %v2153
    %2325 = vmatprep.subr.bf16.mxu0 %v2146
    %2326 = vmatpush1.bf16.msra.mxu0 %v2145
    %2327 = vmatprep.subr.bf16.mxu0 %v2138
    %2328 = vmatpush1.bf16.msra.mxu0 %v2137
    %2329 = vmatprep.subr.bf16.mxu0 %v2130
    %2330 = vmatpush1.bf16.msra.mxu0 %v2129
    %2331 = vmatprep.subr.bf16.mxu0 %v2122
    %2332 = vmatpush1.bf16.msra.mxu0 %v2121
    %2333 = vmatprep.subr.bf16.mxu0 %v2114
    %2334 = vmatpush1.bf16.msra.mxu0 %v2113
    %2335 = vmatprep.subr.bf16.mxu0 0
    %2336 = vmatpush2.bf16.msra.mxu0 0
    %2337 = vmatprep.subr.bf16.mxu0 0
    %2338 = vmatpush2.bf16.msra.mxu0 0
    %2339 = vmatprep.subr.bf16.mxu0 0
    %2340 = vmatpush2.bf16.msra.mxu0 0
    %2341 = vmatprep.subr.bf16.mxu0 0
    %2342 = vmatpush2.bf16.msra.mxu0 0
    %2343 = vmatprep.subr.bf16.mxu0 0
    %2344 = vmatpush2.bf16.msra.mxu0 0
    %2345 = vmatprep.subr.bf16.mxu0 0
    %2346 = vmatpush2.bf16.msra.mxu0 0
    %2347 = vmatprep.subr.bf16.mxu0 0
    %2348 = vmatpush2.bf16.msra.mxu0 0
    %2349 = vmatprep.subr.bf16.mxu0 0
    %2350 = vmatpush2.bf16.msra.mxu0 0
    %2351 = vmatprep.mubr.bf16.mxu0 0
    %2352 = vmatmul.mubr.bf16.gmra.mxu0 %v1852
    %v2353 = vpop.f32.mrf.mxu0
    %v2354 = vadd.f32 0.0, %v2353
    %v2355 = vpop.f32.mrf.mxu0
    %v2356 = vadd.f32 0.0, %v2355
    %v2357 = vpop.f32.mrf.mxu0
    %v2358 = vpop.f32.mrf.mxu0
    %2359 = vdwg.mxu0
    %2360 = vmatprep.subr.bf16.mxu0 %v2172
    %2361 = vmatpush1.bf16.msra.mxu0 %v2171
    %2362 = vmatprep.subr.bf16.mxu0 %v2164
    %2363 = vmatpush1.bf16.msra.mxu0 %v2163
    %2364 = vmatprep.subr.bf16.mxu0 %v2156
    %2365 = vmatpush1.bf16.msra.mxu0 %v2155
    %2366 = vmatprep.subr.bf16.mxu0 %v2148
    %2367 = vmatpush1.bf16.msra.mxu0 %v2147
    %2368 = vmatprep.subr.bf16.mxu0 %v2140
    %2369 = vmatpush1.bf16.msra.mxu0 %v2139
    %2370 = vmatprep.subr.bf16.mxu0 %v2132
    %2371 = vmatpush1.bf16.msra.mxu0 %v2131
    %2372 = vmatprep.subr.bf16.mxu0 %v2124
    %2373 = vmatpush1.bf16.msra.mxu0 %v2123
    %2374 = vmatprep.subr.bf16.mxu0 %v2116
    %2375 = vmatpush1.bf16.msra.mxu0 %v2115
    %2376 = vmatprep.subr.bf16.mxu0 0
    %2377 = vmatpush2.bf16.msra.mxu0 0
    %2378 = vmatprep.subr.bf16.mxu0 0
    %2379 = vmatpush2.bf16.msra.mxu0 0
    %2380 = vmatprep.subr.bf16.mxu0 0
    %2381 = vmatpush2.bf16.msra.mxu0 0
    %2382 = vmatprep.subr.bf16.mxu0 0
    %2383 = vmatpush2.bf16.msra.mxu0 0
    %2384 = vmatprep.subr.bf16.mxu0 0
    %2385 = vmatpush2.bf16.msra.mxu0 0
    %2386 = vmatprep.subr.bf16.mxu0 0
    %2387 = vmatpush2.bf16.msra.mxu0 0
    %2388 = vmatprep.subr.bf16.mxu0 0
    %2389 = vmatpush2.bf16.msra.mxu0 0
    %2390 = vmatprep.subr.bf16.mxu0 0
    %2391 = vmatpush2.bf16.msra.mxu0 0
    %2392 = vmatprep.mubr.bf16.mxu0 0
    %2393 = vmatmul.mubr.bf16.gmra.mxu0 %v1852
    %v2394 = vpop.f32.mrf.mxu0
    %v2395 = vadd.f32 0.0, %v2394
    %v2396 = vpop.f32.mrf.mxu0
    %v2397 = vadd.f32 0.0, %v2396
    %v2398 = vpop.f32.mrf.mxu0
    %v2399 = vpop.f32.mrf.mxu0
    %2400 = vdwg.mxu0
    %v2465 = vunpack.c.l.b16 %v1788
    %v2466 = vunpack.c.h.b16 %v1788
    %v2467 = vunpack.c.l.b16 %v1789
    %v2468 = vunpack.c.h.b16 %v1789
    %v2469 = vunpack.c.l.b16 %v1790
    %v2470 = vunpack.c.h.b16 %v1790
    %v2471 = vunpack.c.l.b16 %v1791
    %v2472 = vunpack.c.h.b16 %v1791
    %v2473 = vunpack.c.l.b16 %v1792
    %v2474 = vunpack.c.h.b16 %v1792
    %v2475 = vunpack.c.l.b16 %v1793
    %v2476 = vunpack.c.h.b16 %v1793
    %v2477 = vunpack.c.l.b16 %v1794
    %v2478 = vunpack.c.h.b16 %v1794
    %v2479 = vunpack.c.l.b16 %v1795
    %v2480 = vunpack.c.h.b16 %v1795
    %v2481 = vunpack.c.l.b16 %v1796
    %v2482 = vunpack.c.h.b16 %v1796
    %v2483 = vunpack.c.l.b16 %v1797
    %v2484 = vunpack.c.h.b16 %v1797
    %v2485 = vunpack.c.l.b16 %v1798
    %v2486 = vunpack.c.h.b16 %v1798
    %v2487 = vunpack.c.l.b16 %v1799
    %v2488 = vunpack.c.h.b16 %v1799
    %v2489 = vunpack.c.l.b16 %v1800
    %v2490 = vunpack.c.h.b16 %v1800
    %v2491 = vunpack.c.l.b16 %v1801
    %v2492 = vunpack.c.h.b16 %v1801
    %v2493 = vunpack.c.l.b16 %v1802
    %v2494 = vunpack.c.h.b16 %v1802
    %v2495 = vunpack.c.l.b16 %v1803
    %v2496 = vunpack.c.h.b16 %v1803
    %v2497 = vunpack.c.l.b16 %v1804
    %v2498 = vunpack.c.h.b16 %v1804
    %v2499 = vunpack.c.l.b16 %v1805
    %v2500 = vunpack.c.h.b16 %v1805
    %v2501 = vunpack.c.l.b16 %v1806
    %v2502 = vunpack.c.h.b16 %v1806
    %v2503 = vunpack.c.l.b16 %v1807
    %v2504 = vunpack.c.h.b16 %v1807
    %v2505 = vunpack.c.l.b16 %v1808
    %v2506 = vunpack.c.h.b16 %v1808
    %v2507 = vunpack.c.l.b16 %v1809
    %v2508 = vunpack.c.h.b16 %v1809
    %v2509 = vunpack.c.l.b16 %v1810
    %v2510 = vunpack.c.h.b16 %v1810
    %v2511 = vunpack.c.l.b16 %v1811
    %v2512 = vunpack.c.h.b16 %v1811
    %v2513 = vunpack.c.l.b16 %v1812
    %v2514 = vunpack.c.h.b16 %v1812
    %v2515 = vunpack.c.l.b16 %v1813
    %v2516 = vunpack.c.h.b16 %v1813
    %v2517 = vunpack.c.l.b16 %v1814
    %v2518 = vunpack.c.h.b16 %v1814
    %v2519 = vunpack.c.l.b16 %v1815
    %v2520 = vunpack.c.h.b16 %v1815
    %v2521 = vunpack.c.l.b16 %v1816
    %v2522 = vunpack.c.h.b16 %v1816
    %v2523 = vunpack.c.l.b16 %v1817
    %v2524 = vunpack.c.h.b16 %v1817
    %v2525 = vunpack.c.l.b16 %v1818
    %v2526 = vunpack.c.h.b16 %v1818
    %v2527 = vunpack.c.l.b16 %v1819
    %v2528 = vunpack.c.h.b16 %v1819
    %v2529 = vunpack.c.l.b16 %v1820
    %v2530 = vunpack.c.h.b16 %v1820
    %v2531 = vunpack.c.l.b16 %v1821
    %v2532 = vunpack.c.h.b16 %v1821
    %v2533 = vunpack.c.l.b16 %v1822
    %v2534 = vunpack.c.h.b16 %v1822
    %v2535 = vunpack.c.l.b16 %v1823
    %v2536 = vunpack.c.h.b16 %v1823
    %v2537 = vunpack.c.l.b16 %v1824
    %v2538 = vunpack.c.h.b16 %v1824
    %v2539 = vunpack.c.l.b16 %v1825
    %v2540 = vunpack.c.h.b16 %v1825
    %v2541 = vunpack.c.l.b16 %v1826
    %v2542 = vunpack.c.h.b16 %v1826
    %v2543 = vunpack.c.l.b16 %v1827
    %v2544 = vunpack.c.h.b16 %v1827
    %v2545 = vunpack.c.l.b16 %v1828
    %v2546 = vunpack.c.h.b16 %v1828
    %v2547 = vunpack.c.l.b16 %v1829
    %v2548 = vunpack.c.h.b16 %v1829
    %v2549 = vunpack.c.l.b16 %v1830
    %v2550 = vunpack.c.h.b16 %v1830
    %v2551 = vunpack.c.l.b16 %v1831
    %v2552 = vunpack.c.h.b16 %v1831
    %v2553 = vunpack.c.l.b16 %v1832
    %v2554 = vunpack.c.h.b16 %v1832
    %v2555 = vunpack.c.l.b16 %v1833
    %v2556 = vunpack.c.h.b16 %v1833
    %v2557 = vunpack.c.l.b16 %v1834
    %v2558 = vunpack.c.h.b16 %v1834
    %v2559 = vunpack.c.l.b16 %v1835
    %v2560 = vunpack.c.h.b16 %v1835
    %v2561 = vunpack.c.l.b16 %v1836
    %v2562 = vunpack.c.h.b16 %v1836
    %v2563 = vunpack.c.l.b16 %v1837
    %v2564 = vunpack.c.h.b16 %v1837
    %v2565 = vunpack.c.l.b16 %v1838
    %v2566 = vunpack.c.h.b16 %v1838
    %v2567 = vunpack.c.l.b16 %v1839
    %v2568 = vunpack.c.h.b16 %v1839
    %v2569 = vunpack.c.l.b16 %v1840
    %v2570 = vunpack.c.h.b16 %v1840
    %v2571 = vunpack.c.l.b16 %v1841
    %v2572 = vunpack.c.h.b16 %v1841
    %v2573 = vunpack.c.l.b16 %v1842
    %v2574 = vunpack.c.h.b16 %v1842
    %v2575 = vunpack.c.l.b16 %v1843
    %v2576 = vunpack.c.h.b16 %v1843
    %v2577 = vunpack.c.l.b16 %v1844
    %v2578 = vunpack.c.h.b16 %v1844
    %v2579 = vunpack.c.l.b16 %v1845
    %v2580 = vunpack.c.h.b16 %v1845
    %v2581 = vunpack.c.l.b16 %v1846
    %v2582 = vunpack.c.h.b16 %v1846
    %v2583 = vunpack.c.l.b16 %v1847
    %v2584 = vunpack.c.h.b16 %v1847
    %v2585 = vunpack.c.l.b16 %v1848
    %v2586 = vunpack.c.h.b16 %v1848
    %v2587 = vunpack.c.l.b16 %v1849
    %v2588 = vunpack.c.h.b16 %v1849
    %v2589 = vunpack.c.l.b16 %v1850
    %v2590 = vunpack.c.h.b16 %v1850
    %v2591 = vunpack.c.l.b16 %v1851
    %v2592 = vunpack.c.h.b16 %v1851
    %v2593 = vpack.c.b16 %v2473, %v2465
    %v2594 = vpack.c.b16 %v2474, %v2466
    %v2595 = vpack.c.b16 %v2475, %v2467
    %v2596 = vpack.c.b16 %v2476, %v2468
    %v2597 = vpack.c.b16 %v2477, %v2469
    %v2598 = vpack.c.b16 %v2478, %v2470
    %v2599 = vpack.c.b16 %v2479, %v2471
    %v2600 = vpack.c.b16 %v2480, %v2472
    %v2601 = vpack.c.b16 %v2489, %v2481
    %v2602 = vpack.c.b16 %v2490, %v2482
    %v2603 = vpack.c.b16 %v2491, %v2483
    %v2604 = vpack.c.b16 %v2492, %v2484
    %v2605 = vpack.c.b16 %v2493, %v2485
    %v2606 = vpack.c.b16 %v2494, %v2486
    %v2607 = vpack.c.b16 %v2495, %v2487
    %v2608 = vpack.c.b16 %v2496, %v2488
    %v2609 = vpack.c.b16 %v2505, %v2497
    %v2610 = vpack.c.b16 %v2506, %v2498
    %v2611 = vpack.c.b16 %v2507, %v2499
    %v2612 = vpack.c.b16 %v2508, %v2500
    %v2613 = vpack.c.b16 %v2509, %v2501
    %v2614 = vpack.c.b16 %v2510, %v2502
    %v2615 = vpack.c.b16 %v2511, %v2503
    %v2616 = vpack.c.b16 %v2512, %v2504
    %v2617 = vpack.c.b16 %v2521, %v2513
    %v2618 = vpack.c.b16 %v2522, %v2514
    %v2619 = vpack.c.b16 %v2523, %v2515
    %v2620 = vpack.c.b16 %v2524, %v2516
    %v2621 = vpack.c.b16 %v2525, %v2517
    %v2622 = vpack.c.b16 %v2526, %v2518
    %v2623 = vpack.c.b16 %v2527, %v2519
    %v2624 = vpack.c.b16 %v2528, %v2520
    %v2625 = vpack.c.b16 %v2537, %v2529
    %v2626 = vpack.c.b16 %v2538, %v2530
    %v2627 = vpack.c.b16 %v2539, %v2531
    %v2628 = vpack.c.b16 %v2540, %v2532
    %v2629 = vpack.c.b16 %v2541, %v2533
    %v2630 = vpack.c.b16 %v2542, %v2534
    %v2631 = vpack.c.b16 %v2543, %v2535
    %v2632 = vpack.c.b16 %v2544, %v2536
    %v2633 = vpack.c.b16 %v2553, %v2545
    %v2634 = vpack.c.b16 %v2554, %v2546
    %v2635 = vpack.c.b16 %v2555, %v2547
    %v2636 = vpack.c.b16 %v2556, %v2548
    %v2637 = vpack.c.b16 %v2557, %v2549
    %v2638 = vpack.c.b16 %v2558, %v2550
    %v2639 = vpack.c.b16 %v2559, %v2551
    %v2640 = vpack.c.b16 %v2560, %v2552
    %v2641 = vpack.c.b16 %v2569, %v2561
    %v2642 = vpack.c.b16 %v2570, %v2562
    %v2643 = vpack.c.b16 %v2571, %v2563
    %v2644 = vpack.c.b16 %v2572, %v2564
    %v2645 = vpack.c.b16 %v2573, %v2565
    %v2646 = vpack.c.b16 %v2574, %v2566
    %v2647 = vpack.c.b16 %v2575, %v2567
    %v2648 = vpack.c.b16 %v2576, %v2568
    %v2649 = vpack.c.b16 %v2585, %v2577
    %v2650 = vpack.c.b16 %v2586, %v2578
    %v2651 = vpack.c.b16 %v2587, %v2579
    %v2652 = vpack.c.b16 %v2588, %v2580
    %v2653 = vpack.c.b16 %v2589, %v2581
    %v2654 = vpack.c.b16 %v2590, %v2582
    %v2655 = vpack.c.b16 %v2591, %v2583
    %v2656 = vpack.c.b16 %v2592, %v2584
    %2721 = vmatprep.subr.bf16.mxu0 %v2650
    %2722 = vmatpush1.bf16.msra.mxu0 %v2649
    %2723 = vmatprep.subr.bf16.mxu0 %v2642
    %2724 = vmatpush1.bf16.msra.mxu0 %v2641
    %2725 = vmatprep.subr.bf16.mxu0 %v2634
    %2726 = vmatpush1.bf16.msra.mxu0 %v2633
    %2727 = vmatprep.subr.bf16.mxu0 %v2626
    %2728 = vmatpush1.bf16.msra.mxu0 %v2625
    %2729 = vmatprep.subr.bf16.mxu0 %v2618
    %2730 = vmatpush1.bf16.msra.mxu0 %v2617
    %2731 = vmatprep.subr.bf16.mxu0 %v2610
    %2732 = vmatpush1.bf16.msra.mxu0 %v2609
    %2733 = vmatprep.subr.bf16.mxu0 %v2602
    %2734 = vmatpush1.bf16.msra.mxu0 %v2601
    %2735 = vmatprep.subr.bf16.mxu0 %v2594
    %2736 = vmatpush1.bf16.msra.mxu0 %v2593
    %2737 = vmatprep.subr.bf16.mxu0 0
    %2738 = vmatpush2.bf16.msra.mxu0 0
    %2739 = vmatprep.subr.bf16.mxu0 0
    %2740 = vmatpush2.bf16.msra.mxu0 0
    %2741 = vmatprep.subr.bf16.mxu0 0
    %2742 = vmatpush2.bf16.msra.mxu0 0
    %2743 = vmatprep.subr.bf16.mxu0 0
    %2744 = vmatpush2.bf16.msra.mxu0 0
    %2745 = vmatprep.subr.bf16.mxu0 0
    %2746 = vmatpush2.bf16.msra.mxu0 0
    %2747 = vmatprep.subr.bf16.mxu0 0
    %2748 = vmatpush2.bf16.msra.mxu0 0
    %2749 = vmatprep.subr.bf16.mxu0 0
    %2750 = vmatpush2.bf16.msra.mxu0 0
    %2751 = vmatprep.subr.bf16.mxu0 0
    %2752 = vmatpush2.bf16.msra.mxu0 0
    %2753 = vmatprep.mubr.bf16.mxu0 0
    %2754 = vmatmul.mubr.bf16.gmra.mxu0 %v1787
    %v2755 = vpop.f32.mrf.mxu0
    %v2756 = vadd.f32 %v2272, %v2755
    %v2757 = vpop.f32.mrf.mxu0
    %v2758 = vadd.f32 %v2274, %v2757
    %v2759 = vpop.f32.mrf.mxu0
    %v2760 = vpop.f32.mrf.mxu0
    %2761 = vdwg.mxu0
    %2762 = vmatprep.subr.bf16.mxu0 %v2652
    %2763 = vmatpush1.bf16.msra.mxu0 %v2651
    %2764 = vmatprep.subr.bf16.mxu0 %v2644
    %2765 = vmatpush1.bf16.msra.mxu0 %v2643
    %2766 = vmatprep.subr.bf16.mxu0 %v2636
    %2767 = vmatpush1.bf16.msra.mxu0 %v2635
    %2768 = vmatprep.subr.bf16.mxu0 %v2628
    %2769 = vmatpush1.bf16.msra.mxu0 %v2627
    %2770 = vmatprep.subr.bf16.mxu0 %v2620
    %2771 = vmatpush1.bf16.msra.mxu0 %v2619
    %2772 = vmatprep.subr.bf16.mxu0 %v2612
    %2773 = vmatpush1.bf16.msra.mxu0 %v2611
    %2774 = vmatprep.subr.bf16.mxu0 %v2604
    %2775 = vmatpush1.bf16.msra.mxu0 %v2603
    %2776 = vmatprep.subr.bf16.mxu0 %v2596
    %2777 = vmatpush1.bf16.msra.mxu0 %v2595
    %2778 = vmatprep.subr.bf16.mxu0 0
    %2779 = vmatpush2.bf16.msra.mxu0 0
    %2780 = vmatprep.subr.bf16.mxu0 0
    %2781 = vmatpush2.bf16.msra.mxu0 0
    %2782 = vmatprep.subr.bf16.mxu0 0
    %2783 = vmatpush2.bf16.msra.mxu0 0
    %2784 = vmatprep.subr.bf16.mxu0 0
    %2785 = vmatpush2.bf16.msra.mxu0 0
    %2786 = vmatprep.subr.bf16.mxu0 0
    %2787 = vmatpush2.bf16.msra.mxu0 0
    %2788 = vmatprep.subr.bf16.mxu0 0
    %2789 = vmatpush2.bf16.msra.mxu0 0
    %2790 = vmatprep.subr.bf16.mxu0 0
    %2791 = vmatpush2.bf16.msra.mxu0 0
    %2792 = vmatprep.subr.bf16.mxu0 0
    %2793 = vmatpush2.bf16.msra.mxu0 0
    %2794 = vmatprep.mubr.bf16.mxu0 0
    %2795 = vmatmul.mubr.bf16.gmra.mxu0 %v1787
    %v2796 = vpop.f32.mrf.mxu0
    %v2797 = vadd.f32 %v2313, %v2796
    %v2798 = vpop.f32.mrf.mxu0
    %v2799 = vadd.f32 %v2315, %v2798
    %v2800 = vpop.f32.mrf.mxu0
    %v2801 = vpop.f32.mrf.mxu0
    %2802 = vdwg.mxu0
    %2803 = vmatprep.subr.bf16.mxu0 %v2654
    %2804 = vmatpush1.bf16.msra.mxu0 %v2653
    %2805 = vmatprep.subr.bf16.mxu0 %v2646
    %2806 = vmatpush1.bf16.msra.mxu0 %v2645
    %2807 = vmatprep.subr.bf16.mxu0 %v2638
    %2808 = vmatpush1.bf16.msra.mxu0 %v2637
    %2809 = vmatprep.subr.bf16.mxu0 %v2630
    %2810 = vmatpush1.bf16.msra.mxu0 %v2629
    %2811 = vmatprep.subr.bf16.mxu0 %v2622
    %2812 = vmatpush1.bf16.msra.mxu0 %v2621
    %2813 = vmatprep.subr.bf16.mxu0 %v2614
    %2814 = vmatpush1.bf16.msra.mxu0 %v2613
    %2815 = vmatprep.subr.bf16.mxu0 %v2606
    %2816 = vmatpush1.bf16.msra.mxu0 %v2605
    %2817 = vmatprep.subr.bf16.mxu0 %v2598
    %2818 = vmatpush1.bf16.msra.mxu0 %v2597
    %2819 = vmatprep.subr.bf16.mxu0 0
    %2820 = vmatpush2.bf16.msra.mxu0 0
    %2821 = vmatprep.subr.bf16.mxu0 0
    %2822 = vmatpush2.bf16.msra.mxu0 0
    %2823 = vmatprep.subr.bf16.mxu0 0
    %2824 = vmatpush2.bf16.msra.mxu0 0
    %2825 = vmatprep.subr.bf16.mxu0 0
    %2826 = vmatpush2.bf16.msra.mxu0 0
    %2827 = vmatprep.subr.bf16.mxu0 0
    %2828 = vmatpush2.bf16.msra.mxu0 0
    %2829 = vmatprep.subr.bf16.mxu0 0
    %2830 = vmatpush2.bf16.msra.mxu0 0
    %2831 = vmatprep.subr.bf16.mxu0 0
    %2832 = vmatpush2.bf16.msra.mxu0 0
    %2833 = vmatprep.subr.bf16.mxu0 0
    %2834 = vmatpush2.bf16.msra.mxu0 0
    %2835 = vmatprep.mubr.bf16.mxu0 0
    %2836 = vmatmul.mubr.bf16.gmra.mxu0 %v1787
    %v2837 = vpop.f32.mrf.mxu0
    %v2838 = vadd.f32 %v2354, %v2837
    %v2839 = vpop.f32.mrf.mxu0
    %v2840 = vadd.f32 %v2356, %v2839
    %v2841 = vpop.f32.mrf.mxu0
    %v2842 = vpop.f32.mrf.mxu0
    %2843 = vdwg.mxu0
    %2844 = vmatprep.subr.bf16.mxu0 %v2656
    %2845 = vmatpush1.bf16.msra.mxu0 %v2655
    %2846 = vmatprep.subr.bf16.mxu0 %v2648
    %2847 = vmatpush1.bf16.msra.mxu0 %v2647
    %2848 = vmatprep.subr.bf16.mxu0 %v2640
    %2849 = vmatpush1.bf16.msra.mxu0 %v2639
    %2850 = vmatprep.subr.bf16.mxu0 %v2632
    %2851 = vmatpush1.bf16.msra.mxu0 %v2631
    %2852 = vmatprep.subr.bf16.mxu0 %v2624
    %2853 = vmatpush1.bf16.msra.mxu0 %v2623
    %2854 = vmatprep.subr.bf16.mxu0 %v2616
    %2855 = vmatpush1.bf16.msra.mxu0 %v2615
    %2856 = vmatprep.subr.bf16.mxu0 %v2608
    %2857 = vmatpush1.bf16.msra.mxu0 %v2607
    %2858 = vmatprep.subr.bf16.mxu0 %v2600
    %2859 = vmatpush1.bf16.msra.mxu0 %v2599
    %2860 = vmatprep.subr.bf16.mxu0 0
    %2861 = vmatpush2.bf16.msra.mxu0 0
    %2862 = vmatprep.subr.bf16.mxu0 0
    %2863 = vmatpush2.bf16.msra.mxu0 0
    %2864 = vmatprep.subr.bf16.mxu0 0
    %2865 = vmatpush2.bf16.msra.mxu0 0
    %2866 = vmatprep.subr.bf16.mxu0 0
    %2867 = vmatpush2.bf16.msra.mxu0 0
    %2868 = vmatprep.subr.bf16.mxu0 0
    %2869 = vmatpush2.bf16.msra.mxu0 0
    %2870 = vmatprep.subr.bf16.mxu0 0
    %2871 = vmatpush2.bf16.msra.mxu0 0
    %2872 = vmatprep.subr.bf16.mxu0 0
    %2873 = vmatpush2.bf16.msra.mxu0 0
    %2874 = vmatprep.subr.bf16.mxu0 0
    %2875 = vmatpush2.bf16.msra.mxu0 0
    %2876 = vmatprep.mubr.bf16.mxu0 0
    %2877 = vmatmul.mubr.bf16.gmra.mxu0 %v1787
    %v2878 = vpop.f32.mrf.mxu0
    %v2879 = vadd.f32 %v2395, %v2878
    %v2880 = vpop.f32.mrf.mxu0
    %v2881 = vadd.f32 %v2397, %v2880
    %v2882 = vpop.f32.mrf.mxu0
    %v2883 = vpop.f32.mrf.mxu0
    %2884 = vdwg.mxu0
    %v2885 = vpack.c.bf16 %v1773, %v1773
    %v2886 = vld [vmem:[#allocation9 + $0x400] sm:$0xff]
    %v2887 = vld [vmem:[#allocation9 + $0x408] sm:$0xff]
    %v2888 = vld [vmem:[#allocation9 + $0x410] sm:$0xff]
    %v2889 = vld [vmem:[#allocation9 + $0x418] sm:$0xff]
    %v2890 = vld [vmem:[#allocation9 + $0x420] sm:$0xff]
    %v2891 = vld [vmem:[#allocation9 + $0x428] sm:$0xff]
    %v2892 = vld [vmem:[#allocation9 + $0x430] sm:$0xff]
    %v2893 = vld [vmem:[#allocation9 + $0x438] sm:$0xff]
    %v2894 = vld [vmem:[#allocation9 + $0x440] sm:$0xff]
    %v2895 = vld [vmem:[#allocation9 + $0x448] sm:$0xff]
    %v2896 = vld [vmem:[#allocation9 + $0x450] sm:$0xff]
    %v2897 = vld [vmem:[#allocation9 + $0x458] sm:$0xff]
    %v2898 = vld [vmem:[#allocation9 + $0x460] sm:$0xff]
    %v2899 = vld [vmem:[#allocation9 + $0x468] sm:$0xff]
    %v2900 = vld [vmem:[#allocation9 + $0x470] sm:$0xff]
    %v2901 = vld [vmem:[#allocation9 + $0x478] sm:$0xff]
    %v2902 = vld [vmem:[#allocation9 + $0x480] sm:$0xff]
    %v2903 = vld [vmem:[#allocation9 + $0x488] sm:$0xff]
    %v2904 = vld [vmem:[#allocation9 + $0x490] sm:$0xff]
    %v2905 = vld [vmem:[#allocation9 + $0x498] sm:$0xff]
    %v2906 = vld [vmem:[#allocation9 + $0x4a0] sm:$0xff]
    %v2907 = vld [vmem:[#allocation9 + $0x4a8] sm:$0xff]
    %v2908 = vld [vmem:[#allocation9 + $0x4b0] sm:$0xff]
    %v2909 = vld [vmem:[#allocation9 + $0x4b8] sm:$0xff]
    %v2910 = vld [vmem:[#allocation9 + $0x4c0] sm:$0xff]
    %v2911 = vld [vmem:[#allocation9 + $0x4c8] sm:$0xff]
    %v2912 = vld [vmem:[#allocation9 + $0x4d0] sm:$0xff]
    %v2913 = vld [vmem:[#allocation9 + $0x4d8] sm:$0xff]
    %v2914 = vld [vmem:[#allocation9 + $0x4e0] sm:$0xff]
    %v2915 = vld [vmem:[#allocation9 + $0x4e8] sm:$0xff]
    %v2916 = vld [vmem:[#allocation9 + $0x4f0] sm:$0xff]
    %v2917 = vld [vmem:[#allocation9 + $0x4f8] sm:$0xff]
    %v2918 = vld [vmem:[#allocation9 + $0x500] sm:$0xff]
    %v2919 = vld [vmem:[#allocation9 + $0x508] sm:$0xff]
    %v2920 = vld [vmem:[#allocation9 + $0x510] sm:$0xff]
    %v2921 = vld [vmem:[#allocation9 + $0x518] sm:$0xff]
    %v2922 = vld [vmem:[#allocation9 + $0x520] sm:$0xff]
    %v2923 = vld [vmem:[#allocation9 + $0x528] sm:$0xff]
    %v2924 = vld [vmem:[#allocation9 + $0x530] sm:$0xff]
    %v2925 = vld [vmem:[#allocation9 + $0x538] sm:$0xff]
    %v2926 = vld [vmem:[#allocation9 + $0x540] sm:$0xff]
    %v2927 = vld [vmem:[#allocation9 + $0x548] sm:$0xff]
    %v2928 = vld [vmem:[#allocation9 + $0x550] sm:$0xff]
    %v2929 = vld [vmem:[#allocation9 + $0x558] sm:$0xff]
    %v2930 = vld [vmem:[#allocation9 + $0x560] sm:$0xff]
    %v2931 = vld [vmem:[#allocation9 + $0x568] sm:$0xff]
    %v2932 = vld [vmem:[#allocation9 + $0x570] sm:$0xff]
    %v2933 = vld [vmem:[#allocation9 + $0x578] sm:$0xff]
    %v2934 = vld [vmem:[#allocation9 + $0x580] sm:$0xff]
    %v2935 = vld [vmem:[#allocation9 + $0x588] sm:$0xff]
    %v2936 = vld [vmem:[#allocation9 + $0x590] sm:$0xff]
    %v2937 = vld [vmem:[#allocation9 + $0x598] sm:$0xff]
    %v2938 = vld [vmem:[#allocation9 + $0x5a0] sm:$0xff]
    %v2939 = vld [vmem:[#allocation9 + $0x5a8] sm:$0xff]
    %v2940 = vld [vmem:[#allocation9 + $0x5b0] sm:$0xff]
    %v2941 = vld [vmem:[#allocation9 + $0x5b8] sm:$0xff]
    %v2942 = vld [vmem:[#allocation9 + $0x5c0] sm:$0xff]
    %v2943 = vld [vmem:[#allocation9 + $0x5c8] sm:$0xff]
    %v2944 = vld [vmem:[#allocation9 + $0x5d0] sm:$0xff]
    %v2945 = vld [vmem:[#allocation9 + $0x5d8] sm:$0xff]
    %v2946 = vld [vmem:[#allocation9 + $0x5e0] sm:$0xff]
    %v2947 = vld [vmem:[#allocation9 + $0x5e8] sm:$0xff]
    %v2948 = vld [vmem:[#allocation9 + $0x5f0] sm:$0xff]
    %v2949 = vld [vmem:[#allocation9 + $0x5f8] sm:$0xff]
    %v3014 = vunpack.c.l.b16 %v2886
    %v3015 = vunpack.c.h.b16 %v2886
    %v3016 = vunpack.c.l.b16 %v2887
    %v3017 = vunpack.c.h.b16 %v2887
    %v3018 = vunpack.c.l.b16 %v2888
    %v3019 = vunpack.c.h.b16 %v2888
    %v3020 = vunpack.c.l.b16 %v2889
    %v3021 = vunpack.c.h.b16 %v2889
    %v3022 = vunpack.c.l.b16 %v2890
    %v3023 = vunpack.c.h.b16 %v2890
    %v3024 = vunpack.c.l.b16 %v2891
    %v3025 = vunpack.c.h.b16 %v2891
    %v3026 = vunpack.c.l.b16 %v2892
    %v3027 = vunpack.c.h.b16 %v2892
    %v3028 = vunpack.c.l.b16 %v2893
    %v3029 = vunpack.c.h.b16 %v2893
    %v3030 = vunpack.c.l.b16 %v2894
    %v3031 = vunpack.c.h.b16 %v2894
    %v3032 = vunpack.c.l.b16 %v2895
    %v3033 = vunpack.c.h.b16 %v2895
    %v3034 = vunpack.c.l.b16 %v2896
    %v3035 = vunpack.c.h.b16 %v2896
    %v3036 = vunpack.c.l.b16 %v2897
    %v3037 = vunpack.c.h.b16 %v2897
    %v3038 = vunpack.c.l.b16 %v2898
    %v3039 = vunpack.c.h.b16 %v2898
    %v3040 = vunpack.c.l.b16 %v2899
    %v3041 = vunpack.c.h.b16 %v2899
    %v3042 = vunpack.c.l.b16 %v2900
    %v3043 = vunpack.c.h.b16 %v2900
    %v3044 = vunpack.c.l.b16 %v2901
    %v3045 = vunpack.c.h.b16 %v2901
    %v3046 = vunpack.c.l.b16 %v2902
    %v3047 = vunpack.c.h.b16 %v2902
    %v3048 = vunpack.c.l.b16 %v2903
    %v3049 = vunpack.c.h.b16 %v2903
    %v3050 = vunpack.c.l.b16 %v2904
    %v3051 = vunpack.c.h.b16 %v2904
    %v3052 = vunpack.c.l.b16 %v2905
    %v3053 = vunpack.c.h.b16 %v2905
    %v3054 = vunpack.c.l.b16 %v2906
    %v3055 = vunpack.c.h.b16 %v2906
    %v3056 = vunpack.c.l.b16 %v2907
    %v3057 = vunpack.c.h.b16 %v2907
    %v3058 = vunpack.c.l.b16 %v2908
    %v3059 = vunpack.c.h.b16 %v2908
    %v3060 = vunpack.c.l.b16 %v2909
    %v3061 = vunpack.c.h.b16 %v2909
    %v3062 = vunpack.c.l.b16 %v2910
    %v3063 = vunpack.c.h.b16 %v2910
    %v3064 = vunpack.c.l.b16 %v2911
    %v3065 = vunpack.c.h.b16 %v2911
    %v3066 = vunpack.c.l.b16 %v2912
    %v3067 = vunpack.c.h.b16 %v2912
    %v3068 = vunpack.c.l.b16 %v2913
    %v3069 = vunpack.c.h.b16 %v2913
    %v3070 = vunpack.c.l.b16 %v2914
    %v3071 = vunpack.c.h.b16 %v2914
    %v3072 = vunpack.c.l.b16 %v2915
    %v3073 = vunpack.c.h.b16 %v2915
    %v3074 = vunpack.c.l.b16 %v2916
    %v3075 = vunpack.c.h.b16 %v2916
    %v3076 = vunpack.c.l.b16 %v2917
    %v3077 = vunpack.c.h.b16 %v2917
    %v3078 = vunpack.c.l.b16 %v2918
    %v3079 = vunpack.c.h.b16 %v2918
    %v3080 = vunpack.c.l.b16 %v2919
    %v3081 = vunpack.c.h.b16 %v2919
    %v3082 = vunpack.c.l.b16 %v2920
    %v3083 = vunpack.c.h.b16 %v2920
    %v3084 = vunpack.c.l.b16 %v2921
    %v3085 = vunpack.c.h.b16 %v2921
    %v3086 = vunpack.c.l.b16 %v2922
    %v3087 = vunpack.c.h.b16 %v2922
    %v3088 = vunpack.c.l.b16 %v2923
    %v3089 = vunpack.c.h.b16 %v2923
    %v3090 = vunpack.c.l.b16 %v2924
    %v3091 = vunpack.c.h.b16 %v2924
    %v3092 = vunpack.c.l.b16 %v2925
    %v3093 = vunpack.c.h.b16 %v2925
    %v3094 = vunpack.c.l.b16 %v2926
    %v3095 = vunpack.c.h.b16 %v2926
    %v3096 = vunpack.c.l.b16 %v2927
    %v3097 = vunpack.c.h.b16 %v2927
    %v3098 = vunpack.c.l.b16 %v2928
    %v3099 = vunpack.c.h.b16 %v2928
    %v3100 = vunpack.c.l.b16 %v2929
    %v3101 = vunpack.c.h.b16 %v2929
    %v3102 = vunpack.c.l.b16 %v2930
    %v3103 = vunpack.c.h.b16 %v2930
    %v3104 = vunpack.c.l.b16 %v2931
    %v3105 = vunpack.c.h.b16 %v2931
    %v3106 = vunpack.c.l.b16 %v2932
    %v3107 = vunpack.c.h.b16 %v2932
    %v3108 = vunpack.c.l.b16 %v2933
    %v3109 = vunpack.c.h.b16 %v2933
    %v3110 = vunpack.c.l.b16 %v2934
    %v3111 = vunpack.c.h.b16 %v2934
    %v3112 = vunpack.c.l.b16 %v2935
    %v3113 = vunpack.c.h.b16 %v2935
    %v3114 = vunpack.c.l.b16 %v2936
    %v3115 = vunpack.c.h.b16 %v2936
    %v3116 = vunpack.c.l.b16 %v2937
    %v3117 = vunpack.c.h.b16 %v2937
    %v3118 = vunpack.c.l.b16 %v2938
    %v3119 = vunpack.c.h.b16 %v2938
    %v3120 = vunpack.c.l.b16 %v2939
    %v3121 = vunpack.c.h.b16 %v2939
    %v3122 = vunpack.c.l.b16 %v2940
    %v3123 = vunpack.c.h.b16 %v2940
    %v3124 = vunpack.c.l.b16 %v2941
    %v3125 = vunpack.c.h.b16 %v2941
    %v3126 = vunpack.c.l.b16 %v2942
    %v3127 = vunpack.c.h.b16 %v2942
    %v3128 = vunpack.c.l.b16 %v2943
    %v3129 = vunpack.c.h.b16 %v2943
    %v3130 = vunpack.c.l.b16 %v2944
    %v3131 = vunpack.c.h.b16 %v2944
    %v3132 = vunpack.c.l.b16 %v2945
    %v3133 = vunpack.c.h.b16 %v2945
    %v3134 = vunpack.c.l.b16 %v2946
    %v3135 = vunpack.c.h.b16 %v2946
    %v3136 = vunpack.c.l.b16 %v2947
    %v3137 = vunpack.c.h.b16 %v2947
    %v3138 = vunpack.c.l.b16 %v2948
    %v3139 = vunpack.c.h.b16 %v2948
    %v3140 = vunpack.c.l.b16 %v2949
    %v3141 = vunpack.c.h.b16 %v2949
    %v3142 = vpack.c.b16 %v3022, %v3014
    %v3143 = vpack.c.b16 %v3023, %v3015
    %v3144 = vpack.c.b16 %v3024, %v3016
    %v3145 = vpack.c.b16 %v3025, %v3017
    %v3146 = vpack.c.b16 %v3026, %v3018
    %v3147 = vpack.c.b16 %v3027, %v3019
    %v3148 = vpack.c.b16 %v3028, %v3020
    %v3149 = vpack.c.b16 %v3029, %v3021
    %v3150 = vpack.c.b16 %v3038, %v3030
    %v3151 = vpack.c.b16 %v3039, %v3031
    %v3152 = vpack.c.b16 %v3040, %v3032
    %v3153 = vpack.c.b16 %v3041, %v3033
    %v3154 = vpack.c.b16 %v3042, %v3034
    %v3155 = vpack.c.b16 %v3043, %v3035
    %v3156 = vpack.c.b16 %v3044, %v3036
    %v3157 = vpack.c.b16 %v3045, %v3037
    %v3158 = vpack.c.b16 %v3054, %v3046
    %v3159 = vpack.c.b16 %v3055, %v3047
    %v3160 = vpack.c.b16 %v3056, %v3048
    %v3161 = vpack.c.b16 %v3057, %v3049
    %v3162 = vpack.c.b16 %v3058, %v3050
    %v3163 = vpack.c.b16 %v3059, %v3051
    %v3164 = vpack.c.b16 %v3060, %v3052
    %v3165 = vpack.c.b16 %v3061, %v3053
    %v3166 = vpack.c.b16 %v3070, %v3062
    %v3167 = vpack.c.b16 %v3071, %v3063
    %v3168 = vpack.c.b16 %v3072, %v3064
    %v3169 = vpack.c.b16 %v3073, %v3065
    %v3170 = vpack.c.b16 %v3074, %v3066
    %v3171 = vpack.c.b16 %v3075, %v3067
    %v3172 = vpack.c.b16 %v3076, %v3068
    %v3173 = vpack.c.b16 %v3077, %v3069
    %v3174 = vpack.c.b16 %v3086, %v3078
    %v3175 = vpack.c.b16 %v3087, %v3079
    %v3176 = vpack.c.b16 %v3088, %v3080
    %v3177 = vpack.c.b16 %v3089, %v3081
    %v3178 = vpack.c.b16 %v3090, %v3082
    %v3179 = vpack.c.b16 %v3091, %v3083
    %v3180 = vpack.c.b16 %v3092, %v3084
    %v3181 = vpack.c.b16 %v3093, %v3085
    %v3182 = vpack.c.b16 %v3102, %v3094
    %v3183 = vpack.c.b16 %v3103, %v3095
    %v3184 = vpack.c.b16 %v3104, %v3096
    %v3185 = vpack.c.b16 %v3105, %v3097
    %v3186 = vpack.c.b16 %v3106, %v3098
    %v3187 = vpack.c.b16 %v3107, %v3099
    %v3188 = vpack.c.b16 %v3108, %v3100
    %v3189 = vpack.c.b16 %v3109, %v3101
    %v3190 = vpack.c.b16 %v3118, %v3110
    %v3191 = vpack.c.b16 %v3119, %v3111
    %v3192 = vpack.c.b16 %v3120, %v3112
    %v3193 = vpack.c.b16 %v3121, %v3113
    %v3194 = vpack.c.b16 %v3122, %v3114
    %v3195 = vpack.c.b16 %v3123, %v3115
    %v3196 = vpack.c.b16 %v3124, %v3116
    %v3197 = vpack.c.b16 %v3125, %v3117
    %v3198 = vpack.c.b16 %v3134, %v3126
    %v3199 = vpack.c.b16 %v3135, %v3127
    %v3200 = vpack.c.b16 %v3136, %v3128
    %v3201 = vpack.c.b16 %v3137, %v3129
    %v3202 = vpack.c.b16 %v3138, %v3130
    %v3203 = vpack.c.b16 %v3139, %v3131
    %v3204 = vpack.c.b16 %v3140, %v3132
    %v3205 = vpack.c.b16 %v3141, %v3133
    %3270 = vmatprep.subr.bf16.mxu0 %v3199
    %3271 = vmatpush1.bf16.msra.mxu0 %v3198
    %3272 = vmatprep.subr.bf16.mxu0 %v3191
    %3273 = vmatpush1.bf16.msra.mxu0 %v3190
    %3274 = vmatprep.subr.bf16.mxu0 %v3183
    %3275 = vmatpush1.bf16.msra.mxu0 %v3182
    %3276 = vmatprep.subr.bf16.mxu0 %v3175
    %3277 = vmatpush1.bf16.msra.mxu0 %v3174
    %3278 = vmatprep.subr.bf16.mxu0 %v3167
    %3279 = vmatpush1.bf16.msra.mxu0 %v3166
    %3280 = vmatprep.subr.bf16.mxu0 %v3159
    %3281 = vmatpush1.bf16.msra.mxu0 %v3158
    %3282 = vmatprep.subr.bf16.mxu0 %v3151
    %3283 = vmatpush1.bf16.msra.mxu0 %v3150
    %3284 = vmatprep.subr.bf16.mxu0 %v3143
    %3285 = vmatpush1.bf16.msra.mxu0 %v3142
    %3286 = vmatprep.subr.bf16.mxu0 0
    %3287 = vmatpush2.bf16.msra.mxu0 0
    %3288 = vmatprep.subr.bf16.mxu0 0
    %3289 = vmatpush2.bf16.msra.mxu0 0
    %3290 = vmatprep.subr.bf16.mxu0 0
    %3291 = vmatpush2.bf16.msra.mxu0 0
    %3292 = vmatprep.subr.bf16.mxu0 0
    %3293 = vmatpush2.bf16.msra.mxu0 0
    %3294 = vmatprep.subr.bf16.mxu0 0
    %3295 = vmatpush2.bf16.msra.mxu0 0
    %3296 = vmatprep.subr.bf16.mxu0 0
    %3297 = vmatpush2.bf16.msra.mxu0 0
    %3298 = vmatprep.subr.bf16.mxu0 0
    %3299 = vmatpush2.bf16.msra.mxu0 0
    %3300 = vmatprep.subr.bf16.mxu0 0
    %3301 = vmatpush2.bf16.msra.mxu0 0
    %3302 = vmatprep.mubr.bf16.mxu0 0
    %3303 = vmatmul.mubr.bf16.gmra.mxu0 %v2885
    %v3304 = vpop.f32.mrf.mxu0
    %v3305 = vadd.f32 0.0, %v3304
    %v3306 = vpop.f32.mrf.mxu0
    %v3307 = vadd.f32 0.0, %v3306
    %v3308 = vpop.f32.mrf.mxu0
    %v3309 = vpop.f32.mrf.mxu0
    %3310 = vdwg.mxu0
    %3311 = vmatprep.subr.bf16.mxu0 %v3201
    %3312 = vmatpush1.bf16.msra.mxu0 %v3200
    %3313 = vmatprep.subr.bf16.mxu0 %v3193
    %3314 = vmatpush1.bf16.msra.mxu0 %v3192
    %3315 = vmatprep.subr.bf16.mxu0 %v3185
    %3316 = vmatpush1.bf16.msra.mxu0 %v3184
    %3317 = vmatprep.subr.bf16.mxu0 %v3177
    %3318 = vmatpush1.bf16.msra.mxu0 %v3176
    %3319 = vmatprep.subr.bf16.mxu0 %v3169
    %3320 = vmatpush1.bf16.msra.mxu0 %v3168
    %3321 = vmatprep.subr.bf16.mxu0 %v3161
    %3322 = vmatpush1.bf16.msra.mxu0 %v3160
    %3323 = vmatprep.subr.bf16.mxu0 %v3153
    %3324 = vmatpush1.bf16.msra.mxu0 %v3152
    %3325 = vmatprep.subr.bf16.mxu0 %v3145
    %3326 = vmatpush1.bf16.msra.mxu0 %v3144
    %3327 = vmatprep.subr.bf16.mxu0 0
    %3328 = vmatpush2.bf16.msra.mxu0 0
    %3329 = vmatprep.subr.bf16.mxu0 0
    %3330 = vmatpush2.bf16.msra.mxu0 0
    %3331 = vmatprep.subr.bf16.mxu0 0
    %3332 = vmatpush2.bf16.msra.mxu0 0
    %3333 = vmatprep.subr.bf16.mxu0 0
    %3334 = vmatpush2.bf16.msra.mxu0 0
    %3335 = vmatprep.subr.bf16.mxu0 0
    %3336 = vmatpush2.bf16.msra.mxu0 0
    %3337 = vmatprep.subr.bf16.mxu0 0
    %3338 = vmatpush2.bf16.msra.mxu0 0
    %3339 = vmatprep.subr.bf16.mxu0 0
    %3340 = vmatpush2.bf16.msra.mxu0 0
    %3341 = vmatprep.subr.bf16.mxu0 0
    %3342 = vmatpush2.bf16.msra.mxu0 0
    %3343 = vmatprep.mubr.bf16.mxu0 0
    %3344 = vmatmul.mubr.bf16.gmra.mxu0 %v2885
    %v3345 = vpop.f32.mrf.mxu0
    %v3346 = vadd.f32 0.0, %v3345
    %v3347 = vpop.f32.mrf.mxu0
    %v3348 = vadd.f32 0.0, %v3347
    %v3349 = vpop.f32.mrf.mxu0
    %v3350 = vpop.f32.mrf.mxu0
    %3351 = vdwg.mxu0
    %3352 = vmatprep.subr.bf16.mxu0 %v3203
    %3353 = vmatpush1.bf16.msra.mxu0 %v3202
    %3354 = vmatprep.subr.bf16.mxu0 %v3195
    %3355 = vmatpush1.bf16.msra.mxu0 %v3194
    %3356 = vmatprep.subr.bf16.mxu0 %v3187
    %3357 = vmatpush1.bf16.msra.mxu0 %v3186
    %3358 = vmatprep.subr.bf16.mxu0 %v3179
    %3359 = vmatpush1.bf16.msra.mxu0 %v3178
    %3360 = vmatprep.subr.bf16.mxu0 %v3171
    %3361 = vmatpush1.bf16.msra.mxu0 %v3170
    %3362 = vmatprep.subr.bf16.mxu0 %v3163
    %3363 = vmatpush1.bf16.msra.mxu0 %v3162
    %3364 = vmatprep.subr.bf16.mxu0 %v3155
    %3365 = vmatpush1.bf16.msra.mxu0 %v3154
    %3366 = vmatprep.subr.bf16.mxu0 %v3147
    %3367 = vmatpush1.bf16.msra.mxu0 %v3146
    %3368 = vmatprep.subr.bf16.mxu0 0
    %3369 = vmatpush2.bf16.msra.mxu0 0
    %3370 = vmatprep.subr.bf16.mxu0 0
    %3371 = vmatpush2.bf16.msra.mxu0 0
    %3372 = vmatprep.subr.bf16.mxu0 0
    %3373 = vmatpush2.bf16.msra.mxu0 0
    %3374 = vmatprep.subr.bf16.mxu0 0
    %3375 = vmatpush2.bf16.msra.mxu0 0
    %3376 = vmatprep.subr.bf16.mxu0 0
    %3377 = vmatpush2.bf16.msra.mxu0 0
    %3378 = vmatprep.subr.bf16.mxu0 0
    %3379 = vmatpush2.bf16.msra.mxu0 0
    %3380 = vmatprep.subr.bf16.mxu0 0
    %3381 = vmatpush2.bf16.msra.mxu0 0
    %3382 = vmatprep.subr.bf16.mxu0 0
    %3383 = vmatpush2.bf16.msra.mxu0 0
    %3384 = vmatprep.mubr.bf16.mxu0 0
    %3385 = vmatmul.mubr.bf16.gmra.mxu0 %v2885
    %v3386 = vpop.f32.mrf.mxu0
    %v3387 = vadd.f32 0.0, %v3386
    %v3388 = vpop.f32.mrf.mxu0
    %v3389 = vadd.f32 0.0, %v3388
    %v3390 = vpop.f32.mrf.mxu0
    %v3391 = vpop.f32.mrf.mxu0
    %3392 = vdwg.mxu0
    %3393 = vmatprep.subr.bf16.mxu0 %v3205
    %3394 = vmatpush1.bf16.msra.mxu0 %v3204
    %3395 = vmatprep.subr.bf16.mxu0 %v3197
    %3396 = vmatpush1.bf16.msra.mxu0 %v3196
    %3397 = vmatprep.subr.bf16.mxu0 %v3189
    %3398 = vmatpush1.bf16.msra.mxu0 %v3188
    %3399 = vmatprep.subr.bf16.mxu0 %v3181
    %3400 = vmatpush1.bf16.msra.mxu0 %v3180
    %3401 = vmatprep.subr.bf16.mxu0 %v3173
    %3402 = vmatpush1.bf16.msra.mxu0 %v3172
    %3403 = vmatprep.subr.bf16.mxu0 %v3165
    %3404 = vmatpush1.bf16.msra.mxu0 %v3164
    %3405 = vmatprep.subr.bf16.mxu0 %v3157
    %3406 = vmatpush1.bf16.msra.mxu0 %v3156
    %3407 = vmatprep.subr.bf16.mxu0 %v3149
    %3408 = vmatpush1.bf16.msra.mxu0 %v3148
    %3409 = vmatprep.subr.bf16.mxu0 0
    %3410 = vmatpush2.bf16.msra.mxu0 0
    %3411 = vmatprep.subr.bf16.mxu0 0
    %3412 = vmatpush2.bf16.msra.mxu0 0
    %3413 = vmatprep.subr.bf16.mxu0 0
    %3414 = vmatpush2.bf16.msra.mxu0 0
    %3415 = vmatprep.subr.bf16.mxu0 0
    %3416 = vmatpush2.bf16.msra.mxu0 0
    %3417 = vmatprep.subr.bf16.mxu0 0
    %3418 = vmatpush2.bf16.msra.mxu0 0
    %3419 = vmatprep.subr.bf16.mxu0 0
    %3420 = vmatpush2.bf16.msra.mxu0 0
    %3421 = vmatprep.subr.bf16.mxu0 0
    %3422 = vmatpush2.bf16.msra.mxu0 0
    %3423 = vmatprep.subr.bf16.mxu0 0
    %3424 = vmatpush2.bf16.msra.mxu0 0
    %3425 = vmatprep.mubr.bf16.mxu0 0
    %3426 = vmatmul.mubr.bf16.gmra.mxu0 %v2885
    %v3427 = vpop.f32.mrf.mxu0
    %v3428 = vadd.f32 0.0, %v3427
    %v3429 = vpop.f32.mrf.mxu0
    %v3430 = vadd.f32 0.0, %v3429
    %v3431 = vpop.f32.mrf.mxu0
    %v3432 = vpop.f32.mrf.mxu0
    %3433 = vdwg.mxu0
    %v3434 = vadd.f32 %v2756, %v3305
    %v3435 = vadd.f32 %v2758, %v3307
    %v3436 = vadd.f32 %v2797, %v3346
    %v3437 = vadd.f32 %v2799, %v3348
    %v3438 = vadd.f32 %v2838, %v3387
    %v3439 = vadd.f32 %v2840, %v3389
    %v3440 = vadd.f32 %v2879, %v3428
    %v3441 = vadd.f32 %v2881, %v3430
    %v3442 = vpack.c.bf16 %v1774, %v1774
    %v3443 = vld [vmem:[#allocation9 + $0x600] sm:$0xff]
    %v3444 = vld [vmem:[#allocation9 + $0x608] sm:$0xff]
    %v3445 = vld [vmem:[#allocation9 + $0x610] sm:$0xff]
    %v3446 = vld [vmem:[#allocation9 + $0x618] sm:$0xff]
    %v3447 = vld [vmem:[#allocation9 + $0x620] sm:$0xff]
    %v3448 = vld [vmem:[#allocation9 + $0x628] sm:$0xff]
    %v3449 = vld [vmem:[#allocation9 + $0x630] sm:$0xff]
    %v3450 = vld [vmem:[#allocation9 + $0x638] sm:$0xff]
    %v3451 = vld [vmem:[#allocation9 + $0x640] sm:$0xff]
    %v3452 = vld [vmem:[#allocation9 + $0x648] sm:$0xff]
    %v3453 = vld [vmem:[#allocation9 + $0x650] sm:$0xff]
    %v3454 = vld [vmem:[#allocation9 + $0x658] sm:$0xff]
    %v3455 = vld [vmem:[#allocation9 + $0x660] sm:$0xff]
    %v3456 = vld [vmem:[#allocation9 + $0x668] sm:$0xff]
    %v3457 = vld [vmem:[#allocation9 + $0x670] sm:$0xff]
    %v3458 = vld [vmem:[#allocation9 + $0x678] sm:$0xff]
    %v3459 = vld [vmem:[#allocation9 + $0x680] sm:$0xff]
    %v3460 = vld [vmem:[#allocation9 + $0x688] sm:$0xff]
    %v3461 = vld [vmem:[#allocation9 + $0x690] sm:$0xff]
    %v3462 = vld [vmem:[#allocation9 + $0x698] sm:$0xff]
    %v3463 = vld [vmem:[#allocation9 + $0x6a0] sm:$0xff]
    %v3464 = vld [vmem:[#allocation9 + $0x6a8] sm:$0xff]
    %v3465 = vld [vmem:[#allocation9 + $0x6b0] sm:$0xff]
    %v3466 = vld [vmem:[#allocation9 + $0x6b8] sm:$0xff]
    %v3467 = vld [vmem:[#allocation9 + $0x6c0] sm:$0xff]
    %v3468 = vld [vmem:[#allocation9 + $0x6c8] sm:$0xff]
    %v3469 = vld [vmem:[#allocation9 + $0x6d0] sm:$0xff]
    %v3470 = vld [vmem:[#allocation9 + $0x6d8] sm:$0xff]
    %v3471 = vld [vmem:[#allocation9 + $0x6e0] sm:$0xff]
    %v3472 = vld [vmem:[#allocation9 + $0x6e8] sm:$0xff]
    %v3473 = vld [vmem:[#allocation9 + $0x6f0] sm:$0xff]
    %v3474 = vld [vmem:[#allocation9 + $0x6f8] sm:$0xff]
    %v3475 = vld [vmem:[#allocation9 + $0x700] sm:$0xff]
    %v3476 = vld [vmem:[#allocation9 + $0x708] sm:$0xff]
    %v3477 = vld [vmem:[#allocation9 + $0x710] sm:$0xff]
    %v3478 = vld [vmem:[#allocation9 + $0x718] sm:$0xff]
    %v3479 = vld [vmem:[#allocation9 + $0x720] sm:$0xff]
    %v3480 = vld [vmem:[#allocation9 + $0x728] sm:$0xff]
    %v3481 = vld [vmem:[#allocation9 + $0x730] sm:$0xff]
    %v3482 = vld [vmem:[#allocation9 + $0x738] sm:$0xff]
    %v3483 = vld [vmem:[#allocation9 + $0x740] sm:$0xff]
    %v3484 = vld [vmem:[#allocation9 + $0x748] sm:$0xff]
    %v3485 = vld [vmem:[#allocation9 + $0x750] sm:$0xff]
    %v3486 = vld [vmem:[#allocation9 + $0x758] sm:$0xff]
    %v3487 = vld [vmem:[#allocation9 + $0x760] sm:$0xff]
    %v3488 = vld [vmem:[#allocation9 + $0x768] sm:$0xff]
    %v3489 = vld [vmem:[#allocation9 + $0x770] sm:$0xff]
    %v3490 = vld [vmem:[#allocation9 + $0x778] sm:$0xff]
    %v3491 = vld [vmem:[#allocation9 + $0x780] sm:$0xff]
    %v3492 = vld [vmem:[#allocation9 + $0x788] sm:$0xff]
    %v3493 = vld [vmem:[#allocation9 + $0x790] sm:$0xff]
    %v3494 = vld [vmem:[#allocation9 + $0x798] sm:$0xff]
    %v3495 = vld [vmem:[#allocation9 + $0x7a0] sm:$0xff]
    %v3496 = vld [vmem:[#allocation9 + $0x7a8] sm:$0xff]
    %v3497 = vld [vmem:[#allocation9 + $0x7b0] sm:$0xff]
    %v3498 = vld [vmem:[#allocation9 + $0x7b8] sm:$0xff]
    %v3499 = vld [vmem:[#allocation9 + $0x7c0] sm:$0xff]
    %v3500 = vld [vmem:[#allocation9 + $0x7c8] sm:$0xff]
    %v3501 = vld [vmem:[#allocation9 + $0x7d0] sm:$0xff]
    %v3502 = vld [vmem:[#allocation9 + $0x7d8] sm:$0xff]
    %v3503 = vld [vmem:[#allocation9 + $0x7e0] sm:$0xff]
    %v3504 = vld [vmem:[#allocation9 + $0x7e8] sm:$0xff]
    %v3505 = vld [vmem:[#allocation9 + $0x7f0] sm:$0xff]
    %v3506 = vld [vmem:[#allocation9 + $0x7f8] sm:$0xff]
    %v3571 = vunpack.c.l.b16 %v3443
    %v3572 = vunpack.c.h.b16 %v3443
    %v3573 = vunpack.c.l.b16 %v3444
    %v3574 = vunpack.c.h.b16 %v3444
    %v3575 = vunpack.c.l.b16 %v3445
    %v3576 = vunpack.c.h.b16 %v3445
    %v3577 = vunpack.c.l.b16 %v3446
    %v3578 = vunpack.c.h.b16 %v3446
    %v3579 = vunpack.c.l.b16 %v3447
    %v3580 = vunpack.c.h.b16 %v3447
    %v3581 = vunpack.c.l.b16 %v3448
    %v3582 = vunpack.c.h.b16 %v3448
    %v3583 = vunpack.c.l.b16 %v3449
    %v3584 = vunpack.c.h.b16 %v3449
    %v3585 = vunpack.c.l.b16 %v3450
    %v3586 = vunpack.c.h.b16 %v3450
    %v3587 = vunpack.c.l.b16 %v3451
    %v3588 = vunpack.c.h.b16 %v3451
    %v3589 = vunpack.c.l.b16 %v3452
    %v3590 = vunpack.c.h.b16 %v3452
    %v3591 = vunpack.c.l.b16 %v3453
    %v3592 = vunpack.c.h.b16 %v3453
    %v3593 = vunpack.c.l.b16 %v3454
    %v3594 = vunpack.c.h.b16 %v3454
    %v3595 = vunpack.c.l.b16 %v3455
    %v3596 = vunpack.c.h.b16 %v3455
    %v3597 = vunpack.c.l.b16 %v3456
    %v3598 = vunpack.c.h.b16 %v3456
    %v3599 = vunpack.c.l.b16 %v3457
    %v3600 = vunpack.c.h.b16 %v3457
    %v3601 = vunpack.c.l.b16 %v3458
    %v3602 = vunpack.c.h.b16 %v3458
    %v3603 = vunpack.c.l.b16 %v3459
    %v3604 = vunpack.c.h.b16 %v3459
    %v3605 = vunpack.c.l.b16 %v3460
    %v3606 = vunpack.c.h.b16 %v3460
    %v3607 = vunpack.c.l.b16 %v3461
    %v3608 = vunpack.c.h.b16 %v3461
    %v3609 = vunpack.c.l.b16 %v3462
    %v3610 = vunpack.c.h.b16 %v3462
    %v3611 = vunpack.c.l.b16 %v3463
    %v3612 = vunpack.c.h.b16 %v3463
    %v3613 = vunpack.c.l.b16 %v3464
    %v3614 = vunpack.c.h.b16 %v3464
    %v3615 = vunpack.c.l.b16 %v3465
    %v3616 = vunpack.c.h.b16 %v3465
    %v3617 = vunpack.c.l.b16 %v3466
    %v3618 = vunpack.c.h.b16 %v3466
    %v3619 = vunpack.c.l.b16 %v3467
    %v3620 = vunpack.c.h.b16 %v3467
    %v3621 = vunpack.c.l.b16 %v3468
    %v3622 = vunpack.c.h.b16 %v3468
    %v3623 = vunpack.c.l.b16 %v3469
    %v3624 = vunpack.c.h.b16 %v3469
    %v3625 = vunpack.c.l.b16 %v3470
    %v3626 = vunpack.c.h.b16 %v3470
    %v3627 = vunpack.c.l.b16 %v3471
    %v3628 = vunpack.c.h.b16 %v3471
    %v3629 = vunpack.c.l.b16 %v3472
    %v3630 = vunpack.c.h.b16 %v3472
    %v3631 = vunpack.c.l.b16 %v3473
    %v3632 = vunpack.c.h.b16 %v3473
    %v3633 = vunpack.c.l.b16 %v3474
    %v3634 = vunpack.c.h.b16 %v3474
    %v3635 = vunpack.c.l.b16 %v3475
    %v3636 = vunpack.c.h.b16 %v3475
    %v3637 = vunpack.c.l.b16 %v3476
    %v3638 = vunpack.c.h.b16 %v3476
    %v3639 = vunpack.c.l.b16 %v3477
    %v3640 = vunpack.c.h.b16 %v3477
    %v3641 = vunpack.c.l.b16 %v3478
    %v3642 = vunpack.c.h.b16 %v3478
    %v3643 = vunpack.c.l.b16 %v3479
    %v3644 = vunpack.c.h.b16 %v3479
    %v3645 = vunpack.c.l.b16 %v3480
    %v3646 = vunpack.c.h.b16 %v3480
    %v3647 = vunpack.c.l.b16 %v3481
    %v3648 = vunpack.c.h.b16 %v3481
    %v3649 = vunpack.c.l.b16 %v3482
    %v3650 = vunpack.c.h.b16 %v3482
    %v3651 = vunpack.c.l.b16 %v3483
    %v3652 = vunpack.c.h.b16 %v3483
    %v3653 = vunpack.c.l.b16 %v3484
    %v3654 = vunpack.c.h.b16 %v3484
    %v3655 = vunpack.c.l.b16 %v3485
    %v3656 = vunpack.c.h.b16 %v3485
    %v3657 = vunpack.c.l.b16 %v3486
    %v3658 = vunpack.c.h.b16 %v3486
    %v3659 = vunpack.c.l.b16 %v3487
    %v3660 = vunpack.c.h.b16 %v3487
    %v3661 = vunpack.c.l.b16 %v3488
    %v3662 = vunpack.c.h.b16 %v3488
    %v3663 = vunpack.c.l.b16 %v3489
    %v3664 = vunpack.c.h.b16 %v3489
    %v3665 = vunpack.c.l.b16 %v3490
    %v3666 = vunpack.c.h.b16 %v3490
    %v3667 = vunpack.c.l.b16 %v3491
    %v3668 = vunpack.c.h.b16 %v3491
    %v3669 = vunpack.c.l.b16 %v3492
    %v3670 = vunpack.c.h.b16 %v3492
    %v3671 = vunpack.c.l.b16 %v3493
    %v3672 = vunpack.c.h.b16 %v3493
    %v3673 = vunpack.c.l.b16 %v3494
    %v3674 = vunpack.c.h.b16 %v3494
    %v3675 = vunpack.c.l.b16 %v3495
    %v3676 = vunpack.c.h.b16 %v3495
    %v3677 = vunpack.c.l.b16 %v3496
    %v3678 = vunpack.c.h.b16 %v3496
    %v3679 = vunpack.c.l.b16 %v3497
    %v3680 = vunpack.c.h.b16 %v3497
    %v3681 = vunpack.c.l.b16 %v3498
    %v3682 = vunpack.c.h.b16 %v3498
    %v3683 = vunpack.c.l.b16 %v3499
    %v3684 = vunpack.c.h.b16 %v3499
    %v3685 = vunpack.c.l.b16 %v3500
    %v3686 = vunpack.c.h.b16 %v3500
    %v3687 = vunpack.c.l.b16 %v3501
    %v3688 = vunpack.c.h.b16 %v3501
    %v3689 = vunpack.c.l.b16 %v3502
    %v3690 = vunpack.c.h.b16 %v3502
    %v3691 = vunpack.c.l.b16 %v3503
    %v3692 = vunpack.c.h.b16 %v3503
    %v3693 = vunpack.c.l.b16 %v3504
    %v3694 = vunpack.c.h.b16 %v3504
    %v3695 = vunpack.c.l.b16 %v3505
    %v3696 = vunpack.c.h.b16 %v3505
    %v3697 = vunpack.c.l.b16 %v3506
    %v3698 = vunpack.c.h.b16 %v3506
    %v3699 = vpack.c.b16 %v3579, %v3571
    %v3700 = vpack.c.b16 %v3580, %v3572
    %v3701 = vpack.c.b16 %v3581, %v3573
    %v3702 = vpack.c.b16 %v3582, %v3574
    %v3703 = vpack.c.b16 %v3583, %v3575
    %v3704 = vpack.c.b16 %v3584, %v3576
    %v3705 = vpack.c.b16 %v3585, %v3577
    %v3706 = vpack.c.b16 %v3586, %v3578
    %v3707 = vpack.c.b16 %v3595, %v3587
    %v3708 = vpack.c.b16 %v3596, %v3588
    %v3709 = vpack.c.b16 %v3597, %v3589
    %v3710 = vpack.c.b16 %v3598, %v3590
    %v3711 = vpack.c.b16 %v3599, %v3591
    %v3712 = vpack.c.b16 %v3600, %v3592
    %v3713 = vpack.c.b16 %v3601, %v3593
    %v3714 = vpack.c.b16 %v3602, %v3594
    %v3715 = vpack.c.b16 %v3611, %v3603
    %v3716 = vpack.c.b16 %v3612, %v3604
    %v3717 = vpack.c.b16 %v3613, %v3605
    %v3718 = vpack.c.b16 %v3614, %v3606
    %v3719 = vpack.c.b16 %v3615, %v3607
    %v3720 = vpack.c.b16 %v3616, %v3608
    %v3721 = vpack.c.b16 %v3617, %v3609
    %v3722 = vpack.c.b16 %v3618, %v3610
    %v3723 = vpack.c.b16 %v3627, %v3619
    %v3724 = vpack.c.b16 %v3628, %v3620
    %v3725 = vpack.c.b16 %v3629, %v3621
    %v3726 = vpack.c.b16 %v3630, %v3622
    %v3727 = vpack.c.b16 %v3631, %v3623
    %v3728 = vpack.c.b16 %v3632, %v3624
    %v3729 = vpack.c.b16 %v3633, %v3625
    %v3730 = vpack.c.b16 %v3634, %v3626
    %v3731 = vpack.c.b16 %v3643, %v3635
    %v3732 = vpack.c.b16 %v3644, %v3636
    %v3733 = vpack.c.b16 %v3645, %v3637
    %v3734 = vpack.c.b16 %v3646, %v3638
    %v3735 = vpack.c.b16 %v3647, %v3639
    %v3736 = vpack.c.b16 %v3648, %v3640
    %v3737 = vpack.c.b16 %v3649, %v3641
    %v3738 = vpack.c.b16 %v3650, %v3642
    %v3739 = vpack.c.b16 %v3659, %v3651
    %v3740 = vpack.c.b16 %v3660, %v3652
    %v3741 = vpack.c.b16 %v3661, %v3653
    %v3742 = vpack.c.b16 %v3662, %v3654
    %v3743 = vpack.c.b16 %v3663, %v3655
    %v3744 = vpack.c.b16 %v3664, %v3656
    %v3745 = vpack.c.b16 %v3665, %v3657
    %v3746 = vpack.c.b16 %v3666, %v3658
    %v3747 = vpack.c.b16 %v3675, %v3667
    %v3748 = vpack.c.b16 %v3676, %v3668
    %v3749 = vpack.c.b16 %v3677, %v3669
    %v3750 = vpack.c.b16 %v3678, %v3670
    %v3751 = vpack.c.b16 %v3679, %v3671
    %v3752 = vpack.c.b16 %v3680, %v3672
    %v3753 = vpack.c.b16 %v3681, %v3673
    %v3754 = vpack.c.b16 %v3682, %v3674
    %v3755 = vpack.c.b16 %v3691, %v3683
    %v3756 = vpack.c.b16 %v3692, %v3684
    %v3757 = vpack.c.b16 %v3693, %v3685
    %v3758 = vpack.c.b16 %v3694, %v3686
    %v3759 = vpack.c.b16 %v3695, %v3687
    %v3760 = vpack.c.b16 %v3696, %v3688
    %v3761 = vpack.c.b16 %v3697, %v3689
    %v3762 = vpack.c.b16 %v3698, %v3690
    %3827 = vmatprep.subr.bf16.mxu0 %v3756
    %3828 = vmatpush1.bf16.msra.mxu0 %v3755
    %3829 = vmatprep.subr.bf16.mxu0 %v3748
    %3830 = vmatpush1.bf16.msra.mxu0 %v3747
    %3831 = vmatprep.subr.bf16.mxu0 %v3740
    %3832 = vmatpush1.bf16.msra.mxu0 %v3739
    %3833 = vmatprep.subr.bf16.mxu0 %v3732
    %3834 = vmatpush1.bf16.msra.mxu0 %v3731
    %3835 = vmatprep.subr.bf16.mxu0 %v3724
    %3836 = vmatpush1.bf16.msra.mxu0 %v3723
    %3837 = vmatprep.subr.bf16.mxu0 %v3716
    %3838 = vmatpush1.bf16.msra.mxu0 %v3715
    %3839 = vmatprep.subr.bf16.mxu0 %v3708
    %3840 = vmatpush1.bf16.msra.mxu0 %v3707
    %3841 = vmatprep.subr.bf16.mxu0 %v3700
    %3842 = vmatpush1.bf16.msra.mxu0 %v3699
    %3843 = vmatprep.subr.bf16.mxu0 0
    %3844 = vmatpush2.bf16.msra.mxu0 0
    %3845 = vmatprep.subr.bf16.mxu0 0
    %3846 = vmatpush2.bf16.msra.mxu0 0
    %3847 = vmatprep.subr.bf16.mxu0 0
    %3848 = vmatpush2.bf16.msra.mxu0 0
    %3849 = vmatprep.subr.bf16.mxu0 0
    %3850 = vmatpush2.bf16.msra.mxu0 0
    %3851 = vmatprep.subr.bf16.mxu0 0
    %3852 = vmatpush2.bf16.msra.mxu0 0
    %3853 = vmatprep.subr.bf16.mxu0 0
    %3854 = vmatpush2.bf16.msra.mxu0 0
    %3855 = vmatprep.subr.bf16.mxu0 0
    %3856 = vmatpush2.bf16.msra.mxu0 0
    %3857 = vmatprep.subr.bf16.mxu0 0
    %3858 = vmatpush2.bf16.msra.mxu0 0
    %3859 = vmatprep.mubr.bf16.mxu0 0
    %3860 = vmatmul.mubr.bf16.gmra.mxu0 %v3442
    %v3861 = vpop.f32.mrf.mxu0
    %v3862 = vadd.f32 0.0, %v3861
    %v3863 = vpop.f32.mrf.mxu0
    %v3864 = vadd.f32 0.0, %v3863
    %v3865 = vpop.f32.mrf.mxu0
    %v3866 = vpop.f32.mrf.mxu0
    %3867 = vdwg.mxu0
    %3868 = vmatprep.subr.bf16.mxu0 %v3758
    %3869 = vmatpush1.bf16.msra.mxu0 %v3757
    %3870 = vmatprep.subr.bf16.mxu0 %v3750
    %3871 = vmatpush1.bf16.msra.mxu0 %v3749
    %3872 = vmatprep.subr.bf16.mxu0 %v3742
    %3873 = vmatpush1.bf16.msra.mxu0 %v3741
    %3874 = vmatprep.subr.bf16.mxu0 %v3734
    %3875 = vmatpush1.bf16.msra.mxu0 %v3733
    %3876 = vmatprep.subr.bf16.mxu0 %v3726
    %3877 = vmatpush1.bf16.msra.mxu0 %v3725
    %3878 = vmatprep.subr.bf16.mxu0 %v3718
    %3879 = vmatpush1.bf16.msra.mxu0 %v3717
    %3880 = vmatprep.subr.bf16.mxu0 %v3710
    %3881 = vmatpush1.bf16.msra.mxu0 %v3709
    %3882 = vmatprep.subr.bf16.mxu0 %v3702
    %3883 = vmatpush1.bf16.msra.mxu0 %v3701
    %3884 = vmatprep.subr.bf16.mxu0 0
    %3885 = vmatpush2.bf16.msra.mxu0 0
    %3886 = vmatprep.subr.bf16.mxu0 0
    %3887 = vmatpush2.bf16.msra.mxu0 0
    %3888 = vmatprep.subr.bf16.mxu0 0
    %3889 = vmatpush2.bf16.msra.mxu0 0
    %3890 = vmatprep.subr.bf16.mxu0 0
    %3891 = vmatpush2.bf16.msra.mxu0 0
    %3892 = vmatprep.subr.bf16.mxu0 0
    %3893 = vmatpush2.bf16.msra.mxu0 0
    %3894 = vmatprep.subr.bf16.mxu0 0
    %3895 = vmatpush2.bf16.msra.mxu0 0
    %3896 = vmatprep.subr.bf16.mxu0 0
    %3897 = vmatpush2.bf16.msra.mxu0 0
    %3898 = vmatprep.subr.bf16.mxu0 0
    %3899 = vmatpush2.bf16.msra.mxu0 0
    %3900 = vmatprep.mubr.bf16.mxu0 0
    %3901 = vmatmul.mubr.bf16.gmra.mxu0 %v3442
    %v3902 = vpop.f32.mrf.mxu0
    %v3903 = vadd.f32 0.0, %v3902
    %v3904 = vpop.f32.mrf.mxu0
    %v3905 = vadd.f32 0.0, %v3904
    %v3906 = vpop.f32.mrf.mxu0
    %v3907 = vpop.f32.mrf.mxu0
    %3908 = vdwg.mxu0
    %3909 = vmatprep.subr.bf16.mxu0 %v3760
    %3910 = vmatpush1.bf16.msra.mxu0 %v3759
    %3911 = vmatprep.subr.bf16.mxu0 %v3752
    %3912 = vmatpush1.bf16.msra.mxu0 %v3751
    %3913 = vmatprep.subr.bf16.mxu0 %v3744
    %3914 = vmatpush1.bf16.msra.mxu0 %v3743
    %3915 = vmatprep.subr.bf16.mxu0 %v3736
    %3916 = vmatpush1.bf16.msra.mxu0 %v3735
    %3917 = vmatprep.subr.bf16.mxu0 %v3728
    %3918 = vmatpush1.bf16.msra.mxu0 %v3727
    %3919 = vmatprep.subr.bf16.mxu0 %v3720
    %3920 = vmatpush1.bf16.msra.mxu0 %v3719
    %3921 = vmatprep.subr.bf16.mxu0 %v3712
    %3922 = vmatpush1.bf16.msra.mxu0 %v3711
    %3923 = vmatprep.subr.bf16.mxu0 %v3704
    %3924 = vmatpush1.bf16.msra.mxu0 %v3703
    %3925 = vmatprep.subr.bf16.mxu0 0
    %3926 = vmatpush2.bf16.msra.mxu0 0
    %3927 = vmatprep.subr.bf16.mxu0 0
    %3928 = vmatpush2.bf16.msra.mxu0 0
    %3929 = vmatprep.subr.bf16.mxu0 0
    %3930 = vmatpush2.bf16.msra.mxu0 0
    %3931 = vmatprep.subr.bf16.mxu0 0
    %3932 = vmatpush2.bf16.msra.mxu0 0
    %3933 = vmatprep.subr.bf16.mxu0 0
    %3934 = vmatpush2.bf16.msra.mxu0 0
    %3935 = vmatprep.subr.bf16.mxu0 0
    %3936 = vmatpush2.bf16.msra.mxu0 0
    %3937 = vmatprep.subr.bf16.mxu0 0
    %3938 = vmatpush2.bf16.msra.mxu0 0
    %3939 = vmatprep.subr.bf16.mxu0 0
    %3940 = vmatpush2.bf16.msra.mxu0 0
    %3941 = vmatprep.mubr.bf16.mxu0 0
    %3942 = vmatmul.mubr.bf16.gmra.mxu0 %v3442
    %v3943 = vpop.f32.mrf.mxu0
    %v3944 = vadd.f32 0.0, %v3943
    %v3945 = vpop.f32.mrf.mxu0
    %v3946 = vadd.f32 0.0, %v3945
    %v3947 = vpop.f32.mrf.mxu0
    %v3948 = vpop.f32.mrf.mxu0
    %3949 = vdwg.mxu0
    %3950 = vmatprep.subr.bf16.mxu0 %v3762
    %3951 = vmatpush1.bf16.msra.mxu0 %v3761
    %3952 = vmatprep.subr.bf16.mxu0 %v3754
    %3953 = vmatpush1.bf16.msra.mxu0 %v3753
    %3954 = vmatprep.subr.bf16.mxu0 %v3746
    %3955 = vmatpush1.bf16.msra.mxu0 %v3745
    %3956 = vmatprep.subr.bf16.mxu0 %v3738
    %3957 = vmatpush1.bf16.msra.mxu0 %v3737
    %3958 = vmatprep.subr.bf16.mxu0 %v3730
    %3959 = vmatpush1.bf16.msra.mxu0 %v3729
    %3960 = vmatprep.subr.bf16.mxu0 %v3722
    %3961 = vmatpush1.bf16.msra.mxu0 %v3721
    %3962 = vmatprep.subr.bf16.mxu0 %v3714
    %3963 = vmatpush1.bf16.msra.mxu0 %v3713
    %3964 = vmatprep.subr.bf16.mxu0 %v3706
    %3965 = vmatpush1.bf16.msra.mxu0 %v3705
    %3966 = vmatprep.subr.bf16.mxu0 0
    %3967 = vmatpush2.bf16.msra.mxu0 0
    %3968 = vmatprep.subr.bf16.mxu0 0
    %3969 = vmatpush2.bf16.msra.mxu0 0
    %3970 = vmatprep.subr.bf16.mxu0 0
    %3971 = vmatpush2.bf16.msra.mxu0 0
    %3972 = vmatprep.subr.bf16.mxu0 0
    %3973 = vmatpush2.bf16.msra.mxu0 0
    %3974 = vmatprep.subr.bf16.mxu0 0
    %3975 = vmatpush2.bf16.msra.mxu0 0
    %3976 = vmatprep.subr.bf16.mxu0 0
    %3977 = vmatpush2.bf16.msra.mxu0 0
    %3978 = vmatprep.subr.bf16.mxu0 0
    %3979 = vmatpush2.bf16.msra.mxu0 0
    %3980 = vmatprep.subr.bf16.mxu0 0
    %3981 = vmatpush2.bf16.msra.mxu0 0
    %3982 = vmatprep.mubr.bf16.mxu0 0
    %3983 = vmatmul.mubr.bf16.gmra.mxu0 %v3442
    %v3984 = vpop.f32.mrf.mxu0
    %v3985 = vadd.f32 0.0, %v3984
    %v3986 = vpop.f32.mrf.mxu0
    %v3987 = vadd.f32 0.0, %v3986
    %v3988 = vpop.f32.mrf.mxu0
    %v3989 = vpop.f32.mrf.mxu0
    %3990 = vdwg.mxu0
    %v3991 = vadd.f32 %v3434, %v3862
    %v3992 = vadd.f32 %v3435, %v3864
    %v3993 = vadd.f32 %v3436, %v3903
    %v3994 = vadd.f32 %v3437, %v3905
    %v3995 = vadd.f32 %v3438, %v3944
    %v3996 = vadd.f32 %v3439, %v3946
    %v3997 = vadd.f32 %v3440, %v3985
    %v3998 = vadd.f32 %v3441, %v3987
    %v3999 = vpack.c.bf16 %v1775, %v1775
    %v4000 = vld [vmem:[#allocation9 + $0x800] sm:$0xff]
    %v4001 = vld [vmem:[#allocation9 + $0x808] sm:$0xff]
    %v4002 = vld [vmem:[#allocation9 + $0x810] sm:$0xff]
    %v4003 = vld [vmem:[#allocation9 + $0x818] sm:$0xff]
    %v4004 = vld [vmem:[#allocation9 + $0x820] sm:$0xff]
    %v4005 = vld [vmem:[#allocation9 + $0x828] sm:$0xff]
    %v4006 = vld [vmem:[#allocation9 + $0x830] sm:$0xff]
    %v4007 = vld [vmem:[#allocation9 + $0x838] sm:$0xff]
    %v4008 = vld [vmem:[#allocation9 + $0x840] sm:$0xff]
    %v4009 = vld [vmem:[#allocation9 + $0x848] sm:$0xff]
    %v4010 = vld [vmem:[#allocation9 + $0x850] sm:$0xff]
    %v4011 = vld [vmem:[#allocation9 + $0x858] sm:$0xff]
    %v4012 = vld [vmem:[#allocation9 + $0x860] sm:$0xff]
    %v4013 = vld [vmem:[#allocation9 + $0x868] sm:$0xff]
    %v4014 = vld [vmem:[#allocation9 + $0x870] sm:$0xff]
    %v4015 = vld [vmem:[#allocation9 + $0x878] sm:$0xff]
    %v4016 = vld [vmem:[#allocation9 + $0x880] sm:$0xff]
    %v4017 = vld [vmem:[#allocation9 + $0x888] sm:$0xff]
    %v4018 = vld [vmem:[#allocation9 + $0x890] sm:$0xff]
    %v4019 = vld [vmem:[#allocation9 + $0x898] sm:$0xff]
    %v4020 = vld [vmem:[#allocation9 + $0x8a0] sm:$0xff]
    %v4021 = vld [vmem:[#allocation9 + $0x8a8] sm:$0xff]
    %v4022 = vld [vmem:[#allocation9 + $0x8b0] sm:$0xff]
    %v4023 = vld [vmem:[#allocation9 + $0x8b8] sm:$0xff]
    %v4024 = vld [vmem:[#allocation9 + $0x8c0] sm:$0xff]
    %v4025 = vld [vmem:[#allocation9 + $0x8c8] sm:$0xff]
    %v4026 = vld [vmem:[#allocation9 + $0x8d0] sm:$0xff]
    %v4027 = vld [vmem:[#allocation9 + $0x8d8] sm:$0xff]
    %v4028 = vld [vmem:[#allocation9 + $0x8e0] sm:$0xff]
    %v4029 = vld [vmem:[#allocation9 + $0x8e8] sm:$0xff]
    %v4030 = vld [vmem:[#allocation9 + $0x8f0] sm:$0xff]
    %v4031 = vld [vmem:[#allocation9 + $0x8f8] sm:$0xff]
    %v4032 = vld [vmem:[#allocation9 + $0x900] sm:$0xff]
    %v4033 = vld [vmem:[#allocation9 + $0x908] sm:$0xff]
    %v4034 = vld [vmem:[#allocation9 + $0x910] sm:$0xff]
    %v4035 = vld [vmem:[#allocation9 + $0x918] sm:$0xff]
    %v4036 = vld [vmem:[#allocation9 + $0x920] sm:$0xff]
    %v4037 = vld [vmem:[#allocation9 + $0x928] sm:$0xff]
    %v4038 = vld [vmem:[#allocation9 + $0x930] sm:$0xff]
    %v4039 = vld [vmem:[#allocation9 + $0x938] sm:$0xff]
    %v4040 = vld [vmem:[#allocation9 + $0x940] sm:$0xff]
    %v4041 = vld [vmem:[#allocation9 + $0x948] sm:$0xff]
    %v4042 = vld [vmem:[#allocation9 + $0x950] sm:$0xff]
    %v4043 = vld [vmem:[#allocation9 + $0x958] sm:$0xff]
    %v4044 = vld [vmem:[#allocation9 + $0x960] sm:$0xff]
    %v4045 = vld [vmem:[#allocation9 + $0x968] sm:$0xff]
    %v4046 = vld [vmem:[#allocation9 + $0x970] sm:$0xff]
    %v4047 = vld [vmem:[#allocation9 + $0x978] sm:$0xff]
    %v4048 = vld [vmem:[#allocation9 + $0x980] sm:$0xff]
    %v4049 = vld [vmem:[#allocation9 + $0x988] sm:$0xff]
    %v4050 = vld [vmem:[#allocation9 + $0x990] sm:$0xff]
    %v4051 = vld [vmem:[#allocation9 + $0x998] sm:$0xff]
    %v4052 = vld [vmem:[#allocation9 + $0x9a0] sm:$0xff]
    %v4053 = vld [vmem:[#allocation9 + $0x9a8] sm:$0xff]
    %v4054 = vld [vmem:[#allocation9 + $0x9b0] sm:$0xff]
    %v4055 = vld [vmem:[#allocation9 + $0x9b8] sm:$0xff]
    %v4056 = vld [vmem:[#allocation9 + $0x9c0] sm:$0xff]
    %v4057 = vld [vmem:[#allocation9 + $0x9c8] sm:$0xff]
    %v4058 = vld [vmem:[#allocation9 + $0x9d0] sm:$0xff]
    %v4059 = vld [vmem:[#allocation9 + $0x9d8] sm:$0xff]
    %v4060 = vld [vmem:[#allocation9 + $0x9e0] sm:$0xff]
    %v4061 = vld [vmem:[#allocation9 + $0x9e8] sm:$0xff]
    %v4062 = vld [vmem:[#allocation9 + $0x9f0] sm:$0xff]
    %v4063 = vld [vmem:[#allocation9 + $0x9f8] sm:$0xff]
    %v4128 = vunpack.c.l.b16 %v4000
    %v4129 = vunpack.c.h.b16 %v4000
    %v4130 = vunpack.c.l.b16 %v4001
    %v4131 = vunpack.c.h.b16 %v4001
    %v4132 = vunpack.c.l.b16 %v4002
    %v4133 = vunpack.c.h.b16 %v4002
    %v4134 = vunpack.c.l.b16 %v4003
    %v4135 = vunpack.c.h.b16 %v4003
    %v4136 = vunpack.c.l.b16 %v4004
    %v4137 = vunpack.c.h.b16 %v4004
    %v4138 = vunpack.c.l.b16 %v4005
    %v4139 = vunpack.c.h.b16 %v4005
    %v4140 = vunpack.c.l.b16 %v4006
    %v4141 = vunpack.c.h.b16 %v4006
    %v4142 = vunpack.c.l.b16 %v4007
    %v4143 = vunpack.c.h.b16 %v4007
    %v4144 = vunpack.c.l.b16 %v4008
    %v4145 = vunpack.c.h.b16 %v4008
    %v4146 = vunpack.c.l.b16 %v4009
    %v4147 = vunpack.c.h.b16 %v4009
    %v4148 = vunpack.c.l.b16 %v4010
    %v4149 = vunpack.c.h.b16 %v4010
    %v4150 = vunpack.c.l.b16 %v4011
    %v4151 = vunpack.c.h.b16 %v4011
    %v4152 = vunpack.c.l.b16 %v4012
    %v4153 = vunpack.c.h.b16 %v4012
    %v4154 = vunpack.c.l.b16 %v4013
    %v4155 = vunpack.c.h.b16 %v4013
    %v4156 = vunpack.c.l.b16 %v4014
    %v4157 = vunpack.c.h.b16 %v4014
    %v4158 = vunpack.c.l.b16 %v4015
    %v4159 = vunpack.c.h.b16 %v4015
    %v4160 = vunpack.c.l.b16 %v4016
    %v4161 = vunpack.c.h.b16 %v4016
    %v4162 = vunpack.c.l.b16 %v4017
    %v4163 = vunpack.c.h.b16 %v4017
    %v4164 = vunpack.c.l.b16 %v4018
    %v4165 = vunpack.c.h.b16 %v4018
    %v4166 = vunpack.c.l.b16 %v4019
    %v4167 = vunpack.c.h.b16 %v4019
    %v4168 = vunpack.c.l.b16 %v4020
    %v4169 = vunpack.c.h.b16 %v4020
    %v4170 = vunpack.c.l.b16 %v4021
    %v4171 = vunpack.c.h.b16 %v4021
    %v4172 = vunpack.c.l.b16 %v4022
    %v4173 = vunpack.c.h.b16 %v4022
    %v4174 = vunpack.c.l.b16 %v4023
    %v4175 = vunpack.c.h.b16 %v4023
    %v4176 = vunpack.c.l.b16 %v4024
    %v4177 = vunpack.c.h.b16 %v4024
    %v4178 = vunpack.c.l.b16 %v4025
    %v4179 = vunpack.c.h.b16 %v4025
    %v4180 = vunpack.c.l.b16 %v4026
    %v4181 = vunpack.c.h.b16 %v4026
    %v4182 = vunpack.c.l.b16 %v4027
    %v4183 = vunpack.c.h.b16 %v4027
    %v4184 = vunpack.c.l.b16 %v4028
    %v4185 = vunpack.c.h.b16 %v4028
    %v4186 = vunpack.c.l.b16 %v4029
    %v4187 = vunpack.c.h.b16 %v4029
    %v4188 = vunpack.c.l.b16 %v4030
    %v4189 = vunpack.c.h.b16 %v4030
    %v4190 = vunpack.c.l.b16 %v4031
    %v4191 = vunpack.c.h.b16 %v4031
    %v4192 = vunpack.c.l.b16 %v4032
    %v4193 = vunpack.c.h.b16 %v4032
    %v4194 = vunpack.c.l.b16 %v4033
    %v4195 = vunpack.c.h.b16 %v4033
    %v4196 = vunpack.c.l.b16 %v4034
    %v4197 = vunpack.c.h.b16 %v4034
    %v4198 = vunpack.c.l.b16 %v4035
    %v4199 = vunpack.c.h.b16 %v4035
    %v4200 = vunpack.c.l.b16 %v4036
    %v4201 = vunpack.c.h.b16 %v4036
    %v4202 = vunpack.c.l.b16 %v4037
    %v4203 = vunpack.c.h.b16 %v4037
    %v4204 = vunpack.c.l.b16 %v4038
    %v4205 = vunpack.c.h.b16 %v4038
    %v4206 = vunpack.c.l.b16 %v4039
    %v4207 = vunpack.c.h.b16 %v4039
    %v4208 = vunpack.c.l.b16 %v4040
    %v4209 = vunpack.c.h.b16 %v4040
    %v4210 = vunpack.c.l.b16 %v4041
    %v4211 = vunpack.c.h.b16 %v4041
    %v4212 = vunpack.c.l.b16 %v4042
    %v4213 = vunpack.c.h.b16 %v4042
    %v4214 = vunpack.c.l.b16 %v4043
    %v4215 = vunpack.c.h.b16 %v4043
    %v4216 = vunpack.c.l.b16 %v4044
    %v4217 = vunpack.c.h.b16 %v4044
    %v4218 = vunpack.c.l.b16 %v4045
    %v4219 = vunpack.c.h.b16 %v4045
    %v4220 = vunpack.c.l.b16 %v4046
    %v4221 = vunpack.c.h.b16 %v4046
    %v4222 = vunpack.c.l.b16 %v4047
    %v4223 = vunpack.c.h.b16 %v4047
    %v4224 = vunpack.c.l.b16 %v4048
    %v4225 = vunpack.c.h.b16 %v4048
    %v4226 = vunpack.c.l.b16 %v4049
    %v4227 = vunpack.c.h.b16 %v4049
    %v4228 = vunpack.c.l.b16 %v4050
    %v4229 = vunpack.c.h.b16 %v4050
    %v4230 = vunpack.c.l.b16 %v4051
    %v4231 = vunpack.c.h.b16 %v4051
    %v4232 = vunpack.c.l.b16 %v4052
    %v4233 = vunpack.c.h.b16 %v4052
    %v4234 = vunpack.c.l.b16 %v4053
    %v4235 = vunpack.c.h.b16 %v4053
    %v4236 = vunpack.c.l.b16 %v4054
    %v4237 = vunpack.c.h.b16 %v4054
    %v4238 = vunpack.c.l.b16 %v4055
    %v4239 = vunpack.c.h.b16 %v4055
    %v4240 = vunpack.c.l.b16 %v4056
    %v4241 = vunpack.c.h.b16 %v4056
    %v4242 = vunpack.c.l.b16 %v4057
    %v4243 = vunpack.c.h.b16 %v4057
    %v4244 = vunpack.c.l.b16 %v4058
    %v4245 = vunpack.c.h.b16 %v4058
    %v4246 = vunpack.c.l.b16 %v4059
    %v4247 = vunpack.c.h.b16 %v4059
    %v4248 = vunpack.c.l.b16 %v4060
    %v4249 = vunpack.c.h.b16 %v4060
    %v4250 = vunpack.c.l.b16 %v4061
    %v4251 = vunpack.c.h.b16 %v4061
    %v4252 = vunpack.c.l.b16 %v4062
    %v4253 = vunpack.c.h.b16 %v4062
    %v4254 = vunpack.c.l.b16 %v4063
    %v4255 = vunpack.c.h.b16 %v4063
    %v4256 = vpack.c.b16 %v4136, %v4128
    %v4257 = vpack.c.b16 %v4137, %v4129
    %v4258 = vpack.c.b16 %v4138, %v4130
    %v4259 = vpack.c.b16 %v4139, %v4131
    %v4260 = vpack.c.b16 %v4140, %v4132
    %v4261 = vpack.c.b16 %v4141, %v4133
    %v4262 = vpack.c.b16 %v4142, %v4134
    %v4263 = vpack.c.b16 %v4143, %v4135
    %v4264 = vpack.c.b16 %v4152, %v4144
    %v4265 = vpack.c.b16 %v4153, %v4145
    %v4266 = vpack.c.b16 %v4154, %v4146
    %v4267 = vpack.c.b16 %v4155, %v4147
    %v4268 = vpack.c.b16 %v4156, %v4148
    %v4269 = vpack.c.b16 %v4157, %v4149
    %v4270 = vpack.c.b16 %v4158, %v4150
    %v4271 = vpack.c.b16 %v4159, %v4151
    %v4272 = vpack.c.b16 %v4168, %v4160
    %v4273 = vpack.c.b16 %v4169, %v4161
    %v4274 = vpack.c.b16 %v4170, %v4162
    %v4275 = vpack.c.b16 %v4171, %v4163
    %v4276 = vpack.c.b16 %v4172, %v4164
    %v4277 = vpack.c.b16 %v4173, %v4165
    %v4278 = vpack.c.b16 %v4174, %v4166
    %v4279 = vpack.c.b16 %v4175, %v4167
    %v4280 = vpack.c.b16 %v4184, %v4176
    %v4281 = vpack.c.b16 %v4185, %v4177
    %v4282 = vpack.c.b16 %v4186, %v4178
    %v4283 = vpack.c.b16 %v4187, %v4179
    %v4284 = vpack.c.b16 %v4188, %v4180
    %v4285 = vpack.c.b16 %v4189, %v4181
    %v4286 = vpack.c.b16 %v4190, %v4182
    %v4287 = vpack.c.b16 %v4191, %v4183
    %v4288 = vpack.c.b16 %v4200, %v4192
    %v4289 = vpack.c.b16 %v4201, %v4193
    %v4290 = vpack.c.b16 %v4202, %v4194
    %v4291 = vpack.c.b16 %v4203, %v4195
    %v4292 = vpack.c.b16 %v4204, %v4196
    %v4293 = vpack.c.b16 %v4205, %v4197
    %v4294 = vpack.c.b16 %v4206, %v4198
    %v4295 = vpack.c.b16 %v4207, %v4199
    %v4296 = vpack.c.b16 %v4216, %v4208
    %v4297 = vpack.c.b16 %v4217, %v4209
    %v4298 = vpack.c.b16 %v4218, %v4210
    %v4299 = vpack.c.b16 %v4219, %v4211
    %v4300 = vpack.c.b16 %v4220, %v4212
    %v4301 = vpack.c.b16 %v4221, %v4213
    %v4302 = vpack.c.b16 %v4222, %v4214
    %v4303 = vpack.c.b16 %v4223, %v4215
    %v4304 = vpack.c.b16 %v4232, %v4224
    %v4305 = vpack.c.b16 %v4233, %v4225
    %v4306 = vpack.c.b16 %v4234, %v4226
    %v4307 = vpack.c.b16 %v4235, %v4227
    %v4308 = vpack.c.b16 %v4236, %v4228
    %v4309 = vpack.c.b16 %v4237, %v4229
    %v4310 = vpack.c.b16 %v4238, %v4230
    %v4311 = vpack.c.b16 %v4239, %v4231
    %v4312 = vpack.c.b16 %v4248, %v4240
    %v4313 = vpack.c.b16 %v4249, %v4241
    %v4314 = vpack.c.b16 %v4250, %v4242
    %v4315 = vpack.c.b16 %v4251, %v4243
    %v4316 = vpack.c.b16 %v4252, %v4244
    %v4317 = vpack.c.b16 %v4253, %v4245
    %v4318 = vpack.c.b16 %v4254, %v4246
    %v4319 = vpack.c.b16 %v4255, %v4247
    %4384 = vmatprep.subr.bf16.mxu0 %v4313
    %4385 = vmatpush1.bf16.msra.mxu0 %v4312
    %4386 = vmatprep.subr.bf16.mxu0 %v4305
    %4387 = vmatpush1.bf16.msra.mxu0 %v4304
    %4388 = vmatprep.subr.bf16.mxu0 %v4297
    %4389 = vmatpush1.bf16.msra.mxu0 %v4296
    %4390 = vmatprep.subr.bf16.mxu0 %v4289
    %4391 = vmatpush1.bf16.msra.mxu0 %v4288
    %4392 = vmatprep.subr.bf16.mxu0 %v4281
    %4393 = vmatpush1.bf16.msra.mxu0 %v4280
    %4394 = vmatprep.subr.bf16.mxu0 %v4273
    %4395 = vmatpush1.bf16.msra.mxu0 %v4272
    %4396 = vmatprep.subr.bf16.mxu0 %v4265
    %4397 = vmatpush1.bf16.msra.mxu0 %v4264
    %4398 = vmatprep.subr.bf16.mxu0 %v4257
    %4399 = vmatpush1.bf16.msra.mxu0 %v4256
    %4400 = vmatprep.subr.bf16.mxu0 0
    %4401 = vmatpush2.bf16.msra.mxu0 0
    %4402 = vmatprep.subr.bf16.mxu0 0
    %4403 = vmatpush2.bf16.msra.mxu0 0
    %4404 = vmatprep.subr.bf16.mxu0 0
    %4405 = vmatpush2.bf16.msra.mxu0 0
    %4406 = vmatprep.subr.bf16.mxu0 0
    %4407 = vmatpush2.bf16.msra.mxu0 0
    %4408 = vmatprep.subr.bf16.mxu0 0
    %4409 = vmatpush2.bf16.msra.mxu0 0
    %4410 = vmatprep.subr.bf16.mxu0 0
    %4411 = vmatpush2.bf16.msra.mxu0 0
    %4412 = vmatprep.subr.bf16.mxu0 0
    %4413 = vmatpush2.bf16.msra.mxu0 0
    %4414 = vmatprep.subr.bf16.mxu0 0
    %4415 = vmatpush2.bf16.msra.mxu0 0
    %4416 = vmatprep.mubr.bf16.mxu0 0
    %4417 = vmatmul.mubr.bf16.gmra.mxu0 %v3999
    %v4418 = vpop.f32.mrf.mxu0
    %v4419 = vadd.f32 0.0, %v4418
    %v4420 = vpop.f32.mrf.mxu0
    %v4421 = vadd.f32 0.0, %v4420
    %v4422 = vpop.f32.mrf.mxu0
    %v4423 = vpop.f32.mrf.mxu0
    %4424 = vdwg.mxu0
    %4425 = vmatprep.subr.bf16.mxu0 %v4315
    %4426 = vmatpush1.bf16.msra.mxu0 %v4314
    %4427 = vmatprep.subr.bf16.mxu0 %v4307
    %4428 = vmatpush1.bf16.msra.mxu0 %v4306
    %4429 = vmatprep.subr.bf16.mxu0 %v4299
    %4430 = vmatpush1.bf16.msra.mxu0 %v4298
    %4431 = vmatprep.subr.bf16.mxu0 %v4291
    %4432 = vmatpush1.bf16.msra.mxu0 %v4290
    %4433 = vmatprep.subr.bf16.mxu0 %v4283
    %4434 = vmatpush1.bf16.msra.mxu0 %v4282
    %4435 = vmatprep.subr.bf16.mxu0 %v4275
    %4436 = vmatpush1.bf16.msra.mxu0 %v4274
    %4437 = vmatprep.subr.bf16.mxu0 %v4267
    %4438 = vmatpush1.bf16.msra.mxu0 %v4266
    %4439 = vmatprep.subr.bf16.mxu0 %v4259
    %4440 = vmatpush1.bf16.msra.mxu0 %v4258
    %4441 = vmatprep.subr.bf16.mxu0 0
    %4442 = vmatpush2.bf16.msra.mxu0 0
    %4443 = vmatprep.subr.bf16.mxu0 0
    %4444 = vmatpush2.bf16.msra.mxu0 0
    %4445 = vmatprep.subr.bf16.mxu0 0
    %4446 = vmatpush2.bf16.msra.mxu0 0
    %4447 = vmatprep.subr.bf16.mxu0 0
    %4448 = vmatpush2.bf16.msra.mxu0 0
    %4449 = vmatprep.subr.bf16.mxu0 0
    %4450 = vmatpush2.bf16.msra.mxu0 0
    %4451 = vmatprep.subr.bf16.mxu0 0
    %4452 = vmatpush2.bf16.msra.mxu0 0
    %4453 = vmatprep.subr.bf16.mxu0 0
    %4454 = vmatpush2.bf16.msra.mxu0 0
    %4455 = vmatprep.subr.bf16.mxu0 0
    %4456 = vmatpush2.bf16.msra.mxu0 0
    %4457 = vmatprep.mubr.bf16.mxu0 0
    %4458 = vmatmul.mubr.bf16.gmra.mxu0 %v3999
    %v4459 = vpop.f32.mrf.mxu0
    %v4460 = vadd.f32 0.0, %v4459
    %v4461 = vpop.f32.mrf.mxu0
    %v4462 = vadd.f32 0.0, %v4461
    %v4463 = vpop.f32.mrf.mxu0
    %v4464 = vpop.f32.mrf.mxu0
    %4465 = vdwg.mxu0
    %4466 = vmatprep.subr.bf16.mxu0 %v4317
    %4467 = vmatpush1.bf16.msra.mxu0 %v4316
    %4468 = vmatprep.subr.bf16.mxu0 %v4309
    %4469 = vmatpush1.bf16.msra.mxu0 %v4308
    %4470 = vmatprep.subr.bf16.mxu0 %v4301
    %4471 = vmatpush1.bf16.msra.mxu0 %v4300
    %4472 = vmatprep.subr.bf16.mxu0 %v4293
    %4473 = vmatpush1.bf16.msra.mxu0 %v4292
    %4474 = vmatprep.subr.bf16.mxu0 %v4285
    %4475 = vmatpush1.bf16.msra.mxu0 %v4284
    %4476 = vmatprep.subr.bf16.mxu0 %v4277
    %4477 = vmatpush1.bf16.msra.mxu0 %v4276
    %4478 = vmatprep.subr.bf16.mxu0 %v4269
    %4479 = vmatpush1.bf16.msra.mxu0 %v4268
    %4480 = vmatprep.subr.bf16.mxu0 %v4261
    %4481 = vmatpush1.bf16.msra.mxu0 %v4260
    %4482 = vmatprep.subr.bf16.mxu0 0
    %4483 = vmatpush2.bf16.msra.mxu0 0
    %4484 = vmatprep.subr.bf16.mxu0 0
    %4485 = vmatpush2.bf16.msra.mxu0 0
    %4486 = vmatprep.subr.bf16.mxu0 0
    %4487 = vmatpush2.bf16.msra.mxu0 0
    %4488 = vmatprep.subr.bf16.mxu0 0
    %4489 = vmatpush2.bf16.msra.mxu0 0
    %4490 = vmatprep.subr.bf16.mxu0 0
    %4491 = vmatpush2.bf16.msra.mxu0 0
    %4492 = vmatprep.subr.bf16.mxu0 0
    %4493 = vmatpush2.bf16.msra.mxu0 0
    %4494 = vmatprep.subr.bf16.mxu0 0
    %4495 = vmatpush2.bf16.msra.mxu0 0
    %4496 = vmatprep.subr.bf16.mxu0 0
    %4497 = vmatpush2.bf16.msra.mxu0 0
    %4498 = vmatprep.mubr.bf16.mxu0 0
    %4499 = vmatmul.mubr.bf16.gmra.mxu0 %v3999
    %v4500 = vpop.f32.mrf.mxu0
    %v4501 = vadd.f32 0.0, %v4500
    %v4502 = vpop.f32.mrf.mxu0
    %v4503 = vadd.f32 0.0, %v4502
    %v4504 = vpop.f32.mrf.mxu0
    %v4505 = vpop.f32.mrf.mxu0
    %4506 = vdwg.mxu0
    %4507 = vmatprep.subr.bf16.mxu0 %v4319
    %4508 = vmatpush1.bf16.msra.mxu0 %v4318
    %4509 = vmatprep.subr.bf16.mxu0 %v4311
    %4510 = vmatpush1.bf16.msra.mxu0 %v4310
    %4511 = vmatprep.subr.bf16.mxu0 %v4303
    %4512 = vmatpush1.bf16.msra.mxu0 %v4302
    %4513 = vmatprep.subr.bf16.mxu0 %v4295
    %4514 = vmatpush1.bf16.msra.mxu0 %v4294
    %4515 = vmatprep.subr.bf16.mxu0 %v4287
    %4516 = vmatpush1.bf16.msra.mxu0 %v4286
    %4517 = vmatprep.subr.bf16.mxu0 %v4279
    %4518 = vmatpush1.bf16.msra.mxu0 %v4278
    %4519 = vmatprep.subr.bf16.mxu0 %v4271
    %4520 = vmatpush1.bf16.msra.mxu0 %v4270
    %4521 = vmatprep.subr.bf16.mxu0 %v4263
    %4522 = vmatpush1.bf16.msra.mxu0 %v4262
    %4523 = vmatprep.subr.bf16.mxu0 0
    %4524 = vmatpush2.bf16.msra.mxu0 0
    %4525 = vmatprep.subr.bf16.mxu0 0
    %4526 = vmatpush2.bf16.msra.mxu0 0
    %4527 = vmatprep.subr.bf16.mxu0 0
    %4528 = vmatpush2.bf16.msra.mxu0 0
    %4529 = vmatprep.subr.bf16.mxu0 0
    %4530 = vmatpush2.bf16.msra.mxu0 0
    %4531 = vmatprep.subr.bf16.mxu0 0
    %4532 = vmatpush2.bf16.msra.mxu0 0
    %4533 = vmatprep.subr.bf16.mxu0 0
    %4534 = vmatpush2.bf16.msra.mxu0 0
    %4535 = vmatprep.subr.bf16.mxu0 0
    %4536 = vmatpush2.bf16.msra.mxu0 0
    %4537 = vmatprep.subr.bf16.mxu0 0
    %4538 = vmatpush2.bf16.msra.mxu0 0
    %4539 = vmatprep.mubr.bf16.mxu0 0
    %4540 = vmatmul.mubr.bf16.gmra.mxu0 %v3999
    %v4541 = vpop.f32.mrf.mxu0
    %v4542 = vadd.f32 0.0, %v4541
    %v4543 = vpop.f32.mrf.mxu0
    %v4544 = vadd.f32 0.0, %v4543
    %v4545 = vpop.f32.mrf.mxu0
    %v4546 = vpop.f32.mrf.mxu0
    %4547 = vdwg.mxu0
    %v4548 = vadd.f32 %v3991, %v4419
    %v4549 = vadd.f32 %v3992, %v4421
    %v4550 = vadd.f32 %v3993, %v4460
    %v4551 = vadd.f32 %v3994, %v4462
    %v4552 = vadd.f32 %v3995, %v4501
    %v4553 = vadd.f32 %v3996, %v4503
    %v4554 = vadd.f32 %v3997, %v4542
    %v4555 = vadd.f32 %v3998, %v4544
    %v4556 = vpack.c.bf16 %v1776, %v1776
    %v4557 = vld [vmem:[#allocation9 + $0xa00] sm:$0xff]
    %v4558 = vld [vmem:[#allocation9 + $0xa08] sm:$0xff]
    %v4559 = vld [vmem:[#allocation9 + $0xa10] sm:$0xff]
    %v4560 = vld [vmem:[#allocation9 + $0xa18] sm:$0xff]
    %v4561 = vld [vmem:[#allocation9 + $0xa20] sm:$0xff]
    %v4562 = vld [vmem:[#allocation9 + $0xa28] sm:$0xff]
    %v4563 = vld [vmem:[#allocation9 + $0xa30] sm:$0xff]
    %v4564 = vld [vmem:[#allocation9 + $0xa38] sm:$0xff]
    %v4565 = vld [vmem:[#allocation9 + $0xa40] sm:$0xff]
    %v4566 = vld [vmem:[#allocation9 + $0xa48] sm:$0xff]
    %v4567 = vld [vmem:[#allocation9 + $0xa50] sm:$0xff]
    %v4568 = vld [vmem:[#allocation9 + $0xa58] sm:$0xff]
    %v4569 = vld [vmem:[#allocation9 + $0xa60] sm:$0xff]
    %v4570 = vld [vmem:[#allocation9 + $0xa68] sm:$0xff]
    %v4571 = vld [vmem:[#allocation9 + $0xa70] sm:$0xff]
    %v4572 = vld [vmem:[#allocation9 + $0xa78] sm:$0xff]
    %v4573 = vld [vmem:[#allocation9 + $0xa80] sm:$0xff]
    %v4574 = vld [vmem:[#allocation9 + $0xa88] sm:$0xff]
    %v4575 = vld [vmem:[#allocation9 + $0xa90] sm:$0xff]
    %v4576 = vld [vmem:[#allocation9 + $0xa98] sm:$0xff]
    %v4577 = vld [vmem:[#allocation9 + $0xaa0] sm:$0xff]
    %v4578 = vld [vmem:[#allocation9 + $0xaa8] sm:$0xff]
    %v4579 = vld [vmem:[#allocation9 + $0xab0] sm:$0xff]
    %v4580 = vld [vmem:[#allocation9 + $0xab8] sm:$0xff]
    %v4581 = vld [vmem:[#allocation9 + $0xac0] sm:$0xff]
    %v4582 = vld [vmem:[#allocation9 + $0xac8] sm:$0xff]
    %v4583 = vld [vmem:[#allocation9 + $0xad0] sm:$0xff]
    %v4584 = vld [vmem:[#allocation9 + $0xad8] sm:$0xff]
    %v4585 = vld [vmem:[#allocation9 + $0xae0] sm:$0xff]
    %v4586 = vld [vmem:[#allocation9 + $0xae8] sm:$0xff]
    %v4587 = vld [vmem:[#allocation9 + $0xaf0] sm:$0xff]
    %v4588 = vld [vmem:[#allocation9 + $0xaf8] sm:$0xff]
    %v4589 = vld [vmem:[#allocation9 + $0xb00] sm:$0xff]
    %v4590 = vld [vmem:[#allocation9 + $0xb08] sm:$0xff]
    %v4591 = vld [vmem:[#allocation9 + $0xb10] sm:$0xff]
    %v4592 = vld [vmem:[#allocation9 + $0xb18] sm:$0xff]
    %v4593 = vld [vmem:[#allocation9 + $0xb20] sm:$0xff]
    %v4594 = vld [vmem:[#allocation9 + $0xb28] sm:$0xff]
    %v4595 = vld [vmem:[#allocation9 + $0xb30] sm:$0xff]
    %v4596 = vld [vmem:[#allocation9 + $0xb38] sm:$0xff]
    %v4597 = vld [vmem:[#allocation9 + $0xb40] sm:$0xff]
    %v4598 = vld [vmem:[#allocation9 + $0xb48] sm:$0xff]
    %v4599 = vld [vmem:[#allocation9 + $0xb50] sm:$0xff]
    %v4600 = vld [vmem:[#allocation9 + $0xb58] sm:$0xff]
    %v4601 = vld [vmem:[#allocation9 + $0xb60] sm:$0xff]
    %v4602 = vld [vmem:[#allocation9 + $0xb68] sm:$0xff]
    %v4603 = vld [vmem:[#allocation9 + $0xb70] sm:$0xff]
    %v4604 = vld [vmem:[#allocation9 + $0xb78] sm:$0xff]
    %v4605 = vld [vmem:[#allocation9 + $0xb80] sm:$0xff]
    %v4606 = vld [vmem:[#allocation9 + $0xb88] sm:$0xff]
    %v4607 = vld [vmem:[#allocation9 + $0xb90] sm:$0xff]
    %v4608 = vld [vmem:[#allocation9 + $0xb98] sm:$0xff]
    %v4609 = vld [vmem:[#allocation9 + $0xba0] sm:$0xff]
    %v4610 = vld [vmem:[#allocation9 + $0xba8] sm:$0xff]
    %v4611 = vld [vmem:[#allocation9 + $0xbb0] sm:$0xff]
    %v4612 = vld [vmem:[#allocation9 + $0xbb8] sm:$0xff]
    %v4613 = vld [vmem:[#allocation9 + $0xbc0] sm:$0xff]
    %v4614 = vld [vmem:[#allocation9 + $0xbc8] sm:$0xff]
    %v4615 = vld [vmem:[#allocation9 + $0xbd0] sm:$0xff]
    %v4616 = vld [vmem:[#allocation9 + $0xbd8] sm:$0xff]
    %v4617 = vld [vmem:[#allocation9 + $0xbe0] sm:$0xff]
    %v4618 = vld [vmem:[#allocation9 + $0xbe8] sm:$0xff]
    %v4619 = vld [vmem:[#allocation9 + $0xbf0] sm:$0xff]
    %v4620 = vld [vmem:[#allocation9 + $0xbf8] sm:$0xff]
    %v4685 = vunpack.c.l.b16 %v4557
    %v4686 = vunpack.c.h.b16 %v4557
    %v4687 = vunpack.c.l.b16 %v4558
    %v4688 = vunpack.c.h.b16 %v4558
    %v4689 = vunpack.c.l.b16 %v4559
    %v4690 = vunpack.c.h.b16 %v4559
    %v4691 = vunpack.c.l.b16 %v4560
    %v4692 = vunpack.c.h.b16 %v4560
    %v4693 = vunpack.c.l.b16 %v4561
    %v4694 = vunpack.c.h.b16 %v4561
    %v4695 = vunpack.c.l.b16 %v4562
    %v4696 = vunpack.c.h.b16 %v4562
    %v4697 = vunpack.c.l.b16 %v4563
    %v4698 = vunpack.c.h.b16 %v4563
    %v4699 = vunpack.c.l.b16 %v4564
    %v4700 = vunpack.c.h.b16 %v4564
    %v4701 = vunpack.c.l.b16 %v4565
    %v4702 = vunpack.c.h.b16 %v4565
    %v4703 = vunpack.c.l.b16 %v4566
    %v4704 = vunpack.c.h.b16 %v4566
    %v4705 = vunpack.c.l.b16 %v4567
    %v4706 = vunpack.c.h.b16 %v4567
    %v4707 = vunpack.c.l.b16 %v4568
    %v4708 = vunpack.c.h.b16 %v4568
    %v4709 = vunpack.c.l.b16 %v4569
    %v4710 = vunpack.c.h.b16 %v4569
    %v4711 = vunpack.c.l.b16 %v4570
    %v4712 = vunpack.c.h.b16 %v4570
    %v4713 = vunpack.c.l.b16 %v4571
    %v4714 = vunpack.c.h.b16 %v4571
    %v4715 = vunpack.c.l.b16 %v4572
    %v4716 = vunpack.c.h.b16 %v4572
    %v4717 = vunpack.c.l.b16 %v4573
    %v4718 = vunpack.c.h.b16 %v4573
    %v4719 = vunpack.c.l.b16 %v4574
    %v4720 = vunpack.c.h.b16 %v4574
    %v4721 = vunpack.c.l.b16 %v4575
    %v4722 = vunpack.c.h.b16 %v4575
    %v4723 = vunpack.c.l.b16 %v4576
    %v4724 = vunpack.c.h.b16 %v4576
    %v4725 = vunpack.c.l.b16 %v4577
    %v4726 = vunpack.c.h.b16 %v4577
    %v4727 = vunpack.c.l.b16 %v4578
    %v4728 = vunpack.c.h.b16 %v4578
    %v4729 = vunpack.c.l.b16 %v4579
    %v4730 = vunpack.c.h.b16 %v4579
    %v4731 = vunpack.c.l.b16 %v4580
    %v4732 = vunpack.c.h.b16 %v4580
    %v4733 = vunpack.c.l.b16 %v4581
    %v4734 = vunpack.c.h.b16 %v4581
    %v4735 = vunpack.c.l.b16 %v4582
    %v4736 = vunpack.c.h.b16 %v4582
    %v4737 = vunpack.c.l.b16 %v4583
    %v4738 = vunpack.c.h.b16 %v4583
    %v4739 = vunpack.c.l.b16 %v4584
    %v4740 = vunpack.c.h.b16 %v4584
    %v4741 = vunpack.c.l.b16 %v4585
    %v4742 = vunpack.c.h.b16 %v4585
    %v4743 = vunpack.c.l.b16 %v4586
    %v4744 = vunpack.c.h.b16 %v4586
    %v4745 = vunpack.c.l.b16 %v4587
    %v4746 = vunpack.c.h.b16 %v4587
    %v4747 = vunpack.c.l.b16 %v4588
    %v4748 = vunpack.c.h.b16 %v4588
    %v4749 = vunpack.c.l.b16 %v4589
    %v4750 = vunpack.c.h.b16 %v4589
    %v4751 = vunpack.c.l.b16 %v4590
    %v4752 = vunpack.c.h.b16 %v4590
    %v4753 = vunpack.c.l.b16 %v4591
    %v4754 = vunpack.c.h.b16 %v4591
    %v4755 = vunpack.c.l.b16 %v4592
    %v4756 = vunpack.c.h.b16 %v4592
    %v4757 = vunpack.c.l.b16 %v4593
    %v4758 = vunpack.c.h.b16 %v4593
    %v4759 = vunpack.c.l.b16 %v4594
    %v4760 = vunpack.c.h.b16 %v4594
    %v4761 = vunpack.c.l.b16 %v4595
    %v4762 = vunpack.c.h.b16 %v4595
    %v4763 = vunpack.c.l.b16 %v4596
    %v4764 = vunpack.c.h.b16 %v4596
    %v4765 = vunpack.c.l.b16 %v4597
    %v4766 = vunpack.c.h.b16 %v4597
    %v4767 = vunpack.c.l.b16 %v4598
    %v4768 = vunpack.c.h.b16 %v4598
    %v4769 = vunpack.c.l.b16 %v4599
    %v4770 = vunpack.c.h.b16 %v4599
    %v4771 = vunpack.c.l.b16 %v4600
    %v4772 = vunpack.c.h.b16 %v4600
    %v4773 = vunpack.c.l.b16 %v4601
    %v4774 = vunpack.c.h.b16 %v4601
    %v4775 = vunpack.c.l.b16 %v4602
    %v4776 = vunpack.c.h.b16 %v4602
    %v4777 = vunpack.c.l.b16 %v4603
    %v4778 = vunpack.c.h.b16 %v4603
    %v4779 = vunpack.c.l.b16 %v4604
    %v4780 = vunpack.c.h.b16 %v4604
    %v4781 = vunpack.c.l.b16 %v4605
    %v4782 = vunpack.c.h.b16 %v4605
    %v4783 = vunpack.c.l.b16 %v4606
    %v4784 = vunpack.c.h.b16 %v4606
    %v4785 = vunpack.c.l.b16 %v4607
    %v4786 = vunpack.c.h.b16 %v4607
    %v4787 = vunpack.c.l.b16 %v4608
    %v4788 = vunpack.c.h.b16 %v4608
    %v4789 = vunpack.c.l.b16 %v4609
    %v4790 = vunpack.c.h.b16 %v4609
    %v4791 = vunpack.c.l.b16 %v4610
    %v4792 = vunpack.c.h.b16 %v4610
    %v4793 = vunpack.c.l.b16 %v4611
    %v4794 = vunpack.c.h.b16 %v4611
    %v4795 = vunpack.c.l.b16 %v4612
    %v4796 = vunpack.c.h.b16 %v4612
    %v4797 = vunpack.c.l.b16 %v4613
    %v4798 = vunpack.c.h.b16 %v4613
    %v4799 = vunpack.c.l.b16 %v4614
    %v4800 = vunpack.c.h.b16 %v4614
    %v4801 = vunpack.c.l.b16 %v4615
    %v4802 = vunpack.c.h.b16 %v4615
    %v4803 = vunpack.c.l.b16 %v4616
    %v4804 = vunpack.c.h.b16 %v4616
    %v4805 = vunpack.c.l.b16 %v4617
    %v4806 = vunpack.c.h.b16 %v4617
    %v4807 = vunpack.c.l.b16 %v4618
    %v4808 = vunpack.c.h.b16 %v4618
    %v4809 = vunpack.c.l.b16 %v4619
    %v4810 = vunpack.c.h.b16 %v4619
    %v4811 = vunpack.c.l.b16 %v4620
    %v4812 = vunpack.c.h.b16 %v4620
    %v4813 = vpack.c.b16 %v4693, %v4685
    %v4814 = vpack.c.b16 %v4694, %v4686
    %v4815 = vpack.c.b16 %v4695, %v4687
    %v4816 = vpack.c.b16 %v4696, %v4688
    %v4817 = vpack.c.b16 %v4697, %v4689
    %v4818 = vpack.c.b16 %v4698, %v4690
    %v4819 = vpack.c.b16 %v4699, %v4691
    %v4820 = vpack.c.b16 %v4700, %v4692
    %v4821 = vpack.c.b16 %v4709, %v4701
    %v4822 = vpack.c.b16 %v4710, %v4702
    %v4823 = vpack.c.b16 %v4711, %v4703
    %v4824 = vpack.c.b16 %v4712, %v4704
    %v4825 = vpack.c.b16 %v4713, %v4705
    %v4826 = vpack.c.b16 %v4714, %v4706
    %v4827 = vpack.c.b16 %v4715, %v4707
    %v4828 = vpack.c.b16 %v4716, %v4708
    %v4829 = vpack.c.b16 %v4725, %v4717
    %v4830 = vpack.c.b16 %v4726, %v4718
    %v4831 = vpack.c.b16 %v4727, %v4719
    %v4832 = vpack.c.b16 %v4728, %v4720
    %v4833 = vpack.c.b16 %v4729, %v4721
    %v4834 = vpack.c.b16 %v4730, %v4722
    %v4835 = vpack.c.b16 %v4731, %v4723
    %v4836 = vpack.c.b16 %v4732, %v4724
    %v4837 = vpack.c.b16 %v4741, %v4733
    %v4838 = vpack.c.b16 %v4742, %v4734
    %v4839 = vpack.c.b16 %v4743, %v4735
    %v4840 = vpack.c.b16 %v4744, %v4736
    %v4841 = vpack.c.b16 %v4745, %v4737
    %v4842 = vpack.c.b16 %v4746, %v4738
    %v4843 = vpack.c.b16 %v4747, %v4739
    %v4844 = vpack.c.b16 %v4748, %v4740
    %v4845 = vpack.c.b16 %v4757, %v4749
    %v4846 = vpack.c.b16 %v4758, %v4750
    %v4847 = vpack.c.b16 %v4759, %v4751
    %v4848 = vpack.c.b16 %v4760, %v4752
    %v4849 = vpack.c.b16 %v4761, %v4753
    %v4850 = vpack.c.b16 %v4762, %v4754
    %v4851 = vpack.c.b16 %v4763, %v4755
    %v4852 = vpack.c.b16 %v4764, %v4756
    %v4853 = vpack.c.b16 %v4773, %v4765
    %v4854 = vpack.c.b16 %v4774, %v4766
    %v4855 = vpack.c.b16 %v4775, %v4767
    %v4856 = vpack.c.b16 %v4776, %v4768
    %v4857 = vpack.c.b16 %v4777, %v4769
    %v4858 = vpack.c.b16 %v4778, %v4770
    %v4859 = vpack.c.b16 %v4779, %v4771
    %v4860 = vpack.c.b16 %v4780, %v4772
    %v4861 = vpack.c.b16 %v4789, %v4781
    %v4862 = vpack.c.b16 %v4790, %v4782
    %v4863 = vpack.c.b16 %v4791, %v4783
    %v4864 = vpack.c.b16 %v4792, %v4784
    %v4865 = vpack.c.b16 %v4793, %v4785
    %v4866 = vpack.c.b16 %v4794, %v4786
    %v4867 = vpack.c.b16 %v4795, %v4787
    %v4868 = vpack.c.b16 %v4796, %v4788
    %v4869 = vpack.c.b16 %v4805, %v4797
    %v4870 = vpack.c.b16 %v4806, %v4798
    %v4871 = vpack.c.b16 %v4807, %v4799
    %v4872 = vpack.c.b16 %v4808, %v4800
    %v4873 = vpack.c.b16 %v4809, %v4801
    %v4874 = vpack.c.b16 %v4810, %v4802
    %v4875 = vpack.c.b16 %v4811, %v4803
    %v4876 = vpack.c.b16 %v4812, %v4804
    %4941 = vmatprep.subr.bf16.mxu0 %v4870
    %4942 = vmatpush1.bf16.msra.mxu0 %v4869
    %4943 = vmatprep.subr.bf16.mxu0 %v4862
    %4944 = vmatpush1.bf16.msra.mxu0 %v4861
    %4945 = vmatprep.subr.bf16.mxu0 %v4854
    %4946 = vmatpush1.bf16.msra.mxu0 %v4853
    %4947 = vmatprep.subr.bf16.mxu0 %v4846
    %4948 = vmatpush1.bf16.msra.mxu0 %v4845
    %4949 = vmatprep.subr.bf16.mxu0 %v4838
    %4950 = vmatpush1.bf16.msra.mxu0 %v4837
    %4951 = vmatprep.subr.bf16.mxu0 %v4830
    %4952 = vmatpush1.bf16.msra.mxu0 %v4829
    %4953 = vmatprep.subr.bf16.mxu0 %v4822
    %4954 = vmatpush1.bf16.msra.mxu0 %v4821
    %4955 = vmatprep.subr.bf16.mxu0 %v4814
    %4956 = vmatpush1.bf16.msra.mxu0 %v4813
    %4957 = vmatprep.subr.bf16.mxu0 0
    %4958 = vmatpush2.bf16.msra.mxu0 0
    %4959 = vmatprep.subr.bf16.mxu0 0
    %4960 = vmatpush2.bf16.msra.mxu0 0
    %4961 = vmatprep.subr.bf16.mxu0 0
    %4962 = vmatpush2.bf16.msra.mxu0 0
    %4963 = vmatprep.subr.bf16.mxu0 0
    %4964 = vmatpush2.bf16.msra.mxu0 0
    %4965 = vmatprep.subr.bf16.mxu0 0
    %4966 = vmatpush2.bf16.msra.mxu0 0
    %4967 = vmatprep.subr.bf16.mxu0 0
    %4968 = vmatpush2.bf16.msra.mxu0 0
    %4969 = vmatprep.subr.bf16.mxu0 0
    %4970 = vmatpush2.bf16.msra.mxu0 0
    %4971 = vmatprep.subr.bf16.mxu0 0
    %4972 = vmatpush2.bf16.msra.mxu0 0
    %4973 = vmatprep.mubr.bf16.mxu0 0
    %4974 = vmatmul.mubr.bf16.gmra.mxu0 %v4556
    %v4975 = vpop.f32.mrf.mxu0
    %v4976 = vadd.f32 0.0, %v4975
    %v4977 = vpop.f32.mrf.mxu0
    %v4978 = vadd.f32 0.0, %v4977
    %v4979 = vpop.f32.mrf.mxu0
    %v4980 = vpop.f32.mrf.mxu0
    %4981 = vdwg.mxu0
    %4982 = vmatprep.subr.bf16.mxu0 %v4872
    %4983 = vmatpush1.bf16.msra.mxu0 %v4871
    %4984 = vmatprep.subr.bf16.mxu0 %v4864
    %4985 = vmatpush1.bf16.msra.mxu0 %v4863
    %4986 = vmatprep.subr.bf16.mxu0 %v4856
    %4987 = vmatpush1.bf16.msra.mxu0 %v4855
    %4988 = vmatprep.subr.bf16.mxu0 %v4848
    %4989 = vmatpush1.bf16.msra.mxu0 %v4847
    %4990 = vmatprep.subr.bf16.mxu0 %v4840
    %4991 = vmatpush1.bf16.msra.mxu0 %v4839
    %4992 = vmatprep.subr.bf16.mxu0 %v4832
    %4993 = vmatpush1.bf16.msra.mxu0 %v4831
    %4994 = vmatprep.subr.bf16.mxu0 %v4824
    %4995 = vmatpush1.bf16.msra.mxu0 %v4823
    %4996 = vmatprep.subr.bf16.mxu0 %v4816
    %4997 = vmatpush1.bf16.msra.mxu0 %v4815
    %4998 = vmatprep.subr.bf16.mxu0 0
    %4999 = vmatpush2.bf16.msra.mxu0 0
    %5000 = vmatprep.subr.bf16.mxu0 0
    %5001 = vmatpush2.bf16.msra.mxu0 0
    %5002 = vmatprep.subr.bf16.mxu0 0
    %5003 = vmatpush2.bf16.msra.mxu0 0
    %5004 = vmatprep.subr.bf16.mxu0 0
    %5005 = vmatpush2.bf16.msra.mxu0 0
    %5006 = vmatprep.subr.bf16.mxu0 0
    %5007 = vmatpush2.bf16.msra.mxu0 0
    %5008 = vmatprep.subr.bf16.mxu0 0
    %5009 = vmatpush2.bf16.msra.mxu0 0
    %5010 = vmatprep.subr.bf16.mxu0 0
    %5011 = vmatpush2.bf16.msra.mxu0 0
    %5012 = vmatprep.subr.bf16.mxu0 0
    %5013 = vmatpush2.bf16.msra.mxu0 0
    %5014 = vmatprep.mubr.bf16.mxu0 0
    %5015 = vmatmul.mubr.bf16.gmra.mxu0 %v4556
    %v5016 = vpop.f32.mrf.mxu0
    %v5017 = vadd.f32 0.0, %v5016
    %v5018 = vpop.f32.mrf.mxu0
    %v5019 = vadd.f32 0.0, %v5018
    %v5020 = vpop.f32.mrf.mxu0
    %v5021 = vpop.f32.mrf.mxu0
    %5022 = vdwg.mxu0
    %5023 = vmatprep.subr.bf16.mxu0 %v4874
    %5024 = vmatpush1.bf16.msra.mxu0 %v4873
    %5025 = vmatprep.subr.bf16.mxu0 %v4866
    %5026 = vmatpush1.bf16.msra.mxu0 %v4865
    %5027 = vmatprep.subr.bf16.mxu0 %v4858
    %5028 = vmatpush1.bf16.msra.mxu0 %v4857
    %5029 = vmatprep.subr.bf16.mxu0 %v4850
    %5030 = vmatpush1.bf16.msra.mxu0 %v4849
    %5031 = vmatprep.subr.bf16.mxu0 %v4842
    %5032 = vmatpush1.bf16.msra.mxu0 %v4841
    %5033 = vmatprep.subr.bf16.mxu0 %v4834
    %5034 = vmatpush1.bf16.msra.mxu0 %v4833
    %5035 = vmatprep.subr.bf16.mxu0 %v4826
    %5036 = vmatpush1.bf16.msra.mxu0 %v4825
    %5037 = vmatprep.subr.bf16.mxu0 %v4818
    %5038 = vmatpush1.bf16.msra.mxu0 %v4817
    %5039 = vmatprep.subr.bf16.mxu0 0
    %5040 = vmatpush2.bf16.msra.mxu0 0
    %5041 = vmatprep.subr.bf16.mxu0 0
    %5042 = vmatpush2.bf16.msra.mxu0 0
    %5043 = vmatprep.subr.bf16.mxu0 0
    %5044 = vmatpush2.bf16.msra.mxu0 0
    %5045 = vmatprep.subr.bf16.mxu0 0
    %5046 = vmatpush2.bf16.msra.mxu0 0
    %5047 = vmatprep.subr.bf16.mxu0 0
    %5048 = vmatpush2.bf16.msra.mxu0 0
    %5049 = vmatprep.subr.bf16.mxu0 0
    %5050 = vmatpush2.bf16.msra.mxu0 0
    %5051 = vmatprep.subr.bf16.mxu0 0
    %5052 = vmatpush2.bf16.msra.mxu0 0
    %5053 = vmatprep.subr.bf16.mxu0 0
    %5054 = vmatpush2.bf16.msra.mxu0 0
    %5055 = vmatprep.mubr.bf16.mxu0 0
    %5056 = vmatmul.mubr.bf16.gmra.mxu0 %v4556
    %v5057 = vpop.f32.mrf.mxu0
    %v5058 = vadd.f32 0.0, %v5057
    %v5059 = vpop.f32.mrf.mxu0
    %v5060 = vadd.f32 0.0, %v5059
    %v5061 = vpop.f32.mrf.mxu0
    %v5062 = vpop.f32.mrf.mxu0
    %5063 = vdwg.mxu0
    %5064 = vmatprep.subr.bf16.mxu0 %v4876
    %5065 = vmatpush1.bf16.msra.mxu0 %v4875
    %5066 = vmatprep.subr.bf16.mxu0 %v4868
    %5067 = vmatpush1.bf16.msra.mxu0 %v4867
    %5068 = vmatprep.subr.bf16.mxu0 %v4860
    %5069 = vmatpush1.bf16.msra.mxu0 %v4859
    %5070 = vmatprep.subr.bf16.mxu0 %v4852
    %5071 = vmatpush1.bf16.msra.mxu0 %v4851
    %5072 = vmatprep.subr.bf16.mxu0 %v4844
    %5073 = vmatpush1.bf16.msra.mxu0 %v4843
    %5074 = vmatprep.subr.bf16.mxu0 %v4836
    %5075 = vmatpush1.bf16.msra.mxu0 %v4835
    %5076 = vmatprep.subr.bf16.mxu0 %v4828
    %5077 = vmatpush1.bf16.msra.mxu0 %v4827
    %5078 = vmatprep.subr.bf16.mxu0 %v4820
    %5079 = vmatpush1.bf16.msra.mxu0 %v4819
    %5080 = vmatprep.subr.bf16.mxu0 0
    %5081 = vmatpush2.bf16.msra.mxu0 0
    %5082 = vmatprep.subr.bf16.mxu0 0
    %5083 = vmatpush2.bf16.msra.mxu0 0
    %5084 = vmatprep.subr.bf16.mxu0 0
    %5085 = vmatpush2.bf16.msra.mxu0 0
    %5086 = vmatprep.subr.bf16.mxu0 0
    %5087 = vmatpush2.bf16.msra.mxu0 0
    %5088 = vmatprep.subr.bf16.mxu0 0
    %5089 = vmatpush2.bf16.msra.mxu0 0
    %5090 = vmatprep.subr.bf16.mxu0 0
    %5091 = vmatpush2.bf16.msra.mxu0 0
    %5092 = vmatprep.subr.bf16.mxu0 0
    %5093 = vmatpush2.bf16.msra.mxu0 0
    %5094 = vmatprep.subr.bf16.mxu0 0
    %5095 = vmatpush2.bf16.msra.mxu0 0
    %5096 = vmatprep.mubr.bf16.mxu0 0
    %5097 = vmatmul.mubr.bf16.gmra.mxu0 %v4556
    %v5098 = vpop.f32.mrf.mxu0
    %v5099 = vadd.f32 0.0, %v5098
    %v5100 = vpop.f32.mrf.mxu0
    %v5101 = vadd.f32 0.0, %v5100
    %v5102 = vpop.f32.mrf.mxu0
    %v5103 = vpop.f32.mrf.mxu0
    %5104 = vdwg.mxu0
    %v5105 = vadd.f32 %v4548, %v4976
    %v5106 = vadd.f32 %v4549, %v4978
    %v5107 = vadd.f32 %v4550, %v5017
    %v5108 = vadd.f32 %v4551, %v5019
    %v5109 = vadd.f32 %v4552, %v5058
    %v5110 = vadd.f32 %v4553, %v5060
    %v5111 = vadd.f32 %v4554, %v5099
    %v5112 = vadd.f32 %v4555, %v5101
    %v5113 = vpack.c.bf16 %v1777, %v1777
    %v5114 = vld [vmem:[#allocation9 + $0xc00] sm:$0xff]
    %v5115 = vld [vmem:[#allocation9 + $0xc08] sm:$0xff]
    %v5116 = vld [vmem:[#allocation9 + $0xc10] sm:$0xff]
    %v5117 = vld [vmem:[#allocation9 + $0xc18] sm:$0xff]
    %v5118 = vld [vmem:[#allocation9 + $0xc20] sm:$0xff]
    %v5119 = vld [vmem:[#allocation9 + $0xc28] sm:$0xff]
    %v5120 = vld [vmem:[#allocation9 + $0xc30] sm:$0xff]
    %v5121 = vld [vmem:[#allocation9 + $0xc38] sm:$0xff]
    %v5122 = vld [vmem:[#allocation9 + $0xc40] sm:$0xff]
    %v5123 = vld [vmem:[#allocation9 + $0xc48] sm:$0xff]
    %v5124 = vld [vmem:[#allocation9 + $0xc50] sm:$0xff]
    %v5125 = vld [vmem:[#allocation9 + $0xc58] sm:$0xff]
    %v5126 = vld [vmem:[#allocation9 + $0xc60] sm:$0xff]
    %v5127 = vld [vmem:[#allocation9 + $0xc68] sm:$0xff]
    %v5128 = vld [vmem:[#allocation9 + $0xc70] sm:$0xff]
    %v5129 = vld [vmem:[#allocation9 + $0xc78] sm:$0xff]
    %v5130 = vld [vmem:[#allocation9 + $0xc80] sm:$0xff]
    %v5131 = vld [vmem:[#allocation9 + $0xc88] sm:$0xff]
    %v5132 = vld [vmem:[#allocation9 + $0xc90] sm:$0xff]
    %v5133 = vld [vmem:[#allocation9 + $0xc98] sm:$0xff]
    %v5134 = vld [vmem:[#allocation9 + $0xca0] sm:$0xff]
    %v5135 = vld [vmem:[#allocation9 + $0xca8] sm:$0xff]
    %v5136 = vld [vmem:[#allocation9 + $0xcb0] sm:$0xff]
    %v5137 = vld [vmem:[#allocation9 + $0xcb8] sm:$0xff]
    %v5138 = vld [vmem:[#allocation9 + $0xcc0] sm:$0xff]
    %v5139 = vld [vmem:[#allocation9 + $0xcc8] sm:$0xff]
    %v5140 = vld [vmem:[#allocation9 + $0xcd0] sm:$0xff]
    %v5141 = vld [vmem:[#allocation9 + $0xcd8] sm:$0xff]
    %v5142 = vld [vmem:[#allocation9 + $0xce0] sm:$0xff]
    %v5143 = vld [vmem:[#allocation9 + $0xce8] sm:$0xff]
    %v5144 = vld [vmem:[#allocation9 + $0xcf0] sm:$0xff]
    %v5145 = vld [vmem:[#allocation9 + $0xcf8] sm:$0xff]
    %v5146 = vld [vmem:[#allocation9 + $0xd00] sm:$0xff]
    %v5147 = vld [vmem:[#allocation9 + $0xd08] sm:$0xff]
    %v5148 = vld [vmem:[#allocation9 + $0xd10] sm:$0xff]
    %v5149 = vld [vmem:[#allocation9 + $0xd18] sm:$0xff]
    %v5150 = vld [vmem:[#allocation9 + $0xd20] sm:$0xff]
    %v5151 = vld [vmem:[#allocation9 + $0xd28] sm:$0xff]
    %v5152 = vld [vmem:[#allocation9 + $0xd30] sm:$0xff]
    %v5153 = vld [vmem:[#allocation9 + $0xd38] sm:$0xff]
    %v5154 = vld [vmem:[#allocation9 + $0xd40] sm:$0xff]
    %v5155 = vld [vmem:[#allocation9 + $0xd48] sm:$0xff]
    %v5156 = vld [vmem:[#allocation9 + $0xd50] sm:$0xff]
    %v5157 = vld [vmem:[#allocation9 + $0xd58] sm:$0xff]
    %v5158 = vld [vmem:[#allocation9 + $0xd60] sm:$0xff]
    %v5159 = vld [vmem:[#allocation9 + $0xd68] sm:$0xff]
    %v5160 = vld [vmem:[#allocation9 + $0xd70] sm:$0xff]
    %v5161 = vld [vmem:[#allocation9 + $0xd78] sm:$0xff]
    %v5162 = vld [vmem:[#allocation9 + $0xd80] sm:$0xff]
    %v5163 = vld [vmem:[#allocation9 + $0xd88] sm:$0xff]
    %v5164 = vld [vmem:[#allocation9 + $0xd90] sm:$0xff]
    %v5165 = vld [vmem:[#allocation9 + $0xd98] sm:$0xff]
    %v5166 = vld [vmem:[#allocation9 + $0xda0] sm:$0xff]
    %v5167 = vld [vmem:[#allocation9 + $0xda8] sm:$0xff]
    %v5168 = vld [vmem:[#allocation9 + $0xdb0] sm:$0xff]
    %v5169 = vld [vmem:[#allocation9 + $0xdb8] sm:$0xff]
    %v5170 = vld [vmem:[#allocation9 + $0xdc0] sm:$0xff]
    %v5171 = vld [vmem:[#allocation9 + $0xdc8] sm:$0xff]
    %v5172 = vld [vmem:[#allocation9 + $0xdd0] sm:$0xff]
    %v5173 = vld [vmem:[#allocation9 + $0xdd8] sm:$0xff]
    %v5174 = vld [vmem:[#allocation9 + $0xde0] sm:$0xff]
    %v5175 = vld [vmem:[#allocation9 + $0xde8] sm:$0xff]
    %v5176 = vld [vmem:[#allocation9 + $0xdf0] sm:$0xff]
    %v5177 = vld [vmem:[#allocation9 + $0xdf8] sm:$0xff]
    %v5242 = vunpack.c.l.b16 %v5114
    %v5243 = vunpack.c.h.b16 %v5114
    %v5244 = vunpack.c.l.b16 %v5115
    %v5245 = vunpack.c.h.b16 %v5115
    %v5246 = vunpack.c.l.b16 %v5116
    %v5247 = vunpack.c.h.b16 %v5116
    %v5248 = vunpack.c.l.b16 %v5117
    %v5249 = vunpack.c.h.b16 %v5117
    %v5250 = vunpack.c.l.b16 %v5118
    %v5251 = vunpack.c.h.b16 %v5118
    %v5252 = vunpack.c.l.b16 %v5119
    %v5253 = vunpack.c.h.b16 %v5119
    %v5254 = vunpack.c.l.b16 %v5120
    %v5255 = vunpack.c.h.b16 %v5120
    %v5256 = vunpack.c.l.b16 %v5121
    %v5257 = vunpack.c.h.b16 %v5121
    %v5258 = vunpack.c.l.b16 %v5122
    %v5259 = vunpack.c.h.b16 %v5122
    %v5260 = vunpack.c.l.b16 %v5123
    %v5261 = vunpack.c.h.b16 %v5123
    %v5262 = vunpack.c.l.b16 %v5124
    %v5263 = vunpack.c.h.b16 %v5124
    %v5264 = vunpack.c.l.b16 %v5125
    %v5265 = vunpack.c.h.b16 %v5125
    %v5266 = vunpack.c.l.b16 %v5126
    %v5267 = vunpack.c.h.b16 %v5126
    %v5268 = vunpack.c.l.b16 %v5127
    %v5269 = vunpack.c.h.b16 %v5127
    %v5270 = vunpack.c.l.b16 %v5128
    %v5271 = vunpack.c.h.b16 %v5128
    %v5272 = vunpack.c.l.b16 %v5129
    %v5273 = vunpack.c.h.b16 %v5129
    %v5274 = vunpack.c.l.b16 %v5130
    %v5275 = vunpack.c.h.b16 %v5130
    %v5276 = vunpack.c.l.b16 %v5131
    %v5277 = vunpack.c.h.b16 %v5131
    %v5278 = vunpack.c.l.b16 %v5132
    %v5279 = vunpack.c.h.b16 %v5132
    %v5280 = vunpack.c.l.b16 %v5133
    %v5281 = vunpack.c.h.b16 %v5133
    %v5282 = vunpack.c.l.b16 %v5134
    %v5283 = vunpack.c.h.b16 %v5134
    %v5284 = vunpack.c.l.b16 %v5135
    %v5285 = vunpack.c.h.b16 %v5135
    %v5286 = vunpack.c.l.b16 %v5136
    %v5287 = vunpack.c.h.b16 %v5136
    %v5288 = vunpack.c.l.b16 %v5137
    %v5289 = vunpack.c.h.b16 %v5137
    %v5290 = vunpack.c.l.b16 %v5138
    %v5291 = vunpack.c.h.b16 %v5138
    %v5292 = vunpack.c.l.b16 %v5139
    %v5293 = vunpack.c.h.b16 %v5139
    %v5294 = vunpack.c.l.b16 %v5140
    %v5295 = vunpack.c.h.b16 %v5140
    %v5296 = vunpack.c.l.b16 %v5141
    %v5297 = vunpack.c.h.b16 %v5141
    %v5298 = vunpack.c.l.b16 %v5142
    %v5299 = vunpack.c.h.b16 %v5142
    %v5300 = vunpack.c.l.b16 %v5143
    %v5301 = vunpack.c.h.b16 %v5143
    %v5302 = vunpack.c.l.b16 %v5144
    %v5303 = vunpack.c.h.b16 %v5144
    %v5304 = vunpack.c.l.b16 %v5145
    %v5305 = vunpack.c.h.b16 %v5145
    %v5306 = vunpack.c.l.b16 %v5146
    %v5307 = vunpack.c.h.b16 %v5146
    %v5308 = vunpack.c.l.b16 %v5147
    %v5309 = vunpack.c.h.b16 %v5147
    %v5310 = vunpack.c.l.b16 %v5148
    %v5311 = vunpack.c.h.b16 %v5148
    %v5312 = vunpack.c.l.b16 %v5149
    %v5313 = vunpack.c.h.b16 %v5149
    %v5314 = vunpack.c.l.b16 %v5150
    %v5315 = vunpack.c.h.b16 %v5150
    %v5316 = vunpack.c.l.b16 %v5151
    %v5317 = vunpack.c.h.b16 %v5151
    %v5318 = vunpack.c.l.b16 %v5152
    %v5319 = vunpack.c.h.b16 %v5152
    %v5320 = vunpack.c.l.b16 %v5153
    %v5321 = vunpack.c.h.b16 %v5153
    %v5322 = vunpack.c.l.b16 %v5154
    %v5323 = vunpack.c.h.b16 %v5154
    %v5324 = vunpack.c.l.b16 %v5155
    %v5325 = vunpack.c.h.b16 %v5155
    %v5326 = vunpack.c.l.b16 %v5156
    %v5327 = vunpack.c.h.b16 %v5156
    %v5328 = vunpack.c.l.b16 %v5157
    %v5329 = vunpack.c.h.b16 %v5157
    %v5330 = vunpack.c.l.b16 %v5158
    %v5331 = vunpack.c.h.b16 %v5158
    %v5332 = vunpack.c.l.b16 %v5159
    %v5333 = vunpack.c.h.b16 %v5159
    %v5334 = vunpack.c.l.b16 %v5160
    %v5335 = vunpack.c.h.b16 %v5160
    %v5336 = vunpack.c.l.b16 %v5161
    %v5337 = vunpack.c.h.b16 %v5161
    %v5338 = vunpack.c.l.b16 %v5162
    %v5339 = vunpack.c.h.b16 %v5162
    %v5340 = vunpack.c.l.b16 %v5163
    %v5341 = vunpack.c.h.b16 %v5163
    %v5342 = vunpack.c.l.b16 %v5164
    %v5343 = vunpack.c.h.b16 %v5164
    %v5344 = vunpack.c.l.b16 %v5165
    %v5345 = vunpack.c.h.b16 %v5165
    %v5346 = vunpack.c.l.b16 %v5166
    %v5347 = vunpack.c.h.b16 %v5166
    %v5348 = vunpack.c.l.b16 %v5167
    %v5349 = vunpack.c.h.b16 %v5167
    %v5350 = vunpack.c.l.b16 %v5168
    %v5351 = vunpack.c.h.b16 %v5168
    %v5352 = vunpack.c.l.b16 %v5169
    %v5353 = vunpack.c.h.b16 %v5169
    %v5354 = vunpack.c.l.b16 %v5170
    %v5355 = vunpack.c.h.b16 %v5170
    %v5356 = vunpack.c.l.b16 %v5171
    %v5357 = vunpack.c.h.b16 %v5171
    %v5358 = vunpack.c.l.b16 %v5172
    %v5359 = vunpack.c.h.b16 %v5172
    %v5360 = vunpack.c.l.b16 %v5173
    %v5361 = vunpack.c.h.b16 %v5173
    %v5362 = vunpack.c.l.b16 %v5174
    %v5363 = vunpack.c.h.b16 %v5174
    %v5364 = vunpack.c.l.b16 %v5175
    %v5365 = vunpack.c.h.b16 %v5175
    %v5366 = vunpack.c.l.b16 %v5176
    %v5367 = vunpack.c.h.b16 %v5176
    %v5368 = vunpack.c.l.b16 %v5177
    %v5369 = vunpack.c.h.b16 %v5177
    %v5370 = vpack.c.b16 %v5250, %v5242
    %v5371 = vpack.c.b16 %v5251, %v5243
    %v5372 = vpack.c.b16 %v5252, %v5244
    %v5373 = vpack.c.b16 %v5253, %v5245
    %v5374 = vpack.c.b16 %v5254, %v5246
    %v5375 = vpack.c.b16 %v5255, %v5247
    %v5376 = vpack.c.b16 %v5256, %v5248
    %v5377 = vpack.c.b16 %v5257, %v5249
    %v5378 = vpack.c.b16 %v5266, %v5258
    %v5379 = vpack.c.b16 %v5267, %v5259
    %v5380 = vpack.c.b16 %v5268, %v5260
    %v5381 = vpack.c.b16 %v5269, %v5261
    %v5382 = vpack.c.b16 %v5270, %v5262
    %v5383 = vpack.c.b16 %v5271, %v5263
    %v5384 = vpack.c.b16 %v5272, %v5264
    %v5385 = vpack.c.b16 %v5273, %v5265
    %v5386 = vpack.c.b16 %v5282, %v5274
    %v5387 = vpack.c.b16 %v5283, %v5275
    %v5388 = vpack.c.b16 %v5284, %v5276
    %v5389 = vpack.c.b16 %v5285, %v5277
    %v5390 = vpack.c.b16 %v5286, %v5278
    %v5391 = vpack.c.b16 %v5287, %v5279
    %v5392 = vpack.c.b16 %v5288, %v5280
    %v5393 = vpack.c.b16 %v5289, %v5281
    %v5394 = vpack.c.b16 %v5298, %v5290
    %v5395 = vpack.c.b16 %v5299, %v5291
    %v5396 = vpack.c.b16 %v5300, %v5292
    %v5397 = vpack.c.b16 %v5301, %v5293
    %v5398 = vpack.c.b16 %v5302, %v5294
    %v5399 = vpack.c.b16 %v5303, %v5295
    %v5400 = vpack.c.b16 %v5304, %v5296
    %v5401 = vpack.c.b16 %v5305, %v5297
    %v5402 = vpack.c.b16 %v5314, %v5306
    %v5403 = vpack.c.b16 %v5315, %v5307
    %v5404 = vpack.c.b16 %v5316, %v5308
    %v5405 = vpack.c.b16 %v5317, %v5309
    %v5406 = vpack.c.b16 %v5318, %v5310
    %v5407 = vpack.c.b16 %v5319, %v5311
    %v5408 = vpack.c.b16 %v5320, %v5312
    %v5409 = vpack.c.b16 %v5321, %v5313
    %v5410 = vpack.c.b16 %v5330, %v5322
    %v5411 = vpack.c.b16 %v5331, %v5323
    %v5412 = vpack.c.b16 %v5332, %v5324
    %v5413 = vpack.c.b16 %v5333, %v5325
    %v5414 = vpack.c.b16 %v5334, %v5326
    %v5415 = vpack.c.b16 %v5335, %v5327
    %v5416 = vpack.c.b16 %v5336, %v5328
    %v5417 = vpack.c.b16 %v5337, %v5329
    %v5418 = vpack.c.b16 %v5346, %v5338
    %v5419 = vpack.c.b16 %v5347, %v5339
    %v5420 = vpack.c.b16 %v5348, %v5340
    %v5421 = vpack.c.b16 %v5349, %v5341
    %v5422 = vpack.c.b16 %v5350, %v5342
    %v5423 = vpack.c.b16 %v5351, %v5343
    %v5424 = vpack.c.b16 %v5352, %v5344
    %v5425 = vpack.c.b16 %v5353, %v5345
    %v5426 = vpack.c.b16 %v5362, %v5354
    %v5427 = vpack.c.b16 %v5363, %v5355
    %v5428 = vpack.c.b16 %v5364, %v5356
    %v5429 = vpack.c.b16 %v5365, %v5357
    %v5430 = vpack.c.b16 %v5366, %v5358
    %v5431 = vpack.c.b16 %v5367, %v5359
    %v5432 = vpack.c.b16 %v5368, %v5360
    %v5433 = vpack.c.b16 %v5369, %v5361
    %5498 = vmatprep.subr.bf16.mxu0 %v5427
    %5499 = vmatpush1.bf16.msra.mxu0 %v5426
    %5500 = vmatprep.subr.bf16.mxu0 %v5419
    %5501 = vmatpush1.bf16.msra.mxu0 %v5418
    %5502 = vmatprep.subr.bf16.mxu0 %v5411
    %5503 = vmatpush1.bf16.msra.mxu0 %v5410
    %5504 = vmatprep.subr.bf16.mxu0 %v5403
    %5505 = vmatpush1.bf16.msra.mxu0 %v5402
    %5506 = vmatprep.subr.bf16.mxu0 %v5395
    %5507 = vmatpush1.bf16.msra.mxu0 %v5394
    %5508 = vmatprep.subr.bf16.mxu0 %v5387
    %5509 = vmatpush1.bf16.msra.mxu0 %v5386
    %5510 = vmatprep.subr.bf16.mxu0 %v5379
    %5511 = vmatpush1.bf16.msra.mxu0 %v5378
    %5512 = vmatprep.subr.bf16.mxu0 %v5371
    %5513 = vmatpush1.bf16.msra.mxu0 %v5370
    %5514 = vmatprep.subr.bf16.mxu0 0
    %5515 = vmatpush2.bf16.msra.mxu0 0
    %5516 = vmatprep.subr.bf16.mxu0 0
    %5517 = vmatpush2.bf16.msra.mxu0 0
    %5518 = vmatprep.subr.bf16.mxu0 0
    %5519 = vmatpush2.bf16.msra.mxu0 0
    %5520 = vmatprep.subr.bf16.mxu0 0
    %5521 = vmatpush2.bf16.msra.mxu0 0
    %5522 = vmatprep.subr.bf16.mxu0 0
    %5523 = vmatpush2.bf16.msra.mxu0 0
    %5524 = vmatprep.subr.bf16.mxu0 0
    %5525 = vmatpush2.bf16.msra.mxu0 0
    %5526 = vmatprep.subr.bf16.mxu0 0
    %5527 = vmatpush2.bf16.msra.mxu0 0
    %5528 = vmatprep.subr.bf16.mxu0 0
    %5529 = vmatpush2.bf16.msra.mxu0 0
    %5530 = vmatprep.mubr.bf16.mxu0 0
    %5531 = vmatmul.mubr.bf16.gmra.mxu0 %v5113
    %v5532 = vpop.f32.mrf.mxu0
    %v5533 = vadd.f32 0.0, %v5532
    %v5534 = vpop.f32.mrf.mxu0
    %v5535 = vadd.f32 0.0, %v5534
    %v5536 = vpop.f32.mrf.mxu0
    %v5537 = vpop.f32.mrf.mxu0
    %5538 = vdwg.mxu0
    %5539 = vmatprep.subr.bf16.mxu0 %v5429
    %5540 = vmatpush1.bf16.msra.mxu0 %v5428
    %5541 = vmatprep.subr.bf16.mxu0 %v5421
    %5542 = vmatpush1.bf16.msra.mxu0 %v5420
    %5543 = vmatprep.subr.bf16.mxu0 %v5413
    %5544 = vmatpush1.bf16.msra.mxu0 %v5412
    %5545 = vmatprep.subr.bf16.mxu0 %v5405
    %5546 = vmatpush1.bf16.msra.mxu0 %v5404
    %5547 = vmatprep.subr.bf16.mxu0 %v5397
    %5548 = vmatpush1.bf16.msra.mxu0 %v5396
    %5549 = vmatprep.subr.bf16.mxu0 %v5389
    %5550 = vmatpush1.bf16.msra.mxu0 %v5388
    %5551 = vmatprep.subr.bf16.mxu0 %v5381
    %5552 = vmatpush1.bf16.msra.mxu0 %v5380
    %5553 = vmatprep.subr.bf16.mxu0 %v5373
    %5554 = vmatpush1.bf16.msra.mxu0 %v5372
    %5555 = vmatprep.subr.bf16.mxu0 0
    %5556 = vmatpush2.bf16.msra.mxu0 0
    %5557 = vmatprep.subr.bf16.mxu0 0
    %5558 = vmatpush2.bf16.msra.mxu0 0
    %5559 = vmatprep.subr.bf16.mxu0 0
    %5560 = vmatpush2.bf16.msra.mxu0 0
    %5561 = vmatprep.subr.bf16.mxu0 0
    %5562 = vmatpush2.bf16.msra.mxu0 0
    %5563 = vmatprep.subr.bf16.mxu0 0
    %5564 = vmatpush2.bf16.msra.mxu0 0
    %5565 = vmatprep.subr.bf16.mxu0 0
    %5566 = vmatpush2.bf16.msra.mxu0 0
    %5567 = vmatprep.subr.bf16.mxu0 0
    %5568 = vmatpush2.bf16.msra.mxu0 0
    %5569 = vmatprep.subr.bf16.mxu0 0
    %5570 = vmatpush2.bf16.msra.mxu0 0
    %5571 = vmatprep.mubr.bf16.mxu0 0
    %5572 = vmatmul.mubr.bf16.gmra.mxu0 %v5113
    %v5573 = vpop.f32.mrf.mxu0
    %v5574 = vadd.f32 0.0, %v5573
    %v5575 = vpop.f32.mrf.mxu0
    %v5576 = vadd.f32 0.0, %v5575
    %v5577 = vpop.f32.mrf.mxu0
    %v5578 = vpop.f32.mrf.mxu0
    %5579 = vdwg.mxu0
    %5580 = vmatprep.subr.bf16.mxu0 %v5431
    %5581 = vmatpush1.bf16.msra.mxu0 %v5430
    %5582 = vmatprep.subr.bf16.mxu0 %v5423
    %5583 = vmatpush1.bf16.msra.mxu0 %v5422
    %5584 = vmatprep.subr.bf16.mxu0 %v5415
    %5585 = vmatpush1.bf16.msra.mxu0 %v5414
    %5586 = vmatprep.subr.bf16.mxu0 %v5407
    %5587 = vmatpush1.bf16.msra.mxu0 %v5406
    %5588 = vmatprep.subr.bf16.mxu0 %v5399
    %5589 = vmatpush1.bf16.msra.mxu0 %v5398
    %5590 = vmatprep.subr.bf16.mxu0 %v5391
    %5591 = vmatpush1.bf16.msra.mxu0 %v5390
    %5592 = vmatprep.subr.bf16.mxu0 %v5383
    %5593 = vmatpush1.bf16.msra.mxu0 %v5382
    %5594 = vmatprep.subr.bf16.mxu0 %v5375
    %5595 = vmatpush1.bf16.msra.mxu0 %v5374
    %5596 = vmatprep.subr.bf16.mxu0 0
    %5597 = vmatpush2.bf16.msra.mxu0 0
    %5598 = vmatprep.subr.bf16.mxu0 0
    %5599 = vmatpush2.bf16.msra.mxu0 0
    %5600 = vmatprep.subr.bf16.mxu0 0
    %5601 = vmatpush2.bf16.msra.mxu0 0
    %5602 = vmatprep.subr.bf16.mxu0 0
    %5603 = vmatpush2.bf16.msra.mxu0 0
    %5604 = vmatprep.subr.bf16.mxu0 0
    %5605 = vmatpush2.bf16.msra.mxu0 0
    %5606 = vmatprep.subr.bf16.mxu0 0
    %5607 = vmatpush2.bf16.msra.mxu0 0
    %5608 = vmatprep.subr.bf16.mxu0 0
    %5609 = vmatpush2.bf16.msra.mxu0 0
    %5610 = vmatprep.subr.bf16.mxu0 0
    %5611 = vmatpush2.bf16.msra.mxu0 0
    %5612 = vmatprep.mubr.bf16.mxu0 0
    %5613 = vmatmul.mubr.bf16.gmra.mxu0 %v5113
    %v5614 = vpop.f32.mrf.mxu0
    %v5615 = vadd.f32 0.0, %v5614
    %v5616 = vpop.f32.mrf.mxu0
    %v5617 = vadd.f32 0.0, %v5616
    %v5618 = vpop.f32.mrf.mxu0
    %v5619 = vpop.f32.mrf.mxu0
    %5620 = vdwg.mxu0
    %5621 = vmatprep.subr.bf16.mxu0 %v5433
    %5622 = vmatpush1.bf16.msra.mxu0 %v5432
    %5623 = vmatprep.subr.bf16.mxu0 %v5425
    %5624 = vmatpush1.bf16.msra.mxu0 %v5424
    %5625 = vmatprep.subr.bf16.mxu0 %v5417
    %5626 = vmatpush1.bf16.msra.mxu0 %v5416
    %5627 = vmatprep.subr.bf16.mxu0 %v5409
    %5628 = vmatpush1.bf16.msra.mxu0 %v5408
    %5629 = vmatprep.subr.bf16.mxu0 %v5401
    %5630 = vmatpush1.bf16.msra.mxu0 %v5400
    %5631 = vmatprep.subr.bf16.mxu0 %v5393
    %5632 = vmatpush1.bf16.msra.mxu0 %v5392
    %5633 = vmatprep.subr.bf16.mxu0 %v5385
    %5634 = vmatpush1.bf16.msra.mxu0 %v5384
    %5635 = vmatprep.subr.bf16.mxu0 %v5377
    %5636 = vmatpush1.bf16.msra.mxu0 %v5376
    %5637 = vmatprep.subr.bf16.mxu0 0
    %5638 = vmatpush2.bf16.msra.mxu0 0
    %5639 = vmatprep.subr.bf16.mxu0 0
    %5640 = vmatpush2.bf16.msra.mxu0 0
    %5641 = vmatprep.subr.bf16.mxu0 0
    %5642 = vmatpush2.bf16.msra.mxu0 0
    %5643 = vmatprep.subr.bf16.mxu0 0
    %5644 = vmatpush2.bf16.msra.mxu0 0
    %5645 = vmatprep.subr.bf16.mxu0 0
    %5646 = vmatpush2.bf16.msra.mxu0 0
    %5647 = vmatprep.subr.bf16.mxu0 0
    %5648 = vmatpush2.bf16.msra.mxu0 0
    %5649 = vmatprep.subr.bf16.mxu0 0
    %5650 = vmatpush2.bf16.msra.mxu0 0
    %5651 = vmatprep.subr.bf16.mxu0 0
    %5652 = vmatpush2.bf16.msra.mxu0 0
    %5653 = vmatprep.mubr.bf16.mxu0 0
    %5654 = vmatmul.mubr.bf16.gmra.mxu0 %v5113
    %v5655 = vpop.f32.mrf.mxu0
    %v5656 = vadd.f32 0.0, %v5655
    %v5657 = vpop.f32.mrf.mxu0
    %v5658 = vadd.f32 0.0, %v5657
    %v5659 = vpop.f32.mrf.mxu0
    %v5660 = vpop.f32.mrf.mxu0
    %5661 = vdwg.mxu0
    %v5662 = vadd.f32 %v5105, %v5533
    %v5663 = vadd.f32 %v5106, %v5535
    %v5664 = vadd.f32 %v5107, %v5574
    %v5665 = vadd.f32 %v5108, %v5576
    %v5666 = vadd.f32 %v5109, %v5615
    %v5667 = vadd.f32 %v5110, %v5617
    %v5668 = vadd.f32 %v5111, %v5656
    %v5669 = vadd.f32 %v5112, %v5658
    %v5670 = vpack.c.bf16 %v1778, %v1778
    %v5671 = vld [vmem:[#allocation9 + $0xe00] sm:$0xff]
    %v5672 = vld [vmem:[#allocation9 + $0xe08] sm:$0xff]
    %v5673 = vld [vmem:[#allocation9 + $0xe10] sm:$0xff]
    %v5674 = vld [vmem:[#allocation9 + $0xe18] sm:$0xff]
    %v5675 = vld [vmem:[#allocation9 + $0xe20] sm:$0xff]
    %v5676 = vld [vmem:[#allocation9 + $0xe28] sm:$0xff]
    %v5677 = vld [vmem:[#allocation9 + $0xe30] sm:$0xff]
    %v5678 = vld [vmem:[#allocation9 + $0xe38] sm:$0xff]
    %v5679 = vld [vmem:[#allocation9 + $0xe40] sm:$0xff]
    %v5680 = vld [vmem:[#allocation9 + $0xe48] sm:$0xff]
    %v5681 = vld [vmem:[#allocation9 + $0xe50] sm:$0xff]
    %v5682 = vld [vmem:[#allocation9 + $0xe58] sm:$0xff]
    %v5683 = vld [vmem:[#allocation9 + $0xe60] sm:$0xff]
    %v5684 = vld [vmem:[#allocation9 + $0xe68] sm:$0xff]
    %v5685 = vld [vmem:[#allocation9 + $0xe70] sm:$0xff]
    %v5686 = vld [vmem:[#allocation9 + $0xe78] sm:$0xff]
    %v5687 = vld [vmem:[#allocation9 + $0xe80] sm:$0xff]
    %v5688 = vld [vmem:[#allocation9 + $0xe88] sm:$0xff]
    %v5689 = vld [vmem:[#allocation9 + $0xe90] sm:$0xff]
    %v5690 = vld [vmem:[#allocation9 + $0xe98] sm:$0xff]
    %v5691 = vld [vmem:[#allocation9 + $0xea0] sm:$0xff]
    %v5692 = vld [vmem:[#allocation9 + $0xea8] sm:$0xff]
    %v5693 = vld [vmem:[#allocation9 + $0xeb0] sm:$0xff]
    %v5694 = vld [vmem:[#allocation9 + $0xeb8] sm:$0xff]
    %v5695 = vld [vmem:[#allocation9 + $0xec0] sm:$0xff]
    %v5696 = vld [vmem:[#allocation9 + $0xec8] sm:$0xff]
    %v5697 = vld [vmem:[#allocation9 + $0xed0] sm:$0xff]
    %v5698 = vld [vmem:[#allocation9 + $0xed8] sm:$0xff]
    %v5699 = vld [vmem:[#allocation9 + $0xee0] sm:$0xff]
    %v5700 = vld [vmem:[#allocation9 + $0xee8] sm:$0xff]
    %v5701 = vld [vmem:[#allocation9 + $0xef0] sm:$0xff]
    %v5702 = vld [vmem:[#allocation9 + $0xef8] sm:$0xff]
    %v5703 = vld [vmem:[#allocation9 + $0xf00] sm:$0xff]
    %v5704 = vld [vmem:[#allocation9 + $0xf08] sm:$0xff]
    %v5705 = vld [vmem:[#allocation9 + $0xf10] sm:$0xff]
    %v5706 = vld [vmem:[#allocation9 + $0xf18] sm:$0xff]
    %v5707 = vld [vmem:[#allocation9 + $0xf20] sm:$0xff]
    %v5708 = vld [vmem:[#allocation9 + $0xf28] sm:$0xff]
    %v5709 = vld [vmem:[#allocation9 + $0xf30] sm:$0xff]
    %v5710 = vld [vmem:[#allocation9 + $0xf38] sm:$0xff]
    %v5711 = vld [vmem:[#allocation9 + $0xf40] sm:$0xff]
    %v5712 = vld [vmem:[#allocation9 + $0xf48] sm:$0xff]
    %v5713 = vld [vmem:[#allocation9 + $0xf50] sm:$0xff]
    %v5714 = vld [vmem:[#allocation9 + $0xf58] sm:$0xff]
    %v5715 = vld [vmem:[#allocation9 + $0xf60] sm:$0xff]
    %v5716 = vld [vmem:[#allocation9 + $0xf68] sm:$0xff]
    %v5717 = vld [vmem:[#allocation9 + $0xf70] sm:$0xff]
    %v5718 = vld [vmem:[#allocation9 + $0xf78] sm:$0xff]
    %v5719 = vld [vmem:[#allocation9 + $0xf80] sm:$0xff]
    %v5720 = vld [vmem:[#allocation9 + $0xf88] sm:$0xff]
    %v5721 = vld [vmem:[#allocation9 + $0xf90] sm:$0xff]
    %v5722 = vld [vmem:[#allocation9 + $0xf98] sm:$0xff]
    %v5723 = vld [vmem:[#allocation9 + $0xfa0] sm:$0xff]
    %v5724 = vld [vmem:[#allocation9 + $0xfa8] sm:$0xff]
    %v5725 = vld [vmem:[#allocation9 + $0xfb0] sm:$0xff]
    %v5726 = vld [vmem:[#allocation9 + $0xfb8] sm:$0xff]
    %v5727 = vld [vmem:[#allocation9 + $0xfc0] sm:$0xff]
    %v5728 = vld [vmem:[#allocation9 + $0xfc8] sm:$0xff]
    %v5729 = vld [vmem:[#allocation9 + $0xfd0] sm:$0xff]
    %v5730 = vld [vmem:[#allocation9 + $0xfd8] sm:$0xff]
    %v5731 = vld [vmem:[#allocation9 + $0xfe0] sm:$0xff]
    %v5732 = vld [vmem:[#allocation9 + $0xfe8] sm:$0xff]
    %v5733 = vld [vmem:[#allocation9 + $0xff0] sm:$0xff]
    %v5734 = vld [vmem:[#allocation9 + $0xff8] sm:$0xff]
    %v5799 = vunpack.c.l.b16 %v5671
    %v5800 = vunpack.c.h.b16 %v5671
    %v5801 = vunpack.c.l.b16 %v5672
    %v5802 = vunpack.c.h.b16 %v5672
    %v5803 = vunpack.c.l.b16 %v5673
    %v5804 = vunpack.c.h.b16 %v5673
    %v5805 = vunpack.c.l.b16 %v5674
    %v5806 = vunpack.c.h.b16 %v5674
    %v5807 = vunpack.c.l.b16 %v5675
    %v5808 = vunpack.c.h.b16 %v5675
    %v5809 = vunpack.c.l.b16 %v5676
    %v5810 = vunpack.c.h.b16 %v5676
    %v5811 = vunpack.c.l.b16 %v5677
    %v5812 = vunpack.c.h.b16 %v5677
    %v5813 = vunpack.c.l.b16 %v5678
    %v5814 = vunpack.c.h.b16 %v5678
    %v5815 = vunpack.c.l.b16 %v5679
    %v5816 = vunpack.c.h.b16 %v5679
    %v5817 = vunpack.c.l.b16 %v5680
    %v5818 = vunpack.c.h.b16 %v5680
    %v5819 = vunpack.c.l.b16 %v5681
    %v5820 = vunpack.c.h.b16 %v5681
    %v5821 = vunpack.c.l.b16 %v5682
    %v5822 = vunpack.c.h.b16 %v5682
    %v5823 = vunpack.c.l.b16 %v5683
    %v5824 = vunpack.c.h.b16 %v5683
    %v5825 = vunpack.c.l.b16 %v5684
    %v5826 = vunpack.c.h.b16 %v5684
    %v5827 = vunpack.c.l.b16 %v5685
    %v5828 = vunpack.c.h.b16 %v5685
    %v5829 = vunpack.c.l.b16 %v5686
    %v5830 = vunpack.c.h.b16 %v5686
    %v5831 = vunpack.c.l.b16 %v5687
    %v5832 = vunpack.c.h.b16 %v5687
    %v5833 = vunpack.c.l.b16 %v5688
    %v5834 = vunpack.c.h.b16 %v5688
    %v5835 = vunpack.c.l.b16 %v5689
    %v5836 = vunpack.c.h.b16 %v5689
    %v5837 = vunpack.c.l.b16 %v5690
    %v5838 = vunpack.c.h.b16 %v5690
    %v5839 = vunpack.c.l.b16 %v5691
    %v5840 = vunpack.c.h.b16 %v5691
    %v5841 = vunpack.c.l.b16 %v5692
    %v5842 = vunpack.c.h.b16 %v5692
    %v5843 = vunpack.c.l.b16 %v5693
    %v5844 = vunpack.c.h.b16 %v5693
    %v5845 = vunpack.c.l.b16 %v5694
    %v5846 = vunpack.c.h.b16 %v5694
    %v5847 = vunpack.c.l.b16 %v5695
    %v5848 = vunpack.c.h.b16 %v5695
    %v5849 = vunpack.c.l.b16 %v5696
    %v5850 = vunpack.c.h.b16 %v5696
    %v5851 = vunpack.c.l.b16 %v5697
    %v5852 = vunpack.c.h.b16 %v5697
    %v5853 = vunpack.c.l.b16 %v5698
    %v5854 = vunpack.c.h.b16 %v5698
    %v5855 = vunpack.c.l.b16 %v5699
    %v5856 = vunpack.c.h.b16 %v5699
    %v5857 = vunpack.c.l.b16 %v5700
    %v5858 = vunpack.c.h.b16 %v5700
    %v5859 = vunpack.c.l.b16 %v5701
    %v5860 = vunpack.c.h.b16 %v5701
    %v5861 = vunpack.c.l.b16 %v5702
    %v5862 = vunpack.c.h.b16 %v5702
    %v5863 = vunpack.c.l.b16 %v5703
    %v5864 = vunpack.c.h.b16 %v5703
    %v5865 = vunpack.c.l.b16 %v5704
    %v5866 = vunpack.c.h.b16 %v5704
    %v5867 = vunpack.c.l.b16 %v5705
    %v5868 = vunpack.c.h.b16 %v5705
    %v5869 = vunpack.c.l.b16 %v5706
    %v5870 = vunpack.c.h.b16 %v5706
    %v5871 = vunpack.c.l.b16 %v5707
    %v5872 = vunpack.c.h.b16 %v5707
    %v5873 = vunpack.c.l.b16 %v5708
    %v5874 = vunpack.c.h.b16 %v5708
    %v5875 = vunpack.c.l.b16 %v5709
    %v5876 = vunpack.c.h.b16 %v5709
    %v5877 = vunpack.c.l.b16 %v5710
    %v5878 = vunpack.c.h.b16 %v5710
    %v5879 = vunpack.c.l.b16 %v5711
    %v5880 = vunpack.c.h.b16 %v5711
    %v5881 = vunpack.c.l.b16 %v5712
    %v5882 = vunpack.c.h.b16 %v5712
    %v5883 = vunpack.c.l.b16 %v5713
    %v5884 = vunpack.c.h.b16 %v5713
    %v5885 = vunpack.c.l.b16 %v5714
    %v5886 = vunpack.c.h.b16 %v5714
    %v5887 = vunpack.c.l.b16 %v5715
    %v5888 = vunpack.c.h.b16 %v5715
    %v5889 = vunpack.c.l.b16 %v5716
    %v5890 = vunpack.c.h.b16 %v5716
    %v5891 = vunpack.c.l.b16 %v5717
    %v5892 = vunpack.c.h.b16 %v5717
    %v5893 = vunpack.c.l.b16 %v5718
    %v5894 = vunpack.c.h.b16 %v5718
    %v5895 = vunpack.c.l.b16 %v5719
    %v5896 = vunpack.c.h.b16 %v5719
    %v5897 = vunpack.c.l.b16 %v5720
    %v5898 = vunpack.c.h.b16 %v5720
    %v5899 = vunpack.c.l.b16 %v5721
    %v5900 = vunpack.c.h.b16 %v5721
    %v5901 = vunpack.c.l.b16 %v5722
    %v5902 = vunpack.c.h.b16 %v5722
    %v5903 = vunpack.c.l.b16 %v5723
    %v5904 = vunpack.c.h.b16 %v5723
    %v5905 = vunpack.c.l.b16 %v5724
    %v5906 = vunpack.c.h.b16 %v5724
    %v5907 = vunpack.c.l.b16 %v5725
    %v5908 = vunpack.c.h.b16 %v5725
    %v5909 = vunpack.c.l.b16 %v5726
    %v5910 = vunpack.c.h.b16 %v5726
    %v5911 = vunpack.c.l.b16 %v5727
    %v5912 = vunpack.c.h.b16 %v5727
    %v5913 = vunpack.c.l.b16 %v5728
    %v5914 = vunpack.c.h.b16 %v5728
    %v5915 = vunpack.c.l.b16 %v5729
    %v5916 = vunpack.c.h.b16 %v5729
    %v5917 = vunpack.c.l.b16 %v5730
    %v5918 = vunpack.c.h.b16 %v5730
    %v5919 = vunpack.c.l.b16 %v5731
    %v5920 = vunpack.c.h.b16 %v5731
    %v5921 = vunpack.c.l.b16 %v5732
    %v5922 = vunpack.c.h.b16 %v5732
    %v5923 = vunpack.c.l.b16 %v5733
    %v5924 = vunpack.c.h.b16 %v5733
    %v5925 = vunpack.c.l.b16 %v5734
    %v5926 = vunpack.c.h.b16 %v5734
    %v5927 = vpack.c.b16 %v5807, %v5799
    %v5928 = vpack.c.b16 %v5808, %v5800
    %v5929 = vpack.c.b16 %v5809, %v5801
    %v5930 = vpack.c.b16 %v5810, %v5802
    %v5931 = vpack.c.b16 %v5811, %v5803
    %v5932 = vpack.c.b16 %v5812, %v5804
    %v5933 = vpack.c.b16 %v5813, %v5805
    %v5934 = vpack.c.b16 %v5814, %v5806
    %v5935 = vpack.c.b16 %v5823, %v5815
    %v5936 = vpack.c.b16 %v5824, %v5816
    %v5937 = vpack.c.b16 %v5825, %v5817
    %v5938 = vpack.c.b16 %v5826, %v5818
    %v5939 = vpack.c.b16 %v5827, %v5819
    %v5940 = vpack.c.b16 %v5828, %v5820
    %v5941 = vpack.c.b16 %v5829, %v5821
    %v5942 = vpack.c.b16 %v5830, %v5822
    %v5943 = vpack.c.b16 %v5839, %v5831
    %v5944 = vpack.c.b16 %v5840, %v5832
    %v5945 = vpack.c.b16 %v5841, %v5833
    %v5946 = vpack.c.b16 %v5842, %v5834
    %v5947 = vpack.c.b16 %v5843, %v5835
    %v5948 = vpack.c.b16 %v5844, %v5836
    %v5949 = vpack.c.b16 %v5845, %v5837
    %v5950 = vpack.c.b16 %v5846, %v5838
    %v5951 = vpack.c.b16 %v5855, %v5847
    %v5952 = vpack.c.b16 %v5856, %v5848
    %v5953 = vpack.c.b16 %v5857, %v5849
    %v5954 = vpack.c.b16 %v5858, %v5850
    %v5955 = vpack.c.b16 %v5859, %v5851
    %v5956 = vpack.c.b16 %v5860, %v5852
    %v5957 = vpack.c.b16 %v5861, %v5853
    %v5958 = vpack.c.b16 %v5862, %v5854
    %v5959 = vpack.c.b16 %v5871, %v5863
    %v5960 = vpack.c.b16 %v5872, %v5864
    %v5961 = vpack.c.b16 %v5873, %v5865
    %v5962 = vpack.c.b16 %v5874, %v5866
    %v5963 = vpack.c.b16 %v5875, %v5867
    %v5964 = vpack.c.b16 %v5876, %v5868
    %v5965 = vpack.c.b16 %v5877, %v5869
    %v5966 = vpack.c.b16 %v5878, %v5870
    %v5967 = vpack.c.b16 %v5887, %v5879
    %v5968 = vpack.c.b16 %v5888, %v5880
    %v5969 = vpack.c.b16 %v5889, %v5881
    %v5970 = vpack.c.b16 %v5890, %v5882
    %v5971 = vpack.c.b16 %v5891, %v5883
    %v5972 = vpack.c.b16 %v5892, %v5884
    %v5973 = vpack.c.b16 %v5893, %v5885
    %v5974 = vpack.c.b16 %v5894, %v5886
    %v5975 = vpack.c.b16 %v5903, %v5895
    %v5976 = vpack.c.b16 %v5904, %v5896
    %v5977 = vpack.c.b16 %v5905, %v5897
    %v5978 = vpack.c.b16 %v5906, %v5898
    %v5979 = vpack.c.b16 %v5907, %v5899
    %v5980 = vpack.c.b16 %v5908, %v5900
    %v5981 = vpack.c.b16 %v5909, %v5901
    %v5982 = vpack.c.b16 %v5910, %v5902
    %v5983 = vpack.c.b16 %v5919, %v5911
    %v5984 = vpack.c.b16 %v5920, %v5912
    %v5985 = vpack.c.b16 %v5921, %v5913
    %v5986 = vpack.c.b16 %v5922, %v5914
    %v5987 = vpack.c.b16 %v5923, %v5915
    %v5988 = vpack.c.b16 %v5924, %v5916
    %v5989 = vpack.c.b16 %v5925, %v5917
    %v5990 = vpack.c.b16 %v5926, %v5918
    %6055 = vmatprep.subr.bf16.mxu0 %v5984
    %6056 = vmatpush1.bf16.msra.mxu0 %v5983
    %6057 = vmatprep.subr.bf16.mxu0 %v5976
    %6058 = vmatpush1.bf16.msra.mxu0 %v5975
    %6059 = vmatprep.subr.bf16.mxu0 %v5968
    %6060 = vmatpush1.bf16.msra.mxu0 %v5967
    %6061 = vmatprep.subr.bf16.mxu0 %v5960
    %6062 = vmatpush1.bf16.msra.mxu0 %v5959
    %6063 = vmatprep.subr.bf16.mxu0 %v5952
    %6064 = vmatpush1.bf16.msra.mxu0 %v5951
    %6065 = vmatprep.subr.bf16.mxu0 %v5944
    %6066 = vmatpush1.bf16.msra.mxu0 %v5943
    %6067 = vmatprep.subr.bf16.mxu0 %v5936
    %6068 = vmatpush1.bf16.msra.mxu0 %v5935
    %6069 = vmatprep.subr.bf16.mxu0 %v5928
    %6070 = vmatpush1.bf16.msra.mxu0 %v5927
    %6071 = vmatprep.subr.bf16.mxu0 0
    %6072 = vmatpush2.bf16.msra.mxu0 0
    %6073 = vmatprep.subr.bf16.mxu0 0
    %6074 = vmatpush2.bf16.msra.mxu0 0
    %6075 = vmatprep.subr.bf16.mxu0 0
    %6076 = vmatpush2.bf16.msra.mxu0 0
    %6077 = vmatprep.subr.bf16.mxu0 0
    %6078 = vmatpush2.bf16.msra.mxu0 0
    %6079 = vmatprep.subr.bf16.mxu0 0
    %6080 = vmatpush2.bf16.msra.mxu0 0
    %6081 = vmatprep.subr.bf16.mxu0 0
    %6082 = vmatpush2.bf16.msra.mxu0 0
    %6083 = vmatprep.subr.bf16.mxu0 0
    %6084 = vmatpush2.bf16.msra.mxu0 0
    %6085 = vmatprep.subr.bf16.mxu0 0
    %6086 = vmatpush2.bf16.msra.mxu0 0
    %6087 = vmatprep.mubr.bf16.mxu0 0
    %6088 = vmatmul.mubr.bf16.gmra.mxu0 %v5670
    %v6089 = vpop.f32.mrf.mxu0
    %v6090 = vadd.f32 0.0, %v6089
    %v6091 = vpop.f32.mrf.mxu0
    %v6092 = vadd.f32 0.0, %v6091
    %v6093 = vpop.f32.mrf.mxu0
    %v6094 = vpop.f32.mrf.mxu0
    %6095 = vdwg.mxu0
    %6096 = vmatprep.subr.bf16.mxu0 %v5986
    %6097 = vmatpush1.bf16.msra.mxu0 %v5985
    %6098 = vmatprep.subr.bf16.mxu0 %v5978
    %6099 = vmatpush1.bf16.msra.mxu0 %v5977
    %6100 = vmatprep.subr.bf16.mxu0 %v5970
    %6101 = vmatpush1.bf16.msra.mxu0 %v5969
    %6102 = vmatprep.subr.bf16.mxu0 %v5962
    %6103 = vmatpush1.bf16.msra.mxu0 %v5961
    %6104 = vmatprep.subr.bf16.mxu0 %v5954
    %6105 = vmatpush1.bf16.msra.mxu0 %v5953
    %6106 = vmatprep.subr.bf16.mxu0 %v5946
    %6107 = vmatpush1.bf16.msra.mxu0 %v5945
    %6108 = vmatprep.subr.bf16.mxu0 %v5938
    %6109 = vmatpush1.bf16.msra.mxu0 %v5937
    %6110 = vmatprep.subr.bf16.mxu0 %v5930
    %6111 = vmatpush1.bf16.msra.mxu0 %v5929
    %6112 = vmatprep.subr.bf16.mxu0 0
    %6113 = vmatpush2.bf16.msra.mxu0 0
    %6114 = vmatprep.subr.bf16.mxu0 0
    %6115 = vmatpush2.bf16.msra.mxu0 0
    %6116 = vmatprep.subr.bf16.mxu0 0
    %6117 = vmatpush2.bf16.msra.mxu0 0
    %6118 = vmatprep.subr.bf16.mxu0 0
    %6119 = vmatpush2.bf16.msra.mxu0 0
    %6120 = vmatprep.subr.bf16.mxu0 0
    %6121 = vmatpush2.bf16.msra.mxu0 0
    %6122 = vmatprep.subr.bf16.mxu0 0
    %6123 = vmatpush2.bf16.msra.mxu0 0
    %6124 = vmatprep.subr.bf16.mxu0 0
    %6125 = vmatpush2.bf16.msra.mxu0 0
    %6126 = vmatprep.subr.bf16.mxu0 0
    %6127 = vmatpush2.bf16.msra.mxu0 0
    %6128 = vmatprep.mubr.bf16.mxu0 0
    %6129 = vmatmul.mubr.bf16.gmra.mxu0 %v5670
    %v6130 = vpop.f32.mrf.mxu0
    %v6131 = vadd.f32 0.0, %v6130
    %v6132 = vpop.f32.mrf.mxu0
    %v6133 = vadd.f32 0.0, %v6132
    %v6134 = vpop.f32.mrf.mxu0
    %v6135 = vpop.f32.mrf.mxu0
    %6136 = vdwg.mxu0
    %6137 = vmatprep.subr.bf16.mxu0 %v5988
    %6138 = vmatpush1.bf16.msra.mxu0 %v5987
    %6139 = vmatprep.subr.bf16.mxu0 %v5980
    %6140 = vmatpush1.bf16.msra.mxu0 %v5979
    %6141 = vmatprep.subr.bf16.mxu0 %v5972
    %6142 = vmatpush1.bf16.msra.mxu0 %v5971
    %6143 = vmatprep.subr.bf16.mxu0 %v5964
    %6144 = vmatpush1.bf16.msra.mxu0 %v5963
    %6145 = vmatprep.subr.bf16.mxu0 %v5956
    %6146 = vmatpush1.bf16.msra.mxu0 %v5955
    %6147 = vmatprep.subr.bf16.mxu0 %v5948
    %6148 = vmatpush1.bf16.msra.mxu0 %v5947
    %6149 = vmatprep.subr.bf16.mxu0 %v5940
    %6150 = vmatpush1.bf16.msra.mxu0 %v5939
    %6151 = vmatprep.subr.bf16.mxu0 %v5932
    %6152 = vmatpush1.bf16.msra.mxu0 %v5931
    %6153 = vmatprep.subr.bf16.mxu0 0
    %6154 = vmatpush2.bf16.msra.mxu0 0
    %6155 = vmatprep.subr.bf16.mxu0 0
    %6156 = vmatpush2.bf16.msra.mxu0 0
    %6157 = vmatprep.subr.bf16.mxu0 0
    %6158 = vmatpush2.bf16.msra.mxu0 0
    %6159 = vmatprep.subr.bf16.mxu0 0
    %6160 = vmatpush2.bf16.msra.mxu0 0
    %6161 = vmatprep.subr.bf16.mxu0 0
    %6162 = vmatpush2.bf16.msra.mxu0 0
    %6163 = vmatprep.subr.bf16.mxu0 0
    %6164 = vmatpush2.bf16.msra.mxu0 0
    %6165 = vmatprep.subr.bf16.mxu0 0
    %6166 = vmatpush2.bf16.msra.mxu0 0
    %6167 = vmatprep.subr.bf16.mxu0 0
    %6168 = vmatpush2.bf16.msra.mxu0 0
    %6169 = vmatprep.mubr.bf16.mxu0 0
    %6170 = vmatmul.mubr.bf16.gmra.mxu0 %v5670
    %v6171 = vpop.f32.mrf.mxu0
    %v6172 = vadd.f32 0.0, %v6171
    %v6173 = vpop.f32.mrf.mxu0
    %v6174 = vadd.f32 0.0, %v6173
    %v6175 = vpop.f32.mrf.mxu0
    %v6176 = vpop.f32.mrf.mxu0
    %6177 = vdwg.mxu0
    %6178 = vmatprep.subr.bf16.mxu0 %v5990
    %6179 = vmatpush1.bf16.msra.mxu0 %v5989
    %6180 = vmatprep.subr.bf16.mxu0 %v5982
    %6181 = vmatpush1.bf16.msra.mxu0 %v5981
    %6182 = vmatprep.subr.bf16.mxu0 %v5974
    %6183 = vmatpush1.bf16.msra.mxu0 %v5973
    %6184 = vmatprep.subr.bf16.mxu0 %v5966
    %6185 = vmatpush1.bf16.msra.mxu0 %v5965
    %6186 = vmatprep.subr.bf16.mxu0 %v5958
    %6187 = vmatpush1.bf16.msra.mxu0 %v5957
    %6188 = vmatprep.subr.bf16.mxu0 %v5950
    %6189 = vmatpush1.bf16.msra.mxu0 %v5949
    %6190 = vmatprep.subr.bf16.mxu0 %v5942
    %6191 = vmatpush1.bf16.msra.mxu0 %v5941
    %6192 = vmatprep.subr.bf16.mxu0 %v5934
    %6193 = vmatpush1.bf16.msra.mxu0 %v5933
    %6194 = vmatprep.subr.bf16.mxu0 0
    %6195 = vmatpush2.bf16.msra.mxu0 0
    %6196 = vmatprep.subr.bf16.mxu0 0
    %6197 = vmatpush2.bf16.msra.mxu0 0
    %6198 = vmatprep.subr.bf16.mxu0 0
    %6199 = vmatpush2.bf16.msra.mxu0 0
    %6200 = vmatprep.subr.bf16.mxu0 0
    %6201 = vmatpush2.bf16.msra.mxu0 0
    %6202 = vmatprep.subr.bf16.mxu0 0
    %6203 = vmatpush2.bf16.msra.mxu0 0
    %6204 = vmatprep.subr.bf16.mxu0 0
    %6205 = vmatpush2.bf16.msra.mxu0 0
    %6206 = vmatprep.subr.bf16.mxu0 0
    %6207 = vmatpush2.bf16.msra.mxu0 0
    %6208 = vmatprep.subr.bf16.mxu0 0
    %6209 = vmatpush2.bf16.msra.mxu0 0
    %6210 = vmatprep.mubr.bf16.mxu0 0
    %6211 = vmatmul.mubr.bf16.gmra.mxu0 %v5670
    %v6212 = vpop.f32.mrf.mxu0
    %v6213 = vadd.f32 0.0, %v6212
    %v6214 = vpop.f32.mrf.mxu0
    %v6215 = vadd.f32 0.0, %v6214
    %v6216 = vpop.f32.mrf.mxu0
    %v6217 = vpop.f32.mrf.mxu0
    %6218 = vdwg.mxu0
    %v6219 = vadd.f32 %v5662, %v6090
    %v6220 = vadd.f32 %v5663, %v6092
    %v6221 = vadd.f32 %v5664, %v6131
    %v6222 = vadd.f32 %v5665, %v6133
    %v6223 = vadd.f32 %v5666, %v6172
    %v6224 = vadd.f32 %v5667, %v6174
    %v6225 = vadd.f32 %v5668, %v6213
    %v6226 = vadd.f32 %v5669, %v6215
    %v6227 = vpack.c.bf16 %v1779, %v1779
    %v6228 = vld [vmem:[#allocation9 + $0x1000] sm:$0xff]
    %v6229 = vld [vmem:[#allocation9 + $0x1008] sm:$0xff]
    %v6230 = vld [vmem:[#allocation9 + $0x1010] sm:$0xff]
    %v6231 = vld [vmem:[#allocation9 + $0x1018] sm:$0xff]
    %v6232 = vld [vmem:[#allocation9 + $0x1020] sm:$0xff]
    %v6233 = vld [vmem:[#allocation9 + $0x1028] sm:$0xff]
    %v6234 = vld [vmem:[#allocation9 + $0x1030] sm:$0xff]
    %v6235 = vld [vmem:[#allocation9 + $0x1038] sm:$0xff]
    %v6236 = vld [vmem:[#allocation9 + $0x1040] sm:$0xff]
    %v6237 = vld [vmem:[#allocation9 + $0x1048] sm:$0xff]
    %v6238 = vld [vmem:[#allocation9 + $0x1050] sm:$0xff]
    %v6239 = vld [vmem:[#allocation9 + $0x1058] sm:$0xff]
    %v6240 = vld [vmem:[#allocation9 + $0x1060] sm:$0xff]
    %v6241 = vld [vmem:[#allocation9 + $0x1068] sm:$0xff]
    %v6242 = vld [vmem:[#allocation9 + $0x1070] sm:$0xff]
    %v6243 = vld [vmem:[#allocation9 + $0x1078] sm:$0xff]
    %v6244 = vld [vmem:[#allocation9 + $0x1080] sm:$0xff]
    %v6245 = vld [vmem:[#allocation9 + $0x1088] sm:$0xff]
    %v6246 = vld [vmem:[#allocation9 + $0x1090] sm:$0xff]
    %v6247 = vld [vmem:[#allocation9 + $0x1098] sm:$0xff]
    %v6248 = vld [vmem:[#allocation9 + $0x10a0] sm:$0xff]
    %v6249 = vld [vmem:[#allocation9 + $0x10a8] sm:$0xff]
    %v6250 = vld [vmem:[#allocation9 + $0x10b0] sm:$0xff]
    %v6251 = vld [vmem:[#allocation9 + $0x10b8] sm:$0xff]
    %v6252 = vld [vmem:[#allocation9 + $0x10c0] sm:$0xff]
    %v6253 = vld [vmem:[#allocation9 + $0x10c8] sm:$0xff]
    %v6254 = vld [vmem:[#allocation9 + $0x10d0] sm:$0xff]
    %v6255 = vld [vmem:[#allocation9 + $0x10d8] sm:$0xff]
    %v6256 = vld [vmem:[#allocation9 + $0x10e0] sm:$0xff]
    %v6257 = vld [vmem:[#allocation9 + $0x10e8] sm:$0xff]
    %v6258 = vld [vmem:[#allocation9 + $0x10f0] sm:$0xff]
    %v6259 = vld [vmem:[#allocation9 + $0x10f8] sm:$0xff]
    %v6260 = vld [vmem:[#allocation9 + $0x1100] sm:$0xff]
    %v6261 = vld [vmem:[#allocation9 + $0x1108] sm:$0xff]
    %v6262 = vld [vmem:[#allocation9 + $0x1110] sm:$0xff]
    %v6263 = vld [vmem:[#allocation9 + $0x1118] sm:$0xff]
    %v6264 = vld [vmem:[#allocation9 + $0x1120] sm:$0xff]
    %v6265 = vld [vmem:[#allocation9 + $0x1128] sm:$0xff]
    %v6266 = vld [vmem:[#allocation9 + $0x1130] sm:$0xff]
    %v6267 = vld [vmem:[#allocation9 + $0x1138] sm:$0xff]
    %v6268 = vld [vmem:[#allocation9 + $0x1140] sm:$0xff]
    %v6269 = vld [vmem:[#allocation9 + $0x1148] sm:$0xff]
    %v6270 = vld [vmem:[#allocation9 + $0x1150] sm:$0xff]
    %v6271 = vld [vmem:[#allocation9 + $0x1158] sm:$0xff]
    %v6272 = vld [vmem:[#allocation9 + $0x1160] sm:$0xff]
    %v6273 = vld [vmem:[#allocation9 + $0x1168] sm:$0xff]
    %v6274 = vld [vmem:[#allocation9 + $0x1170] sm:$0xff]
    %v6275 = vld [vmem:[#allocation9 + $0x1178] sm:$0xff]
    %v6276 = vld [vmem:[#allocation9 + $0x1180] sm:$0xff]
    %v6277 = vld [vmem:[#allocation9 + $0x1188] sm:$0xff]
    %v6278 = vld [vmem:[#allocation9 + $0x1190] sm:$0xff]
    %v6279 = vld [vmem:[#allocation9 + $0x1198] sm:$0xff]
    %v6280 = vld [vmem:[#allocation9 + $0x11a0] sm:$0xff]
    %v6281 = vld [vmem:[#allocation9 + $0x11a8] sm:$0xff]
    %v6282 = vld [vmem:[#allocation9 + $0x11b0] sm:$0xff]
    %v6283 = vld [vmem:[#allocation9 + $0x11b8] sm:$0xff]
    %v6284 = vld [vmem:[#allocation9 + $0x11c0] sm:$0xff]
    %v6285 = vld [vmem:[#allocation9 + $0x11c8] sm:$0xff]
    %v6286 = vld [vmem:[#allocation9 + $0x11d0] sm:$0xff]
    %v6287 = vld [vmem:[#allocation9 + $0x11d8] sm:$0xff]
    %v6288 = vld [vmem:[#allocation9 + $0x11e0] sm:$0xff]
    %v6289 = vld [vmem:[#allocation9 + $0x11e8] sm:$0xff]
    %v6290 = vld [vmem:[#allocation9 + $0x11f0] sm:$0xff]
    %v6291 = vld [vmem:[#allocation9 + $0x11f8] sm:$0xff]
    %v6356 = vunpack.c.l.b16 %v6228
    %v6357 = vunpack.c.h.b16 %v6228
    %v6358 = vunpack.c.l.b16 %v6229
    %v6359 = vunpack.c.h.b16 %v6229
    %v6360 = vunpack.c.l.b16 %v6230
    %v6361 = vunpack.c.h.b16 %v6230
    %v6362 = vunpack.c.l.b16 %v6231
    %v6363 = vunpack.c.h.b16 %v6231
    %v6364 = vunpack.c.l.b16 %v6232
    %v6365 = vunpack.c.h.b16 %v6232
    %v6366 = vunpack.c.l.b16 %v6233
    %v6367 = vunpack.c.h.b16 %v6233
    %v6368 = vunpack.c.l.b16 %v6234
    %v6369 = vunpack.c.h.b16 %v6234
    %v6370 = vunpack.c.l.b16 %v6235
    %v6371 = vunpack.c.h.b16 %v6235
    %v6372 = vunpack.c.l.b16 %v6236
    %v6373 = vunpack.c.h.b16 %v6236
    %v6374 = vunpack.c.l.b16 %v6237
    %v6375 = vunpack.c.h.b16 %v6237
    %v6376 = vunpack.c.l.b16 %v6238
    %v6377 = vunpack.c.h.b16 %v6238
    %v6378 = vunpack.c.l.b16 %v6239
    %v6379 = vunpack.c.h.b16 %v6239
    %v6380 = vunpack.c.l.b16 %v6240
    %v6381 = vunpack.c.h.b16 %v6240
    %v6382 = vunpack.c.l.b16 %v6241
    %v6383 = vunpack.c.h.b16 %v6241
    %v6384 = vunpack.c.l.b16 %v6242
    %v6385 = vunpack.c.h.b16 %v6242
    %v6386 = vunpack.c.l.b16 %v6243
    %v6387 = vunpack.c.h.b16 %v6243
    %v6388 = vunpack.c.l.b16 %v6244
    %v6389 = vunpack.c.h.b16 %v6244
    %v6390 = vunpack.c.l.b16 %v6245
    %v6391 = vunpack.c.h.b16 %v6245
    %v6392 = vunpack.c.l.b16 %v6246
    %v6393 = vunpack.c.h.b16 %v6246
    %v6394 = vunpack.c.l.b16 %v6247
    %v6395 = vunpack.c.h.b16 %v6247
    %v6396 = vunpack.c.l.b16 %v6248
    %v6397 = vunpack.c.h.b16 %v6248
    %v6398 = vunpack.c.l.b16 %v6249
    %v6399 = vunpack.c.h.b16 %v6249
    %v6400 = vunpack.c.l.b16 %v6250
    %v6401 = vunpack.c.h.b16 %v6250
    %v6402 = vunpack.c.l.b16 %v6251
    %v6403 = vunpack.c.h.b16 %v6251
    %v6404 = vunpack.c.l.b16 %v6252
    %v6405 = vunpack.c.h.b16 %v6252
    %v6406 = vunpack.c.l.b16 %v6253
    %v6407 = vunpack.c.h.b16 %v6253
    %v6408 = vunpack.c.l.b16 %v6254
    %v6409 = vunpack.c.h.b16 %v6254
    %v6410 = vunpack.c.l.b16 %v6255
    %v6411 = vunpack.c.h.b16 %v6255
    %v6412 = vunpack.c.l.b16 %v6256
    %v6413 = vunpack.c.h.b16 %v6256
    %v6414 = vunpack.c.l.b16 %v6257
    %v6415 = vunpack.c.h.b16 %v6257
    %v6416 = vunpack.c.l.b16 %v6258
    %v6417 = vunpack.c.h.b16 %v6258
    %v6418 = vunpack.c.l.b16 %v6259
    %v6419 = vunpack.c.h.b16 %v6259
    %v6420 = vunpack.c.l.b16 %v6260
    %v6421 = vunpack.c.h.b16 %v6260
    %v6422 = vunpack.c.l.b16 %v6261
    %v6423 = vunpack.c.h.b16 %v6261
    %v6424 = vunpack.c.l.b16 %v6262
    %v6425 = vunpack.c.h.b16 %v6262
    %v6426 = vunpack.c.l.b16 %v6263
    %v6427 = vunpack.c.h.b16 %v6263
    %v6428 = vunpack.c.l.b16 %v6264
    %v6429 = vunpack.c.h.b16 %v6264
    %v6430 = vunpack.c.l.b16 %v6265
    %v6431 = vunpack.c.h.b16 %v6265
    %v6432 = vunpack.c.l.b16 %v6266
    %v6433 = vunpack.c.h.b16 %v6266
    %v6434 = vunpack.c.l.b16 %v6267
    %v6435 = vunpack.c.h.b16 %v6267
    %v6436 = vunpack.c.l.b16 %v6268
    %v6437 = vunpack.c.h.b16 %v6268
    %v6438 = vunpack.c.l.b16 %v6269
    %v6439 = vunpack.c.h.b16 %v6269
    %v6440 = vunpack.c.l.b16 %v6270
    %v6441 = vunpack.c.h.b16 %v6270
    %v6442 = vunpack.c.l.b16 %v6271
    %v6443 = vunpack.c.h.b16 %v6271
    %v6444 = vunpack.c.l.b16 %v6272
    %v6445 = vunpack.c.h.b16 %v6272
    %v6446 = vunpack.c.l.b16 %v6273
    %v6447 = vunpack.c.h.b16 %v6273
    %v6448 = vunpack.c.l.b16 %v6274
    %v6449 = vunpack.c.h.b16 %v6274
    %v6450 = vunpack.c.l.b16 %v6275
    %v6451 = vunpack.c.h.b16 %v6275
    %v6452 = vunpack.c.l.b16 %v6276
    %v6453 = vunpack.c.h.b16 %v6276
    %v6454 = vunpack.c.l.b16 %v6277
    %v6455 = vunpack.c.h.b16 %v6277
    %v6456 = vunpack.c.l.b16 %v6278
    %v6457 = vunpack.c.h.b16 %v6278
    %v6458 = vunpack.c.l.b16 %v6279
    %v6459 = vunpack.c.h.b16 %v6279
    %v6460 = vunpack.c.l.b16 %v6280
    %v6461 = vunpack.c.h.b16 %v6280
    %v6462 = vunpack.c.l.b16 %v6281
    %v6463 = vunpack.c.h.b16 %v6281
    %v6464 = vunpack.c.l.b16 %v6282
    %v6465 = vunpack.c.h.b16 %v6282
    %v6466 = vunpack.c.l.b16 %v6283
    %v6467 = vunpack.c.h.b16 %v6283
    %v6468 = vunpack.c.l.b16 %v6284
    %v6469 = vunpack.c.h.b16 %v6284
    %v6470 = vunpack.c.l.b16 %v6285
    %v6471 = vunpack.c.h.b16 %v6285
    %v6472 = vunpack.c.l.b16 %v6286
    %v6473 = vunpack.c.h.b16 %v6286
    %v6474 = vunpack.c.l.b16 %v6287
    %v6475 = vunpack.c.h.b16 %v6287
    %v6476 = vunpack.c.l.b16 %v6288
    %v6477 = vunpack.c.h.b16 %v6288
    %v6478 = vunpack.c.l.b16 %v6289
    %v6479 = vunpack.c.h.b16 %v6289
    %v6480 = vunpack.c.l.b16 %v6290
    %v6481 = vunpack.c.h.b16 %v6290
    %v6482 = vunpack.c.l.b16 %v6291
    %v6483 = vunpack.c.h.b16 %v6291
    %v6484 = vpack.c.b16 %v6364, %v6356
    %v6485 = vpack.c.b16 %v6365, %v6357
    %v6486 = vpack.c.b16 %v6366, %v6358
    %v6487 = vpack.c.b16 %v6367, %v6359
    %v6488 = vpack.c.b16 %v6368, %v6360
    %v6489 = vpack.c.b16 %v6369, %v6361
    %v6490 = vpack.c.b16 %v6370, %v6362
    %v6491 = vpack.c.b16 %v6371, %v6363
    %v6492 = vpack.c.b16 %v6380, %v6372
    %v6493 = vpack.c.b16 %v6381, %v6373
    %v6494 = vpack.c.b16 %v6382, %v6374
    %v6495 = vpack.c.b16 %v6383, %v6375
    %v6496 = vpack.c.b16 %v6384, %v6376
    %v6497 = vpack.c.b16 %v6385, %v6377
    %v6498 = vpack.c.b16 %v6386, %v6378
    %v6499 = vpack.c.b16 %v6387, %v6379
    %v6500 = vpack.c.b16 %v6396, %v6388
    %v6501 = vpack.c.b16 %v6397, %v6389
    %v6502 = vpack.c.b16 %v6398, %v6390
    %v6503 = vpack.c.b16 %v6399, %v6391
    %v6504 = vpack.c.b16 %v6400, %v6392
    %v6505 = vpack.c.b16 %v6401, %v6393
    %v6506 = vpack.c.b16 %v6402, %v6394
    %v6507 = vpack.c.b16 %v6403, %v6395
    %v6508 = vpack.c.b16 %v6412, %v6404
    %v6509 = vpack.c.b16 %v6413, %v6405
    %v6510 = vpack.c.b16 %v6414, %v6406
    %v6511 = vpack.c.b16 %v6415, %v6407
    %v6512 = vpack.c.b16 %v6416, %v6408
    %v6513 = vpack.c.b16 %v6417, %v6409
    %v6514 = vpack.c.b16 %v6418, %v6410
    %v6515 = vpack.c.b16 %v6419, %v6411
    %v6516 = vpack.c.b16 %v6428, %v6420
    %v6517 = vpack.c.b16 %v6429, %v6421
    %v6518 = vpack.c.b16 %v6430, %v6422
    %v6519 = vpack.c.b16 %v6431, %v6423
    %v6520 = vpack.c.b16 %v6432, %v6424
    %v6521 = vpack.c.b16 %v6433, %v6425
    %v6522 = vpack.c.b16 %v6434, %v6426
    %v6523 = vpack.c.b16 %v6435, %v6427
    %v6524 = vpack.c.b16 %v6444, %v6436
    %v6525 = vpack.c.b16 %v6445, %v6437
    %v6526 = vpack.c.b16 %v6446, %v6438
    %v6527 = vpack.c.b16 %v6447, %v6439
    %v6528 = vpack.c.b16 %v6448, %v6440
    %v6529 = vpack.c.b16 %v6449, %v6441
    %v6530 = vpack.c.b16 %v6450, %v6442
    %v6531 = vpack.c.b16 %v6451, %v6443
    %v6532 = vpack.c.b16 %v6460, %v6452
    %v6533 = vpack.c.b16 %v6461, %v6453
    %v6534 = vpack.c.b16 %v6462, %v6454
    %v6535 = vpack.c.b16 %v6463, %v6455
    %v6536 = vpack.c.b16 %v6464, %v6456
    %v6537 = vpack.c.b16 %v6465, %v6457
    %v6538 = vpack.c.b16 %v6466, %v6458
    %v6539 = vpack.c.b16 %v6467, %v6459
    %v6540 = vpack.c.b16 %v6476, %v6468
    %v6541 = vpack.c.b16 %v6477, %v6469
    %v6542 = vpack.c.b16 %v6478, %v6470
    %v6543 = vpack.c.b16 %v6479, %v6471
    %v6544 = vpack.c.b16 %v6480, %v6472
    %v6545 = vpack.c.b16 %v6481, %v6473
    %v6546 = vpack.c.b16 %v6482, %v6474
    %v6547 = vpack.c.b16 %v6483, %v6475
    %6612 = vmatprep.subr.bf16.mxu0 %v6541
    %6613 = vmatpush1.bf16.msra.mxu0 %v6540
    %6614 = vmatprep.subr.bf16.mxu0 %v6533
    %6615 = vmatpush1.bf16.msra.mxu0 %v6532
    %6616 = vmatprep.subr.bf16.mxu0 %v6525
    %6617 = vmatpush1.bf16.msra.mxu0 %v6524
    %6618 = vmatprep.subr.bf16.mxu0 %v6517
    %6619 = vmatpush1.bf16.msra.mxu0 %v6516
    %6620 = vmatprep.subr.bf16.mxu0 %v6509
    %6621 = vmatpush1.bf16.msra.mxu0 %v6508
    %6622 = vmatprep.subr.bf16.mxu0 %v6501
    %6623 = vmatpush1.bf16.msra.mxu0 %v6500
    %6624 = vmatprep.subr.bf16.mxu0 %v6493
    %6625 = vmatpush1.bf16.msra.mxu0 %v6492
    %6626 = vmatprep.subr.bf16.mxu0 %v6485
    %6627 = vmatpush1.bf16.msra.mxu0 %v6484
    %6628 = vmatprep.subr.bf16.mxu0 0
    %6629 = vmatpush2.bf16.msra.mxu0 0
    %6630 = vmatprep.subr.bf16.mxu0 0
    %6631 = vmatpush2.bf16.msra.mxu0 0
    %6632 = vmatprep.subr.bf16.mxu0 0
    %6633 = vmatpush2.bf16.msra.mxu0 0
    %6634 = vmatprep.subr.bf16.mxu0 0
    %6635 = vmatpush2.bf16.msra.mxu0 0
    %6636 = vmatprep.subr.bf16.mxu0 0
    %6637 = vmatpush2.bf16.msra.mxu0 0
    %6638 = vmatprep.subr.bf16.mxu0 0
    %6639 = vmatpush2.bf16.msra.mxu0 0
    %6640 = vmatprep.subr.bf16.mxu0 0
    %6641 = vmatpush2.bf16.msra.mxu0 0
    %6642 = vmatprep.subr.bf16.mxu0 0
    %6643 = vmatpush2.bf16.msra.mxu0 0
    %6644 = vmatprep.mubr.bf16.mxu0 0
    %6645 = vmatmul.mubr.bf16.gmra.mxu0 %v6227
    %v6646 = vpop.f32.mrf.mxu0
    %v6647 = vadd.f32 0.0, %v6646
    %v6648 = vpop.f32.mrf.mxu0
    %v6649 = vadd.f32 0.0, %v6648
    %v6650 = vpop.f32.mrf.mxu0
    %v6651 = vpop.f32.mrf.mxu0
    %6652 = vdwg.mxu0
    %6653 = vmatprep.subr.bf16.mxu0 %v6543
    %6654 = vmatpush1.bf16.msra.mxu0 %v6542
    %6655 = vmatprep.subr.bf16.mxu0 %v6535
    %6656 = vmatpush1.bf16.msra.mxu0 %v6534
    %6657 = vmatprep.subr.bf16.mxu0 %v6527
    %6658 = vmatpush1.bf16.msra.mxu0 %v6526
    %6659 = vmatprep.subr.bf16.mxu0 %v6519
    %6660 = vmatpush1.bf16.msra.mxu0 %v6518
    %6661 = vmatprep.subr.bf16.mxu0 %v6511
    %6662 = vmatpush1.bf16.msra.mxu0 %v6510
    %6663 = vmatprep.subr.bf16.mxu0 %v6503
    %6664 = vmatpush1.bf16.msra.mxu0 %v6502
    %6665 = vmatprep.subr.bf16.mxu0 %v6495
    %6666 = vmatpush1.bf16.msra.mxu0 %v6494
    %6667 = vmatprep.subr.bf16.mxu0 %v6487
    %6668 = vmatpush1.bf16.msra.mxu0 %v6486
    %6669 = vmatprep.subr.bf16.mxu0 0
    %6670 = vmatpush2.bf16.msra.mxu0 0
    %6671 = vmatprep.subr.bf16.mxu0 0
    %6672 = vmatpush2.bf16.msra.mxu0 0
    %6673 = vmatprep.subr.bf16.mxu0 0
    %6674 = vmatpush2.bf16.msra.mxu0 0
    %6675 = vmatprep.subr.bf16.mxu0 0
    %6676 = vmatpush2.bf16.msra.mxu0 0
    %6677 = vmatprep.subr.bf16.mxu0 0
    %6678 = vmatpush2.bf16.msra.mxu0 0
    %6679 = vmatprep.subr.bf16.mxu0 0
    %6680 = vmatpush2.bf16.msra.mxu0 0
    %6681 = vmatprep.subr.bf16.mxu0 0
    %6682 = vmatpush2.bf16.msra.mxu0 0
    %6683 = vmatprep.subr.bf16.mxu0 0
    %6684 = vmatpush2.bf16.msra.mxu0 0
    %6685 = vmatprep.mubr.bf16.mxu0 0
    %6686 = vmatmul.mubr.bf16.gmra.mxu0 %v6227
    %v6687 = vpop.f32.mrf.mxu0
    %v6688 = vadd.f32 0.0, %v6687
    %v6689 = vpop.f32.mrf.mxu0
    %v6690 = vadd.f32 0.0, %v6689
    %v6691 = vpop.f32.mrf.mxu0
    %v6692 = vpop.f32.mrf.mxu0
    %6693 = vdwg.mxu0
    %6694 = vmatprep.subr.bf16.mxu0 %v6545
    %6695 = vmatpush1.bf16.msra.mxu0 %v6544
    %6696 = vmatprep.subr.bf16.mxu0 %v6537
    %6697 = vmatpush1.bf16.msra.mxu0 %v6536
    %6698 = vmatprep.subr.bf16.mxu0 %v6529
    %6699 = vmatpush1.bf16.msra.mxu0 %v6528
    %6700 = vmatprep.subr.bf16.mxu0 %v6521
    %6701 = vmatpush1.bf16.msra.mxu0 %v6520
    %6702 = vmatprep.subr.bf16.mxu0 %v6513
    %6703 = vmatpush1.bf16.msra.mxu0 %v6512
    %6704 = vmatprep.subr.bf16.mxu0 %v6505
    %6705 = vmatpush1.bf16.msra.mxu0 %v6504
    %6706 = vmatprep.subr.bf16.mxu0 %v6497
    %6707 = vmatpush1.bf16.msra.mxu0 %v6496
    %6708 = vmatprep.subr.bf16.mxu0 %v6489
    %6709 = vmatpush1.bf16.msra.mxu0 %v6488
    %6710 = vmatprep.subr.bf16.mxu0 0
    %6711 = vmatpush2.bf16.msra.mxu0 0
    %6712 = vmatprep.subr.bf16.mxu0 0
    %6713 = vmatpush2.bf16.msra.mxu0 0
    %6714 = vmatprep.subr.bf16.mxu0 0
    %6715 = vmatpush2.bf16.msra.mxu0 0
    %6716 = vmatprep.subr.bf16.mxu0 0
    %6717 = vmatpush2.bf16.msra.mxu0 0
    %6718 = vmatprep.subr.bf16.mxu0 0
    %6719 = vmatpush2.bf16.msra.mxu0 0
    %6720 = vmatprep.subr.bf16.mxu0 0
    %6721 = vmatpush2.bf16.msra.mxu0 0
    %6722 = vmatprep.subr.bf16.mxu0 0
    %6723 = vmatpush2.bf16.msra.mxu0 0
    %6724 = vmatprep.subr.bf16.mxu0 0
    %6725 = vmatpush2.bf16.msra.mxu0 0
    %6726 = vmatprep.mubr.bf16.mxu0 0
    %6727 = vmatmul.mubr.bf16.gmra.mxu0 %v6227
    %v6728 = vpop.f32.mrf.mxu0
    %v6729 = vadd.f32 0.0, %v6728
    %v6730 = vpop.f32.mrf.mxu0
    %v6731 = vadd.f32 0.0, %v6730
    %v6732 = vpop.f32.mrf.mxu0
    %v6733 = vpop.f32.mrf.mxu0
    %6734 = vdwg.mxu0
    %6735 = vmatprep.subr.bf16.mxu0 %v6547
    %6736 = vmatpush1.bf16.msra.mxu0 %v6546
    %6737 = vmatprep.subr.bf16.mxu0 %v6539
    %6738 = vmatpush1.bf16.msra.mxu0 %v6538
    %6739 = vmatprep.subr.bf16.mxu0 %v6531
    %6740 = vmatpush1.bf16.msra.mxu0 %v6530
    %6741 = vmatprep.subr.bf16.mxu0 %v6523
    %6742 = vmatpush1.bf16.msra.mxu0 %v6522
    %6743 = vmatprep.subr.bf16.mxu0 %v6515
    %6744 = vmatpush1.bf16.msra.mxu0 %v6514
    %6745 = vmatprep.subr.bf16.mxu0 %v6507
    %6746 = vmatpush1.bf16.msra.mxu0 %v6506
    %6747 = vmatprep.subr.bf16.mxu0 %v6499
    %6748 = vmatpush1.bf16.msra.mxu0 %v6498
    %6749 = vmatprep.subr.bf16.mxu0 %v6491
    %6750 = vmatpush1.bf16.msra.mxu0 %v6490
    %6751 = vmatprep.subr.bf16.mxu0 0
    %6752 = vmatpush2.bf16.msra.mxu0 0
    %6753 = vmatprep.subr.bf16.mxu0 0
    %6754 = vmatpush2.bf16.msra.mxu0 0
    %6755 = vmatprep.subr.bf16.mxu0 0
    %6756 = vmatpush2.bf16.msra.mxu0 0
    %6757 = vmatprep.subr.bf16.mxu0 0
    %6758 = vmatpush2.bf16.msra.mxu0 0
    %6759 = vmatprep.subr.bf16.mxu0 0
    %6760 = vmatpush2.bf16.msra.mxu0 0
    %6761 = vmatprep.subr.bf16.mxu0 0
    %6762 = vmatpush2.bf16.msra.mxu0 0
    %6763 = vmatprep.subr.bf16.mxu0 0
    %6764 = vmatpush2.bf16.msra.mxu0 0
    %6765 = vmatprep.subr.bf16.mxu0 0
    %6766 = vmatpush2.bf16.msra.mxu0 0
    %6767 = vmatprep.mubr.bf16.mxu0 0
    %6768 = vmatmul.mubr.bf16.gmra.mxu0 %v6227
    %v6769 = vpop.f32.mrf.mxu0
    %v6770 = vadd.f32 0.0, %v6769
    %v6771 = vpop.f32.mrf.mxu0
    %v6772 = vadd.f32 0.0, %v6771
    %v6773 = vpop.f32.mrf.mxu0
    %v6774 = vpop.f32.mrf.mxu0
    %6775 = vdwg.mxu0
    %v6776 = vadd.f32 %v6219, %v6647
    %v6777 = vadd.f32 %v6220, %v6649
    %v6778 = vadd.f32 %v6221, %v6688
    %v6779 = vadd.f32 %v6222, %v6690
    %v6780 = vadd.f32 %v6223, %v6729
    %v6781 = vadd.f32 %v6224, %v6731
    %v6782 = vadd.f32 %v6225, %v6770
    %v6783 = vadd.f32 %v6226, %v6772
    %v6784 = vpack.c.bf16 %v1780, %v1780
    %v6785 = vld [vmem:[#allocation9 + $0x1200] sm:$0xff]
    %v6786 = vld [vmem:[#allocation9 + $0x1208] sm:$0xff]
    %v6787 = vld [vmem:[#allocation9 + $0x1210] sm:$0xff]
    %v6788 = vld [vmem:[#allocation9 + $0x1218] sm:$0xff]
    %v6789 = vld [vmem:[#allocation9 + $0x1220] sm:$0xff]
    %v6790 = vld [vmem:[#allocation9 + $0x1228] sm:$0xff]
    %v6791 = vld [vmem:[#allocation9 + $0x1230] sm:$0xff]
    %v6792 = vld [vmem:[#allocation9 + $0x1238] sm:$0xff]
    %v6793 = vld [vmem:[#allocation9 + $0x1240] sm:$0xff]
    %v6794 = vld [vmem:[#allocation9 + $0x1248] sm:$0xff]
    %v6795 = vld [vmem:[#allocation9 + $0x1250] sm:$0xff]
    %v6796 = vld [vmem:[#allocation9 + $0x1258] sm:$0xff]
    %v6797 = vld [vmem:[#allocation9 + $0x1260] sm:$0xff]
    %v6798 = vld [vmem:[#allocation9 + $0x1268] sm:$0xff]
    %v6799 = vld [vmem:[#allocation9 + $0x1270] sm:$0xff]
    %v6800 = vld [vmem:[#allocation9 + $0x1278] sm:$0xff]
    %v6801 = vld [vmem:[#allocation9 + $0x1280] sm:$0xff]
    %v6802 = vld [vmem:[#allocation9 + $0x1288] sm:$0xff]
    %v6803 = vld [vmem:[#allocation9 + $0x1290] sm:$0xff]
    %v6804 = vld [vmem:[#allocation9 + $0x1298] sm:$0xff]
    %v6805 = vld [vmem:[#allocation9 + $0x12a0] sm:$0xff]
    %v6806 = vld [vmem:[#allocation9 + $0x12a8] sm:$0xff]
    %v6807 = vld [vmem:[#allocation9 + $0x12b0] sm:$0xff]
    %v6808 = vld [vmem:[#allocation9 + $0x12b8] sm:$0xff]
    %v6809 = vld [vmem:[#allocation9 + $0x12c0] sm:$0xff]
    %v6810 = vld [vmem:[#allocation9 + $0x12c8] sm:$0xff]
    %v6811 = vld [vmem:[#allocation9 + $0x12d0] sm:$0xff]
    %v6812 = vld [vmem:[#allocation9 + $0x12d8] sm:$0xff]
    %v6813 = vld [vmem:[#allocation9 + $0x12e0] sm:$0xff]
    %v6814 = vld [vmem:[#allocation9 + $0x12e8] sm:$0xff]
    %v6815 = vld [vmem:[#allocation9 + $0x12f0] sm:$0xff]
    %v6816 = vld [vmem:[#allocation9 + $0x12f8] sm:$0xff]
    %v6817 = vld [vmem:[#allocation9 + $0x1300] sm:$0xff]
    %v6818 = vld [vmem:[#allocation9 + $0x1308] sm:$0xff]
    %v6819 = vld [vmem:[#allocation9 + $0x1310] sm:$0xff]
    %v6820 = vld [vmem:[#allocation9 + $0x1318] sm:$0xff]
    %v6821 = vld [vmem:[#allocation9 + $0x1320] sm:$0xff]
    %v6822 = vld [vmem:[#allocation9 + $0x1328] sm:$0xff]
    %v6823 = vld [vmem:[#allocation9 + $0x1330] sm:$0xff]
    %v6824 = vld [vmem:[#allocation9 + $0x1338] sm:$0xff]
    %v6825 = vld [vmem:[#allocation9 + $0x1340] sm:$0xff]
    %v6826 = vld [vmem:[#allocation9 + $0x1348] sm:$0xff]
    %v6827 = vld [vmem:[#allocation9 + $0x1350] sm:$0xff]
    %v6828 = vld [vmem:[#allocation9 + $0x1358] sm:$0xff]
    %v6829 = vld [vmem:[#allocation9 + $0x1360] sm:$0xff]
    %v6830 = vld [vmem:[#allocation9 + $0x1368] sm:$0xff]
    %v6831 = vld [vmem:[#allocation9 + $0x1370] sm:$0xff]
    %v6832 = vld [vmem:[#allocation9 + $0x1378] sm:$0xff]
    %v6833 = vld [vmem:[#allocation9 + $0x1380] sm:$0xff]
    %v6834 = vld [vmem:[#allocation9 + $0x1388] sm:$0xff]
    %v6835 = vld [vmem:[#allocation9 + $0x1390] sm:$0xff]
    %v6836 = vld [vmem:[#allocation9 + $0x1398] sm:$0xff]
    %v6837 = vld [vmem:[#allocation9 + $0x13a0] sm:$0xff]
    %v6838 = vld [vmem:[#allocation9 + $0x13a8] sm:$0xff]
    %v6839 = vld [vmem:[#allocation9 + $0x13b0] sm:$0xff]
    %v6840 = vld [vmem:[#allocation9 + $0x13b8] sm:$0xff]
    %v6841 = vld [vmem:[#allocation9 + $0x13c0] sm:$0xff]
    %v6842 = vld [vmem:[#allocation9 + $0x13c8] sm:$0xff]
    %v6843 = vld [vmem:[#allocation9 + $0x13d0] sm:$0xff]
    %v6844 = vld [vmem:[#allocation9 + $0x13d8] sm:$0xff]
    %v6845 = vld [vmem:[#allocation9 + $0x13e0] sm:$0xff]
    %v6846 = vld [vmem:[#allocation9 + $0x13e8] sm:$0xff]
    %v6847 = vld [vmem:[#allocation9 + $0x13f0] sm:$0xff]
    %v6848 = vld [vmem:[#allocation9 + $0x13f8] sm:$0xff]
    %v6913 = vunpack.c.l.b16 %v6785
    %v6914 = vunpack.c.h.b16 %v6785
    %v6915 = vunpack.c.l.b16 %v6786
    %v6916 = vunpack.c.h.b16 %v6786
    %v6917 = vunpack.c.l.b16 %v6787
    %v6918 = vunpack.c.h.b16 %v6787
    %v6919 = vunpack.c.l.b16 %v6788
    %v6920 = vunpack.c.h.b16 %v6788
    %v6921 = vunpack.c.l.b16 %v6789
    %v6922 = vunpack.c.h.b16 %v6789
    %v6923 = vunpack.c.l.b16 %v6790
    %v6924 = vunpack.c.h.b16 %v6790
    %v6925 = vunpack.c.l.b16 %v6791
    %v6926 = vunpack.c.h.b16 %v6791
    %v6927 = vunpack.c.l.b16 %v6792
    %v6928 = vunpack.c.h.b16 %v6792
    %v6929 = vunpack.c.l.b16 %v6793
    %v6930 = vunpack.c.h.b16 %v6793
    %v6931 = vunpack.c.l.b16 %v6794
    %v6932 = vunpack.c.h.b16 %v6794
    %v6933 = vunpack.c.l.b16 %v6795
    %v6934 = vunpack.c.h.b16 %v6795
    %v6935 = vunpack.c.l.b16 %v6796
    %v6936 = vunpack.c.h.b16 %v6796
    %v6937 = vunpack.c.l.b16 %v6797
    %v6938 = vunpack.c.h.b16 %v6797
    %v6939 = vunpack.c.l.b16 %v6798
    %v6940 = vunpack.c.h.b16 %v6798
    %v6941 = vunpack.c.l.b16 %v6799
    %v6942 = vunpack.c.h.b16 %v6799
    %v6943 = vunpack.c.l.b16 %v6800
    %v6944 = vunpack.c.h.b16 %v6800
    %v6945 = vunpack.c.l.b16 %v6801
    %v6946 = vunpack.c.h.b16 %v6801
    %v6947 = vunpack.c.l.b16 %v6802
    %v6948 = vunpack.c.h.b16 %v6802
    %v6949 = vunpack.c.l.b16 %v6803
    %v6950 = vunpack.c.h.b16 %v6803
    %v6951 = vunpack.c.l.b16 %v6804
    %v6952 = vunpack.c.h.b16 %v6804
    %v6953 = vunpack.c.l.b16 %v6805
    %v6954 = vunpack.c.h.b16 %v6805
    %v6955 = vunpack.c.l.b16 %v6806
    %v6956 = vunpack.c.h.b16 %v6806
    %v6957 = vunpack.c.l.b16 %v6807
    %v6958 = vunpack.c.h.b16 %v6807
    %v6959 = vunpack.c.l.b16 %v6808
    %v6960 = vunpack.c.h.b16 %v6808
    %v6961 = vunpack.c.l.b16 %v6809
    %v6962 = vunpack.c.h.b16 %v6809
    %v6963 = vunpack.c.l.b16 %v6810
    %v6964 = vunpack.c.h.b16 %v6810
    %v6965 = vunpack.c.l.b16 %v6811
    %v6966 = vunpack.c.h.b16 %v6811
    %v6967 = vunpack.c.l.b16 %v6812
    %v6968 = vunpack.c.h.b16 %v6812
    %v6969 = vunpack.c.l.b16 %v6813
    %v6970 = vunpack.c.h.b16 %v6813
    %v6971 = vunpack.c.l.b16 %v6814
    %v6972 = vunpack.c.h.b16 %v6814
    %v6973 = vunpack.c.l.b16 %v6815
    %v6974 = vunpack.c.h.b16 %v6815
    %v6975 = vunpack.c.l.b16 %v6816
    %v6976 = vunpack.c.h.b16 %v6816
    %v6977 = vunpack.c.l.b16 %v6817
    %v6978 = vunpack.c.h.b16 %v6817
    %v6979 = vunpack.c.l.b16 %v6818
    %v6980 = vunpack.c.h.b16 %v6818
    %v6981 = vunpack.c.l.b16 %v6819
    %v6982 = vunpack.c.h.b16 %v6819
    %v6983 = vunpack.c.l.b16 %v6820
    %v6984 = vunpack.c.h.b16 %v6820
    %v6985 = vunpack.c.l.b16 %v6821
    %v6986 = vunpack.c.h.b16 %v6821
    %v6987 = vunpack.c.l.b16 %v6822
    %v6988 = vunpack.c.h.b16 %v6822
    %v6989 = vunpack.c.l.b16 %v6823
    %v6990 = vunpack.c.h.b16 %v6823
    %v6991 = vunpack.c.l.b16 %v6824
    %v6992 = vunpack.c.h.b16 %v6824
    %v6993 = vunpack.c.l.b16 %v6825
    %v6994 = vunpack.c.h.b16 %v6825
    %v6995 = vunpack.c.l.b16 %v6826
    %v6996 = vunpack.c.h.b16 %v6826
    %v6997 = vunpack.c.l.b16 %v6827
    %v6998 = vunpack.c.h.b16 %v6827
    %v6999 = vunpack.c.l.b16 %v6828
    %v7000 = vunpack.c.h.b16 %v6828
    %v7001 = vunpack.c.l.b16 %v6829
    %v7002 = vunpack.c.h.b16 %v6829
    %v7003 = vunpack.c.l.b16 %v6830
    %v7004 = vunpack.c.h.b16 %v6830
    %v7005 = vunpack.c.l.b16 %v6831
    %v7006 = vunpack.c.h.b16 %v6831
    %v7007 = vunpack.c.l.b16 %v6832
    %v7008 = vunpack.c.h.b16 %v6832
    %v7009 = vunpack.c.l.b16 %v6833
    %v7010 = vunpack.c.h.b16 %v6833
    %v7011 = vunpack.c.l.b16 %v6834
    %v7012 = vunpack.c.h.b16 %v6834
    %v7013 = vunpack.c.l.b16 %v6835
    %v7014 = vunpack.c.h.b16 %v6835
    %v7015 = vunpack.c.l.b16 %v6836
    %v7016 = vunpack.c.h.b16 %v6836
    %v7017 = vunpack.c.l.b16 %v6837
    %v7018 = vunpack.c.h.b16 %v6837
    %v7019 = vunpack.c.l.b16 %v6838
    %v7020 = vunpack.c.h.b16 %v6838
    %v7021 = vunpack.c.l.b16 %v6839
    %v7022 = vunpack.c.h.b16 %v6839
    %v7023 = vunpack.c.l.b16 %v6840
    %v7024 = vunpack.c.h.b16 %v6840
    %v7025 = vunpack.c.l.b16 %v6841
    %v7026 = vunpack.c.h.b16 %v6841
    %v7027 = vunpack.c.l.b16 %v6842
    %v7028 = vunpack.c.h.b16 %v6842
    %v7029 = vunpack.c.l.b16 %v6843
    %v7030 = vunpack.c.h.b16 %v6843
    %v7031 = vunpack.c.l.b16 %v6844
    %v7032 = vunpack.c.h.b16 %v6844
    %v7033 = vunpack.c.l.b16 %v6845
    %v7034 = vunpack.c.h.b16 %v6845
    %v7035 = vunpack.c.l.b16 %v6846
    %v7036 = vunpack.c.h.b16 %v6846
    %v7037 = vunpack.c.l.b16 %v6847
    %v7038 = vunpack.c.h.b16 %v6847
    %v7039 = vunpack.c.l.b16 %v6848
    %v7040 = vunpack.c.h.b16 %v6848
    %v7041 = vpack.c.b16 %v6921, %v6913
    %v7042 = vpack.c.b16 %v6922, %v6914
    %v7043 = vpack.c.b16 %v6923, %v6915
    %v7044 = vpack.c.b16 %v6924, %v6916
    %v7045 = vpack.c.b16 %v6925, %v6917
    %v7046 = vpack.c.b16 %v6926, %v6918
    %v7047 = vpack.c.b16 %v6927, %v6919
    %v7048 = vpack.c.b16 %v6928, %v6920
    %v7049 = vpack.c.b16 %v6937, %v6929
    %v7050 = vpack.c.b16 %v6938, %v6930
    %v7051 = vpack.c.b16 %v6939, %v6931
    %v7052 = vpack.c.b16 %v6940, %v6932
    %v7053 = vpack.c.b16 %v6941, %v6933
    %v7054 = vpack.c.b16 %v6942, %v6934
    %v7055 = vpack.c.b16 %v6943, %v6935
    %v7056 = vpack.c.b16 %v6944, %v6936
    %v7057 = vpack.c.b16 %v6953, %v6945
    %v7058 = vpack.c.b16 %v6954, %v6946
    %v7059 = vpack.c.b16 %v6955, %v6947
    %v7060 = vpack.c.b16 %v6956, %v6948
    %v7061 = vpack.c.b16 %v6957, %v6949
    %v7062 = vpack.c.b16 %v6958, %v6950
    %v7063 = vpack.c.b16 %v6959, %v6951
    %v7064 = vpack.c.b16 %v6960, %v6952
    %v7065 = vpack.c.b16 %v6969, %v6961
    %v7066 = vpack.c.b16 %v6970, %v6962
    %v7067 = vpack.c.b16 %v6971, %v6963
    %v7068 = vpack.c.b16 %v6972, %v6964
    %v7069 = vpack.c.b16 %v6973, %v6965
    %v7070 = vpack.c.b16 %v6974, %v6966
    %v7071 = vpack.c.b16 %v6975, %v6967
    %v7072 = vpack.c.b16 %v6976, %v6968
    %v7073 = vpack.c.b16 %v6985, %v6977
    %v7074 = vpack.c.b16 %v6986, %v6978
    %v7075 = vpack.c.b16 %v6987, %v6979
    %v7076 = vpack.c.b16 %v6988, %v6980
    %v7077 = vpack.c.b16 %v6989, %v6981
    %v7078 = vpack.c.b16 %v6990, %v6982
    %v7079 = vpack.c.b16 %v6991, %v6983
    %v7080 = vpack.c.b16 %v6992, %v6984
    %v7081 = vpack.c.b16 %v7001, %v6993
    %v7082 = vpack.c.b16 %v7002, %v6994
    %v7083 = vpack.c.b16 %v7003, %v6995
    %v7084 = vpack.c.b16 %v7004, %v6996
    %v7085 = vpack.c.b16 %v7005, %v6997
    %v7086 = vpack.c.b16 %v7006, %v6998
    %v7087 = vpack.c.b16 %v7007, %v6999
    %v7088 = vpack.c.b16 %v7008, %v7000
    %v7089 = vpack.c.b16 %v7017, %v7009
    %v7090 = vpack.c.b16 %v7018, %v7010
    %v7091 = vpack.c.b16 %v7019, %v7011
    %v7092 = vpack.c.b16 %v7020, %v7012
    %v7093 = vpack.c.b16 %v7021, %v7013
    %v7094 = vpack.c.b16 %v7022, %v7014
    %v7095 = vpack.c.b16 %v7023, %v7015
    %v7096 = vpack.c.b16 %v7024, %v7016
    %v7097 = vpack.c.b16 %v7033, %v7025
    %v7098 = vpack.c.b16 %v7034, %v7026
    %v7099 = vpack.c.b16 %v7035, %v7027
    %v7100 = vpack.c.b16 %v7036, %v7028
    %v7101 = vpack.c.b16 %v7037, %v7029
    %v7102 = vpack.c.b16 %v7038, %v7030
    %v7103 = vpack.c.b16 %v7039, %v7031
    %v7104 = vpack.c.b16 %v7040, %v7032
    %7169 = vmatprep.subr.bf16.mxu0 %v7098
    %7170 = vmatpush1.bf16.msra.mxu0 %v7097
    %7171 = vmatprep.subr.bf16.mxu0 %v7090
    %7172 = vmatpush1.bf16.msra.mxu0 %v7089
    %7173 = vmatprep.subr.bf16.mxu0 %v7082
    %7174 = vmatpush1.bf16.msra.mxu0 %v7081
    %7175 = vmatprep.subr.bf16.mxu0 %v7074
    %7176 = vmatpush1.bf16.msra.mxu0 %v7073
    %7177 = vmatprep.subr.bf16.mxu0 %v7066
    %7178 = vmatpush1.bf16.msra.mxu0 %v7065
    %7179 = vmatprep.subr.bf16.mxu0 %v7058
    %7180 = vmatpush1.bf16.msra.mxu0 %v7057
    %7181 = vmatprep.subr.bf16.mxu0 %v7050
    %7182 = vmatpush1.bf16.msra.mxu0 %v7049
    %7183 = vmatprep.subr.bf16.mxu0 %v7042
    %7184 = vmatpush1.bf16.msra.mxu0 %v7041
    %7185 = vmatprep.subr.bf16.mxu0 0
    %7186 = vmatpush2.bf16.msra.mxu0 0
    %7187 = vmatprep.subr.bf16.mxu0 0
    %7188 = vmatpush2.bf16.msra.mxu0 0
    %7189 = vmatprep.subr.bf16.mxu0 0
    %7190 = vmatpush2.bf16.msra.mxu0 0
    %7191 = vmatprep.subr.bf16.mxu0 0
    %7192 = vmatpush2.bf16.msra.mxu0 0
    %7193 = vmatprep.subr.bf16.mxu0 0
    %7194 = vmatpush2.bf16.msra.mxu0 0
    %7195 = vmatprep.subr.bf16.mxu0 0
    %7196 = vmatpush2.bf16.msra.mxu0 0
    %7197 = vmatprep.subr.bf16.mxu0 0
    %7198 = vmatpush2.bf16.msra.mxu0 0
    %7199 = vmatprep.subr.bf16.mxu0 0
    %7200 = vmatpush2.bf16.msra.mxu0 0
    %7201 = vmatprep.mubr.bf16.mxu0 0
    %7202 = vmatmul.mubr.bf16.gmra.mxu0 %v6784
    %v7203 = vpop.f32.mrf.mxu0
    %v7204 = vadd.f32 0.0, %v7203
    %v7205 = vpop.f32.mrf.mxu0
    %v7206 = vadd.f32 0.0, %v7205
    %v7207 = vpop.f32.mrf.mxu0
    %v7208 = vpop.f32.mrf.mxu0
    %7209 = vdwg.mxu0
    %7210 = vmatprep.subr.bf16.mxu0 %v7100
    %7211 = vmatpush1.bf16.msra.mxu0 %v7099
    %7212 = vmatprep.subr.bf16.mxu0 %v7092
    %7213 = vmatpush1.bf16.msra.mxu0 %v7091
    %7214 = vmatprep.subr.bf16.mxu0 %v7084
    %7215 = vmatpush1.bf16.msra.mxu0 %v7083
    %7216 = vmatprep.subr.bf16.mxu0 %v7076
    %7217 = vmatpush1.bf16.msra.mxu0 %v7075
    %7218 = vmatprep.subr.bf16.mxu0 %v7068
    %7219 = vmatpush1.bf16.msra.mxu0 %v7067
    %7220 = vmatprep.subr.bf16.mxu0 %v7060
    %7221 = vmatpush1.bf16.msra.mxu0 %v7059
    %7222 = vmatprep.subr.bf16.mxu0 %v7052
    %7223 = vmatpush1.bf16.msra.mxu0 %v7051
    %7224 = vmatprep.subr.bf16.mxu0 %v7044
    %7225 = vmatpush1.bf16.msra.mxu0 %v7043
    %7226 = vmatprep.subr.bf16.mxu0 0
    %7227 = vmatpush2.bf16.msra.mxu0 0
    %7228 = vmatprep.subr.bf16.mxu0 0
    %7229 = vmatpush2.bf16.msra.mxu0 0
    %7230 = vmatprep.subr.bf16.mxu0 0
    %7231 = vmatpush2.bf16.msra.mxu0 0
    %7232 = vmatprep.subr.bf16.mxu0 0
    %7233 = vmatpush2.bf16.msra.mxu0 0
    %7234 = vmatprep.subr.bf16.mxu0 0
    %7235 = vmatpush2.bf16.msra.mxu0 0
    %7236 = vmatprep.subr.bf16.mxu0 0
    %7237 = vmatpush2.bf16.msra.mxu0 0
    %7238 = vmatprep.subr.bf16.mxu0 0
    %7239 = vmatpush2.bf16.msra.mxu0 0
    %7240 = vmatprep.subr.bf16.mxu0 0
    %7241 = vmatpush2.bf16.msra.mxu0 0
    %7242 = vmatprep.mubr.bf16.mxu0 0
    %7243 = vmatmul.mubr.bf16.gmra.mxu0 %v6784
    %v7244 = vpop.f32.mrf.mxu0
    %v7245 = vadd.f32 0.0, %v7244
    %v7246 = vpop.f32.mrf.mxu0
    %v7247 = vadd.f32 0.0, %v7246
    %v7248 = vpop.f32.mrf.mxu0
    %v7249 = vpop.f32.mrf.mxu0
    %7250 = vdwg.mxu0
    %7251 = vmatprep.subr.bf16.mxu0 %v7102
    %7252 = vmatpush1.bf16.msra.mxu0 %v7101
    %7253 = vmatprep.subr.bf16.mxu0 %v7094
    %7254 = vmatpush1.bf16.msra.mxu0 %v7093
    %7255 = vmatprep.subr.bf16.mxu0 %v7086
    %7256 = vmatpush1.bf16.msra.mxu0 %v7085
    %7257 = vmatprep.subr.bf16.mxu0 %v7078
    %7258 = vmatpush1.bf16.msra.mxu0 %v7077
    %7259 = vmatprep.subr.bf16.mxu0 %v7070
    %7260 = vmatpush1.bf16.msra.mxu0 %v7069
    %7261 = vmatprep.subr.bf16.mxu0 %v7062
    %7262 = vmatpush1.bf16.msra.mxu0 %v7061
    %7263 = vmatprep.subr.bf16.mxu0 %v7054
    %7264 = vmatpush1.bf16.msra.mxu0 %v7053
    %7265 = vmatprep.subr.bf16.mxu0 %v7046
    %7266 = vmatpush1.bf16.msra.mxu0 %v7045
    %7267 = vmatprep.subr.bf16.mxu0 0
    %7268 = vmatpush2.bf16.msra.mxu0 0
    %7269 = vmatprep.subr.bf16.mxu0 0
    %7270 = vmatpush2.bf16.msra.mxu0 0
    %7271 = vmatprep.subr.bf16.mxu0 0
    %7272 = vmatpush2.bf16.msra.mxu0 0
    %7273 = vmatprep.subr.bf16.mxu0 0
    %7274 = vmatpush2.bf16.msra.mxu0 0
    %7275 = vmatprep.subr.bf16.mxu0 0
    %7276 = vmatpush2.bf16.msra.mxu0 0
    %7277 = vmatprep.subr.bf16.mxu0 0
    %7278 = vmatpush2.bf16.msra.mxu0 0
    %7279 = vmatprep.subr.bf16.mxu0 0
    %7280 = vmatpush2.bf16.msra.mxu0 0
    %7281 = vmatprep.subr.bf16.mxu0 0
    %7282 = vmatpush2.bf16.msra.mxu0 0
    %7283 = vmatprep.mubr.bf16.mxu0 0
    %7284 = vmatmul.mubr.bf16.gmra.mxu0 %v6784
    %v7285 = vpop.f32.mrf.mxu0
    %v7286 = vadd.f32 0.0, %v7285
    %v7287 = vpop.f32.mrf.mxu0
    %v7288 = vadd.f32 0.0, %v7287
    %v7289 = vpop.f32.mrf.mxu0
    %v7290 = vpop.f32.mrf.mxu0
    %7291 = vdwg.mxu0
    %7292 = vmatprep.subr.bf16.mxu0 %v7104
    %7293 = vmatpush1.bf16.msra.mxu0 %v7103
    %7294 = vmatprep.subr.bf16.mxu0 %v7096
    %7295 = vmatpush1.bf16.msra.mxu0 %v7095
    %7296 = vmatprep.subr.bf16.mxu0 %v7088
    %7297 = vmatpush1.bf16.msra.mxu0 %v7087
    %7298 = vmatprep.subr.bf16.mxu0 %v7080
    %7299 = vmatpush1.bf16.msra.mxu0 %v7079
    %7300 = vmatprep.subr.bf16.mxu0 %v7072
    %7301 = vmatpush1.bf16.msra.mxu0 %v7071
    %7302 = vmatprep.subr.bf16.mxu0 %v7064
    %7303 = vmatpush1.bf16.msra.mxu0 %v7063
    %7304 = vmatprep.subr.bf16.mxu0 %v7056
    %7305 = vmatpush1.bf16.msra.mxu0 %v7055
    %7306 = vmatprep.subr.bf16.mxu0 %v7048
    %7307 = vmatpush1.bf16.msra.mxu0 %v7047
    %7308 = vmatprep.subr.bf16.mxu0 0
    %7309 = vmatpush2.bf16.msra.mxu0 0
    %7310 = vmatprep.subr.bf16.mxu0 0
    %7311 = vmatpush2.bf16.msra.mxu0 0
    %7312 = vmatprep.subr.bf16.mxu0 0
    %7313 = vmatpush2.bf16.msra.mxu0 0
    %7314 = vmatprep.subr.bf16.mxu0 0
    %7315 = vmatpush2.bf16.msra.mxu0 0
    %7316 = vmatprep.subr.bf16.mxu0 0
    %7317 = vmatpush2.bf16.msra.mxu0 0
    %7318 = vmatprep.subr.bf16.mxu0 0
    %7319 = vmatpush2.bf16.msra.mxu0 0
    %7320 = vmatprep.subr.bf16.mxu0 0
    %7321 = vmatpush2.bf16.msra.mxu0 0
    %7322 = vmatprep.subr.bf16.mxu0 0
    %7323 = vmatpush2.bf16.msra.mxu0 0
    %7324 = vmatprep.mubr.bf16.mxu0 0
    %7325 = vmatmul.mubr.bf16.gmra.mxu0 %v6784
    %v7326 = vpop.f32.mrf.mxu0
    %v7327 = vadd.f32 0.0, %v7326
    %v7328 = vpop.f32.mrf.mxu0
    %v7329 = vadd.f32 0.0, %v7328
    %v7330 = vpop.f32.mrf.mxu0
    %v7331 = vpop.f32.mrf.mxu0
    %7332 = vdwg.mxu0
    %v7333 = vadd.f32 %v6776, %v7204
    %v7334 = vadd.f32 %v6777, %v7206
    %v7335 = vadd.f32 %v6778, %v7245
    %v7336 = vadd.f32 %v6779, %v7247
    %v7337 = vadd.f32 %v6780, %v7286
    %v7338 = vadd.f32 %v6781, %v7288
    %v7339 = vadd.f32 %v6782, %v7327
    %v7340 = vadd.f32 %v6783, %v7329
    %v7341 = vpack.c.bf16 %v1781, %v1781
    %v7342 = vld [vmem:[#allocation9 + $0x1400] sm:$0xff]
    %v7343 = vld [vmem:[#allocation9 + $0x1408] sm:$0xff]
    %v7344 = vld [vmem:[#allocation9 + $0x1410] sm:$0xff]
    %v7345 = vld [vmem:[#allocation9 + $0x1418] sm:$0xff]
    %v7346 = vld [vmem:[#allocation9 + $0x1420] sm:$0xff]
    %v7347 = vld [vmem:[#allocation9 + $0x1428] sm:$0xff]
    %v7348 = vld [vmem:[#allocation9 + $0x1430] sm:$0xff]
    %v7349 = vld [vmem:[#allocation9 + $0x1438] sm:$0xff]
    %v7350 = vld [vmem:[#allocation9 + $0x1440] sm:$0xff]
    %v7351 = vld [vmem:[#allocation9 + $0x1448] sm:$0xff]
    %v7352 = vld [vmem:[#allocation9 + $0x1450] sm:$0xff]
    %v7353 = vld [vmem:[#allocation9 + $0x1458] sm:$0xff]
    %v7354 = vld [vmem:[#allocation9 + $0x1460] sm:$0xff]
    %v7355 = vld [vmem:[#allocation9 + $0x1468] sm:$0xff]
    %v7356 = vld [vmem:[#allocation9 + $0x1470] sm:$0xff]
    %v7357 = vld [vmem:[#allocation9 + $0x1478] sm:$0xff]
    %v7358 = vld [vmem:[#allocation9 + $0x1480] sm:$0xff]
    %v7359 = vld [vmem:[#allocation9 + $0x1488] sm:$0xff]
    %v7360 = vld [vmem:[#allocation9 + $0x1490] sm:$0xff]
    %v7361 = vld [vmem:[#allocation9 + $0x1498] sm:$0xff]
    %v7362 = vld [vmem:[#allocation9 + $0x14a0] sm:$0xff]
    %v7363 = vld [vmem:[#allocation9 + $0x14a8] sm:$0xff]
    %v7364 = vld [vmem:[#allocation9 + $0x14b0] sm:$0xff]
    %v7365 = vld [vmem:[#allocation9 + $0x14b8] sm:$0xff]
    %v7366 = vld [vmem:[#allocation9 + $0x14c0] sm:$0xff]
    %v7367 = vld [vmem:[#allocation9 + $0x14c8] sm:$0xff]
    %v7368 = vld [vmem:[#allocation9 + $0x14d0] sm:$0xff]
    %v7369 = vld [vmem:[#allocation9 + $0x14d8] sm:$0xff]
    %v7370 = vld [vmem:[#allocation9 + $0x14e0] sm:$0xff]
    %v7371 = vld [vmem:[#allocation9 + $0x14e8] sm:$0xff]
    %v7372 = vld [vmem:[#allocation9 + $0x14f0] sm:$0xff]
    %v7373 = vld [vmem:[#allocation9 + $0x14f8] sm:$0xff]
    %v7374 = vld [vmem:[#allocation9 + $0x1500] sm:$0xff]
    %v7375 = vld [vmem:[#allocation9 + $0x1508] sm:$0xff]
    %v7376 = vld [vmem:[#allocation9 + $0x1510] sm:$0xff]
    %v7377 = vld [vmem:[#allocation9 + $0x1518] sm:$0xff]
    %v7378 = vld [vmem:[#allocation9 + $0x1520] sm:$0xff]
    %v7379 = vld [vmem:[#allocation9 + $0x1528] sm:$0xff]
    %v7380 = vld [vmem:[#allocation9 + $0x1530] sm:$0xff]
    %v7381 = vld [vmem:[#allocation9 + $0x1538] sm:$0xff]
    %v7382 = vld [vmem:[#allocation9 + $0x1540] sm:$0xff]
    %v7383 = vld [vmem:[#allocation9 + $0x1548] sm:$0xff]
    %v7384 = vld [vmem:[#allocation9 + $0x1550] sm:$0xff]
    %v7385 = vld [vmem:[#allocation9 + $0x1558] sm:$0xff]
    %v7386 = vld [vmem:[#allocation9 + $0x1560] sm:$0xff]
    %v7387 = vld [vmem:[#allocation9 + $0x1568] sm:$0xff]
    %v7388 = vld [vmem:[#allocation9 + $0x1570] sm:$0xff]
    %v7389 = vld [vmem:[#allocation9 + $0x1578] sm:$0xff]
    %v7390 = vld [vmem:[#allocation9 + $0x1580] sm:$0xff]
    %v7391 = vld [vmem:[#allocation9 + $0x1588] sm:$0xff]
    %v7392 = vld [vmem:[#allocation9 + $0x1590] sm:$0xff]
    %v7393 = vld [vmem:[#allocation9 + $0x1598] sm:$0xff]
    %v7394 = vld [vmem:[#allocation9 + $0x15a0] sm:$0xff]
    %v7395 = vld [vmem:[#allocation9 + $0x15a8] sm:$0xff]
    %v7396 = vld [vmem:[#allocation9 + $0x15b0] sm:$0xff]
    %v7397 = vld [vmem:[#allocation9 + $0x15b8] sm:$0xff]
    %v7398 = vld [vmem:[#allocation9 + $0x15c0] sm:$0xff]
    %v7399 = vld [vmem:[#allocation9 + $0x15c8] sm:$0xff]
    %v7400 = vld [vmem:[#allocation9 + $0x15d0] sm:$0xff]
    %v7401 = vld [vmem:[#allocation9 + $0x15d8] sm:$0xff]
    %v7402 = vld [vmem:[#allocation9 + $0x15e0] sm:$0xff]
    %v7403 = vld [vmem:[#allocation9 + $0x15e8] sm:$0xff]
    %v7404 = vld [vmem:[#allocation9 + $0x15f0] sm:$0xff]
    %v7405 = vld [vmem:[#allocation9 + $0x15f8] sm:$0xff]
    %v7470 = vunpack.c.l.b16 %v7342
    %v7471 = vunpack.c.h.b16 %v7342
    %v7472 = vunpack.c.l.b16 %v7343
    %v7473 = vunpack.c.h.b16 %v7343
    %v7474 = vunpack.c.l.b16 %v7344
    %v7475 = vunpack.c.h.b16 %v7344
    %v7476 = vunpack.c.l.b16 %v7345
    %v7477 = vunpack.c.h.b16 %v7345
    %v7478 = vunpack.c.l.b16 %v7346
    %v7479 = vunpack.c.h.b16 %v7346
    %v7480 = vunpack.c.l.b16 %v7347
    %v7481 = vunpack.c.h.b16 %v7347
    %v7482 = vunpack.c.l.b16 %v7348
    %v7483 = vunpack.c.h.b16 %v7348
    %v7484 = vunpack.c.l.b16 %v7349
    %v7485 = vunpack.c.h.b16 %v7349
    %v7486 = vunpack.c.l.b16 %v7350
    %v7487 = vunpack.c.h.b16 %v7350
    %v7488 = vunpack.c.l.b16 %v7351
    %v7489 = vunpack.c.h.b16 %v7351
    %v7490 = vunpack.c.l.b16 %v7352
    %v7491 = vunpack.c.h.b16 %v7352
    %v7492 = vunpack.c.l.b16 %v7353
    %v7493 = vunpack.c.h.b16 %v7353
    %v7494 = vunpack.c.l.b16 %v7354
    %v7495 = vunpack.c.h.b16 %v7354
    %v7496 = vunpack.c.l.b16 %v7355
    %v7497 = vunpack.c.h.b16 %v7355
    %v7498 = vunpack.c.l.b16 %v7356
    %v7499 = vunpack.c.h.b16 %v7356
    %v7500 = vunpack.c.l.b16 %v7357
    %v7501 = vunpack.c.h.b16 %v7357
    %v7502 = vunpack.c.l.b16 %v7358
    %v7503 = vunpack.c.h.b16 %v7358
    %v7504 = vunpack.c.l.b16 %v7359
    %v7505 = vunpack.c.h.b16 %v7359
    %v7506 = vunpack.c.l.b16 %v7360
    %v7507 = vunpack.c.h.b16 %v7360
    %v7508 = vunpack.c.l.b16 %v7361
    %v7509 = vunpack.c.h.b16 %v7361
    %v7510 = vunpack.c.l.b16 %v7362
    %v7511 = vunpack.c.h.b16 %v7362
    %v7512 = vunpack.c.l.b16 %v7363
    %v7513 = vunpack.c.h.b16 %v7363
    %v7514 = vunpack.c.l.b16 %v7364
    %v7515 = vunpack.c.h.b16 %v7364
    %v7516 = vunpack.c.l.b16 %v7365
    %v7517 = vunpack.c.h.b16 %v7365
    %v7518 = vunpack.c.l.b16 %v7366
    %v7519 = vunpack.c.h.b16 %v7366
    %v7520 = vunpack.c.l.b16 %v7367
    %v7521 = vunpack.c.h.b16 %v7367
    %v7522 = vunpack.c.l.b16 %v7368
    %v7523 = vunpack.c.h.b16 %v7368
    %v7524 = vunpack.c.l.b16 %v7369
    %v7525 = vunpack.c.h.b16 %v7369
    %v7526 = vunpack.c.l.b16 %v7370
    %v7527 = vunpack.c.h.b16 %v7370
    %v7528 = vunpack.c.l.b16 %v7371
    %v7529 = vunpack.c.h.b16 %v7371
    %v7530 = vunpack.c.l.b16 %v7372
    %v7531 = vunpack.c.h.b16 %v7372
    %v7532 = vunpack.c.l.b16 %v7373
    %v7533 = vunpack.c.h.b16 %v7373
    %v7534 = vunpack.c.l.b16 %v7374
    %v7535 = vunpack.c.h.b16 %v7374
    %v7536 = vunpack.c.l.b16 %v7375
    %v7537 = vunpack.c.h.b16 %v7375
    %v7538 = vunpack.c.l.b16 %v7376
    %v7539 = vunpack.c.h.b16 %v7376
    %v7540 = vunpack.c.l.b16 %v7377
    %v7541 = vunpack.c.h.b16 %v7377
    %v7542 = vunpack.c.l.b16 %v7378
    %v7543 = vunpack.c.h.b16 %v7378
    %v7544 = vunpack.c.l.b16 %v7379
    %v7545 = vunpack.c.h.b16 %v7379
    %v7546 = vunpack.c.l.b16 %v7380
    %v7547 = vunpack.c.h.b16 %v7380
    %v7548 = vunpack.c.l.b16 %v7381
    %v7549 = vunpack.c.h.b16 %v7381
    %v7550 = vunpack.c.l.b16 %v7382
    %v7551 = vunpack.c.h.b16 %v7382
    %v7552 = vunpack.c.l.b16 %v7383
    %v7553 = vunpack.c.h.b16 %v7383
    %v7554 = vunpack.c.l.b16 %v7384
    %v7555 = vunpack.c.h.b16 %v7384
    %v7556 = vunpack.c.l.b16 %v7385
    %v7557 = vunpack.c.h.b16 %v7385
    %v7558 = vunpack.c.l.b16 %v7386
    %v7559 = vunpack.c.h.b16 %v7386
    %v7560 = vunpack.c.l.b16 %v7387
    %v7561 = vunpack.c.h.b16 %v7387
    %v7562 = vunpack.c.l.b16 %v7388
    %v7563 = vunpack.c.h.b16 %v7388
    %v7564 = vunpack.c.l.b16 %v7389
    %v7565 = vunpack.c.h.b16 %v7389
    %v7566 = vunpack.c.l.b16 %v7390
    %v7567 = vunpack.c.h.b16 %v7390
    %v7568 = vunpack.c.l.b16 %v7391
    %v7569 = vunpack.c.h.b16 %v7391
    %v7570 = vunpack.c.l.b16 %v7392
    %v7571 = vunpack.c.h.b16 %v7392
    %v7572 = vunpack.c.l.b16 %v7393
    %v7573 = vunpack.c.h.b16 %v7393
    %v7574 = vunpack.c.l.b16 %v7394
    %v7575 = vunpack.c.h.b16 %v7394
    %v7576 = vunpack.c.l.b16 %v7395
    %v7577 = vunpack.c.h.b16 %v7395
    %v7578 = vunpack.c.l.b16 %v7396
    %v7579 = vunpack.c.h.b16 %v7396
    %v7580 = vunpack.c.l.b16 %v7397
    %v7581 = vunpack.c.h.b16 %v7397
    %v7582 = vunpack.c.l.b16 %v7398
    %v7583 = vunpack.c.h.b16 %v7398
    %v7584 = vunpack.c.l.b16 %v7399
    %v7585 = vunpack.c.h.b16 %v7399
    %v7586 = vunpack.c.l.b16 %v7400
    %v7587 = vunpack.c.h.b16 %v7400
    %v7588 = vunpack.c.l.b16 %v7401
    %v7589 = vunpack.c.h.b16 %v7401
    %v7590 = vunpack.c.l.b16 %v7402
    %v7591 = vunpack.c.h.b16 %v7402
    %v7592 = vunpack.c.l.b16 %v7403
    %v7593 = vunpack.c.h.b16 %v7403
    %v7594 = vunpack.c.l.b16 %v7404
    %v7595 = vunpack.c.h.b16 %v7404
    %v7596 = vunpack.c.l.b16 %v7405
    %v7597 = vunpack.c.h.b16 %v7405
    %v7598 = vpack.c.b16 %v7478, %v7470
    %v7599 = vpack.c.b16 %v7479, %v7471
    %v7600 = vpack.c.b16 %v7480, %v7472
    %v7601 = vpack.c.b16 %v7481, %v7473
    %v7602 = vpack.c.b16 %v7482, %v7474
    %v7603 = vpack.c.b16 %v7483, %v7475
    %v7604 = vpack.c.b16 %v7484, %v7476
    %v7605 = vpack.c.b16 %v7485, %v7477
    %v7606 = vpack.c.b16 %v7494, %v7486
    %v7607 = vpack.c.b16 %v7495, %v7487
    %v7608 = vpack.c.b16 %v7496, %v7488
    %v7609 = vpack.c.b16 %v7497, %v7489
    %v7610 = vpack.c.b16 %v7498, %v7490
    %v7611 = vpack.c.b16 %v7499, %v7491
    %v7612 = vpack.c.b16 %v7500, %v7492
    %v7613 = vpack.c.b16 %v7501, %v7493
    %v7614 = vpack.c.b16 %v7510, %v7502
    %v7615 = vpack.c.b16 %v7511, %v7503
    %v7616 = vpack.c.b16 %v7512, %v7504
    %v7617 = vpack.c.b16 %v7513, %v7505
    %v7618 = vpack.c.b16 %v7514, %v7506
    %v7619 = vpack.c.b16 %v7515, %v7507
    %v7620 = vpack.c.b16 %v7516, %v7508
    %v7621 = vpack.c.b16 %v7517, %v7509
    %v7622 = vpack.c.b16 %v7526, %v7518
    %v7623 = vpack.c.b16 %v7527, %v7519
    %v7624 = vpack.c.b16 %v7528, %v7520
    %v7625 = vpack.c.b16 %v7529, %v7521
    %v7626 = vpack.c.b16 %v7530, %v7522
    %v7627 = vpack.c.b16 %v7531, %v7523
    %v7628 = vpack.c.b16 %v7532, %v7524
    %v7629 = vpack.c.b16 %v7533, %v7525
    %v7630 = vpack.c.b16 %v7542, %v7534
    %v7631 = vpack.c.b16 %v7543, %v7535
    %v7632 = vpack.c.b16 %v7544, %v7536
    %v7633 = vpack.c.b16 %v7545, %v7537
    %v7634 = vpack.c.b16 %v7546, %v7538
    %v7635 = vpack.c.b16 %v7547, %v7539
    %v7636 = vpack.c.b16 %v7548, %v7540
    %v7637 = vpack.c.b16 %v7549, %v7541
    %v7638 = vpack.c.b16 %v7558, %v7550
    %v7639 = vpack.c.b16 %v7559, %v7551
    %v7640 = vpack.c.b16 %v7560, %v7552
    %v7641 = vpack.c.b16 %v7561, %v7553
    %v7642 = vpack.c.b16 %v7562, %v7554
    %v7643 = vpack.c.b16 %v7563, %v7555
    %v7644 = vpack.c.b16 %v7564, %v7556
    %v7645 = vpack.c.b16 %v7565, %v7557
    %v7646 = vpack.c.b16 %v7574, %v7566
    %v7647 = vpack.c.b16 %v7575, %v7567
    %v7648 = vpack.c.b16 %v7576, %v7568
    %v7649 = vpack.c.b16 %v7577, %v7569
    %v7650 = vpack.c.b16 %v7578, %v7570
    %v7651 = vpack.c.b16 %v7579, %v7571
    %v7652 = vpack.c.b16 %v7580, %v7572
    %v7653 = vpack.c.b16 %v7581, %v7573
    %v7654 = vpack.c.b16 %v7590, %v7582
    %v7655 = vpack.c.b16 %v7591, %v7583
    %v7656 = vpack.c.b16 %v7592, %v7584
    %v7657 = vpack.c.b16 %v7593, %v7585
    %v7658 = vpack.c.b16 %v7594, %v7586
    %v7659 = vpack.c.b16 %v7595, %v7587
    %v7660 = vpack.c.b16 %v7596, %v7588
    %v7661 = vpack.c.b16 %v7597, %v7589
    %7726 = vmatprep.subr.bf16.mxu0 %v7655
    %7727 = vmatpush1.bf16.msra.mxu0 %v7654
    %7728 = vmatprep.subr.bf16.mxu0 %v7647
    %7729 = vmatpush1.bf16.msra.mxu0 %v7646
    %7730 = vmatprep.subr.bf16.mxu0 %v7639
    %7731 = vmatpush1.bf16.msra.mxu0 %v7638
    %7732 = vmatprep.subr.bf16.mxu0 %v7631
    %7733 = vmatpush1.bf16.msra.mxu0 %v7630
    %7734 = vmatprep.subr.bf16.mxu0 %v7623
    %7735 = vmatpush1.bf16.msra.mxu0 %v7622
    %7736 = vmatprep.subr.bf16.mxu0 %v7615
    %7737 = vmatpush1.bf16.msra.mxu0 %v7614
    %7738 = vmatprep.subr.bf16.mxu0 %v7607
    %7739 = vmatpush1.bf16.msra.mxu0 %v7606
    %7740 = vmatprep.subr.bf16.mxu0 %v7599
    %7741 = vmatpush1.bf16.msra.mxu0 %v7598
    %7742 = vmatprep.subr.bf16.mxu0 0
    %7743 = vmatpush2.bf16.msra.mxu0 0
    %7744 = vmatprep.subr.bf16.mxu0 0
    %7745 = vmatpush2.bf16.msra.mxu0 0
    %7746 = vmatprep.subr.bf16.mxu0 0
    %7747 = vmatpush2.bf16.msra.mxu0 0
    %7748 = vmatprep.subr.bf16.mxu0 0
    %7749 = vmatpush2.bf16.msra.mxu0 0
    %7750 = vmatprep.subr.bf16.mxu0 0
    %7751 = vmatpush2.bf16.msra.mxu0 0
    %7752 = vmatprep.subr.bf16.mxu0 0
    %7753 = vmatpush2.bf16.msra.mxu0 0
    %7754 = vmatprep.subr.bf16.mxu0 0
    %7755 = vmatpush2.bf16.msra.mxu0 0
    %7756 = vmatprep.subr.bf16.mxu0 0
    %7757 = vmatpush2.bf16.msra.mxu0 0
    %7758 = vmatprep.mubr.bf16.mxu0 0
    %7759 = vmatmul.mubr.bf16.gmra.mxu0 %v7341
    %v7760 = vpop.f32.mrf.mxu0
    %v7761 = vadd.f32 0.0, %v7760
    %v7762 = vpop.f32.mrf.mxu0
    %v7763 = vadd.f32 0.0, %v7762
    %v7764 = vpop.f32.mrf.mxu0
    %v7765 = vpop.f32.mrf.mxu0
    %7766 = vdwg.mxu0
    %7767 = vmatprep.subr.bf16.mxu0 %v7657
    %7768 = vmatpush1.bf16.msra.mxu0 %v7656
    %7769 = vmatprep.subr.bf16.mxu0 %v7649
    %7770 = vmatpush1.bf16.msra.mxu0 %v7648
    %7771 = vmatprep.subr.bf16.mxu0 %v7641
    %7772 = vmatpush1.bf16.msra.mxu0 %v7640
    %7773 = vmatprep.subr.bf16.mxu0 %v7633
    %7774 = vmatpush1.bf16.msra.mxu0 %v7632
    %7775 = vmatprep.subr.bf16.mxu0 %v7625
    %7776 = vmatpush1.bf16.msra.mxu0 %v7624
    %7777 = vmatprep.subr.bf16.mxu0 %v7617
    %7778 = vmatpush1.bf16.msra.mxu0 %v7616
    %7779 = vmatprep.subr.bf16.mxu0 %v7609
    %7780 = vmatpush1.bf16.msra.mxu0 %v7608
    %7781 = vmatprep.subr.bf16.mxu0 %v7601
    %7782 = vmatpush1.bf16.msra.mxu0 %v7600
    %7783 = vmatprep.subr.bf16.mxu0 0
    %7784 = vmatpush2.bf16.msra.mxu0 0
    %7785 = vmatprep.subr.bf16.mxu0 0
    %7786 = vmatpush2.bf16.msra.mxu0 0
    %7787 = vmatprep.subr.bf16.mxu0 0
    %7788 = vmatpush2.bf16.msra.mxu0 0
    %7789 = vmatprep.subr.bf16.mxu0 0
    %7790 = vmatpush2.bf16.msra.mxu0 0
    %7791 = vmatprep.subr.bf16.mxu0 0
    %7792 = vmatpush2.bf16.msra.mxu0 0
    %7793 = vmatprep.subr.bf16.mxu0 0
    %7794 = vmatpush2.bf16.msra.mxu0 0
    %7795 = vmatprep.subr.bf16.mxu0 0
    %7796 = vmatpush2.bf16.msra.mxu0 0
    %7797 = vmatprep.subr.bf16.mxu0 0
    %7798 = vmatpush2.bf16.msra.mxu0 0
    %7799 = vmatprep.mubr.bf16.mxu0 0
    %7800 = vmatmul.mubr.bf16.gmra.mxu0 %v7341
    %v7801 = vpop.f32.mrf.mxu0
    %v7802 = vadd.f32 0.0, %v7801
    %v7803 = vpop.f32.mrf.mxu0
    %v7804 = vadd.f32 0.0, %v7803
    %v7805 = vpop.f32.mrf.mxu0
    %v7806 = vpop.f32.mrf.mxu0
    %7807 = vdwg.mxu0
    %7808 = vmatprep.subr.bf16.mxu0 %v7659
    %7809 = vmatpush1.bf16.msra.mxu0 %v7658
    %7810 = vmatprep.subr.bf16.mxu0 %v7651
    %7811 = vmatpush1.bf16.msra.mxu0 %v7650
    %7812 = vmatprep.subr.bf16.mxu0 %v7643
    %7813 = vmatpush1.bf16.msra.mxu0 %v7642
    %7814 = vmatprep.subr.bf16.mxu0 %v7635
    %7815 = vmatpush1.bf16.msra.mxu0 %v7634
    %7816 = vmatprep.subr.bf16.mxu0 %v7627
    %7817 = vmatpush1.bf16.msra.mxu0 %v7626
    %7818 = vmatprep.subr.bf16.mxu0 %v7619
    %7819 = vmatpush1.bf16.msra.mxu0 %v7618
    %7820 = vmatprep.subr.bf16.mxu0 %v7611
    %7821 = vmatpush1.bf16.msra.mxu0 %v7610
    %7822 = vmatprep.subr.bf16.mxu0 %v7603
    %7823 = vmatpush1.bf16.msra.mxu0 %v7602
    %7824 = vmatprep.subr.bf16.mxu0 0
    %7825 = vmatpush2.bf16.msra.mxu0 0
    %7826 = vmatprep.subr.bf16.mxu0 0
    %7827 = vmatpush2.bf16.msra.mxu0 0
    %7828 = vmatprep.subr.bf16.mxu0 0
    %7829 = vmatpush2.bf16.msra.mxu0 0
    %7830 = vmatprep.subr.bf16.mxu0 0
    %7831 = vmatpush2.bf16.msra.mxu0 0
    %7832 = vmatprep.subr.bf16.mxu0 0
    %7833 = vmatpush2.bf16.msra.mxu0 0
    %7834 = vmatprep.subr.bf16.mxu0 0
    %7835 = vmatpush2.bf16.msra.mxu0 0
    %7836 = vmatprep.subr.bf16.mxu0 0
    %7837 = vmatpush2.bf16.msra.mxu0 0
    %7838 = vmatprep.subr.bf16.mxu0 0
    %7839 = vmatpush2.bf16.msra.mxu0 0
    %7840 = vmatprep.mubr.bf16.mxu0 0
    %7841 = vmatmul.mubr.bf16.gmra.mxu0 %v7341
    %v7842 = vpop.f32.mrf.mxu0
    %v7843 = vadd.f32 0.0, %v7842
    %v7844 = vpop.f32.mrf.mxu0
    %v7845 = vadd.f32 0.0, %v7844
    %v7846 = vpop.f32.mrf.mxu0
    %v7847 = vpop.f32.mrf.mxu0
    %7848 = vdwg.mxu0
    %7849 = vmatprep.subr.bf16.mxu0 %v7661
    %7850 = vmatpush1.bf16.msra.mxu0 %v7660
    %7851 = vmatprep.subr.bf16.mxu0 %v7653
    %7852 = vmatpush1.bf16.msra.mxu0 %v7652
    %7853 = vmatprep.subr.bf16.mxu0 %v7645
    %7854 = vmatpush1.bf16.msra.mxu0 %v7644
    %7855 = vmatprep.subr.bf16.mxu0 %v7637
    %7856 = vmatpush1.bf16.msra.mxu0 %v7636
    %7857 = vmatprep.subr.bf16.mxu0 %v7629
    %7858 = vmatpush1.bf16.msra.mxu0 %v7628
    %7859 = vmatprep.subr.bf16.mxu0 %v7621
    %7860 = vmatpush1.bf16.msra.mxu0 %v7620
    %7861 = vmatprep.subr.bf16.mxu0 %v7613
    %7862 = vmatpush1.bf16.msra.mxu0 %v7612
    %7863 = vmatprep.subr.bf16.mxu0 %v7605
    %7864 = vmatpush1.bf16.msra.mxu0 %v7604
    %7865 = vmatprep.subr.bf16.mxu0 0
    %7866 = vmatpush2.bf16.msra.mxu0 0
    %7867 = vmatprep.subr.bf16.mxu0 0
    %7868 = vmatpush2.bf16.msra.mxu0 0
    %7869 = vmatprep.subr.bf16.mxu0 0
    %7870 = vmatpush2.bf16.msra.mxu0 0
    %7871 = vmatprep.subr.bf16.mxu0 0
    %7872 = vmatpush2.bf16.msra.mxu0 0
    %7873 = vmatprep.subr.bf16.mxu0 0
    %7874 = vmatpush2.bf16.msra.mxu0 0
    %7875 = vmatprep.subr.bf16.mxu0 0
    %7876 = vmatpush2.bf16.msra.mxu0 0
    %7877 = vmatprep.subr.bf16.mxu0 0
    %7878 = vmatpush2.bf16.msra.mxu0 0
    %7879 = vmatprep.subr.bf16.mxu0 0
    %7880 = vmatpush2.bf16.msra.mxu0 0
    %7881 = vmatprep.mubr.bf16.mxu0 0
    %7882 = vmatmul.mubr.bf16.gmra.mxu0 %v7341
    %v7883 = vpop.f32.mrf.mxu0
    %v7884 = vadd.f32 0.0, %v7883
    %v7885 = vpop.f32.mrf.mxu0
    %v7886 = vadd.f32 0.0, %v7885
    %v7887 = vpop.f32.mrf.mxu0
    %v7888 = vpop.f32.mrf.mxu0
    %7889 = vdwg.mxu0
    %v7890 = vadd.f32 %v7333, %v7761
    %v7891 = vadd.f32 %v7334, %v7763
    %v7892 = vadd.f32 %v7335, %v7802
    %v7893 = vadd.f32 %v7336, %v7804
    %v7894 = vadd.f32 %v7337, %v7843
    %v7895 = vadd.f32 %v7338, %v7845
    %v7896 = vadd.f32 %v7339, %v7884
    %v7897 = vadd.f32 %v7340, %v7886
    %v7898 = vpack.c.bf16 %v1782, %v1782
    %v7899 = vld [vmem:[#allocation9 + $0x1600] sm:$0xff]
    %v7900 = vld [vmem:[#allocation9 + $0x1608] sm:$0xff]
    %v7901 = vld [vmem:[#allocation9 + $0x1610] sm:$0xff]
    %v7902 = vld [vmem:[#allocation9 + $0x1618] sm:$0xff]
    %v7903 = vld [vmem:[#allocation9 + $0x1620] sm:$0xff]
    %v7904 = vld [vmem:[#allocation9 + $0x1628] sm:$0xff]
    %v7905 = vld [vmem:[#allocation9 + $0x1630] sm:$0xff]
    %v7906 = vld [vmem:[#allocation9 + $0x1638] sm:$0xff]
    %v7907 = vld [vmem:[#allocation9 + $0x1640] sm:$0xff]
    %v7908 = vld [vmem:[#allocation9 + $0x1648] sm:$0xff]
    %v7909 = vld [vmem:[#allocation9 + $0x1650] sm:$0xff]
    %v7910 = vld [vmem:[#allocation9 + $0x1658] sm:$0xff]
    %v7911 = vld [vmem:[#allocation9 + $0x1660] sm:$0xff]
    %v7912 = vld [vmem:[#allocation9 + $0x1668] sm:$0xff]
    %v7913 = vld [vmem:[#allocation9 + $0x1670] sm:$0xff]
    %v7914 = vld [vmem:[#allocation9 + $0x1678] sm:$0xff]
    %v7915 = vld [vmem:[#allocation9 + $0x1680] sm:$0xff]
    %v7916 = vld [vmem:[#allocation9 + $0x1688] sm:$0xff]
    %v7917 = vld [vmem:[#allocation9 + $0x1690] sm:$0xff]
    %v7918 = vld [vmem:[#allocation9 + $0x1698] sm:$0xff]
    %v7919 = vld [vmem:[#allocation9 + $0x16a0] sm:$0xff]
    %v7920 = vld [vmem:[#allocation9 + $0x16a8] sm:$0xff]
    %v7921 = vld [vmem:[#allocation9 + $0x16b0] sm:$0xff]
    %v7922 = vld [vmem:[#allocation9 + $0x16b8] sm:$0xff]
    %v7923 = vld [vmem:[#allocation9 + $0x16c0] sm:$0xff]
    %v7924 = vld [vmem:[#allocation9 + $0x16c8] sm:$0xff]
    %v7925 = vld [vmem:[#allocation9 + $0x16d0] sm:$0xff]
    %v7926 = vld [vmem:[#allocation9 + $0x16d8] sm:$0xff]
    %v7927 = vld [vmem:[#allocation9 + $0x16e0] sm:$0xff]
    %v7928 = vld [vmem:[#allocation9 + $0x16e8] sm:$0xff]
    %v7929 = vld [vmem:[#allocation9 + $0x16f0] sm:$0xff]
    %v7930 = vld [vmem:[#allocation9 + $0x16f8] sm:$0xff]
    %v7931 = vld [vmem:[#allocation9 + $0x1700] sm:$0xff]
    %v7932 = vld [vmem:[#allocation9 + $0x1708] sm:$0xff]
    %v7933 = vld [vmem:[#allocation9 + $0x1710] sm:$0xff]
    %v7934 = vld [vmem:[#allocation9 + $0x1718] sm:$0xff]
    %v7935 = vld [vmem:[#allocation9 + $0x1720] sm:$0xff]
    %v7936 = vld [vmem:[#allocation9 + $0x1728] sm:$0xff]
    %v7937 = vld [vmem:[#allocation9 + $0x1730] sm:$0xff]
    %v7938 = vld [vmem:[#allocation9 + $0x1738] sm:$0xff]
    %v7939 = vld [vmem:[#allocation9 + $0x1740] sm:$0xff]
    %v7940 = vld [vmem:[#allocation9 + $0x1748] sm:$0xff]
    %v7941 = vld [vmem:[#allocation9 + $0x1750] sm:$0xff]
    %v7942 = vld [vmem:[#allocation9 + $0x1758] sm:$0xff]
    %v7943 = vld [vmem:[#allocation9 + $0x1760] sm:$0xff]
    %v7944 = vld [vmem:[#allocation9 + $0x1768] sm:$0xff]
    %v7945 = vld [vmem:[#allocation9 + $0x1770] sm:$0xff]
    %v7946 = vld [vmem:[#allocation9 + $0x1778] sm:$0xff]
    %v7947 = vld [vmem:[#allocation9 + $0x1780] sm:$0xff]
    %v7948 = vld [vmem:[#allocation9 + $0x1788] sm:$0xff]
    %v7949 = vld [vmem:[#allocation9 + $0x1790] sm:$0xff]
    %v7950 = vld [vmem:[#allocation9 + $0x1798] sm:$0xff]
    %v7951 = vld [vmem:[#allocation9 + $0x17a0] sm:$0xff]
    %v7952 = vld [vmem:[#allocation9 + $0x17a8] sm:$0xff]
    %v7953 = vld [vmem:[#allocation9 + $0x17b0] sm:$0xff]
    %v7954 = vld [vmem:[#allocation9 + $0x17b8] sm:$0xff]
    %v7955 = vld [vmem:[#allocation9 + $0x17c0] sm:$0xff]
    %v7956 = vld [vmem:[#allocation9 + $0x17c8] sm:$0xff]
    %v7957 = vld [vmem:[#allocation9 + $0x17d0] sm:$0xff]
    %v7958 = vld [vmem:[#allocation9 + $0x17d8] sm:$0xff]
    %v7959 = vld [vmem:[#allocation9 + $0x17e0] sm:$0xff]
    %v7960 = vld [vmem:[#allocation9 + $0x17e8] sm:$0xff]
    %v7961 = vld [vmem:[#allocation9 + $0x17f0] sm:$0xff]
    %v7962 = vld [vmem:[#allocation9 + $0x17f8] sm:$0xff]
    %v8027 = vunpack.c.l.b16 %v7899
    %v8028 = vunpack.c.h.b16 %v7899
    %v8029 = vunpack.c.l.b16 %v7900
    %v8030 = vunpack.c.h.b16 %v7900
    %v8031 = vunpack.c.l.b16 %v7901
    %v8032 = vunpack.c.h.b16 %v7901
    %v8033 = vunpack.c.l.b16 %v7902
    %v8034 = vunpack.c.h.b16 %v7902
    %v8035 = vunpack.c.l.b16 %v7903
    %v8036 = vunpack.c.h.b16 %v7903
    %v8037 = vunpack.c.l.b16 %v7904
    %v8038 = vunpack.c.h.b16 %v7904
    %v8039 = vunpack.c.l.b16 %v7905
    %v8040 = vunpack.c.h.b16 %v7905
    %v8041 = vunpack.c.l.b16 %v7906
    %v8042 = vunpack.c.h.b16 %v7906
    %v8043 = vunpack.c.l.b16 %v7907
    %v8044 = vunpack.c.h.b16 %v7907
    %v8045 = vunpack.c.l.b16 %v7908
    %v8046 = vunpack.c.h.b16 %v7908
    %v8047 = vunpack.c.l.b16 %v7909
    %v8048 = vunpack.c.h.b16 %v7909
    %v8049 = vunpack.c.l.b16 %v7910
    %v8050 = vunpack.c.h.b16 %v7910
    %v8051 = vunpack.c.l.b16 %v7911
    %v8052 = vunpack.c.h.b16 %v7911
    %v8053 = vunpack.c.l.b16 %v7912
    %v8054 = vunpack.c.h.b16 %v7912
    %v8055 = vunpack.c.l.b16 %v7913
    %v8056 = vunpack.c.h.b16 %v7913
    %v8057 = vunpack.c.l.b16 %v7914
    %v8058 = vunpack.c.h.b16 %v7914
    %v8059 = vunpack.c.l.b16 %v7915
    %v8060 = vunpack.c.h.b16 %v7915
    %v8061 = vunpack.c.l.b16 %v7916
    %v8062 = vunpack.c.h.b16 %v7916
    %v8063 = vunpack.c.l.b16 %v7917
    %v8064 = vunpack.c.h.b16 %v7917
    %v8065 = vunpack.c.l.b16 %v7918
    %v8066 = vunpack.c.h.b16 %v7918
    %v8067 = vunpack.c.l.b16 %v7919
    %v8068 = vunpack.c.h.b16 %v7919
    %v8069 = vunpack.c.l.b16 %v7920
    %v8070 = vunpack.c.h.b16 %v7920
    %v8071 = vunpack.c.l.b16 %v7921
    %v8072 = vunpack.c.h.b16 %v7921
    %v8073 = vunpack.c.l.b16 %v7922
    %v8074 = vunpack.c.h.b16 %v7922
    %v8075 = vunpack.c.l.b16 %v7923
    %v8076 = vunpack.c.h.b16 %v7923
    %v8077 = vunpack.c.l.b16 %v7924
    %v8078 = vunpack.c.h.b16 %v7924
    %v8079 = vunpack.c.l.b16 %v7925
    %v8080 = vunpack.c.h.b16 %v7925
    %v8081 = vunpack.c.l.b16 %v7926
    %v8082 = vunpack.c.h.b16 %v7926
    %v8083 = vunpack.c.l.b16 %v7927
    %v8084 = vunpack.c.h.b16 %v7927
    %v8085 = vunpack.c.l.b16 %v7928
    %v8086 = vunpack.c.h.b16 %v7928
    %v8087 = vunpack.c.l.b16 %v7929
    %v8088 = vunpack.c.h.b16 %v7929
    %v8089 = vunpack.c.l.b16 %v7930
    %v8090 = vunpack.c.h.b16 %v7930
    %v8091 = vunpack.c.l.b16 %v7931
    %v8092 = vunpack.c.h.b16 %v7931
    %v8093 = vunpack.c.l.b16 %v7932
    %v8094 = vunpack.c.h.b16 %v7932
    %v8095 = vunpack.c.l.b16 %v7933
    %v8096 = vunpack.c.h.b16 %v7933
    %v8097 = vunpack.c.l.b16 %v7934
    %v8098 = vunpack.c.h.b16 %v7934
    %v8099 = vunpack.c.l.b16 %v7935
    %v8100 = vunpack.c.h.b16 %v7935
    %v8101 = vunpack.c.l.b16 %v7936
    %v8102 = vunpack.c.h.b16 %v7936
    %v8103 = vunpack.c.l.b16 %v7937
    %v8104 = vunpack.c.h.b16 %v7937
    %v8105 = vunpack.c.l.b16 %v7938
    %v8106 = vunpack.c.h.b16 %v7938
    %v8107 = vunpack.c.l.b16 %v7939
    %v8108 = vunpack.c.h.b16 %v7939
    %v8109 = vunpack.c.l.b16 %v7940
    %v8110 = vunpack.c.h.b16 %v7940
    %v8111 = vunpack.c.l.b16 %v7941
    %v8112 = vunpack.c.h.b16 %v7941
    %v8113 = vunpack.c.l.b16 %v7942
    %v8114 = vunpack.c.h.b16 %v7942
    %v8115 = vunpack.c.l.b16 %v7943
    %v8116 = vunpack.c.h.b16 %v7943
    %v8117 = vunpack.c.l.b16 %v7944
    %v8118 = vunpack.c.h.b16 %v7944
    %v8119 = vunpack.c.l.b16 %v7945
    %v8120 = vunpack.c.h.b16 %v7945
    %v8121 = vunpack.c.l.b16 %v7946
    %v8122 = vunpack.c.h.b16 %v7946
    %v8123 = vunpack.c.l.b16 %v7947
    %v8124 = vunpack.c.h.b16 %v7947
    %v8125 = vunpack.c.l.b16 %v7948
    %v8126 = vunpack.c.h.b16 %v7948
    %v8127 = vunpack.c.l.b16 %v7949
    %v8128 = vunpack.c.h.b16 %v7949
    %v8129 = vunpack.c.l.b16 %v7950
    %v8130 = vunpack.c.h.b16 %v7950
    %v8131 = vunpack.c.l.b16 %v7951
    %v8132 = vunpack.c.h.b16 %v7951
    %v8133 = vunpack.c.l.b16 %v7952
    %v8134 = vunpack.c.h.b16 %v7952
    %v8135 = vunpack.c.l.b16 %v7953
    %v8136 = vunpack.c.h.b16 %v7953
    %v8137 = vunpack.c.l.b16 %v7954
    %v8138 = vunpack.c.h.b16 %v7954
    %v8139 = vunpack.c.l.b16 %v7955
    %v8140 = vunpack.c.h.b16 %v7955
    %v8141 = vunpack.c.l.b16 %v7956
    %v8142 = vunpack.c.h.b16 %v7956
    %v8143 = vunpack.c.l.b16 %v7957
    %v8144 = vunpack.c.h.b16 %v7957
    %v8145 = vunpack.c.l.b16 %v7958
    %v8146 = vunpack.c.h.b16 %v7958
    %v8147 = vunpack.c.l.b16 %v7959
    %v8148 = vunpack.c.h.b16 %v7959
    %v8149 = vunpack.c.l.b16 %v7960
    %v8150 = vunpack.c.h.b16 %v7960
    %v8151 = vunpack.c.l.b16 %v7961
    %v8152 = vunpack.c.h.b16 %v7961
    %v8153 = vunpack.c.l.b16 %v7962
    %v8154 = vunpack.c.h.b16 %v7962
    %v8155 = vpack.c.b16 %v8035, %v8027
    %v8156 = vpack.c.b16 %v8036, %v8028
    %v8157 = vpack.c.b16 %v8037, %v8029
    %v8158 = vpack.c.b16 %v8038, %v8030
    %v8159 = vpack.c.b16 %v8039, %v8031
    %v8160 = vpack.c.b16 %v8040, %v8032
    %v8161 = vpack.c.b16 %v8041, %v8033
    %v8162 = vpack.c.b16 %v8042, %v8034
    %v8163 = vpack.c.b16 %v8051, %v8043
    %v8164 = vpack.c.b16 %v8052, %v8044
    %v8165 = vpack.c.b16 %v8053, %v8045
    %v8166 = vpack.c.b16 %v8054, %v8046
    %v8167 = vpack.c.b16 %v8055, %v8047
    %v8168 = vpack.c.b16 %v8056, %v8048
    %v8169 = vpack.c.b16 %v8057, %v8049
    %v8170 = vpack.c.b16 %v8058, %v8050
    %v8171 = vpack.c.b16 %v8067, %v8059
    %v8172 = vpack.c.b16 %v8068, %v8060
    %v8173 = vpack.c.b16 %v8069, %v8061
    %v8174 = vpack.c.b16 %v8070, %v8062
    %v8175 = vpack.c.b16 %v8071, %v8063
    %v8176 = vpack.c.b16 %v8072, %v8064
    %v8177 = vpack.c.b16 %v8073, %v8065
    %v8178 = vpack.c.b16 %v8074, %v8066
    %v8179 = vpack.c.b16 %v8083, %v8075
    %v8180 = vpack.c.b16 %v8084, %v8076
    %v8181 = vpack.c.b16 %v8085, %v8077
    %v8182 = vpack.c.b16 %v8086, %v8078
    %v8183 = vpack.c.b16 %v8087, %v8079
    %v8184 = vpack.c.b16 %v8088, %v8080
    %v8185 = vpack.c.b16 %v8089, %v8081
    %v8186 = vpack.c.b16 %v8090, %v8082
    %v8187 = vpack.c.b16 %v8099, %v8091
    %v8188 = vpack.c.b16 %v8100, %v8092
    %v8189 = vpack.c.b16 %v8101, %v8093
    %v8190 = vpack.c.b16 %v8102, %v8094
    %v8191 = vpack.c.b16 %v8103, %v8095
    %v8192 = vpack.c.b16 %v8104, %v8096
    %v8193 = vpack.c.b16 %v8105, %v8097
    %v8194 = vpack.c.b16 %v8106, %v8098
    %v8195 = vpack.c.b16 %v8115, %v8107
    %v8196 = vpack.c.b16 %v8116, %v8108
    %v8197 = vpack.c.b16 %v8117, %v8109
    %v8198 = vpack.c.b16 %v8118, %v8110
    %v8199 = vpack.c.b16 %v8119, %v8111
    %v8200 = vpack.c.b16 %v8120, %v8112
    %v8201 = vpack.c.b16 %v8121, %v8113
    %v8202 = vpack.c.b16 %v8122, %v8114
    %v8203 = vpack.c.b16 %v8131, %v8123
    %v8204 = vpack.c.b16 %v8132, %v8124
    %v8205 = vpack.c.b16 %v8133, %v8125
    %v8206 = vpack.c.b16 %v8134, %v8126
    %v8207 = vpack.c.b16 %v8135, %v8127
    %v8208 = vpack.c.b16 %v8136, %v8128
    %v8209 = vpack.c.b16 %v8137, %v8129
    %v8210 = vpack.c.b16 %v8138, %v8130
    %v8211 = vpack.c.b16 %v8147, %v8139
    %v8212 = vpack.c.b16 %v8148, %v8140
    %v8213 = vpack.c.b16 %v8149, %v8141
    %v8214 = vpack.c.b16 %v8150, %v8142
    %v8215 = vpack.c.b16 %v8151, %v8143
    %v8216 = vpack.c.b16 %v8152, %v8144
    %v8217 = vpack.c.b16 %v8153, %v8145
    %v8218 = vpack.c.b16 %v8154, %v8146
    %8283 = vmatprep.subr.bf16.mxu0 %v8212
    %8284 = vmatpush1.bf16.msra.mxu0 %v8211
    %8285 = vmatprep.subr.bf16.mxu0 %v8204
    %8286 = vmatpush1.bf16.msra.mxu0 %v8203
    %8287 = vmatprep.subr.bf16.mxu0 %v8196
    %8288 = vmatpush1.bf16.msra.mxu0 %v8195
    %8289 = vmatprep.subr.bf16.mxu0 %v8188
    %8290 = vmatpush1.bf16.msra.mxu0 %v8187
    %8291 = vmatprep.subr.bf16.mxu0 %v8180
    %8292 = vmatpush1.bf16.msra.mxu0 %v8179
    %8293 = vmatprep.subr.bf16.mxu0 %v8172
    %8294 = vmatpush1.bf16.msra.mxu0 %v8171
    %8295 = vmatprep.subr.bf16.mxu0 %v8164
    %8296 = vmatpush1.bf16.msra.mxu0 %v8163
    %8297 = vmatprep.subr.bf16.mxu0 %v8156
    %8298 = vmatpush1.bf16.msra.mxu0 %v8155
    %8299 = vmatprep.subr.bf16.mxu0 0
    %8300 = vmatpush2.bf16.msra.mxu0 0
    %8301 = vmatprep.subr.bf16.mxu0 0
    %8302 = vmatpush2.bf16.msra.mxu0 0
    %8303 = vmatprep.subr.bf16.mxu0 0
    %8304 = vmatpush2.bf16.msra.mxu0 0
    %8305 = vmatprep.subr.bf16.mxu0 0
    %8306 = vmatpush2.bf16.msra.mxu0 0
    %8307 = vmatprep.subr.bf16.mxu0 0
    %8308 = vmatpush2.bf16.msra.mxu0 0
    %8309 = vmatprep.subr.bf16.mxu0 0
    %8310 = vmatpush2.bf16.msra.mxu0 0
    %8311 = vmatprep.subr.bf16.mxu0 0
    %8312 = vmatpush2.bf16.msra.mxu0 0
    %8313 = vmatprep.subr.bf16.mxu0 0
    %8314 = vmatpush2.bf16.msra.mxu0 0
    %8315 = vmatprep.mubr.bf16.mxu0 0
    %8316 = vmatmul.mubr.bf16.gmra.mxu0 %v7898
    %v8317 = vpop.f32.mrf.mxu0
    %v8318 = vadd.f32 0.0, %v8317
    %v8319 = vpop.f32.mrf.mxu0
    %v8320 = vadd.f32 0.0, %v8319
    %v8321 = vpop.f32.mrf.mxu0
    %v8322 = vpop.f32.mrf.mxu0
    %8323 = vdwg.mxu0
    %8324 = vmatprep.subr.bf16.mxu0 %v8214
    %8325 = vmatpush1.bf16.msra.mxu0 %v8213
    %8326 = vmatprep.subr.bf16.mxu0 %v8206
    %8327 = vmatpush1.bf16.msra.mxu0 %v8205
    %8328 = vmatprep.subr.bf16.mxu0 %v8198
    %8329 = vmatpush1.bf16.msra.mxu0 %v8197
    %8330 = vmatprep.subr.bf16.mxu0 %v8190
    %8331 = vmatpush1.bf16.msra.mxu0 %v8189
    %8332 = vmatprep.subr.bf16.mxu0 %v8182
    %8333 = vmatpush1.bf16.msra.mxu0 %v8181
    %8334 = vmatprep.subr.bf16.mxu0 %v8174
    %8335 = vmatpush1.bf16.msra.mxu0 %v8173
    %8336 = vmatprep.subr.bf16.mxu0 %v8166
    %8337 = vmatpush1.bf16.msra.mxu0 %v8165
    %8338 = vmatprep.subr.bf16.mxu0 %v8158
    %8339 = vmatpush1.bf16.msra.mxu0 %v8157
    %8340 = vmatprep.subr.bf16.mxu0 0
    %8341 = vmatpush2.bf16.msra.mxu0 0
    %8342 = vmatprep.subr.bf16.mxu0 0
    %8343 = vmatpush2.bf16.msra.mxu0 0
    %8344 = vmatprep.subr.bf16.mxu0 0
    %8345 = vmatpush2.bf16.msra.mxu0 0
    %8346 = vmatprep.subr.bf16.mxu0 0
    %8347 = vmatpush2.bf16.msra.mxu0 0
    %8348 = vmatprep.subr.bf16.mxu0 0
    %8349 = vmatpush2.bf16.msra.mxu0 0
    %8350 = vmatprep.subr.bf16.mxu0 0
    %8351 = vmatpush2.bf16.msra.mxu0 0
    %8352 = vmatprep.subr.bf16.mxu0 0
    %8353 = vmatpush2.bf16.msra.mxu0 0
    %8354 = vmatprep.subr.bf16.mxu0 0
    %8355 = vmatpush2.bf16.msra.mxu0 0
    %8356 = vmatprep.mubr.bf16.mxu0 0
    %8357 = vmatmul.mubr.bf16.gmra.mxu0 %v7898
    %v8358 = vpop.f32.mrf.mxu0
    %v8359 = vadd.f32 0.0, %v8358
    %v8360 = vpop.f32.mrf.mxu0
    %v8361 = vadd.f32 0.0, %v8360
    %v8362 = vpop.f32.mrf.mxu0
    %v8363 = vpop.f32.mrf.mxu0
    %8364 = vdwg.mxu0
    %8365 = vmatprep.subr.bf16.mxu0 %v8216
    %8366 = vmatpush1.bf16.msra.mxu0 %v8215
    %8367 = vmatprep.subr.bf16.mxu0 %v8208
    %8368 = vmatpush1.bf16.msra.mxu0 %v8207
    %8369 = vmatprep.subr.bf16.mxu0 %v8200
    %8370 = vmatpush1.bf16.msra.mxu0 %v8199
    %8371 = vmatprep.subr.bf16.mxu0 %v8192
    %8372 = vmatpush1.bf16.msra.mxu0 %v8191
    %8373 = vmatprep.subr.bf16.mxu0 %v8184
    %8374 = vmatpush1.bf16.msra.mxu0 %v8183
    %8375 = vmatprep.subr.bf16.mxu0 %v8176
    %8376 = vmatpush1.bf16.msra.mxu0 %v8175
    %8377 = vmatprep.subr.bf16.mxu0 %v8168
    %8378 = vmatpush1.bf16.msra.mxu0 %v8167
    %8379 = vmatprep.subr.bf16.mxu0 %v8160
    %8380 = vmatpush1.bf16.msra.mxu0 %v8159
    %8381 = vmatprep.subr.bf16.mxu0 0
    %8382 = vmatpush2.bf16.msra.mxu0 0
    %8383 = vmatprep.subr.bf16.mxu0 0
    %8384 = vmatpush2.bf16.msra.mxu0 0
    %8385 = vmatprep.subr.bf16.mxu0 0
    %8386 = vmatpush2.bf16.msra.mxu0 0
    %8387 = vmatprep.subr.bf16.mxu0 0
    %8388 = vmatpush2.bf16.msra.mxu0 0
    %8389 = vmatprep.subr.bf16.mxu0 0
    %8390 = vmatpush2.bf16.msra.mxu0 0
    %8391 = vmatprep.subr.bf16.mxu0 0
    %8392 = vmatpush2.bf16.msra.mxu0 0
    %8393 = vmatprep.subr.bf16.mxu0 0
    %8394 = vmatpush2.bf16.msra.mxu0 0
    %8395 = vmatprep.subr.bf16.mxu0 0
    %8396 = vmatpush2.bf16.msra.mxu0 0
    %8397 = vmatprep.mubr.bf16.mxu0 0
    %8398 = vmatmul.mubr.bf16.gmra.mxu0 %v7898
    %v8399 = vpop.f32.mrf.mxu0
    %v8400 = vadd.f32 0.0, %v8399
    %v8401 = vpop.f32.mrf.mxu0
    %v8402 = vadd.f32 0.0, %v8401
    %v8403 = vpop.f32.mrf.mxu0
    %v8404 = vpop.f32.mrf.mxu0
    %8405 = vdwg.mxu0
    %8406 = vmatprep.subr.bf16.mxu0 %v8218
    %8407 = vmatpush1.bf16.msra.mxu0 %v8217
    %8408 = vmatprep.subr.bf16.mxu0 %v8210
    %8409 = vmatpush1.bf16.msra.mxu0 %v8209
    %8410 = vmatprep.subr.bf16.mxu0 %v8202
    %8411 = vmatpush1.bf16.msra.mxu0 %v8201
    %8412 = vmatprep.subr.bf16.mxu0 %v8194
    %8413 = vmatpush1.bf16.msra.mxu0 %v8193
    %8414 = vmatprep.subr.bf16.mxu0 %v8186
    %8415 = vmatpush1.bf16.msra.mxu0 %v8185
    %8416 = vmatprep.subr.bf16.mxu0 %v8178
    %8417 = vmatpush1.bf16.msra.mxu0 %v8177
    %8418 = vmatprep.subr.bf16.mxu0 %v8170
    %8419 = vmatpush1.bf16.msra.mxu0 %v8169
    %8420 = vmatprep.subr.bf16.mxu0 %v8162
    %8421 = vmatpush1.bf16.msra.mxu0 %v8161
    %8422 = vmatprep.subr.bf16.mxu0 0
    %8423 = vmatpush2.bf16.msra.mxu0 0
    %8424 = vmatprep.subr.bf16.mxu0 0
    %8425 = vmatpush2.bf16.msra.mxu0 0
    %8426 = vmatprep.subr.bf16.mxu0 0
    %8427 = vmatpush2.bf16.msra.mxu0 0
    %8428 = vmatprep.subr.bf16.mxu0 0
    %8429 = vmatpush2.bf16.msra.mxu0 0
    %8430 = vmatprep.subr.bf16.mxu0 0
    %8431 = vmatpush2.bf16.msra.mxu0 0
    %8432 = vmatprep.subr.bf16.mxu0 0
    %8433 = vmatpush2.bf16.msra.mxu0 0
    %8434 = vmatprep.subr.bf16.mxu0 0
    %8435 = vmatpush2.bf16.msra.mxu0 0
    %8436 = vmatprep.subr.bf16.mxu0 0
    %8437 = vmatpush2.bf16.msra.mxu0 0
    %8438 = vmatprep.mubr.bf16.mxu0 0
    %8439 = vmatmul.mubr.bf16.gmra.mxu0 %v7898
    %v8440 = vpop.f32.mrf.mxu0
    %v8441 = vadd.f32 0.0, %v8440
    %v8442 = vpop.f32.mrf.mxu0
    %v8443 = vadd.f32 0.0, %v8442
    %v8444 = vpop.f32.mrf.mxu0
    %v8445 = vpop.f32.mrf.mxu0
    %8446 = vdwg.mxu0
    %v8447 = vadd.f32 %v7890, %v8318
    %v8448 = vadd.f32 %v7891, %v8320
    %v8449 = vadd.f32 %v7892, %v8359
    %v8450 = vadd.f32 %v7893, %v8361
    %v8451 = vadd.f32 %v7894, %v8400
    %v8452 = vadd.f32 %v7895, %v8402
    %v8453 = vadd.f32 %v7896, %v8441
    %v8454 = vadd.f32 %v7897, %v8443
    %v8455 = vpack.c.bf16 %v1783, %v1783
    %v8456 = vld [vmem:[#allocation9 + $0x1800] sm:$0xff]
    %v8457 = vld [vmem:[#allocation9 + $0x1808] sm:$0xff]
    %v8458 = vld [vmem:[#allocation9 + $0x1810] sm:$0xff]
    %v8459 = vld [vmem:[#allocation9 + $0x1818] sm:$0xff]
    %v8460 = vld [vmem:[#allocation9 + $0x1820] sm:$0xff]
    %v8461 = vld [vmem:[#allocation9 + $0x1828] sm:$0xff]
    %v8462 = vld [vmem:[#allocation9 + $0x1830] sm:$0xff]
    %v8463 = vld [vmem:[#allocation9 + $0x1838] sm:$0xff]
    %v8464 = vld [vmem:[#allocation9 + $0x1840] sm:$0xff]
    %v8465 = vld [vmem:[#allocation9 + $0x1848] sm:$0xff]
    %v8466 = vld [vmem:[#allocation9 + $0x1850] sm:$0xff]
    %v8467 = vld [vmem:[#allocation9 + $0x1858] sm:$0xff]
    %v8468 = vld [vmem:[#allocation9 + $0x1860] sm:$0xff]
    %v8469 = vld [vmem:[#allocation9 + $0x1868] sm:$0xff]
    %v8470 = vld [vmem:[#allocation9 + $0x1870] sm:$0xff]
    %v8471 = vld [vmem:[#allocation9 + $0x1878] sm:$0xff]
    %v8472 = vld [vmem:[#allocation9 + $0x1880] sm:$0xff]
    %v8473 = vld [vmem:[#allocation9 + $0x1888] sm:$0xff]
    %v8474 = vld [vmem:[#allocation9 + $0x1890] sm:$0xff]
    %v8475 = vld [vmem:[#allocation9 + $0x1898] sm:$0xff]
    %v8476 = vld [vmem:[#allocation9 + $0x18a0] sm:$0xff]
    %v8477 = vld [vmem:[#allocation9 + $0x18a8] sm:$0xff]
    %v8478 = vld [vmem:[#allocation9 + $0x18b0] sm:$0xff]
    %v8479 = vld [vmem:[#allocation9 + $0x18b8] sm:$0xff]
    %v8480 = vld [vmem:[#allocation9 + $0x18c0] sm:$0xff]
    %v8481 = vld [vmem:[#allocation9 + $0x18c8] sm:$0xff]
    %v8482 = vld [vmem:[#allocation9 + $0x18d0] sm:$0xff]
    %v8483 = vld [vmem:[#allocation9 + $0x18d8] sm:$0xff]
    %v8484 = vld [vmem:[#allocation9 + $0x18e0] sm:$0xff]
    %v8485 = vld [vmem:[#allocation9 + $0x18e8] sm:$0xff]
    %v8486 = vld [vmem:[#allocation9 + $0x18f0] sm:$0xff]
    %v8487 = vld [vmem:[#allocation9 + $0x18f8] sm:$0xff]
    %v8488 = vld [vmem:[#allocation9 + $0x1900] sm:$0xff]
    %v8489 = vld [vmem:[#allocation9 + $0x1908] sm:$0xff]
    %v8490 = vld [vmem:[#allocation9 + $0x1910] sm:$0xff]
    %v8491 = vld [vmem:[#allocation9 + $0x1918] sm:$0xff]
    %v8492 = vld [vmem:[#allocation9 + $0x1920] sm:$0xff]
    %v8493 = vld [vmem:[#allocation9 + $0x1928] sm:$0xff]
    %v8494 = vld [vmem:[#allocation9 + $0x1930] sm:$0xff]
    %v8495 = vld [vmem:[#allocation9 + $0x1938] sm:$0xff]
    %v8496 = vld [vmem:[#allocation9 + $0x1940] sm:$0xff]
    %v8497 = vld [vmem:[#allocation9 + $0x1948] sm:$0xff]
    %v8498 = vld [vmem:[#allocation9 + $0x1950] sm:$0xff]
    %v8499 = vld [vmem:[#allocation9 + $0x1958] sm:$0xff]
    %v8500 = vld [vmem:[#allocation9 + $0x1960] sm:$0xff]
    %v8501 = vld [vmem:[#allocation9 + $0x1968] sm:$0xff]
    %v8502 = vld [vmem:[#allocation9 + $0x1970] sm:$0xff]
    %v8503 = vld [vmem:[#allocation9 + $0x1978] sm:$0xff]
    %v8504 = vld [vmem:[#allocation9 + $0x1980] sm:$0xff]
    %v8505 = vld [vmem:[#allocation9 + $0x1988] sm:$0xff]
    %v8506 = vld [vmem:[#allocation9 + $0x1990] sm:$0xff]
    %v8507 = vld [vmem:[#allocation9 + $0x1998] sm:$0xff]
    %v8508 = vld [vmem:[#allocation9 + $0x19a0] sm:$0xff]
    %v8509 = vld [vmem:[#allocation9 + $0x19a8] sm:$0xff]
    %v8510 = vld [vmem:[#allocation9 + $0x19b0] sm:$0xff]
    %v8511 = vld [vmem:[#allocation9 + $0x19b8] sm:$0xff]
    %v8512 = vld [vmem:[#allocation9 + $0x19c0] sm:$0xff]
    %v8513 = vld [vmem:[#allocation9 + $0x19c8] sm:$0xff]
    %v8514 = vld [vmem:[#allocation9 + $0x19d0] sm:$0xff]
    %v8515 = vld [vmem:[#allocation9 + $0x19d8] sm:$0xff]
    %v8516 = vld [vmem:[#allocation9 + $0x19e0] sm:$0xff]
    %v8517 = vld [vmem:[#allocation9 + $0x19e8] sm:$0xff]
    %v8518 = vld [vmem:[#allocation9 + $0x19f0] sm:$0xff]
    %v8519 = vld [vmem:[#allocation9 + $0x19f8] sm:$0xff]
    %v8584 = vunpack.c.l.b16 %v8456
    %v8585 = vunpack.c.h.b16 %v8456
    %v8586 = vunpack.c.l.b16 %v8457
    %v8587 = vunpack.c.h.b16 %v8457
    %v8588 = vunpack.c.l.b16 %v8458
    %v8589 = vunpack.c.h.b16 %v8458
    %v8590 = vunpack.c.l.b16 %v8459
    %v8591 = vunpack.c.h.b16 %v8459
    %v8592 = vunpack.c.l.b16 %v8460
    %v8593 = vunpack.c.h.b16 %v8460
    %v8594 = vunpack.c.l.b16 %v8461
    %v8595 = vunpack.c.h.b16 %v8461
    %v8596 = vunpack.c.l.b16 %v8462
    %v8597 = vunpack.c.h.b16 %v8462
    %v8598 = vunpack.c.l.b16 %v8463
    %v8599 = vunpack.c.h.b16 %v8463
    %v8600 = vunpack.c.l.b16 %v8464
    %v8601 = vunpack.c.h.b16 %v8464
    %v8602 = vunpack.c.l.b16 %v8465
    %v8603 = vunpack.c.h.b16 %v8465
    %v8604 = vunpack.c.l.b16 %v8466
    %v8605 = vunpack.c.h.b16 %v8466
    %v8606 = vunpack.c.l.b16 %v8467
    %v8607 = vunpack.c.h.b16 %v8467
    %v8608 = vunpack.c.l.b16 %v8468
    %v8609 = vunpack.c.h.b16 %v8468
    %v8610 = vunpack.c.l.b16 %v8469
    %v8611 = vunpack.c.h.b16 %v8469
    %v8612 = vunpack.c.l.b16 %v8470
    %v8613 = vunpack.c.h.b16 %v8470
    %v8614 = vunpack.c.l.b16 %v8471
    %v8615 = vunpack.c.h.b16 %v8471
    %v8616 = vunpack.c.l.b16 %v8472
    %v8617 = vunpack.c.h.b16 %v8472
    %v8618 = vunpack.c.l.b16 %v8473
    %v8619 = vunpack.c.h.b16 %v8473
    %v8620 = vunpack.c.l.b16 %v8474
    %v8621 = vunpack.c.h.b16 %v8474
    %v8622 = vunpack.c.l.b16 %v8475
    %v8623 = vunpack.c.h.b16 %v8475
    %v8624 = vunpack.c.l.b16 %v8476
    %v8625 = vunpack.c.h.b16 %v8476
    %v8626 = vunpack.c.l.b16 %v8477
    %v8627 = vunpack.c.h.b16 %v8477
    %v8628 = vunpack.c.l.b16 %v8478
    %v8629 = vunpack.c.h.b16 %v8478
    %v8630 = vunpack.c.l.b16 %v8479
    %v8631 = vunpack.c.h.b16 %v8479
    %v8632 = vunpack.c.l.b16 %v8480
    %v8633 = vunpack.c.h.b16 %v8480
    %v8634 = vunpack.c.l.b16 %v8481
    %v8635 = vunpack.c.h.b16 %v8481
    %v8636 = vunpack.c.l.b16 %v8482
    %v8637 = vunpack.c.h.b16 %v8482
    %v8638 = vunpack.c.l.b16 %v8483
    %v8639 = vunpack.c.h.b16 %v8483
    %v8640 = vunpack.c.l.b16 %v8484
    %v8641 = vunpack.c.h.b16 %v8484
    %v8642 = vunpack.c.l.b16 %v8485
    %v8643 = vunpack.c.h.b16 %v8485
    %v8644 = vunpack.c.l.b16 %v8486
    %v8645 = vunpack.c.h.b16 %v8486
    %v8646 = vunpack.c.l.b16 %v8487
    %v8647 = vunpack.c.h.b16 %v8487
    %v8648 = vunpack.c.l.b16 %v8488
    %v8649 = vunpack.c.h.b16 %v8488
    %v8650 = vunpack.c.l.b16 %v8489
    %v8651 = vunpack.c.h.b16 %v8489
    %v8652 = vunpack.c.l.b16 %v8490
    %v8653 = vunpack.c.h.b16 %v8490
    %v8654 = vunpack.c.l.b16 %v8491
    %v8655 = vunpack.c.h.b16 %v8491
    %v8656 = vunpack.c.l.b16 %v8492
    %v8657 = vunpack.c.h.b16 %v8492
    %v8658 = vunpack.c.l.b16 %v8493
    %v8659 = vunpack.c.h.b16 %v8493
    %v8660 = vunpack.c.l.b16 %v8494
    %v8661 = vunpack.c.h.b16 %v8494
    %v8662 = vunpack.c.l.b16 %v8495
    %v8663 = vunpack.c.h.b16 %v8495
    %v8664 = vunpack.c.l.b16 %v8496
    %v8665 = vunpack.c.h.b16 %v8496
    %v8666 = vunpack.c.l.b16 %v8497
    %v8667 = vunpack.c.h.b16 %v8497
    %v8668 = vunpack.c.l.b16 %v8498
    %v8669 = vunpack.c.h.b16 %v8498
    %v8670 = vunpack.c.l.b16 %v8499
    %v8671 = vunpack.c.h.b16 %v8499
    %v8672 = vunpack.c.l.b16 %v8500
    %v8673 = vunpack.c.h.b16 %v8500
    %v8674 = vunpack.c.l.b16 %v8501
    %v8675 = vunpack.c.h.b16 %v8501
    %v8676 = vunpack.c.l.b16 %v8502
    %v8677 = vunpack.c.h.b16 %v8502
    %v8678 = vunpack.c.l.b16 %v8503
    %v8679 = vunpack.c.h.b16 %v8503
    %v8680 = vunpack.c.l.b16 %v8504
    %v8681 = vunpack.c.h.b16 %v8504
    %v8682 = vunpack.c.l.b16 %v8505
    %v8683 = vunpack.c.h.b16 %v8505
    %v8684 = vunpack.c.l.b16 %v8506
    %v8685 = vunpack.c.h.b16 %v8506
    %v8686 = vunpack.c.l.b16 %v8507
    %v8687 = vunpack.c.h.b16 %v8507
    %v8688 = vunpack.c.l.b16 %v8508
    %v8689 = vunpack.c.h.b16 %v8508
    %v8690 = vunpack.c.l.b16 %v8509
    %v8691 = vunpack.c.h.b16 %v8509
    %v8692 = vunpack.c.l.b16 %v8510
    %v8693 = vunpack.c.h.b16 %v8510
    %v8694 = vunpack.c.l.b16 %v8511
    %v8695 = vunpack.c.h.b16 %v8511
    %v8696 = vunpack.c.l.b16 %v8512
    %v8697 = vunpack.c.h.b16 %v8512
    %v8698 = vunpack.c.l.b16 %v8513
    %v8699 = vunpack.c.h.b16 %v8513
    %v8700 = vunpack.c.l.b16 %v8514
    %v8701 = vunpack.c.h.b16 %v8514
    %v8702 = vunpack.c.l.b16 %v8515
    %v8703 = vunpack.c.h.b16 %v8515
    %v8704 = vunpack.c.l.b16 %v8516
    %v8705 = vunpack.c.h.b16 %v8516
    %v8706 = vunpack.c.l.b16 %v8517
    %v8707 = vunpack.c.h.b16 %v8517
    %v8708 = vunpack.c.l.b16 %v8518
    %v8709 = vunpack.c.h.b16 %v8518
    %v8710 = vunpack.c.l.b16 %v8519
    %v8711 = vunpack.c.h.b16 %v8519
    %v8712 = vpack.c.b16 %v8592, %v8584
    %v8713 = vpack.c.b16 %v8593, %v8585
    %v8714 = vpack.c.b16 %v8594, %v8586
    %v8715 = vpack.c.b16 %v8595, %v8587
    %v8716 = vpack.c.b16 %v8596, %v8588
    %v8717 = vpack.c.b16 %v8597, %v8589
    %v8718 = vpack.c.b16 %v8598, %v8590
    %v8719 = vpack.c.b16 %v8599, %v8591
    %v8720 = vpack.c.b16 %v8608, %v8600
    %v8721 = vpack.c.b16 %v8609, %v8601
    %v8722 = vpack.c.b16 %v8610, %v8602
    %v8723 = vpack.c.b16 %v8611, %v8603
    %v8724 = vpack.c.b16 %v8612, %v8604
    %v8725 = vpack.c.b16 %v8613, %v8605
    %v8726 = vpack.c.b16 %v8614, %v8606
    %v8727 = vpack.c.b16 %v8615, %v8607
    %v8728 = vpack.c.b16 %v8624, %v8616
    %v8729 = vpack.c.b16 %v8625, %v8617
    %v8730 = vpack.c.b16 %v8626, %v8618
    %v8731 = vpack.c.b16 %v8627, %v8619
    %v8732 = vpack.c.b16 %v8628, %v8620
    %v8733 = vpack.c.b16 %v8629, %v8621
    %v8734 = vpack.c.b16 %v8630, %v8622
    %v8735 = vpack.c.b16 %v8631, %v8623
    %v8736 = vpack.c.b16 %v8640, %v8632
    %v8737 = vpack.c.b16 %v8641, %v8633
    %v8738 = vpack.c.b16 %v8642, %v8634
    %v8739 = vpack.c.b16 %v8643, %v8635
    %v8740 = vpack.c.b16 %v8644, %v8636
    %v8741 = vpack.c.b16 %v8645, %v8637
    %v8742 = vpack.c.b16 %v8646, %v8638
    %v8743 = vpack.c.b16 %v8647, %v8639
    %v8744 = vpack.c.b16 %v8656, %v8648
    %v8745 = vpack.c.b16 %v8657, %v8649
    %v8746 = vpack.c.b16 %v8658, %v8650
    %v8747 = vpack.c.b16 %v8659, %v8651
    %v8748 = vpack.c.b16 %v8660, %v8652
    %v8749 = vpack.c.b16 %v8661, %v8653
    %v8750 = vpack.c.b16 %v8662, %v8654
    %v8751 = vpack.c.b16 %v8663, %v8655
    %v8752 = vpack.c.b16 %v8672, %v8664
    %v8753 = vpack.c.b16 %v8673, %v8665
    %v8754 = vpack.c.b16 %v8674, %v8666
    %v8755 = vpack.c.b16 %v8675, %v8667
    %v8756 = vpack.c.b16 %v8676, %v8668
    %v8757 = vpack.c.b16 %v8677, %v8669
    %v8758 = vpack.c.b16 %v8678, %v8670
    %v8759 = vpack.c.b16 %v8679, %v8671
    %v8760 = vpack.c.b16 %v8688, %v8680
    %v8761 = vpack.c.b16 %v8689, %v8681
    %v8762 = vpack.c.b16 %v8690, %v8682
    %v8763 = vpack.c.b16 %v8691, %v8683
    %v8764 = vpack.c.b16 %v8692, %v8684
    %v8765 = vpack.c.b16 %v8693, %v8685
    %v8766 = vpack.c.b16 %v8694, %v8686
    %v8767 = vpack.c.b16 %v8695, %v8687
    %v8768 = vpack.c.b16 %v8704, %v8696
    %v8769 = vpack.c.b16 %v8705, %v8697
    %v8770 = vpack.c.b16 %v8706, %v8698
    %v8771 = vpack.c.b16 %v8707, %v8699
    %v8772 = vpack.c.b16 %v8708, %v8700
    %v8773 = vpack.c.b16 %v8709, %v8701
    %v8774 = vpack.c.b16 %v8710, %v8702
    %v8775 = vpack.c.b16 %v8711, %v8703
    %8840 = vmatprep.subr.bf16.mxu0 %v8769
    %8841 = vmatpush1.bf16.msra.mxu0 %v8768
    %8842 = vmatprep.subr.bf16.mxu0 %v8761
    %8843 = vmatpush1.bf16.msra.mxu0 %v8760
    %8844 = vmatprep.subr.bf16.mxu0 %v8753
    %8845 = vmatpush1.bf16.msra.mxu0 %v8752
    %8846 = vmatprep.subr.bf16.mxu0 %v8745
    %8847 = vmatpush1.bf16.msra.mxu0 %v8744
    %8848 = vmatprep.subr.bf16.mxu0 %v8737
    %8849 = vmatpush1.bf16.msra.mxu0 %v8736
    %8850 = vmatprep.subr.bf16.mxu0 %v8729
    %8851 = vmatpush1.bf16.msra.mxu0 %v8728
    %8852 = vmatprep.subr.bf16.mxu0 %v8721
    %8853 = vmatpush1.bf16.msra.mxu0 %v8720
    %8854 = vmatprep.subr.bf16.mxu0 %v8713
    %8855 = vmatpush1.bf16.msra.mxu0 %v8712
    %8856 = vmatprep.subr.bf16.mxu0 0
    %8857 = vmatpush2.bf16.msra.mxu0 0
    %8858 = vmatprep.subr.bf16.mxu0 0
    %8859 = vmatpush2.bf16.msra.mxu0 0
    %8860 = vmatprep.subr.bf16.mxu0 0
    %8861 = vmatpush2.bf16.msra.mxu0 0
    %8862 = vmatprep.subr.bf16.mxu0 0
    %8863 = vmatpush2.bf16.msra.mxu0 0
    %8864 = vmatprep.subr.bf16.mxu0 0
    %8865 = vmatpush2.bf16.msra.mxu0 0
    %8866 = vmatprep.subr.bf16.mxu0 0
    %8867 = vmatpush2.bf16.msra.mxu0 0
    %8868 = vmatprep.subr.bf16.mxu0 0
    %8869 = vmatpush2.bf16.msra.mxu0 0
    %8870 = vmatprep.subr.bf16.mxu0 0
    %8871 = vmatpush2.bf16.msra.mxu0 0
    %8872 = vmatprep.mubr.bf16.mxu0 0
    %8873 = vmatmul.mubr.bf16.gmra.mxu0 %v8455
    %v8874 = vpop.f32.mrf.mxu0
    %v8875 = vadd.f32 0.0, %v8874
    %v8876 = vpop.f32.mrf.mxu0
    %v8877 = vadd.f32 0.0, %v8876
    %v8878 = vpop.f32.mrf.mxu0
    %v8879 = vpop.f32.mrf.mxu0
    %8880 = vdwg.mxu0
    %8881 = vmatprep.subr.bf16.mxu0 %v8771
    %8882 = vmatpush1.bf16.msra.mxu0 %v8770
    %8883 = vmatprep.subr.bf16.mxu0 %v8763
    %8884 = vmatpush1.bf16.msra.mxu0 %v8762
    %8885 = vmatprep.subr.bf16.mxu0 %v8755
    %8886 = vmatpush1.bf16.msra.mxu0 %v8754
    %8887 = vmatprep.subr.bf16.mxu0 %v8747
    %8888 = vmatpush1.bf16.msra.mxu0 %v8746
    %8889 = vmatprep.subr.bf16.mxu0 %v8739
    %8890 = vmatpush1.bf16.msra.mxu0 %v8738
    %8891 = vmatprep.subr.bf16.mxu0 %v8731
    %8892 = vmatpush1.bf16.msra.mxu0 %v8730
    %8893 = vmatprep.subr.bf16.mxu0 %v8723
    %8894 = vmatpush1.bf16.msra.mxu0 %v8722
    %8895 = vmatprep.subr.bf16.mxu0 %v8715
    %8896 = vmatpush1.bf16.msra.mxu0 %v8714
    %8897 = vmatprep.subr.bf16.mxu0 0
    %8898 = vmatpush2.bf16.msra.mxu0 0
    %8899 = vmatprep.subr.bf16.mxu0 0
    %8900 = vmatpush2.bf16.msra.mxu0 0
    %8901 = vmatprep.subr.bf16.mxu0 0
    %8902 = vmatpush2.bf16.msra.mxu0 0
    %8903 = vmatprep.subr.bf16.mxu0 0
    %8904 = vmatpush2.bf16.msra.mxu0 0
    %8905 = vmatprep.subr.bf16.mxu0 0
    %8906 = vmatpush2.bf16.msra.mxu0 0
    %8907 = vmatprep.subr.bf16.mxu0 0
    %8908 = vmatpush2.bf16.msra.mxu0 0
    %8909 = vmatprep.subr.bf16.mxu0 0
    %8910 = vmatpush2.bf16.msra.mxu0 0
    %8911 = vmatprep.subr.bf16.mxu0 0
    %8912 = vmatpush2.bf16.msra.mxu0 0
    %8913 = vmatprep.mubr.bf16.mxu0 0
    %8914 = vmatmul.mubr.bf16.gmra.mxu0 %v8455
    %v8915 = vpop.f32.mrf.mxu0
    %v8916 = vadd.f32 0.0, %v8915
    %v8917 = vpop.f32.mrf.mxu0
    %v8918 = vadd.f32 0.0, %v8917
    %v8919 = vpop.f32.mrf.mxu0
    %v8920 = vpop.f32.mrf.mxu0
    %8921 = vdwg.mxu0
    %8922 = vmatprep.subr.bf16.mxu0 %v8773
    %8923 = vmatpush1.bf16.msra.mxu0 %v8772
    %8924 = vmatprep.subr.bf16.mxu0 %v8765
    %8925 = vmatpush1.bf16.msra.mxu0 %v8764
    %8926 = vmatprep.subr.bf16.mxu0 %v8757
    %8927 = vmatpush1.bf16.msra.mxu0 %v8756
    %8928 = vmatprep.subr.bf16.mxu0 %v8749
    %8929 = vmatpush1.bf16.msra.mxu0 %v8748
    %8930 = vmatprep.subr.bf16.mxu0 %v8741
    %8931 = vmatpush1.bf16.msra.mxu0 %v8740
    %8932 = vmatprep.subr.bf16.mxu0 %v8733
    %8933 = vmatpush1.bf16.msra.mxu0 %v8732
    %8934 = vmatprep.subr.bf16.mxu0 %v8725
    %8935 = vmatpush1.bf16.msra.mxu0 %v8724
    %8936 = vmatprep.subr.bf16.mxu0 %v8717
    %8937 = vmatpush1.bf16.msra.mxu0 %v8716
    %8938 = vmatprep.subr.bf16.mxu0 0
    %8939 = vmatpush2.bf16.msra.mxu0 0
    %8940 = vmatprep.subr.bf16.mxu0 0
    %8941 = vmatpush2.bf16.msra.mxu0 0
    %8942 = vmatprep.subr.bf16.mxu0 0
    %8943 = vmatpush2.bf16.msra.mxu0 0
    %8944 = vmatprep.subr.bf16.mxu0 0
    %8945 = vmatpush2.bf16.msra.mxu0 0
    %8946 = vmatprep.subr.bf16.mxu0 0
    %8947 = vmatpush2.bf16.msra.mxu0 0
    %8948 = vmatprep.subr.bf16.mxu0 0
    %8949 = vmatpush2.bf16.msra.mxu0 0
    %8950 = vmatprep.subr.bf16.mxu0 0
    %8951 = vmatpush2.bf16.msra.mxu0 0
    %8952 = vmatprep.subr.bf16.mxu0 0
    %8953 = vmatpush2.bf16.msra.mxu0 0
    %8954 = vmatprep.mubr.bf16.mxu0 0
    %8955 = vmatmul.mubr.bf16.gmra.mxu0 %v8455
    %v8956 = vpop.f32.mrf.mxu0
    %v8957 = vadd.f32 0.0, %v8956
    %v8958 = vpop.f32.mrf.mxu0
    %v8959 = vadd.f32 0.0, %v8958
    %v8960 = vpop.f32.mrf.mxu0
    %v8961 = vpop.f32.mrf.mxu0
    %8962 = vdwg.mxu0
    %8963 = vmatprep.subr.bf16.mxu0 %v8775
    %8964 = vmatpush1.bf16.msra.mxu0 %v8774
    %8965 = vmatprep.subr.bf16.mxu0 %v8767
    %8966 = vmatpush1.bf16.msra.mxu0 %v8766
    %8967 = vmatprep.subr.bf16.mxu0 %v8759
    %8968 = vmatpush1.bf16.msra.mxu0 %v8758
    %8969 = vmatprep.subr.bf16.mxu0 %v8751
    %8970 = vmatpush1.bf16.msra.mxu0 %v8750
    %8971 = vmatprep.subr.bf16.mxu0 %v8743
    %8972 = vmatpush1.bf16.msra.mxu0 %v8742
    %8973 = vmatprep.subr.bf16.mxu0 %v8735
    %8974 = vmatpush1.bf16.msra.mxu0 %v8734
    %8975 = vmatprep.subr.bf16.mxu0 %v8727
    %8976 = vmatpush1.bf16.msra.mxu0 %v8726
    %8977 = vmatprep.subr.bf16.mxu0 %v8719
    %8978 = vmatpush1.bf16.msra.mxu0 %v8718
    %8979 = vmatprep.subr.bf16.mxu0 0
    %8980 = vmatpush2.bf16.msra.mxu0 0
    %8981 = vmatprep.subr.bf16.mxu0 0
    %8982 = vmatpush2.bf16.msra.mxu0 0
    %8983 = vmatprep.subr.bf16.mxu0 0
    %8984 = vmatpush2.bf16.msra.mxu0 0
    %8985 = vmatprep.subr.bf16.mxu0 0
    %8986 = vmatpush2.bf16.msra.mxu0 0
    %8987 = vmatprep.subr.bf16.mxu0 0
    %8988 = vmatpush2.bf16.msra.mxu0 0
    %8989 = vmatprep.subr.bf16.mxu0 0
    %8990 = vmatpush2.bf16.msra.mxu0 0
    %8991 = vmatprep.subr.bf16.mxu0 0
    %8992 = vmatpush2.bf16.msra.mxu0 0
    %8993 = vmatprep.subr.bf16.mxu0 0
    %8994 = vmatpush2.bf16.msra.mxu0 0
    %8995 = vmatprep.mubr.bf16.mxu0 0
    %8996 = vmatmul.mubr.bf16.gmra.mxu0 %v8455
    %v8997 = vpop.f32.mrf.mxu0
    %v8998 = vadd.f32 0.0, %v8997
    %v8999 = vpop.f32.mrf.mxu0
    %v9000 = vadd.f32 0.0, %v8999
    %v9001 = vpop.f32.mrf.mxu0
    %v9002 = vpop.f32.mrf.mxu0
    %9003 = vdwg.mxu0
    %v9004 = vadd.f32 %v8447, %v8875
    %v9005 = vadd.f32 %v8448, %v8877
    %v9006 = vadd.f32 %v8449, %v8916
    %v9007 = vadd.f32 %v8450, %v8918
    %v9008 = vadd.f32 %v8451, %v8957
    %v9009 = vadd.f32 %v8452, %v8959
    %v9010 = vadd.f32 %v8453, %v8998
    %v9011 = vadd.f32 %v8454, %v9000
    %v9012 = vpack.c.bf16 %v1784, %v1784
    %v9013 = vld [vmem:[#allocation9 + $0x1a00] sm:$0xff]
    %v9014 = vld [vmem:[#allocation9 + $0x1a08] sm:$0xff]
    %v9015 = vld [vmem:[#allocation9 + $0x1a10] sm:$0xff]
    %v9016 = vld [vmem:[#allocation9 + $0x1a18] sm:$0xff]
    %v9017 = vld [vmem:[#allocation9 + $0x1a20] sm:$0xff]
    %v9018 = vld [vmem:[#allocation9 + $0x1a28] sm:$0xff]
    %v9019 = vld [vmem:[#allocation9 + $0x1a30] sm:$0xff]
    %v9020 = vld [vmem:[#allocation9 + $0x1a38] sm:$0xff]
    %v9021 = vld [vmem:[#allocation9 + $0x1a40] sm:$0xff]
    %v9022 = vld [vmem:[#allocation9 + $0x1a48] sm:$0xff]
    %v9023 = vld [vmem:[#allocation9 + $0x1a50] sm:$0xff]
    %v9024 = vld [vmem:[#allocation9 + $0x1a58] sm:$0xff]
    %v9025 = vld [vmem:[#allocation9 + $0x1a60] sm:$0xff]
    %v9026 = vld [vmem:[#allocation9 + $0x1a68] sm:$0xff]
    %v9027 = vld [vmem:[#allocation9 + $0x1a70] sm:$0xff]
    %v9028 = vld [vmem:[#allocation9 + $0x1a78] sm:$0xff]
    %v9029 = vld [vmem:[#allocation9 + $0x1a80] sm:$0xff]
    %v9030 = vld [vmem:[#allocation9 + $0x1a88] sm:$0xff]
    %v9031 = vld [vmem:[#allocation9 + $0x1a90] sm:$0xff]
    %v9032 = vld [vmem:[#allocation9 + $0x1a98] sm:$0xff]
    %v9033 = vld [vmem:[#allocation9 + $0x1aa0] sm:$0xff]
    %v9034 = vld [vmem:[#allocation9 + $0x1aa8] sm:$0xff]
    %v9035 = vld [vmem:[#allocation9 + $0x1ab0] sm:$0xff]
    %v9036 = vld [vmem:[#allocation9 + $0x1ab8] sm:$0xff]
    %v9037 = vld [vmem:[#allocation9 + $0x1ac0] sm:$0xff]
    %v9038 = vld [vmem:[#allocation9 + $0x1ac8] sm:$0xff]
    %v9039 = vld [vmem:[#allocation9 + $0x1ad0] sm:$0xff]
    %v9040 = vld [vmem:[#allocation9 + $0x1ad8] sm:$0xff]
    %v9041 = vld [vmem:[#allocation9 + $0x1ae0] sm:$0xff]
    %v9042 = vld [vmem:[#allocation9 + $0x1ae8] sm:$0xff]
    %v9043 = vld [vmem:[#allocation9 + $0x1af0] sm:$0xff]
    %v9044 = vld [vmem:[#allocation9 + $0x1af8] sm:$0xff]
    %v9045 = vld [vmem:[#allocation9 + $0x1b00] sm:$0xff]
    %v9046 = vld [vmem:[#allocation9 + $0x1b08] sm:$0xff]
    %v9047 = vld [vmem:[#allocation9 + $0x1b10] sm:$0xff]
    %v9048 = vld [vmem:[#allocation9 + $0x1b18] sm:$0xff]
    %v9049 = vld [vmem:[#allocation9 + $0x1b20] sm:$0xff]
    %v9050 = vld [vmem:[#allocation9 + $0x1b28] sm:$0xff]
    %v9051 = vld [vmem:[#allocation9 + $0x1b30] sm:$0xff]
    %v9052 = vld [vmem:[#allocation9 + $0x1b38] sm:$0xff]
    %v9053 = vld [vmem:[#allocation9 + $0x1b40] sm:$0xff]
    %v9054 = vld [vmem:[#allocation9 + $0x1b48] sm:$0xff]
    %v9055 = vld [vmem:[#allocation9 + $0x1b50] sm:$0xff]
    %v9056 = vld [vmem:[#allocation9 + $0x1b58] sm:$0xff]
    %v9057 = vld [vmem:[#allocation9 + $0x1b60] sm:$0xff]
    %v9058 = vld [vmem:[#allocation9 + $0x1b68] sm:$0xff]
    %v9059 = vld [vmem:[#allocation9 + $0x1b70] sm:$0xff]
    %v9060 = vld [vmem:[#allocation9 + $0x1b78] sm:$0xff]
    %v9061 = vld [vmem:[#allocation9 + $0x1b80] sm:$0xff]
    %v9062 = vld [vmem:[#allocation9 + $0x1b88] sm:$0xff]
    %v9063 = vld [vmem:[#allocation9 + $0x1b90] sm:$0xff]
    %v9064 = vld [vmem:[#allocation9 + $0x1b98] sm:$0xff]
    %v9065 = vld [vmem:[#allocation9 + $0x1ba0] sm:$0xff]
    %v9066 = vld [vmem:[#allocation9 + $0x1ba8] sm:$0xff]
    %v9067 = vld [vmem:[#allocation9 + $0x1bb0] sm:$0xff]
    %v9068 = vld [vmem:[#allocation9 + $0x1bb8] sm:$0xff]
    %v9069 = vld [vmem:[#allocation9 + $0x1bc0] sm:$0xff]
    %v9070 = vld [vmem:[#allocation9 + $0x1bc8] sm:$0xff]
    %v9071 = vld [vmem:[#allocation9 + $0x1bd0] sm:$0xff]
    %v9072 = vld [vmem:[#allocation9 + $0x1bd8] sm:$0xff]
    %v9073 = vld [vmem:[#allocation9 + $0x1be0] sm:$0xff]
    %v9074 = vld [vmem:[#allocation9 + $0x1be8] sm:$0xff]
    %v9075 = vld [vmem:[#allocation9 + $0x1bf0] sm:$0xff]
    %v9076 = vld [vmem:[#allocation9 + $0x1bf8] sm:$0xff]
    %v9141 = vunpack.c.l.b16 %v9013
    %v9142 = vunpack.c.h.b16 %v9013
    %v9143 = vunpack.c.l.b16 %v9014
    %v9144 = vunpack.c.h.b16 %v9014
    %v9145 = vunpack.c.l.b16 %v9015
    %v9146 = vunpack.c.h.b16 %v9015
    %v9147 = vunpack.c.l.b16 %v9016
    %v9148 = vunpack.c.h.b16 %v9016
    %v9149 = vunpack.c.l.b16 %v9017
    %v9150 = vunpack.c.h.b16 %v9017
    %v9151 = vunpack.c.l.b16 %v9018
    %v9152 = vunpack.c.h.b16 %v9018
    %v9153 = vunpack.c.l.b16 %v9019
    %v9154 = vunpack.c.h.b16 %v9019
    %v9155 = vunpack.c.l.b16 %v9020
    %v9156 = vunpack.c.h.b16 %v9020
    %v9157 = vunpack.c.l.b16 %v9021
    %v9158 = vunpack.c.h.b16 %v9021
    %v9159 = vunpack.c.l.b16 %v9022
    %v9160 = vunpack.c.h.b16 %v9022
    %v9161 = vunpack.c.l.b16 %v9023
    %v9162 = vunpack.c.h.b16 %v9023
    %v9163 = vunpack.c.l.b16 %v9024
    %v9164 = vunpack.c.h.b16 %v9024
    %v9165 = vunpack.c.l.b16 %v9025
    %v9166 = vunpack.c.h.b16 %v9025
    %v9167 = vunpack.c.l.b16 %v9026
    %v9168 = vunpack.c.h.b16 %v9026
    %v9169 = vunpack.c.l.b16 %v9027
    %v9170 = vunpack.c.h.b16 %v9027
    %v9171 = vunpack.c.l.b16 %v9028
    %v9172 = vunpack.c.h.b16 %v9028
    %v9173 = vunpack.c.l.b16 %v9029
    %v9174 = vunpack.c.h.b16 %v9029
    %v9175 = vunpack.c.l.b16 %v9030
    %v9176 = vunpack.c.h.b16 %v9030
    %v9177 = vunpack.c.l.b16 %v9031
    %v9178 = vunpack.c.h.b16 %v9031
    %v9179 = vunpack.c.l.b16 %v9032
    %v9180 = vunpack.c.h.b16 %v9032
    %v9181 = vunpack.c.l.b16 %v9033
    %v9182 = vunpack.c.h.b16 %v9033
    %v9183 = vunpack.c.l.b16 %v9034
    %v9184 = vunpack.c.h.b16 %v9034
    %v9185 = vunpack.c.l.b16 %v9035
    %v9186 = vunpack.c.h.b16 %v9035
    %v9187 = vunpack.c.l.b16 %v9036
    %v9188 = vunpack.c.h.b16 %v9036
    %v9189 = vunpack.c.l.b16 %v9037
    %v9190 = vunpack.c.h.b16 %v9037
    %v9191 = vunpack.c.l.b16 %v9038
    %v9192 = vunpack.c.h.b16 %v9038
    %v9193 = vunpack.c.l.b16 %v9039
    %v9194 = vunpack.c.h.b16 %v9039
    %v9195 = vunpack.c.l.b16 %v9040
    %v9196 = vunpack.c.h.b16 %v9040
    %v9197 = vunpack.c.l.b16 %v9041
    %v9198 = vunpack.c.h.b16 %v9041
    %v9199 = vunpack.c.l.b16 %v9042
    %v9200 = vunpack.c.h.b16 %v9042
    %v9201 = vunpack.c.l.b16 %v9043
    %v9202 = vunpack.c.h.b16 %v9043
    %v9203 = vunpack.c.l.b16 %v9044
    %v9204 = vunpack.c.h.b16 %v9044
    %v9205 = vunpack.c.l.b16 %v9045
    %v9206 = vunpack.c.h.b16 %v9045
    %v9207 = vunpack.c.l.b16 %v9046
    %v9208 = vunpack.c.h.b16 %v9046
    %v9209 = vunpack.c.l.b16 %v9047
    %v9210 = vunpack.c.h.b16 %v9047
    %v9211 = vunpack.c.l.b16 %v9048
    %v9212 = vunpack.c.h.b16 %v9048
    %v9213 = vunpack.c.l.b16 %v9049
    %v9214 = vunpack.c.h.b16 %v9049
    %v9215 = vunpack.c.l.b16 %v9050
    %v9216 = vunpack.c.h.b16 %v9050
    %v9217 = vunpack.c.l.b16 %v9051
    %v9218 = vunpack.c.h.b16 %v9051
    %v9219 = vunpack.c.l.b16 %v9052
    %v9220 = vunpack.c.h.b16 %v9052
    %v9221 = vunpack.c.l.b16 %v9053
    %v9222 = vunpack.c.h.b16 %v9053
    %v9223 = vunpack.c.l.b16 %v9054
    %v9224 = vunpack.c.h.b16 %v9054
    %v9225 = vunpack.c.l.b16 %v9055
    %v9226 = vunpack.c.h.b16 %v9055
    %v9227 = vunpack.c.l.b16 %v9056
    %v9228 = vunpack.c.h.b16 %v9056
    %v9229 = vunpack.c.l.b16 %v9057
    %v9230 = vunpack.c.h.b16 %v9057
    %v9231 = vunpack.c.l.b16 %v9058
    %v9232 = vunpack.c.h.b16 %v9058
    %v9233 = vunpack.c.l.b16 %v9059
    %v9234 = vunpack.c.h.b16 %v9059
    %v9235 = vunpack.c.l.b16 %v9060
    %v9236 = vunpack.c.h.b16 %v9060
    %v9237 = vunpack.c.l.b16 %v9061
    %v9238 = vunpack.c.h.b16 %v9061
    %v9239 = vunpack.c.l.b16 %v9062
    %v9240 = vunpack.c.h.b16 %v9062
    %v9241 = vunpack.c.l.b16 %v9063
    %v9242 = vunpack.c.h.b16 %v9063
    %v9243 = vunpack.c.l.b16 %v9064
    %v9244 = vunpack.c.h.b16 %v9064
    %v9245 = vunpack.c.l.b16 %v9065
    %v9246 = vunpack.c.h.b16 %v9065
    %v9247 = vunpack.c.l.b16 %v9066
    %v9248 = vunpack.c.h.b16 %v9066
    %v9249 = vunpack.c.l.b16 %v9067
    %v9250 = vunpack.c.h.b16 %v9067
    %v9251 = vunpack.c.l.b16 %v9068
    %v9252 = vunpack.c.h.b16 %v9068
    %v9253 = vunpack.c.l.b16 %v9069
    %v9254 = vunpack.c.h.b16 %v9069
    %v9255 = vunpack.c.l.b16 %v9070
    %v9256 = vunpack.c.h.b16 %v9070
    %v9257 = vunpack.c.l.b16 %v9071
    %v9258 = vunpack.c.h.b16 %v9071
    %v9259 = vunpack.c.l.b16 %v9072
    %v9260 = vunpack.c.h.b16 %v9072
    %v9261 = vunpack.c.l.b16 %v9073
    %v9262 = vunpack.c.h.b16 %v9073
    %v9263 = vunpack.c.l.b16 %v9074
    %v9264 = vunpack.c.h.b16 %v9074
    %v9265 = vunpack.c.l.b16 %v9075
    %v9266 = vunpack.c.h.b16 %v9075
    %v9267 = vunpack.c.l.b16 %v9076
    %v9268 = vunpack.c.h.b16 %v9076
    %v9269 = vpack.c.b16 %v9149, %v9141
    %v9270 = vpack.c.b16 %v9150, %v9142
    %v9271 = vpack.c.b16 %v9151, %v9143
    %v9272 = vpack.c.b16 %v9152, %v9144
    %v9273 = vpack.c.b16 %v9153, %v9145
    %v9274 = vpack.c.b16 %v9154, %v9146
    %v9275 = vpack.c.b16 %v9155, %v9147
    %v9276 = vpack.c.b16 %v9156, %v9148
    %v9277 = vpack.c.b16 %v9165, %v9157
    %v9278 = vpack.c.b16 %v9166, %v9158
    %v9279 = vpack.c.b16 %v9167, %v9159
    %v9280 = vpack.c.b16 %v9168, %v9160
    %v9281 = vpack.c.b16 %v9169, %v9161
    %v9282 = vpack.c.b16 %v9170, %v9162
    %v9283 = vpack.c.b16 %v9171, %v9163
    %v9284 = vpack.c.b16 %v9172, %v9164
    %v9285 = vpack.c.b16 %v9181, %v9173
    %v9286 = vpack.c.b16 %v9182, %v9174
    %v9287 = vpack.c.b16 %v9183, %v9175
    %v9288 = vpack.c.b16 %v9184, %v9176
    %v9289 = vpack.c.b16 %v9185, %v9177
    %v9290 = vpack.c.b16 %v9186, %v9178
    %v9291 = vpack.c.b16 %v9187, %v9179
    %v9292 = vpack.c.b16 %v9188, %v9180
    %v9293 = vpack.c.b16 %v9197, %v9189
    %v9294 = vpack.c.b16 %v9198, %v9190
    %v9295 = vpack.c.b16 %v9199, %v9191
    %v9296 = vpack.c.b16 %v9200, %v9192
    %v9297 = vpack.c.b16 %v9201, %v9193
    %v9298 = vpack.c.b16 %v9202, %v9194
    %v9299 = vpack.c.b16 %v9203, %v9195
    %v9300 = vpack.c.b16 %v9204, %v9196
    %v9301 = vpack.c.b16 %v9213, %v9205
    %v9302 = vpack.c.b16 %v9214, %v9206
    %v9303 = vpack.c.b16 %v9215, %v9207
    %v9304 = vpack.c.b16 %v9216, %v9208
    %v9305 = vpack.c.b16 %v9217, %v9209
    %v9306 = vpack.c.b16 %v9218, %v9210
    %v9307 = vpack.c.b16 %v9219, %v9211
    %v9308 = vpack.c.b16 %v9220, %v9212
    %v9309 = vpack.c.b16 %v9229, %v9221
    %v9310 = vpack.c.b16 %v9230, %v9222
    %v9311 = vpack.c.b16 %v9231, %v9223
    %v9312 = vpack.c.b16 %v9232, %v9224
    %v9313 = vpack.c.b16 %v9233, %v9225
    %v9314 = vpack.c.b16 %v9234, %v9226
    %v9315 = vpack.c.b16 %v9235, %v9227
    %v9316 = vpack.c.b16 %v9236, %v9228
    %v9317 = vpack.c.b16 %v9245, %v9237
    %v9318 = vpack.c.b16 %v9246, %v9238
    %v9319 = vpack.c.b16 %v9247, %v9239
    %v9320 = vpack.c.b16 %v9248, %v9240
    %v9321 = vpack.c.b16 %v9249, %v9241
    %v9322 = vpack.c.b16 %v9250, %v9242
    %v9323 = vpack.c.b16 %v9251, %v9243
    %v9324 = vpack.c.b16 %v9252, %v9244
    %v9325 = vpack.c.b16 %v9261, %v9253
    %v9326 = vpack.c.b16 %v9262, %v9254
    %v9327 = vpack.c.b16 %v9263, %v9255
    %v9328 = vpack.c.b16 %v9264, %v9256
    %v9329 = vpack.c.b16 %v9265, %v9257
    %v9330 = vpack.c.b16 %v9266, %v9258
    %v9331 = vpack.c.b16 %v9267, %v9259
    %v9332 = vpack.c.b16 %v9268, %v9260
    %9397 = vmatprep.subr.bf16.mxu0 %v9326
    %9398 = vmatpush1.bf16.msra.mxu0 %v9325
    %9399 = vmatprep.subr.bf16.mxu0 %v9318
    %9400 = vmatpush1.bf16.msra.mxu0 %v9317
    %9401 = vmatprep.subr.bf16.mxu0 %v9310
    %9402 = vmatpush1.bf16.msra.mxu0 %v9309
    %9403 = vmatprep.subr.bf16.mxu0 %v9302
    %9404 = vmatpush1.bf16.msra.mxu0 %v9301
    %9405 = vmatprep.subr.bf16.mxu0 %v9294
    %9406 = vmatpush1.bf16.msra.mxu0 %v9293
    %9407 = vmatprep.subr.bf16.mxu0 %v9286
    %9408 = vmatpush1.bf16.msra.mxu0 %v9285
    %9409 = vmatprep.subr.bf16.mxu0 %v9278
    %9410 = vmatpush1.bf16.msra.mxu0 %v9277
    %9411 = vmatprep.subr.bf16.mxu0 %v9270
    %9412 = vmatpush1.bf16.msra.mxu0 %v9269
    %9413 = vmatprep.subr.bf16.mxu0 0
    %9414 = vmatpush2.bf16.msra.mxu0 0
    %9415 = vmatprep.subr.bf16.mxu0 0
    %9416 = vmatpush2.bf16.msra.mxu0 0
    %9417 = vmatprep.subr.bf16.mxu0 0
    %9418 = vmatpush2.bf16.msra.mxu0 0
    %9419 = vmatprep.subr.bf16.mxu0 0
    %9420 = vmatpush2.bf16.msra.mxu0 0
    %9421 = vmatprep.subr.bf16.mxu0 0
    %9422 = vmatpush2.bf16.msra.mxu0 0
    %9423 = vmatprep.subr.bf16.mxu0 0
    %9424 = vmatpush2.bf16.msra.mxu0 0
    %9425 = vmatprep.subr.bf16.mxu0 0
    %9426 = vmatpush2.bf16.msra.mxu0 0
    %9427 = vmatprep.subr.bf16.mxu0 0
    %9428 = vmatpush2.bf16.msra.mxu0 0
    %9429 = vmatprep.mubr.bf16.mxu0 0
    %9430 = vmatmul.mubr.bf16.gmra.mxu0 %v9012
    %v9431 = vpop.f32.mrf.mxu0
    %v9432 = vadd.f32 0.0, %v9431
    %v9433 = vpop.f32.mrf.mxu0
    %v9434 = vadd.f32 0.0, %v9433
    %v9435 = vpop.f32.mrf.mxu0
    %v9436 = vpop.f32.mrf.mxu0
    %9437 = vdwg.mxu0
    %9438 = vmatprep.subr.bf16.mxu0 %v9328
    %9439 = vmatpush1.bf16.msra.mxu0 %v9327
    %9440 = vmatprep.subr.bf16.mxu0 %v9320
    %9441 = vmatpush1.bf16.msra.mxu0 %v9319
    %9442 = vmatprep.subr.bf16.mxu0 %v9312
    %9443 = vmatpush1.bf16.msra.mxu0 %v9311
    %9444 = vmatprep.subr.bf16.mxu0 %v9304
    %9445 = vmatpush1.bf16.msra.mxu0 %v9303
    %9446 = vmatprep.subr.bf16.mxu0 %v9296
    %9447 = vmatpush1.bf16.msra.mxu0 %v9295
    %9448 = vmatprep.subr.bf16.mxu0 %v9288
    %9449 = vmatpush1.bf16.msra.mxu0 %v9287
    %9450 = vmatprep.subr.bf16.mxu0 %v9280
    %9451 = vmatpush1.bf16.msra.mxu0 %v9279
    %9452 = vmatprep.subr.bf16.mxu0 %v9272
    %9453 = vmatpush1.bf16.msra.mxu0 %v9271
    %9454 = vmatprep.subr.bf16.mxu0 0
    %9455 = vmatpush2.bf16.msra.mxu0 0
    %9456 = vmatprep.subr.bf16.mxu0 0
    %9457 = vmatpush2.bf16.msra.mxu0 0
    %9458 = vmatprep.subr.bf16.mxu0 0
    %9459 = vmatpush2.bf16.msra.mxu0 0
    %9460 = vmatprep.subr.bf16.mxu0 0
    %9461 = vmatpush2.bf16.msra.mxu0 0
    %9462 = vmatprep.subr.bf16.mxu0 0
    %9463 = vmatpush2.bf16.msra.mxu0 0
    %9464 = vmatprep.subr.bf16.mxu0 0
    %9465 = vmatpush2.bf16.msra.mxu0 0
    %9466 = vmatprep.subr.bf16.mxu0 0
    %9467 = vmatpush2.bf16.msra.mxu0 0
    %9468 = vmatprep.subr.bf16.mxu0 0
    %9469 = vmatpush2.bf16.msra.mxu0 0
    %9470 = vmatprep.mubr.bf16.mxu0 0
    %9471 = vmatmul.mubr.bf16.gmra.mxu0 %v9012
    %v9472 = vpop.f32.mrf.mxu0
    %v9473 = vadd.f32 0.0, %v9472
    %v9474 = vpop.f32.mrf.mxu0
    %v9475 = vadd.f32 0.0, %v9474
    %v9476 = vpop.f32.mrf.mxu0
    %v9477 = vpop.f32.mrf.mxu0
    %9478 = vdwg.mxu0
    %9479 = vmatprep.subr.bf16.mxu0 %v9330
    %9480 = vmatpush1.bf16.msra.mxu0 %v9329
    %9481 = vmatprep.subr.bf16.mxu0 %v9322
    %9482 = vmatpush1.bf16.msra.mxu0 %v9321
    %9483 = vmatprep.subr.bf16.mxu0 %v9314
    %9484 = vmatpush1.bf16.msra.mxu0 %v9313
    %9485 = vmatprep.subr.bf16.mxu0 %v9306
    %9486 = vmatpush1.bf16.msra.mxu0 %v9305
    %9487 = vmatprep.subr.bf16.mxu0 %v9298
    %9488 = vmatpush1.bf16.msra.mxu0 %v9297
    %9489 = vmatprep.subr.bf16.mxu0 %v9290
    %9490 = vmatpush1.bf16.msra.mxu0 %v9289
    %9491 = vmatprep.subr.bf16.mxu0 %v9282
    %9492 = vmatpush1.bf16.msra.mxu0 %v9281
    %9493 = vmatprep.subr.bf16.mxu0 %v9274
    %9494 = vmatpush1.bf16.msra.mxu0 %v9273
    %9495 = vmatprep.subr.bf16.mxu0 0
    %9496 = vmatpush2.bf16.msra.mxu0 0
    %9497 = vmatprep.subr.bf16.mxu0 0
    %9498 = vmatpush2.bf16.msra.mxu0 0
    %9499 = vmatprep.subr.bf16.mxu0 0
    %9500 = vmatpush2.bf16.msra.mxu0 0
    %9501 = vmatprep.subr.bf16.mxu0 0
    %9502 = vmatpush2.bf16.msra.mxu0 0
    %9503 = vmatprep.subr.bf16.mxu0 0
    %9504 = vmatpush2.bf16.msra.mxu0 0
    %9505 = vmatprep.subr.bf16.mxu0 0
    %9506 = vmatpush2.bf16.msra.mxu0 0
    %9507 = vmatprep.subr.bf16.mxu0 0
    %9508 = vmatpush2.bf16.msra.mxu0 0
    %9509 = vmatprep.subr.bf16.mxu0 0
    %9510 = vmatpush2.bf16.msra.mxu0 0
    %9511 = vmatprep.mubr.bf16.mxu0 0
    %9512 = vmatmul.mubr.bf16.gmra.mxu0 %v9012
    %v9513 = vpop.f32.mrf.mxu0
    %v9514 = vadd.f32 0.0, %v9513
    %v9515 = vpop.f32.mrf.mxu0
    %v9516 = vadd.f32 0.0, %v9515
    %v9517 = vpop.f32.mrf.mxu0
    %v9518 = vpop.f32.mrf.mxu0
    %9519 = vdwg.mxu0
    %9520 = vmatprep.subr.bf16.mxu0 %v9332
    %9521 = vmatpush1.bf16.msra.mxu0 %v9331
    %9522 = vmatprep.subr.bf16.mxu0 %v9324
    %9523 = vmatpush1.bf16.msra.mxu0 %v9323
    %9524 = vmatprep.subr.bf16.mxu0 %v9316
    %9525 = vmatpush1.bf16.msra.mxu0 %v9315
    %9526 = vmatprep.subr.bf16.mxu0 %v9308
    %9527 = vmatpush1.bf16.msra.mxu0 %v9307
    %9528 = vmatprep.subr.bf16.mxu0 %v9300
    %9529 = vmatpush1.bf16.msra.mxu0 %v9299
    %9530 = vmatprep.subr.bf16.mxu0 %v9292
    %9531 = vmatpush1.bf16.msra.mxu0 %v9291
    %9532 = vmatprep.subr.bf16.mxu0 %v9284
    %9533 = vmatpush1.bf16.msra.mxu0 %v9283
    %9534 = vmatprep.subr.bf16.mxu0 %v9276
    %9535 = vmatpush1.bf16.msra.mxu0 %v9275
    %9536 = vmatprep.subr.bf16.mxu0 0
    %9537 = vmatpush2.bf16.msra.mxu0 0
    %9538 = vmatprep.subr.bf16.mxu0 0
    %9539 = vmatpush2.bf16.msra.mxu0 0
    %9540 = vmatprep.subr.bf16.mxu0 0
    %9541 = vmatpush2.bf16.msra.mxu0 0
    %9542 = vmatprep.subr.bf16.mxu0 0
    %9543 = vmatpush2.bf16.msra.mxu0 0
    %9544 = vmatprep.subr.bf16.mxu0 0
    %9545 = vmatpush2.bf16.msra.mxu0 0
    %9546 = vmatprep.subr.bf16.mxu0 0
    %9547 = vmatpush2.bf16.msra.mxu0 0
    %9548 = vmatprep.subr.bf16.mxu0 0
    %9549 = vmatpush2.bf16.msra.mxu0 0
    %9550 = vmatprep.subr.bf16.mxu0 0
    %9551 = vmatpush2.bf16.msra.mxu0 0
    %9552 = vmatprep.mubr.bf16.mxu0 0
    %9553 = vmatmul.mubr.bf16.gmra.mxu0 %v9012
    %v9554 = vpop.f32.mrf.mxu0
    %v9555 = vadd.f32 0.0, %v9554
    %v9556 = vpop.f32.mrf.mxu0
    %v9557 = vadd.f32 0.0, %v9556
    %v9558 = vpop.f32.mrf.mxu0
    %v9559 = vpop.f32.mrf.mxu0
    %9560 = vdwg.mxu0
    %v9561 = vadd.f32 %v9004, %v9432
    %v9562 = vadd.f32 %v9005, %v9434
    %v9563 = vadd.f32 %v9006, %v9473
    %v9564 = vadd.f32 %v9007, %v9475
    %v9565 = vadd.f32 %v9008, %v9514
    %v9566 = vadd.f32 %v9009, %v9516
    %v9567 = vadd.f32 %v9010, %v9555
    %v9568 = vadd.f32 %v9011, %v9557
    %v9569 = vpack.c.bf16 %v1785, %v1785
    %v9570 = vld [vmem:[#allocation9 + $0x1c00] sm:$0xff]
    %v9571 = vld [vmem:[#allocation9 + $0x1c08] sm:$0xff]
    %v9572 = vld [vmem:[#allocation9 + $0x1c10] sm:$0xff]
    %v9573 = vld [vmem:[#allocation9 + $0x1c18] sm:$0xff]
    %v9574 = vld [vmem:[#allocation9 + $0x1c20] sm:$0xff]
    %v9575 = vld [vmem:[#allocation9 + $0x1c28] sm:$0xff]
    %v9576 = vld [vmem:[#allocation9 + $0x1c30] sm:$0xff]
    %v9577 = vld [vmem:[#allocation9 + $0x1c38] sm:$0xff]
    %v9578 = vld [vmem:[#allocation9 + $0x1c40] sm:$0xff]
    %v9579 = vld [vmem:[#allocation9 + $0x1c48] sm:$0xff]
    %v9580 = vld [vmem:[#allocation9 + $0x1c50] sm:$0xff]
    %v9581 = vld [vmem:[#allocation9 + $0x1c58] sm:$0xff]
    %v9582 = vld [vmem:[#allocation9 + $0x1c60] sm:$0xff]
    %v9583 = vld [vmem:[#allocation9 + $0x1c68] sm:$0xff]
    %v9584 = vld [vmem:[#allocation9 + $0x1c70] sm:$0xff]
    %v9585 = vld [vmem:[#allocation9 + $0x1c78] sm:$0xff]
    %v9586 = vld [vmem:[#allocation9 + $0x1c80] sm:$0xff]
    %v9587 = vld [vmem:[#allocation9 + $0x1c88] sm:$0xff]
    %v9588 = vld [vmem:[#allocation9 + $0x1c90] sm:$0xff]
    %v9589 = vld [vmem:[#allocation9 + $0x1c98] sm:$0xff]
    %v9590 = vld [vmem:[#allocation9 + $0x1ca0] sm:$0xff]
    %v9591 = vld [vmem:[#allocation9 + $0x1ca8] sm:$0xff]
    %v9592 = vld [vmem:[#allocation9 + $0x1cb0] sm:$0xff]
    %v9593 = vld [vmem:[#allocation9 + $0x1cb8] sm:$0xff]
    %v9594 = vld [vmem:[#allocation9 + $0x1cc0] sm:$0xff]
    %v9595 = vld [vmem:[#allocation9 + $0x1cc8] sm:$0xff]
    %v9596 = vld [vmem:[#allocation9 + $0x1cd0] sm:$0xff]
    %v9597 = vld [vmem:[#allocation9 + $0x1cd8] sm:$0xff]
    %v9598 = vld [vmem:[#allocation9 + $0x1ce0] sm:$0xff]
    %v9599 = vld [vmem:[#allocation9 + $0x1ce8] sm:$0xff]
    %v9600 = vld [vmem:[#allocation9 + $0x1cf0] sm:$0xff]
    %v9601 = vld [vmem:[#allocation9 + $0x1cf8] sm:$0xff]
    %v9602 = vld [vmem:[#allocation9 + $0x1d00] sm:$0xff]
    %v9603 = vld [vmem:[#allocation9 + $0x1d08] sm:$0xff]
    %v9604 = vld [vmem:[#allocation9 + $0x1d10] sm:$0xff]
    %v9605 = vld [vmem:[#allocation9 + $0x1d18] sm:$0xff]
    %v9606 = vld [vmem:[#allocation9 + $0x1d20] sm:$0xff]
    %v9607 = vld [vmem:[#allocation9 + $0x1d28] sm:$0xff]
    %v9608 = vld [vmem:[#allocation9 + $0x1d30] sm:$0xff]
    %v9609 = vld [vmem:[#allocation9 + $0x1d38] sm:$0xff]
    %v9610 = vld [vmem:[#allocation9 + $0x1d40] sm:$0xff]
    %v9611 = vld [vmem:[#allocation9 + $0x1d48] sm:$0xff]
    %v9612 = vld [vmem:[#allocation9 + $0x1d50] sm:$0xff]
    %v9613 = vld [vmem:[#allocation9 + $0x1d58] sm:$0xff]
    %v9614 = vld [vmem:[#allocation9 + $0x1d60] sm:$0xff]
    %v9615 = vld [vmem:[#allocation9 + $0x1d68] sm:$0xff]
    %v9616 = vld [vmem:[#allocation9 + $0x1d70] sm:$0xff]
    %v9617 = vld [vmem:[#allocation9 + $0x1d78] sm:$0xff]
    %v9618 = vld [vmem:[#allocation9 + $0x1d80] sm:$0xff]
    %v9619 = vld [vmem:[#allocation9 + $0x1d88] sm:$0xff]
    %v9620 = vld [vmem:[#allocation9 + $0x1d90] sm:$0xff]
    %v9621 = vld [vmem:[#allocation9 + $0x1d98] sm:$0xff]
    %v9622 = vld [vmem:[#allocation9 + $0x1da0] sm:$0xff]
    %v9623 = vld [vmem:[#allocation9 + $0x1da8] sm:$0xff]
    %v9624 = vld [vmem:[#allocation9 + $0x1db0] sm:$0xff]
    %v9625 = vld [vmem:[#allocation9 + $0x1db8] sm:$0xff]
    %v9626 = vld [vmem:[#allocation9 + $0x1dc0] sm:$0xff]
    %v9627 = vld [vmem:[#allocation9 + $0x1dc8] sm:$0xff]
    %v9628 = vld [vmem:[#allocation9 + $0x1dd0] sm:$0xff]
    %v9629 = vld [vmem:[#allocation9 + $0x1dd8] sm:$0xff]
    %v9630 = vld [vmem:[#allocation9 + $0x1de0] sm:$0xff]
    %v9631 = vld [vmem:[#allocation9 + $0x1de8] sm:$0xff]
    %v9632 = vld [vmem:[#allocation9 + $0x1df0] sm:$0xff]
    %v9633 = vld [vmem:[#allocation9 + $0x1df8] sm:$0xff]
    %v9698 = vunpack.c.l.b16 %v9570
    %v9699 = vunpack.c.h.b16 %v9570
    %v9700 = vunpack.c.l.b16 %v9571
    %v9701 = vunpack.c.h.b16 %v9571
    %v9702 = vunpack.c.l.b16 %v9572
    %v9703 = vunpack.c.h.b16 %v9572
    %v9704 = vunpack.c.l.b16 %v9573
    %v9705 = vunpack.c.h.b16 %v9573
    %v9706 = vunpack.c.l.b16 %v9574
    %v9707 = vunpack.c.h.b16 %v9574
    %v9708 = vunpack.c.l.b16 %v9575
    %v9709 = vunpack.c.h.b16 %v9575
    %v9710 = vunpack.c.l.b16 %v9576
    %v9711 = vunpack.c.h.b16 %v9576
    %v9712 = vunpack.c.l.b16 %v9577
    %v9713 = vunpack.c.h.b16 %v9577
    %v9714 = vunpack.c.l.b16 %v9578
    %v9715 = vunpack.c.h.b16 %v9578
    %v9716 = vunpack.c.l.b16 %v9579
    %v9717 = vunpack.c.h.b16 %v9579
    %v9718 = vunpack.c.l.b16 %v9580
    %v9719 = vunpack.c.h.b16 %v9580
    %v9720 = vunpack.c.l.b16 %v9581
    %v9721 = vunpack.c.h.b16 %v9581
    %v9722 = vunpack.c.l.b16 %v9582
    %v9723 = vunpack.c.h.b16 %v9582
    %v9724 = vunpack.c.l.b16 %v9583
    %v9725 = vunpack.c.h.b16 %v9583
    %v9726 = vunpack.c.l.b16 %v9584
    %v9727 = vunpack.c.h.b16 %v9584
    %v9728 = vunpack.c.l.b16 %v9585
    %v9729 = vunpack.c.h.b16 %v9585
    %v9730 = vunpack.c.l.b16 %v9586
    %v9731 = vunpack.c.h.b16 %v9586
    %v9732 = vunpack.c.l.b16 %v9587
    %v9733 = vunpack.c.h.b16 %v9587
    %v9734 = vunpack.c.l.b16 %v9588
    %v9735 = vunpack.c.h.b16 %v9588
    %v9736 = vunpack.c.l.b16 %v9589
    %v9737 = vunpack.c.h.b16 %v9589
    %v9738 = vunpack.c.l.b16 %v9590
    %v9739 = vunpack.c.h.b16 %v9590
    %v9740 = vunpack.c.l.b16 %v9591
    %v9741 = vunpack.c.h.b16 %v9591
    %v9742 = vunpack.c.l.b16 %v9592
    %v9743 = vunpack.c.h.b16 %v9592
    %v9744 = vunpack.c.l.b16 %v9593
    %v9745 = vunpack.c.h.b16 %v9593
    %v9746 = vunpack.c.l.b16 %v9594
    %v9747 = vunpack.c.h.b16 %v9594
    %v9748 = vunpack.c.l.b16 %v9595
    %v9749 = vunpack.c.h.b16 %v9595
    %v9750 = vunpack.c.l.b16 %v9596
    %v9751 = vunpack.c.h.b16 %v9596
    %v9752 = vunpack.c.l.b16 %v9597
    %v9753 = vunpack.c.h.b16 %v9597
    %v9754 = vunpack.c.l.b16 %v9598
    %v9755 = vunpack.c.h.b16 %v9598
    %v9756 = vunpack.c.l.b16 %v9599
    %v9757 = vunpack.c.h.b16 %v9599
    %v9758 = vunpack.c.l.b16 %v9600
    %v9759 = vunpack.c.h.b16 %v9600
    %v9760 = vunpack.c.l.b16 %v9601
    %v9761 = vunpack.c.h.b16 %v9601
    %v9762 = vunpack.c.l.b16 %v9602
    %v9763 = vunpack.c.h.b16 %v9602
    %v9764 = vunpack.c.l.b16 %v9603
    %v9765 = vunpack.c.h.b16 %v9603
    %v9766 = vunpack.c.l.b16 %v9604
    %v9767 = vunpack.c.h.b16 %v9604
    %v9768 = vunpack.c.l.b16 %v9605
    %v9769 = vunpack.c.h.b16 %v9605
    %v9770 = vunpack.c.l.b16 %v9606
    %v9771 = vunpack.c.h.b16 %v9606
    %v9772 = vunpack.c.l.b16 %v9607
    %v9773 = vunpack.c.h.b16 %v9607
    %v9774 = vunpack.c.l.b16 %v9608
    %v9775 = vunpack.c.h.b16 %v9608
    %v9776 = vunpack.c.l.b16 %v9609
    %v9777 = vunpack.c.h.b16 %v9609
    %v9778 = vunpack.c.l.b16 %v9610
    %v9779 = vunpack.c.h.b16 %v9610
    %v9780 = vunpack.c.l.b16 %v9611
    %v9781 = vunpack.c.h.b16 %v9611
    %v9782 = vunpack.c.l.b16 %v9612
    %v9783 = vunpack.c.h.b16 %v9612
    %v9784 = vunpack.c.l.b16 %v9613
    %v9785 = vunpack.c.h.b16 %v9613
    %v9786 = vunpack.c.l.b16 %v9614
    %v9787 = vunpack.c.h.b16 %v9614
    %v9788 = vunpack.c.l.b16 %v9615
    %v9789 = vunpack.c.h.b16 %v9615
    %v9790 = vunpack.c.l.b16 %v9616
    %v9791 = vunpack.c.h.b16 %v9616
    %v9792 = vunpack.c.l.b16 %v9617
    %v9793 = vunpack.c.h.b16 %v9617
    %v9794 = vunpack.c.l.b16 %v9618
    %v9795 = vunpack.c.h.b16 %v9618
    %v9796 = vunpack.c.l.b16 %v9619
    %v9797 = vunpack.c.h.b16 %v9619
    %v9798 = vunpack.c.l.b16 %v9620
    %v9799 = vunpack.c.h.b16 %v9620
    %v9800 = vunpack.c.l.b16 %v9621
    %v9801 = vunpack.c.h.b16 %v9621
    %v9802 = vunpack.c.l.b16 %v9622
    %v9803 = vunpack.c.h.b16 %v9622
    %v9804 = vunpack.c.l.b16 %v9623
    %v9805 = vunpack.c.h.b16 %v9623
    %v9806 = vunpack.c.l.b16 %v9624
    %v9807 = vunpack.c.h.b16 %v9624
    %v9808 = vunpack.c.l.b16 %v9625
    %v9809 = vunpack.c.h.b16 %v9625
    %v9810 = vunpack.c.l.b16 %v9626
    %v9811 = vunpack.c.h.b16 %v9626
    %v9812 = vunpack.c.l.b16 %v9627
    %v9813 = vunpack.c.h.b16 %v9627
    %v9814 = vunpack.c.l.b16 %v9628
    %v9815 = vunpack.c.h.b16 %v9628
    %v9816 = vunpack.c.l.b16 %v9629
    %v9817 = vunpack.c.h.b16 %v9629
    %v9818 = vunpack.c.l.b16 %v9630
    %v9819 = vunpack.c.h.b16 %v9630
    %v9820 = vunpack.c.l.b16 %v9631
    %v9821 = vunpack.c.h.b16 %v9631
    %v9822 = vunpack.c.l.b16 %v9632
    %v9823 = vunpack.c.h.b16 %v9632
    %v9824 = vunpack.c.l.b16 %v9633
    %v9825 = vunpack.c.h.b16 %v9633
    %v9826 = vpack.c.b16 %v9706, %v9698
    %v9827 = vpack.c.b16 %v9707, %v9699
    %v9828 = vpack.c.b16 %v9708, %v9700
    %v9829 = vpack.c.b16 %v9709, %v9701
    %v9830 = vpack.c.b16 %v9710, %v9702
    %v9831 = vpack.c.b16 %v9711, %v9703
    %v9832 = vpack.c.b16 %v9712, %v9704
    %v9833 = vpack.c.b16 %v9713, %v9705
    %v9834 = vpack.c.b16 %v9722, %v9714
    %v9835 = vpack.c.b16 %v9723, %v9715
    %v9836 = vpack.c.b16 %v9724, %v9716
    %v9837 = vpack.c.b16 %v9725, %v9717
    %v9838 = vpack.c.b16 %v9726, %v9718
    %v9839 = vpack.c.b16 %v9727, %v9719
    %v9840 = vpack.c.b16 %v9728, %v9720
    %v9841 = vpack.c.b16 %v9729, %v9721
    %v9842 = vpack.c.b16 %v9738, %v9730
    %v9843 = vpack.c.b16 %v9739, %v9731
    %v9844 = vpack.c.b16 %v9740, %v9732
    %v9845 = vpack.c.b16 %v9741, %v9733
    %v9846 = vpack.c.b16 %v9742, %v9734
    %v9847 = vpack.c.b16 %v9743, %v9735
    %v9848 = vpack.c.b16 %v9744, %v9736
    %v9849 = vpack.c.b16 %v9745, %v9737
    %v9850 = vpack.c.b16 %v9754, %v9746
    %v9851 = vpack.c.b16 %v9755, %v9747
    %v9852 = vpack.c.b16 %v9756, %v9748
    %v9853 = vpack.c.b16 %v9757, %v9749
    %v9854 = vpack.c.b16 %v9758, %v9750
    %v9855 = vpack.c.b16 %v9759, %v9751
    %v9856 = vpack.c.b16 %v9760, %v9752
    %v9857 = vpack.c.b16 %v9761, %v9753
    %v9858 = vpack.c.b16 %v9770, %v9762
    %v9859 = vpack.c.b16 %v9771, %v9763
    %v9860 = vpack.c.b16 %v9772, %v9764
    %v9861 = vpack.c.b16 %v9773, %v9765
    %v9862 = vpack.c.b16 %v9774, %v9766
    %v9863 = vpack.c.b16 %v9775, %v9767
    %v9864 = vpack.c.b16 %v9776, %v9768
    %v9865 = vpack.c.b16 %v9777, %v9769
    %v9866 = vpack.c.b16 %v9786, %v9778
    %v9867 = vpack.c.b16 %v9787, %v9779
    %v9868 = vpack.c.b16 %v9788, %v9780
    %v9869 = vpack.c.b16 %v9789, %v9781
    %v9870 = vpack.c.b16 %v9790, %v9782
    %v9871 = vpack.c.b16 %v9791, %v9783
    %v9872 = vpack.c.b16 %v9792, %v9784
    %v9873 = vpack.c.b16 %v9793, %v9785
    %v9874 = vpack.c.b16 %v9802, %v9794
    %v9875 = vpack.c.b16 %v9803, %v9795
    %v9876 = vpack.c.b16 %v9804, %v9796
    %v9877 = vpack.c.b16 %v9805, %v9797
    %v9878 = vpack.c.b16 %v9806, %v9798
    %v9879 = vpack.c.b16 %v9807, %v9799
    %v9880 = vpack.c.b16 %v9808, %v9800
    %v9881 = vpack.c.b16 %v9809, %v9801
    %v9882 = vpack.c.b16 %v9818, %v9810
    %v9883 = vpack.c.b16 %v9819, %v9811
    %v9884 = vpack.c.b16 %v9820, %v9812
    %v9885 = vpack.c.b16 %v9821, %v9813
    %v9886 = vpack.c.b16 %v9822, %v9814
    %v9887 = vpack.c.b16 %v9823, %v9815
    %v9888 = vpack.c.b16 %v9824, %v9816
    %v9889 = vpack.c.b16 %v9825, %v9817
    %9954 = vmatprep.subr.bf16.mxu0 %v9883
    %9955 = vmatpush1.bf16.msra.mxu0 %v9882
    %9956 = vmatprep.subr.bf16.mxu0 %v9875
    %9957 = vmatpush1.bf16.msra.mxu0 %v9874
    %9958 = vmatprep.subr.bf16.mxu0 %v9867
    %9959 = vmatpush1.bf16.msra.mxu0 %v9866
    %9960 = vmatprep.subr.bf16.mxu0 %v9859
    %9961 = vmatpush1.bf16.msra.mxu0 %v9858
    %9962 = vmatprep.subr.bf16.mxu0 %v9851
    %9963 = vmatpush1.bf16.msra.mxu0 %v9850
    %9964 = vmatprep.subr.bf16.mxu0 %v9843
    %9965 = vmatpush1.bf16.msra.mxu0 %v9842
    %9966 = vmatprep.subr.bf16.mxu0 %v9835
    %9967 = vmatpush1.bf16.msra.mxu0 %v9834
    %9968 = vmatprep.subr.bf16.mxu0 %v9827
    %9969 = vmatpush1.bf16.msra.mxu0 %v9826
    %9970 = vmatprep.subr.bf16.mxu0 0
    %9971 = vmatpush2.bf16.msra.mxu0 0
    %9972 = vmatprep.subr.bf16.mxu0 0
    %9973 = vmatpush2.bf16.msra.mxu0 0
    %9974 = vmatprep.subr.bf16.mxu0 0
    %9975 = vmatpush2.bf16.msra.mxu0 0
    %9976 = vmatprep.subr.bf16.mxu0 0
    %9977 = vmatpush2.bf16.msra.mxu0 0
    %9978 = vmatprep.subr.bf16.mxu0 0
    %9979 = vmatpush2.bf16.msra.mxu0 0
    %9980 = vmatprep.subr.bf16.mxu0 0
    %9981 = vmatpush2.bf16.msra.mxu0 0
    %9982 = vmatprep.subr.bf16.mxu0 0
    %9983 = vmatpush2.bf16.msra.mxu0 0
    %9984 = vmatprep.subr.bf16.mxu0 0
    %9985 = vmatpush2.bf16.msra.mxu0 0
    %9986 = vmatprep.mubr.bf16.mxu0 0
    %9987 = vmatmul.mubr.bf16.gmra.mxu0 %v9569
    %v9988 = vpop.f32.mrf.mxu0
    %v9989 = vadd.f32 0.0, %v9988
    %v9990 = vpop.f32.mrf.mxu0
    %v9991 = vadd.f32 0.0, %v9990
    %v9992 = vpop.f32.mrf.mxu0
    %v9993 = vpop.f32.mrf.mxu0
    %9994 = vdwg.mxu0
    %9995 = vmatprep.subr.bf16.mxu0 %v9885
    %9996 = vmatpush1.bf16.msra.mxu0 %v9884
    %9997 = vmatprep.subr.bf16.mxu0 %v9877
    %9998 = vmatpush1.bf16.msra.mxu0 %v9876
    %9999 = vmatprep.subr.bf16.mxu0 %v9869
    %10000 = vmatpush1.bf16.msra.mxu0 %v9868
    %10001 = vmatprep.subr.bf16.mxu0 %v9861
    %10002 = vmatpush1.bf16.msra.mxu0 %v9860
    %10003 = vmatprep.subr.bf16.mxu0 %v9853
    %10004 = vmatpush1.bf16.msra.mxu0 %v9852
    %10005 = vmatprep.subr.bf16.mxu0 %v9845
    %10006 = vmatpush1.bf16.msra.mxu0 %v9844
    %10007 = vmatprep.subr.bf16.mxu0 %v9837
    %10008 = vmatpush1.bf16.msra.mxu0 %v9836
    %10009 = vmatprep.subr.bf16.mxu0 %v9829
    %10010 = vmatpush1.bf16.msra.mxu0 %v9828
    %10011 = vmatprep.subr.bf16.mxu0 0
    %10012 = vmatpush2.bf16.msra.mxu0 0
    %10013 = vmatprep.subr.bf16.mxu0 0
    %10014 = vmatpush2.bf16.msra.mxu0 0
    %10015 = vmatprep.subr.bf16.mxu0 0
    %10016 = vmatpush2.bf16.msra.mxu0 0
    %10017 = vmatprep.subr.bf16.mxu0 0
    %10018 = vmatpush2.bf16.msra.mxu0 0
    %10019 = vmatprep.subr.bf16.mxu0 0
    %10020 = vmatpush2.bf16.msra.mxu0 0
    %10021 = vmatprep.subr.bf16.mxu0 0
    %10022 = vmatpush2.bf16.msra.mxu0 0
    %10023 = vmatprep.subr.bf16.mxu0 0
    %10024 = vmatpush2.bf16.msra.mxu0 0
    %10025 = vmatprep.subr.bf16.mxu0 0
    %10026 = vmatpush2.bf16.msra.mxu0 0
    %10027 = vmatprep.mubr.bf16.mxu0 0
    %10028 = vmatmul.mubr.bf16.gmra.mxu0 %v9569
    %v10029 = vpop.f32.mrf.mxu0
    %v10030 = vadd.f32 0.0, %v10029
    %v10031 = vpop.f32.mrf.mxu0
    %v10032 = vadd.f32 0.0, %v10031
    %v10033 = vpop.f32.mrf.mxu0
    %v10034 = vpop.f32.mrf.mxu0
    %10035 = vdwg.mxu0
    %10036 = vmatprep.subr.bf16.mxu0 %v9887
    %10037 = vmatpush1.bf16.msra.mxu0 %v9886
    %10038 = vmatprep.subr.bf16.mxu0 %v9879
    %10039 = vmatpush1.bf16.msra.mxu0 %v9878
    %10040 = vmatprep.subr.bf16.mxu0 %v9871
    %10041 = vmatpush1.bf16.msra.mxu0 %v9870
    %10042 = vmatprep.subr.bf16.mxu0 %v9863
    %10043 = vmatpush1.bf16.msra.mxu0 %v9862
    %10044 = vmatprep.subr.bf16.mxu0 %v9855
    %10045 = vmatpush1.bf16.msra.mxu0 %v9854
    %10046 = vmatprep.subr.bf16.mxu0 %v9847
    %10047 = vmatpush1.bf16.msra.mxu0 %v9846
    %10048 = vmatprep.subr.bf16.mxu0 %v9839
    %10049 = vmatpush1.bf16.msra.mxu0 %v9838
    %10050 = vmatprep.subr.bf16.mxu0 %v9831
    %10051 = vmatpush1.bf16.msra.mxu0 %v9830
    %10052 = vmatprep.subr.bf16.mxu0 0
    %10053 = vmatpush2.bf16.msra.mxu0 0
    %10054 = vmatprep.subr.bf16.mxu0 0
    %10055 = vmatpush2.bf16.msra.mxu0 0
    %10056 = vmatprep.subr.bf16.mxu0 0
    %10057 = vmatpush2.bf16.msra.mxu0 0
    %10058 = vmatprep.subr.bf16.mxu0 0
    %10059 = vmatpush2.bf16.msra.mxu0 0
    %10060 = vmatprep.subr.bf16.mxu0 0
    %10061 = vmatpush2.bf16.msra.mxu0 0
    %10062 = vmatprep.subr.bf16.mxu0 0
    %10063 = vmatpush2.bf16.msra.mxu0 0
    %10064 = vmatprep.subr.bf16.mxu0 0
    %10065 = vmatpush2.bf16.msra.mxu0 0
    %10066 = vmatprep.subr.bf16.mxu0 0
    %10067 = vmatpush2.bf16.msra.mxu0 0
    %10068 = vmatprep.mubr.bf16.mxu0 0
    %10069 = vmatmul.mubr.bf16.gmra.mxu0 %v9569
    %v10070 = vpop.f32.mrf.mxu0
    %v10071 = vadd.f32 0.0, %v10070
    %v10072 = vpop.f32.mrf.mxu0
    %v10073 = vadd.f32 0.0, %v10072
    %v10074 = vpop.f32.mrf.mxu0
    %v10075 = vpop.f32.mrf.mxu0
    %10076 = vdwg.mxu0
    %10077 = vmatprep.subr.bf16.mxu0 %v9889
    %10078 = vmatpush1.bf16.msra.mxu0 %v9888
    %10079 = vmatprep.subr.bf16.mxu0 %v9881
    %10080 = vmatpush1.bf16.msra.mxu0 %v9880
    %10081 = vmatprep.subr.bf16.mxu0 %v9873
    %10082 = vmatpush1.bf16.msra.mxu0 %v9872
    %10083 = vmatprep.subr.bf16.mxu0 %v9865
    %10084 = vmatpush1.bf16.msra.mxu0 %v9864
    %10085 = vmatprep.subr.bf16.mxu0 %v9857
    %10086 = vmatpush1.bf16.msra.mxu0 %v9856
    %10087 = vmatprep.subr.bf16.mxu0 %v9849
    %10088 = vmatpush1.bf16.msra.mxu0 %v9848
    %10089 = vmatprep.subr.bf16.mxu0 %v9841
    %10090 = vmatpush1.bf16.msra.mxu0 %v9840
    %10091 = vmatprep.subr.bf16.mxu0 %v9833
    %10092 = vmatpush1.bf16.msra.mxu0 %v9832
    %10093 = vmatprep.subr.bf16.mxu0 0
    %10094 = vmatpush2.bf16.msra.mxu0 0
    %10095 = vmatprep.subr.bf16.mxu0 0
    %10096 = vmatpush2.bf16.msra.mxu0 0
    %10097 = vmatprep.subr.bf16.mxu0 0
    %10098 = vmatpush2.bf16.msra.mxu0 0
    %10099 = vmatprep.subr.bf16.mxu0 0
    %10100 = vmatpush2.bf16.msra.mxu0 0
    %10101 = vmatprep.subr.bf16.mxu0 0
    %10102 = vmatpush2.bf16.msra.mxu0 0
    %10103 = vmatprep.subr.bf16.mxu0 0
    %10104 = vmatpush2.bf16.msra.mxu0 0
    %10105 = vmatprep.subr.bf16.mxu0 0
    %10106 = vmatpush2.bf16.msra.mxu0 0
    %10107 = vmatprep.subr.bf16.mxu0 0
    %10108 = vmatpush2.bf16.msra.mxu0 0
    %10109 = vmatprep.mubr.bf16.mxu0 0
    %10110 = vmatmul.mubr.bf16.gmra.mxu0 %v9569
    %v10111 = vpop.f32.mrf.mxu0
    %v10112 = vadd.f32 0.0, %v10111
    %v10113 = vpop.f32.mrf.mxu0
    %v10114 = vadd.f32 0.0, %v10113
    %v10115 = vpop.f32.mrf.mxu0
    %v10116 = vpop.f32.mrf.mxu0
    %10117 = vdwg.mxu0
    %v10118 = vadd.f32 %v9561, %v9989
    %v10119 = vadd.f32 %v9562, %v9991
    %v10120 = vadd.f32 %v9563, %v10030
    %v10121 = vadd.f32 %v9564, %v10032
    %v10122 = vadd.f32 %v9565, %v10071
    %v10123 = vadd.f32 %v9566, %v10073
    %v10124 = vadd.f32 %v9567, %v10112
    %v10125 = vadd.f32 %v9568, %v10114
    %v10126 = vpack.c.bf16 %v1786, %v1786
    %v10127 = vld [vmem:[#allocation9 + $0x1e00] sm:$0xff]
    %v10128 = vld [vmem:[#allocation9 + $0x1e08] sm:$0xff]
    %v10129 = vld [vmem:[#allocation9 + $0x1e10] sm:$0xff]
    %v10130 = vld [vmem:[#allocation9 + $0x1e18] sm:$0xff]
    %v10131 = vld [vmem:[#allocation9 + $0x1e20] sm:$0xff]
    %v10132 = vld [vmem:[#allocation9 + $0x1e28] sm:$0xff]
    %v10133 = vld [vmem:[#allocation9 + $0x1e30] sm:$0xff]
    %v10134 = vld [vmem:[#allocation9 + $0x1e38] sm:$0xff]
    %v10135 = vld [vmem:[#allocation9 + $0x1e40] sm:$0xff]
    %v10136 = vld [vmem:[#allocation9 + $0x1e48] sm:$0xff]
    %v10137 = vld [vmem:[#allocation9 + $0x1e50] sm:$0xff]
    %v10138 = vld [vmem:[#allocation9 + $0x1e58] sm:$0xff]
    %v10139 = vld [vmem:[#allocation9 + $0x1e60] sm:$0xff]
    %v10140 = vld [vmem:[#allocation9 + $0x1e68] sm:$0xff]
    %v10141 = vld [vmem:[#allocation9 + $0x1e70] sm:$0xff]
    %v10142 = vld [vmem:[#allocation9 + $0x1e78] sm:$0xff]
    %v10143 = vld [vmem:[#allocation9 + $0x1e80] sm:$0xff]
    %v10144 = vld [vmem:[#allocation9 + $0x1e88] sm:$0xff]
    %v10145 = vld [vmem:[#allocation9 + $0x1e90] sm:$0xff]
    %v10146 = vld [vmem:[#allocation9 + $0x1e98] sm:$0xff]
    %v10147 = vld [vmem:[#allocation9 + $0x1ea0] sm:$0xff]
    %v10148 = vld [vmem:[#allocation9 + $0x1ea8] sm:$0xff]
    %v10149 = vld [vmem:[#allocation9 + $0x1eb0] sm:$0xff]
    %v10150 = vld [vmem:[#allocation9 + $0x1eb8] sm:$0xff]
    %v10151 = vld [vmem:[#allocation9 + $0x1ec0] sm:$0xff]
    %v10152 = vld [vmem:[#allocation9 + $0x1ec8] sm:$0xff]
    %v10153 = vld [vmem:[#allocation9 + $0x1ed0] sm:$0xff]
    %v10154 = vld [vmem:[#allocation9 + $0x1ed8] sm:$0xff]
    %v10155 = vld [vmem:[#allocation9 + $0x1ee0] sm:$0xff]
    %v10156 = vld [vmem:[#allocation9 + $0x1ee8] sm:$0xff]
    %v10157 = vld [vmem:[#allocation9 + $0x1ef0] sm:$0xff]
    %v10158 = vld [vmem:[#allocation9 + $0x1ef8] sm:$0xff]
    %v10159 = vld [vmem:[#allocation9 + $0x1f00] sm:$0xff]
    %v10160 = vld [vmem:[#allocation9 + $0x1f08] sm:$0xff]
    %v10161 = vld [vmem:[#allocation9 + $0x1f10] sm:$0xff]
    %v10162 = vld [vmem:[#allocation9 + $0x1f18] sm:$0xff]
    %v10163 = vld [vmem:[#allocation9 + $0x1f20] sm:$0xff]
    %v10164 = vld [vmem:[#allocation9 + $0x1f28] sm:$0xff]
    %v10165 = vld [vmem:[#allocation9 + $0x1f30] sm:$0xff]
    %v10166 = vld [vmem:[#allocation9 + $0x1f38] sm:$0xff]
    %v10167 = vld [vmem:[#allocation9 + $0x1f40] sm:$0xff]
    %v10168 = vld [vmem:[#allocation9 + $0x1f48] sm:$0xff]
    %v10169 = vld [vmem:[#allocation9 + $0x1f50] sm:$0xff]
    %v10170 = vld [vmem:[#allocation9 + $0x1f58] sm:$0xff]
    %v10171 = vld [vmem:[#allocation9 + $0x1f60] sm:$0xff]
    %v10172 = vld [vmem:[#allocation9 + $0x1f68] sm:$0xff]
    %v10173 = vld [vmem:[#allocation9 + $0x1f70] sm:$0xff]
    %v10174 = vld [vmem:[#allocation9 + $0x1f78] sm:$0xff]
    %v10175 = vld [vmem:[#allocation9 + $0x1f80] sm:$0xff]
    %v10176 = vld [vmem:[#allocation9 + $0x1f88] sm:$0xff]
    %v10177 = vld [vmem:[#allocation9 + $0x1f90] sm:$0xff]
    %v10178 = vld [vmem:[#allocation9 + $0x1f98] sm:$0xff]
    %v10179 = vld [vmem:[#allocation9 + $0x1fa0] sm:$0xff]
    %v10180 = vld [vmem:[#allocation9 + $0x1fa8] sm:$0xff]
    %v10181 = vld [vmem:[#allocation9 + $0x1fb0] sm:$0xff]
    %v10182 = vld [vmem:[#allocation9 + $0x1fb8] sm:$0xff]
    %v10183 = vld [vmem:[#allocation9 + $0x1fc0] sm:$0xff]
    %v10184 = vld [vmem:[#allocation9 + $0x1fc8] sm:$0xff]
    %v10185 = vld [vmem:[#allocation9 + $0x1fd0] sm:$0xff]
    %v10186 = vld [vmem:[#allocation9 + $0x1fd8] sm:$0xff]
    %v10187 = vld [vmem:[#allocation9 + $0x1fe0] sm:$0xff]
    %v10188 = vld [vmem:[#allocation9 + $0x1fe8] sm:$0xff]
    %v10189 = vld [vmem:[#allocation9 + $0x1ff0] sm:$0xff]
    %v10190 = vld [vmem:[#allocation9 + $0x1ff8] sm:$0xff]
    %v10255 = vunpack.c.l.b16 %v10127
    %v10256 = vunpack.c.h.b16 %v10127
    %v10257 = vunpack.c.l.b16 %v10128
    %v10258 = vunpack.c.h.b16 %v10128
    %v10259 = vunpack.c.l.b16 %v10129
    %v10260 = vunpack.c.h.b16 %v10129
    %v10261 = vunpack.c.l.b16 %v10130
    %v10262 = vunpack.c.h.b16 %v10130
    %v10263 = vunpack.c.l.b16 %v10131
    %v10264 = vunpack.c.h.b16 %v10131
    %v10265 = vunpack.c.l.b16 %v10132
    %v10266 = vunpack.c.h.b16 %v10132
    %v10267 = vunpack.c.l.b16 %v10133
    %v10268 = vunpack.c.h.b16 %v10133
    %v10269 = vunpack.c.l.b16 %v10134
    %v10270 = vunpack.c.h.b16 %v10134
    %v10271 = vunpack.c.l.b16 %v10135
    %v10272 = vunpack.c.h.b16 %v10135
    %v10273 = vunpack.c.l.b16 %v10136
    %v10274 = vunpack.c.h.b16 %v10136
    %v10275 = vunpack.c.l.b16 %v10137
    %v10276 = vunpack.c.h.b16 %v10137
    %v10277 = vunpack.c.l.b16 %v10138
    %v10278 = vunpack.c.h.b16 %v10138
    %v10279 = vunpack.c.l.b16 %v10139
    %v10280 = vunpack.c.h.b16 %v10139
    %v10281 = vunpack.c.l.b16 %v10140
    %v10282 = vunpack.c.h.b16 %v10140
    %v10283 = vunpack.c.l.b16 %v10141
    %v10284 = vunpack.c.h.b16 %v10141
    %v10285 = vunpack.c.l.b16 %v10142
    %v10286 = vunpack.c.h.b16 %v10142
    %v10287 = vunpack.c.l.b16 %v10143
    %v10288 = vunpack.c.h.b16 %v10143
    %v10289 = vunpack.c.l.b16 %v10144
    %v10290 = vunpack.c.h.b16 %v10144
    %v10291 = vunpack.c.l.b16 %v10145
    %v10292 = vunpack.c.h.b16 %v10145
    %v10293 = vunpack.c.l.b16 %v10146
    %v10294 = vunpack.c.h.b16 %v10146
    %v10295 = vunpack.c.l.b16 %v10147
    %v10296 = vunpack.c.h.b16 %v10147
    %v10297 = vunpack.c.l.b16 %v10148
    %v10298 = vunpack.c.h.b16 %v10148
    %v10299 = vunpack.c.l.b16 %v10149
    %v10300 = vunpack.c.h.b16 %v10149
    %v10301 = vunpack.c.l.b16 %v10150
    %v10302 = vunpack.c.h.b16 %v10150
    %v10303 = vunpack.c.l.b16 %v10151
    %v10304 = vunpack.c.h.b16 %v10151
    %v10305 = vunpack.c.l.b16 %v10152
    %v10306 = vunpack.c.h.b16 %v10152
    %v10307 = vunpack.c.l.b16 %v10153
    %v10308 = vunpack.c.h.b16 %v10153
    %v10309 = vunpack.c.l.b16 %v10154
    %v10310 = vunpack.c.h.b16 %v10154
    %v10311 = vunpack.c.l.b16 %v10155
    %v10312 = vunpack.c.h.b16 %v10155
    %v10313 = vunpack.c.l.b16 %v10156
    %v10314 = vunpack.c.h.b16 %v10156
    %v10315 = vunpack.c.l.b16 %v10157
    %v10316 = vunpack.c.h.b16 %v10157
    %v10317 = vunpack.c.l.b16 %v10158
    %v10318 = vunpack.c.h.b16 %v10158
    %v10319 = vunpack.c.l.b16 %v10159
    %v10320 = vunpack.c.h.b16 %v10159
    %v10321 = vunpack.c.l.b16 %v10160
    %v10322 = vunpack.c.h.b16 %v10160
    %v10323 = vunpack.c.l.b16 %v10161
    %v10324 = vunpack.c.h.b16 %v10161
    %v10325 = vunpack.c.l.b16 %v10162
    %v10326 = vunpack.c.h.b16 %v10162
    %v10327 = vunpack.c.l.b16 %v10163
    %v10328 = vunpack.c.h.b16 %v10163
    %v10329 = vunpack.c.l.b16 %v10164
    %v10330 = vunpack.c.h.b16 %v10164
    %v10331 = vunpack.c.l.b16 %v10165
    %v10332 = vunpack.c.h.b16 %v10165
    %v10333 = vunpack.c.l.b16 %v10166
    %v10334 = vunpack.c.h.b16 %v10166
    %v10335 = vunpack.c.l.b16 %v10167
    %v10336 = vunpack.c.h.b16 %v10167
    %v10337 = vunpack.c.l.b16 %v10168
    %v10338 = vunpack.c.h.b16 %v10168
    %v10339 = vunpack.c.l.b16 %v10169
    %v10340 = vunpack.c.h.b16 %v10169
    %v10341 = vunpack.c.l.b16 %v10170
    %v10342 = vunpack.c.h.b16 %v10170
    %v10343 = vunpack.c.l.b16 %v10171
    %v10344 = vunpack.c.h.b16 %v10171
    %v10345 = vunpack.c.l.b16 %v10172
    %v10346 = vunpack.c.h.b16 %v10172
    %v10347 = vunpack.c.l.b16 %v10173
    %v10348 = vunpack.c.h.b16 %v10173
    %v10349 = vunpack.c.l.b16 %v10174
    %v10350 = vunpack.c.h.b16 %v10174
    %v10351 = vunpack.c.l.b16 %v10175
    %v10352 = vunpack.c.h.b16 %v10175
    %v10353 = vunpack.c.l.b16 %v10176
    %v10354 = vunpack.c.h.b16 %v10176
    %v10355 = vunpack.c.l.b16 %v10177
    %v10356 = vunpack.c.h.b16 %v10177
    %v10357 = vunpack.c.l.b16 %v10178
    %v10358 = vunpack.c.h.b16 %v10178
    %v10359 = vunpack.c.l.b16 %v10179
    %v10360 = vunpack.c.h.b16 %v10179
    %v10361 = vunpack.c.l.b16 %v10180
    %v10362 = vunpack.c.h.b16 %v10180
    %v10363 = vunpack.c.l.b16 %v10181
    %v10364 = vunpack.c.h.b16 %v10181
    %v10365 = vunpack.c.l.b16 %v10182
    %v10366 = vunpack.c.h.b16 %v10182
    %v10367 = vunpack.c.l.b16 %v10183
    %v10368 = vunpack.c.h.b16 %v10183
    %v10369 = vunpack.c.l.b16 %v10184
    %v10370 = vunpack.c.h.b16 %v10184
    %v10371 = vunpack.c.l.b16 %v10185
    %v10372 = vunpack.c.h.b16 %v10185
    %v10373 = vunpack.c.l.b16 %v10186
    %v10374 = vunpack.c.h.b16 %v10186
    %v10375 = vunpack.c.l.b16 %v10187
    %v10376 = vunpack.c.h.b16 %v10187
    %v10377 = vunpack.c.l.b16 %v10188
    %v10378 = vunpack.c.h.b16 %v10188
    %v10379 = vunpack.c.l.b16 %v10189
    %v10380 = vunpack.c.h.b16 %v10189
    %v10381 = vunpack.c.l.b16 %v10190
    %v10382 = vunpack.c.h.b16 %v10190
    %v10383 = vpack.c.b16 %v10263, %v10255
    %v10384 = vpack.c.b16 %v10264, %v10256
    %v10385 = vpack.c.b16 %v10265, %v10257
    %v10386 = vpack.c.b16 %v10266, %v10258
    %v10387 = vpack.c.b16 %v10267, %v10259
    %v10388 = vpack.c.b16 %v10268, %v10260
    %v10389 = vpack.c.b16 %v10269, %v10261
    %v10390 = vpack.c.b16 %v10270, %v10262
    %v10391 = vpack.c.b16 %v10279, %v10271
    %v10392 = vpack.c.b16 %v10280, %v10272
    %v10393 = vpack.c.b16 %v10281, %v10273
    %v10394 = vpack.c.b16 %v10282, %v10274
    %v10395 = vpack.c.b16 %v10283, %v10275
    %v10396 = vpack.c.b16 %v10284, %v10276
    %v10397 = vpack.c.b16 %v10285, %v10277
    %v10398 = vpack.c.b16 %v10286, %v10278
    %v10399 = vpack.c.b16 %v10295, %v10287
    %v10400 = vpack.c.b16 %v10296, %v10288
    %v10401 = vpack.c.b16 %v10297, %v10289
    %v10402 = vpack.c.b16 %v10298, %v10290
    %v10403 = vpack.c.b16 %v10299, %v10291
    %v10404 = vpack.c.b16 %v10300, %v10292
    %v10405 = vpack.c.b16 %v10301, %v10293
    %v10406 = vpack.c.b16 %v10302, %v10294
    %v10407 = vpack.c.b16 %v10311, %v10303
    %v10408 = vpack.c.b16 %v10312, %v10304
    %v10409 = vpack.c.b16 %v10313, %v10305
    %v10410 = vpack.c.b16 %v10314, %v10306
    %v10411 = vpack.c.b16 %v10315, %v10307
    %v10412 = vpack.c.b16 %v10316, %v10308
    %v10413 = vpack.c.b16 %v10317, %v10309
    %v10414 = vpack.c.b16 %v10318, %v10310
    %v10415 = vpack.c.b16 %v10327, %v10319
    %v10416 = vpack.c.b16 %v10328, %v10320
    %v10417 = vpack.c.b16 %v10329, %v10321
    %v10418 = vpack.c.b16 %v10330, %v10322
    %v10419 = vpack.c.b16 %v10331, %v10323
    %v10420 = vpack.c.b16 %v10332, %v10324
    %v10421 = vpack.c.b16 %v10333, %v10325
    %v10422 = vpack.c.b16 %v10334, %v10326
    %v10423 = vpack.c.b16 %v10343, %v10335
    %v10424 = vpack.c.b16 %v10344, %v10336
    %v10425 = vpack.c.b16 %v10345, %v10337
    %v10426 = vpack.c.b16 %v10346, %v10338
    %v10427 = vpack.c.b16 %v10347, %v10339
    %v10428 = vpack.c.b16 %v10348, %v10340
    %v10429 = vpack.c.b16 %v10349, %v10341
    %v10430 = vpack.c.b16 %v10350, %v10342
    %v10431 = vpack.c.b16 %v10359, %v10351
    %v10432 = vpack.c.b16 %v10360, %v10352
    %v10433 = vpack.c.b16 %v10361, %v10353
    %v10434 = vpack.c.b16 %v10362, %v10354
    %v10435 = vpack.c.b16 %v10363, %v10355
    %v10436 = vpack.c.b16 %v10364, %v10356
    %v10437 = vpack.c.b16 %v10365, %v10357
    %v10438 = vpack.c.b16 %v10366, %v10358
    %v10439 = vpack.c.b16 %v10375, %v10367
    %v10440 = vpack.c.b16 %v10376, %v10368
    %v10441 = vpack.c.b16 %v10377, %v10369
    %v10442 = vpack.c.b16 %v10378, %v10370
    %v10443 = vpack.c.b16 %v10379, %v10371
    %v10444 = vpack.c.b16 %v10380, %v10372
    %v10445 = vpack.c.b16 %v10381, %v10373
    %v10446 = vpack.c.b16 %v10382, %v10374
    %10511 = vmatprep.subr.bf16.mxu0 %v10440
    %10512 = vmatpush1.bf16.msra.mxu0 %v10439
    %10513 = vmatprep.subr.bf16.mxu0 %v10432
    %10514 = vmatpush1.bf16.msra.mxu0 %v10431
    %10515 = vmatprep.subr.bf16.mxu0 %v10424
    %10516 = vmatpush1.bf16.msra.mxu0 %v10423
    %10517 = vmatprep.subr.bf16.mxu0 %v10416
    %10518 = vmatpush1.bf16.msra.mxu0 %v10415
    %10519 = vmatprep.subr.bf16.mxu0 %v10408
    %10520 = vmatpush1.bf16.msra.mxu0 %v10407
    %10521 = vmatprep.subr.bf16.mxu0 %v10400
    %10522 = vmatpush1.bf16.msra.mxu0 %v10399
    %10523 = vmatprep.subr.bf16.mxu0 %v10392
    %10524 = vmatpush1.bf16.msra.mxu0 %v10391
    %10525 = vmatprep.subr.bf16.mxu0 %v10384
    %10526 = vmatpush1.bf16.msra.mxu0 %v10383
    %10527 = vmatprep.subr.bf16.mxu0 0
    %10528 = vmatpush2.bf16.msra.mxu0 0
    %10529 = vmatprep.subr.bf16.mxu0 0
    %10530 = vmatpush2.bf16.msra.mxu0 0
    %10531 = vmatprep.subr.bf16.mxu0 0
    %10532 = vmatpush2.bf16.msra.mxu0 0
    %10533 = vmatprep.subr.bf16.mxu0 0
    %10534 = vmatpush2.bf16.msra.mxu0 0
    %10535 = vmatprep.subr.bf16.mxu0 0
    %10536 = vmatpush2.bf16.msra.mxu0 0
    %10537 = vmatprep.subr.bf16.mxu0 0
    %10538 = vmatpush2.bf16.msra.mxu0 0
    %10539 = vmatprep.subr.bf16.mxu0 0
    %10540 = vmatpush2.bf16.msra.mxu0 0
    %10541 = vmatprep.subr.bf16.mxu0 0
    %10542 = vmatpush2.bf16.msra.mxu0 0
    %10543 = vmatprep.mubr.bf16.mxu0 0
    %10544 = vmatmul.mubr.bf16.gmra.mxu0 %v10126
    %v10545 = vpop.f32.mrf.mxu0
    %v10546 = vadd.f32 0.0, %v10545
    %v10547 = vpop.f32.mrf.mxu0
    %v10548 = vadd.f32 0.0, %v10547
    %v10549 = vpop.f32.mrf.mxu0
    %v10550 = vpop.f32.mrf.mxu0
    %10551 = vdwg.mxu0
    %10552 = vmatprep.subr.bf16.mxu0 %v10442
    %10553 = vmatpush1.bf16.msra.mxu0 %v10441
    %10554 = vmatprep.subr.bf16.mxu0 %v10434
    %10555 = vmatpush1.bf16.msra.mxu0 %v10433
    %10556 = vmatprep.subr.bf16.mxu0 %v10426
    %10557 = vmatpush1.bf16.msra.mxu0 %v10425
    %10558 = vmatprep.subr.bf16.mxu0 %v10418
    %10559 = vmatpush1.bf16.msra.mxu0 %v10417
    %10560 = vmatprep.subr.bf16.mxu0 %v10410
    %10561 = vmatpush1.bf16.msra.mxu0 %v10409
    %10562 = vmatprep.subr.bf16.mxu0 %v10402
    %10563 = vmatpush1.bf16.msra.mxu0 %v10401
    %10564 = vmatprep.subr.bf16.mxu0 %v10394
    %10565 = vmatpush1.bf16.msra.mxu0 %v10393
    %10566 = vmatprep.subr.bf16.mxu0 %v10386
    %10567 = vmatpush1.bf16.msra.mxu0 %v10385
    %10568 = vmatprep.subr.bf16.mxu0 0
    %10569 = vmatpush2.bf16.msra.mxu0 0
    %10570 = vmatprep.subr.bf16.mxu0 0
    %10571 = vmatpush2.bf16.msra.mxu0 0
    %10572 = vmatprep.subr.bf16.mxu0 0
    %10573 = vmatpush2.bf16.msra.mxu0 0
    %10574 = vmatprep.subr.bf16.mxu0 0
    %10575 = vmatpush2.bf16.msra.mxu0 0
    %10576 = vmatprep.subr.bf16.mxu0 0
    %10577 = vmatpush2.bf16.msra.mxu0 0
    %10578 = vmatprep.subr.bf16.mxu0 0
    %10579 = vmatpush2.bf16.msra.mxu0 0
    %10580 = vmatprep.subr.bf16.mxu0 0
    %10581 = vmatpush2.bf16.msra.mxu0 0
    %10582 = vmatprep.subr.bf16.mxu0 0
    %10583 = vmatpush2.bf16.msra.mxu0 0
    %10584 = vmatprep.mubr.bf16.mxu0 0
    %10585 = vmatmul.mubr.bf16.gmra.mxu0 %v10126
    %v10586 = vpop.f32.mrf.mxu0
    %v10587 = vadd.f32 0.0, %v10586
    %v10588 = vpop.f32.mrf.mxu0
    %v10589 = vadd.f32 0.0, %v10588
    %v10590 = vpop.f32.mrf.mxu0
    %v10591 = vpop.f32.mrf.mxu0
    %10592 = vdwg.mxu0
    %10593 = vmatprep.subr.bf16.mxu0 %v10444
    %10594 = vmatpush1.bf16.msra.mxu0 %v10443
    %10595 = vmatprep.subr.bf16.mxu0 %v10436
    %10596 = vmatpush1.bf16.msra.mxu0 %v10435
    %10597 = vmatprep.subr.bf16.mxu0 %v10428
    %10598 = vmatpush1.bf16.msra.mxu0 %v10427
    %10599 = vmatprep.subr.bf16.mxu0 %v10420
    %10600 = vmatpush1.bf16.msra.mxu0 %v10419
    %10601 = vmatprep.subr.bf16.mxu0 %v10412
    %10602 = vmatpush1.bf16.msra.mxu0 %v10411
    %10603 = vmatprep.subr.bf16.mxu0 %v10404
    %10604 = vmatpush1.bf16.msra.mxu0 %v10403
    %10605 = vmatprep.subr.bf16.mxu0 %v10396
    %10606 = vmatpush1.bf16.msra.mxu0 %v10395
    %10607 = vmatprep.subr.bf16.mxu0 %v10388
    %10608 = vmatpush1.bf16.msra.mxu0 %v10387
    %10609 = vmatprep.subr.bf16.mxu0 0
    %10610 = vmatpush2.bf16.msra.mxu0 0
    %10611 = vmatprep.subr.bf16.mxu0 0
    %10612 = vmatpush2.bf16.msra.mxu0 0
    %10613 = vmatprep.subr.bf16.mxu0 0
    %10614 = vmatpush2.bf16.msra.mxu0 0
    %10615 = vmatprep.subr.bf16.mxu0 0
    %10616 = vmatpush2.bf16.msra.mxu0 0
    %10617 = vmatprep.subr.bf16.mxu0 0
    %10618 = vmatpush2.bf16.msra.mxu0 0
    %10619 = vmatprep.subr.bf16.mxu0 0
    %10620 = vmatpush2.bf16.msra.mxu0 0
    %10621 = vmatprep.subr.bf16.mxu0 0
    %10622 = vmatpush2.bf16.msra.mxu0 0
    %10623 = vmatprep.subr.bf16.mxu0 0
    %10624 = vmatpush2.bf16.msra.mxu0 0
    %10625 = vmatprep.mubr.bf16.mxu0 0
    %10626 = vmatmul.mubr.bf16.gmra.mxu0 %v10126
    %v10627 = vpop.f32.mrf.mxu0
    %v10628 = vadd.f32 0.0, %v10627
    %v10629 = vpop.f32.mrf.mxu0
    %v10630 = vadd.f32 0.0, %v10629
    %v10631 = vpop.f32.mrf.mxu0
    %v10632 = vpop.f32.mrf.mxu0
    %10633 = vdwg.mxu0
    %10634 = vmatprep.subr.bf16.mxu0 %v10446
    %10635 = vmatpush1.bf16.msra.mxu0 %v10445
    %10636 = vmatprep.subr.bf16.mxu0 %v10438
    %10637 = vmatpush1.bf16.msra.mxu0 %v10437
    %10638 = vmatprep.subr.bf16.mxu0 %v10430
    %10639 = vmatpush1.bf16.msra.mxu0 %v10429
    %10640 = vmatprep.subr.bf16.mxu0 %v10422
    %10641 = vmatpush1.bf16.msra.mxu0 %v10421
    %10642 = vmatprep.subr.bf16.mxu0 %v10414
    %10643 = vmatpush1.bf16.msra.mxu0 %v10413
    %10644 = vmatprep.subr.bf16.mxu0 %v10406
    %10645 = vmatpush1.bf16.msra.mxu0 %v10405
    %10646 = vmatprep.subr.bf16.mxu0 %v10398
    %10647 = vmatpush1.bf16.msra.mxu0 %v10397
    %10648 = vmatprep.subr.bf16.mxu0 %v10390
    %10649 = vmatpush1.bf16.msra.mxu0 %v10389
    %10650 = vmatprep.subr.bf16.mxu0 0
    %10651 = vmatpush2.bf16.msra.mxu0 0
    %10652 = vmatprep.subr.bf16.mxu0 0
    %10653 = vmatpush2.bf16.msra.mxu0 0
    %10654 = vmatprep.subr.bf16.mxu0 0
    %10655 = vmatpush2.bf16.msra.mxu0 0
    %10656 = vmatprep.subr.bf16.mxu0 0
    %10657 = vmatpush2.bf16.msra.mxu0 0
    %10658 = vmatprep.subr.bf16.mxu0 0
    %10659 = vmatpush2.bf16.msra.mxu0 0
    %10660 = vmatprep.subr.bf16.mxu0 0
    %10661 = vmatpush2.bf16.msra.mxu0 0
    %10662 = vmatprep.subr.bf16.mxu0 0
    %10663 = vmatpush2.bf16.msra.mxu0 0
    %10664 = vmatprep.subr.bf16.mxu0 0
    %10665 = vmatpush2.bf16.msra.mxu0 0
    %10666 = vmatprep.mubr.bf16.mxu0 0
    %10667 = vmatmul.mubr.bf16.gmra.mxu0 %v10126
    %v10668 = vpop.f32.mrf.mxu0
    %v10669 = vadd.f32 0.0, %v10668
    %v10670 = vpop.f32.mrf.mxu0
    %v10671 = vadd.f32 0.0, %v10670
    %v10672 = vpop.f32.mrf.mxu0
    %v10673 = vpop.f32.mrf.mxu0
    %10674 = vdwg.mxu0
    %v10675 = vadd.f32 %v10118, %v10546
    %v10676 = vadd.f32 %v10119, %v10548
    %v10677 = vadd.f32 %v10120, %v10587
    %v10678 = vadd.f32 %v10121, %v10589
    %v10679 = vadd.f32 %v10122, %v10628
    %v10680 = vadd.f32 %v10123, %v10630
    %v10681 = vadd.f32 %v10124, %v10669
    %v10682 = vadd.f32 %v10125, %v10671
    %v10683 = vld [vmem:[#allocation10] sm:$0xff]
    %v10685 = vlaneseq
    %v10686 = vshrl.u32 %v10685, 7
    %v10687 = vsub.s32 0, %v10686
    %v10688 = vrot.slane %v10683, %v10687
    %v10689 = vlaneseq
    %v10690 = vshrl.u32 %v10689, 7
    %v10691 = vsub.s32 1, %v10690
    %v10692 = vrot.slane %v10683, %v10691
    %v10693 = vlaneseq
    %v10694 = vshrl.u32 %v10693, 7
    %v10695 = vsub.s32 2, %v10694
    %v10696 = vrot.slane %v10683, %v10695
    %v10697 = vlaneseq
    %v10698 = vshrl.u32 %v10697, 7
    %v10699 = vsub.s32 3, %v10698
    %v10700 = vrot.slane %v10683, %v10699
    %v10701 = vlaneseq
    %v10702 = vshrl.u32 %v10701, 7
    %v10703 = vsub.s32 4, %v10702
    %v10704 = vrot.slane %v10683, %v10703
    %v10705 = vlaneseq
    %v10706 = vshrl.u32 %v10705, 7
    %v10707 = vsub.s32 5, %v10706
    %v10708 = vrot.slane %v10683, %v10707
    %v10709 = vlaneseq
    %v10710 = vshrl.u32 %v10709, 7
    %v10711 = vsub.s32 6, %v10710
    %v10712 = vrot.slane %v10683, %v10711
    %v10713 = vlaneseq
    %v10714 = vshrl.u32 %v10713, 7
    %v10715 = vsub.s32 7, %v10714
    %v10716 = vrot.slane %v10683, %v10715
    %v10725 = vadd.f32 %v10675, %v10688
    %v10726 = vadd.f32 %v10676, %v10692
    %v10727 = vadd.f32 %v10677, %v10696
    %v10728 = vadd.f32 %v10678, %v10700
    %v10729 = vadd.f32 %v10679, %v10704
    %v10730 = vadd.f32 %v10680, %v10708
    %v10731 = vadd.f32 %v10681, %v10712
    %v10732 = vadd.f32 %v10682, %v10716
    %v10733 = vmul.f32 %v10725, %v1474
    %v10734 = vmul.f32 %v10726, %v1474
    %v10735 = vmul.f32 %v10727, %v1474
    %v10736 = vmul.f32 %v10728, %v1474
    %v10737 = vmul.f32 %v10729, %v1474
    %v10738 = vmul.f32 %v10730, %v1474
    %v10739 = vmul.f32 %v10731, %v1474
    %v10740 = vmul.f32 %v10732, %v1474
    %v10741 = vrot.slane %v10733, 4
    %v10742 = vadd.f32 %v10733, %v10741
    %v10743 = vrot.slane %v10742, 2
    %v10744 = vadd.f32 %v10742, %v10743
    %v10745 = vrot.slane %v10744, 1
    %v10746 = vadd.f32 %v10744, %v10745
    %v10747 = vrot.slane %v10734, 4
    %v10748 = vadd.f32 %v10734, %v10747
    %v10749 = vrot.slane %v10748, 2
    %v10750 = vadd.f32 %v10748, %v10749
    %v10751 = vrot.slane %v10750, 1
    %v10752 = vadd.f32 %v10750, %v10751
    %v10753 = vrot.slane %v10735, 4
    %v10754 = vadd.f32 %v10735, %v10753
    %v10755 = vrot.slane %v10754, 2
    %v10756 = vadd.f32 %v10754, %v10755
    %v10757 = vrot.slane %v10756, 1
    %v10758 = vadd.f32 %v10756, %v10757
    %v10759 = vrot.slane %v10736, 4
    %v10760 = vadd.f32 %v10736, %v10759
    %v10761 = vrot.slane %v10760, 2
    %v10762 = vadd.f32 %v10760, %v10761
    %v10763 = vrot.slane %v10762, 1
    %v10764 = vadd.f32 %v10762, %v10763
    %v10765 = vrot.slane %v10737, 4
    %v10766 = vadd.f32 %v10737, %v10765
    %v10767 = vrot.slane %v10766, 2
    %v10768 = vadd.f32 %v10766, %v10767
    %v10769 = vrot.slane %v10768, 1
    %v10770 = vadd.f32 %v10768, %v10769
    %v10771 = vrot.slane %v10738, 4
    %v10772 = vadd.f32 %v10738, %v10771
    %v10773 = vrot.slane %v10772, 2
    %v10774 = vadd.f32 %v10772, %v10773
    %v10775 = vrot.slane %v10774, 1
    %v10776 = vadd.f32 %v10774, %v10775
    %v10777 = vrot.slane %v10739, 4
    %v10778 = vadd.f32 %v10739, %v10777
    %v10779 = vrot.slane %v10778, 2
    %v10780 = vadd.f32 %v10778, %v10779
    %v10781 = vrot.slane %v10780, 1
    %v10782 = vadd.f32 %v10780, %v10781
    %v10783 = vrot.slane %v10740, 4
    %v10784 = vadd.f32 %v10740, %v10783
    %v10785 = vrot.slane %v10784, 2
    %v10786 = vadd.f32 %v10784, %v10785
    %v10787 = vrot.slane %v10786, 1
    %v10788 = vadd.f32 %v10786, %v10787
    %v10789 = vmul.f32 %v10746, 0.5
    %v10790 = vmul.f32 %v10752, 0.5
    %v10791 = vmul.f32 %v10758, 0.5
    %v10792 = vmul.f32 %v10764, 0.5
    %v10793 = vmul.f32 %v10770, 0.5
    %v10794 = vmul.f32 %v10776, 0.5
    %v10795 = vmul.f32 %v10782, 0.5
    %v10796 = vmul.f32 %v10788, 0.5
    %v10797 = vsub.f32 %v10725, %v10789
    %v10798 = vsub.f32 %v10726, %v10790
    %v10799 = vsub.f32 %v10727, %v10791
    %v10800 = vsub.f32 %v10728, %v10792
    %v10801 = vsub.f32 %v10729, %v10793
    %v10802 = vsub.f32 %v10730, %v10794
    %v10803 = vsub.f32 %v10731, %v10795
    %v10804 = vsub.f32 %v10732, %v10796
    %v10805 = vmul.f32 %v10797, %v10797
    %v10806 = vmul.f32 %v10798, %v10798
    %v10807 = vmul.f32 %v10799, %v10799
    %v10808 = vmul.f32 %v10800, %v10800
    %v10809 = vmul.f32 %v10801, %v10801
    %v10810 = vmul.f32 %v10802, %v10802
    %v10811 = vmul.f32 %v10803, %v10803
    %v10812 = vmul.f32 %v10804, %v10804
    %v10813 = vmul.f32 %v1474, %v10805
    %v10814 = vmul.f32 %v1474, %v10806
    %v10815 = vmul.f32 %v1474, %v10807
    %v10816 = vmul.f32 %v1474, %v10808
    %v10817 = vmul.f32 %v1474, %v10809
    %v10818 = vmul.f32 %v1474, %v10810
    %v10819 = vmul.f32 %v1474, %v10811
    %v10820 = vmul.f32 %v1474, %v10812
    %v10821 = vrot.slane %v10813, 4
    %v10822 = vadd.f32 %v10813, %v10821
    %v10823 = vrot.slane %v10822, 2
    %v10824 = vadd.f32 %v10822, %v10823
    %v10825 = vrot.slane %v10824, 1
    %v10826 = vadd.f32 %v10824, %v10825
    %v10827 = vrot.slane %v10814, 4
    %v10828 = vadd.f32 %v10814, %v10827
    %v10829 = vrot.slane %v10828, 2
    %v10830 = vadd.f32 %v10828, %v10829
    %v10831 = vrot.slane %v10830, 1
    %v10832 = vadd.f32 %v10830, %v10831
    %v10833 = vrot.slane %v10815, 4
    %v10834 = vadd.f32 %v10815, %v10833
    %v10835 = vrot.slane %v10834, 2
    %v10836 = vadd.f32 %v10834, %v10835
    %v10837 = vrot.slane %v10836, 1
    %v10838 = vadd.f32 %v10836, %v10837
    %v10839 = vrot.slane %v10816, 4
    %v10840 = vadd.f32 %v10816, %v10839
    %v10841 = vrot.slane %v10840, 2
    %v10842 = vadd.f32 %v10840, %v10841
    %v10843 = vrot.slane %v10842, 1
    %v10844 = vadd.f32 %v10842, %v10843
    %v10845 = vrot.slane %v10817, 4
    %v10846 = vadd.f32 %v10817, %v10845
    %v10847 = vrot.slane %v10846, 2
    %v10848 = vadd.f32 %v10846, %v10847
    %v10849 = vrot.slane %v10848, 1
    %v10850 = vadd.f32 %v10848, %v10849
    %v10851 = vrot.slane %v10818, 4
    %v10852 = vadd.f32 %v10818, %v10851
    %v10853 = vrot.slane %v10852, 2
    %v10854 = vadd.f32 %v10852, %v10853
    %v10855 = vrot.slane %v10854, 1
    %v10856 = vadd.f32 %v10854, %v10855
    %v10857 = vrot.slane %v10819, 4
    %v10858 = vadd.f32 %v10819, %v10857
    %v10859 = vrot.slane %v10858, 2
    %v10860 = vadd.f32 %v10858, %v10859
    %v10861 = vrot.slane %v10860, 1
    %v10862 = vadd.f32 %v10860, %v10861
    %v10863 = vrot.slane %v10820, 4
    %v10864 = vadd.f32 %v10820, %v10863
    %v10865 = vrot.slane %v10864, 2
    %v10866 = vadd.f32 %v10864, %v10865
    %v10867 = vrot.slane %v10866, 1
    %v10868 = vadd.f32 %v10866, %v10867
    %v10869 = vmul.f32 %v10826, 0.5
    %v10870 = vmul.f32 %v10832, 0.5
    %v10871 = vmul.f32 %v10838, 0.5
    %v10872 = vmul.f32 %v10844, 0.5
    %v10873 = vmul.f32 %v10850, 0.5
    %v10874 = vmul.f32 %v10856, 0.5
    %v10875 = vmul.f32 %v10862, 0.5
    %v10876 = vmul.f32 %v10868, 0.5
    %v10877 = vadd.f32 %v10869, 1e-05
    %v10878 = vadd.f32 %v10870, 1e-05
    %v10879 = vadd.f32 %v10871, 1e-05
    %v10880 = vadd.f32 %v10872, 1e-05
    %v10881 = vadd.f32 %v10873, 1e-05
    %v10882 = vadd.f32 %v10874, 1e-05
    %v10883 = vadd.f32 %v10875, 1e-05
    %v10884 = vadd.f32 %v10876, 1e-05
    %v10885 = vrsqrt.pop %v10877
    %v10886 = vrsqrt.pop %v10878
    %v10887 = vrsqrt.pop %v10879
    %v10888 = vrsqrt.pop %v10880
    %v10889 = vrsqrt.pop %v10881
    %v10890 = vrsqrt.pop %v10882
    %v10891 = vrsqrt.pop %v10883
    %v10892 = vrsqrt.pop %v10884
    %v10893 = vmul.f32 %v10797, %v10885
    %v10894 = vmul.f32 %v10798, %v10886
    %v10895 = vmul.f32 %v10799, %v10887
    %v10896 = vmul.f32 %v10800, %v10888
    %v10897 = vmul.f32 %v10801, %v10889
    %v10898 = vmul.f32 %v10802, %v10890
    %v10899 = vmul.f32 %v10803, %v10891
    %v10900 = vmul.f32 %v10804, %v10892
    %v10901 = vld [vmem:[#allocation12] sm:$0xff]
    %v10903 = vlaneseq
    %v10904 = vshrl.u32 %v10903, 7
    %v10905 = vsub.s32 0, %v10904
    %v10906 = vrot.slane %v10901, %v10905
    %v10907 = vlaneseq
    %v10908 = vshrl.u32 %v10907, 7
    %v10909 = vsub.s32 1, %v10908
    %v10910 = vrot.slane %v10901, %v10909
    %v10911 = vlaneseq
    %v10912 = vshrl.u32 %v10911, 7
    %v10913 = vsub.s32 2, %v10912
    %v10914 = vrot.slane %v10901, %v10913
    %v10915 = vlaneseq
    %v10916 = vshrl.u32 %v10915, 7
    %v10917 = vsub.s32 3, %v10916
    %v10918 = vrot.slane %v10901, %v10917
    %v10919 = vlaneseq
    %v10920 = vshrl.u32 %v10919, 7
    %v10921 = vsub.s32 4, %v10920
    %v10922 = vrot.slane %v10901, %v10921
    %v10923 = vlaneseq
    %v10924 = vshrl.u32 %v10923, 7
    %v10925 = vsub.s32 5, %v10924
    %v10926 = vrot.slane %v10901, %v10925
    %v10927 = vlaneseq
    %v10928 = vshrl.u32 %v10927, 7
    %v10929 = vsub.s32 6, %v10928
    %v10930 = vrot.slane %v10901, %v10929
    %v10931 = vlaneseq
    %v10932 = vshrl.u32 %v10931, 7
    %v10933 = vsub.s32 7, %v10932
    %v10934 = vrot.slane %v10901, %v10933
    %v10943 = vmul.f32 %v10893, %v10906
    %v10944 = vmul.f32 %v10894, %v10910
    %v10945 = vmul.f32 %v10895, %v10914
    %v10946 = vmul.f32 %v10896, %v10918
    %v10947 = vmul.f32 %v10897, %v10922
    %v10948 = vmul.f32 %v10898, %v10926
    %v10949 = vmul.f32 %v10899, %v10930
    %v10950 = vmul.f32 %v10900, %v10934
    %v10951 = vld [vmem:[#allocation13] sm:$0xff]
    %v10953 = vlaneseq
    %v10954 = vshrl.u32 %v10953, 7
    %v10955 = vsub.s32 0, %v10954
    %v10956 = vrot.slane %v10951, %v10955
    %v10957 = vlaneseq
    %v10958 = vshrl.u32 %v10957, 7
    %v10959 = vsub.s32 1, %v10958
    %v10960 = vrot.slane %v10951, %v10959
    %v10961 = vlaneseq
    %v10962 = vshrl.u32 %v10961, 7
    %v10963 = vsub.s32 2, %v10962
    %v10964 = vrot.slane %v10951, %v10963
    %v10965 = vlaneseq
    %v10966 = vshrl.u32 %v10965, 7
    %v10967 = vsub.s32 3, %v10966
    %v10968 = vrot.slane %v10951, %v10967
    %v10969 = vlaneseq
    %v10970 = vshrl.u32 %v10969, 7
    %v10971 = vsub.s32 4, %v10970
    %v10972 = vrot.slane %v10951, %v10971
    %v10973 = vlaneseq
    %v10974 = vshrl.u32 %v10973, 7
    %v10975 = vsub.s32 5, %v10974
    %v10976 = vrot.slane %v10951, %v10975
    %v10977 = vlaneseq
    %v10978 = vshrl.u32 %v10977, 7
    %v10979 = vsub.s32 6, %v10978
    %v10980 = vrot.slane %v10951, %v10979
    %v10981 = vlaneseq
    %v10982 = vshrl.u32 %v10981, 7
    %v10983 = vsub.s32 7, %v10982
    %v10984 = vrot.slane %v10951, %v10983
    %v10993 = vadd.f32 %v10943, %v10956
    %v10994 = vadd.f32 %v10944, %v10960
    %v10995 = vadd.f32 %v10945, %v10964
    %v10996 = vadd.f32 %v10946, %v10968
    %v10997 = vadd.f32 %v10947, %v10972
    %v10998 = vadd.f32 %v10948, %v10976
    %v10999 = vadd.f32 %v10949, %v10980
    %v11000 = vadd.f32 %v10950, %v10984
    %vm11001 = vcmp.ge.f32.partialorder %v10993, 0.0
    %vm11002 = vcmp.ge.f32.partialorder %v10994, 0.0
    %vm11003 = vcmp.ge.f32.partialorder %v10995, 0.0
    %vm11004 = vcmp.ge.f32.partialorder %v10996, 0.0
    %vm11005 = vcmp.ge.f32.partialorder %v10997, 0.0
    %vm11006 = vcmp.ge.f32.partialorder %v10998, 0.0
    %vm11007 = vcmp.ge.f32.partialorder %v10999, 0.0
    %vm11008 = vcmp.ge.f32.partialorder %v11000, 0.0
    %v11009 = vmul.f32 %v10993, 0.2
    %v11010 = vmul.f32 %v10994, 0.2
    %v11011 = vmul.f32 %v10995, 0.2
    %v11012 = vmul.f32 %v10996, 0.2
    %v11013 = vmul.f32 %v10997, 0.2
    %v11014 = vmul.f32 %v10998, 0.2
    %v11015 = vmul.f32 %v10999, 0.2
    %v11016 = vmul.f32 %v11000, 0.2
    %v11017 = vsel %vm11001, %v10993, %v11009
    %v11018 = vsel %vm11002, %v10994, %v11010
    %v11019 = vsel %vm11003, %v10995, %v11011
    %v11020 = vsel %vm11004, %v10996, %v11012
    %v11021 = vsel %vm11005, %v10997, %v11013
    %v11022 = vsel %vm11006, %v10998, %v11014
    %v11023 = vsel %vm11007, %v10999, %v11015
    %v11024 = vsel %vm11008, %v11000, %v11016
    %v11025 = vpack.c.bf16 %v11017, %v11017
    %v11026 = vpack.c.bf16 %v11018, %v11018
    %v11027 = vpack.c.bf16 %v11019, %v11019
    %v11028 = vpack.c.bf16 %v11020, %v11020
    %v11029 = vpack.c.bf16 %v11021, %v11021
    %v11030 = vpack.c.bf16 %v11022, %v11022
    %v11031 = vpack.c.bf16 %v11023, %v11023
    %v11032 = vpack.c.bf16 %v11024, %v11024
    %v11033 = vld [vmem:[#allocation15] sm:$0xf]
    %v11034 = vld [vmem:[#allocation15 + $0x4] sm:$0xf]
    %v11035 = vld [vmem:[#allocation15 + $0x8] sm:$0xf]
    %v11036 = vld [vmem:[#allocation15 + $0xc] sm:$0xf]
    %v11037 = vld [vmem:[#allocation15 + $0x10] sm:$0xf]
    %v11038 = vld [vmem:[#allocation15 + $0x14] sm:$0xf]
    %v11039 = vld [vmem:[#allocation15 + $0x18] sm:$0xf]
    %v11040 = vld [vmem:[#allocation15 + $0x1c] sm:$0xf]
    %v11041 = vld [vmem:[#allocation15 + $0x20] sm:$0xf]
    %v11042 = vld [vmem:[#allocation15 + $0x24] sm:$0xf]
    %v11043 = vld [vmem:[#allocation15 + $0x28] sm:$0xf]
    %v11044 = vld [vmem:[#allocation15 + $0x2c] sm:$0xf]
    %v11045 = vld [vmem:[#allocation15 + $0x30] sm:$0xf]
    %v11046 = vld [vmem:[#allocation15 + $0x34] sm:$0xf]
    %v11047 = vld [vmem:[#allocation15 + $0x38] sm:$0xf]
    %v11048 = vld [vmem:[#allocation15 + $0x3c] sm:$0xf]
    %v11049 = vld [vmem:[#allocation15 + $0x40] sm:$0xf]
    %v11050 = vld [vmem:[#allocation15 + $0x44] sm:$0xf]
    %v11051 = vld [vmem:[#allocation15 + $0x48] sm:$0xf]
    %v11052 = vld [vmem:[#allocation15 + $0x4c] sm:$0xf]
    %v11053 = vld [vmem:[#allocation15 + $0x50] sm:$0xf]
    %v11054 = vld [vmem:[#allocation15 + $0x54] sm:$0xf]
    %v11055 = vld [vmem:[#allocation15 + $0x58] sm:$0xf]
    %v11056 = vld [vmem:[#allocation15 + $0x5c] sm:$0xf]
    %v11057 = vld [vmem:[#allocation15 + $0x60] sm:$0xf]
    %v11058 = vld [vmem:[#allocation15 + $0x64] sm:$0xf]
    %v11059 = vld [vmem:[#allocation15 + $0x68] sm:$0xf]
    %v11060 = vld [vmem:[#allocation15 + $0x6c] sm:$0xf]
    %v11061 = vld [vmem:[#allocation15 + $0x70] sm:$0xf]
    %v11062 = vld [vmem:[#allocation15 + $0x74] sm:$0xf]
    %v11063 = vld [vmem:[#allocation15 + $0x78] sm:$0xf]
    %v11064 = vld [vmem:[#allocation15 + $0x7c] sm:$0xf]
    %v11065 = vld [vmem:[#allocation15 + $0x80] sm:$0xf]
    %v11066 = vld [vmem:[#allocation15 + $0x84] sm:$0xf]
    %v11067 = vld [vmem:[#allocation15 + $0x88] sm:$0xf]
    %v11068 = vld [vmem:[#allocation15 + $0x8c] sm:$0xf]
    %v11069 = vld [vmem:[#allocation15 + $0x90] sm:$0xf]
    %v11070 = vld [vmem:[#allocation15 + $0x94] sm:$0xf]
    %v11071 = vld [vmem:[#allocation15 + $0x98] sm:$0xf]
    %v11072 = vld [vmem:[#allocation15 + $0x9c] sm:$0xf]
    %v11073 = vld [vmem:[#allocation15 + $0xa0] sm:$0xf]
    %v11074 = vld [vmem:[#allocation15 + $0xa4] sm:$0xf]
    %v11075 = vld [vmem:[#allocation15 + $0xa8] sm:$0xf]
    %v11076 = vld [vmem:[#allocation15 + $0xac] sm:$0xf]
    %v11077 = vld [vmem:[#allocation15 + $0xb0] sm:$0xf]
    %v11078 = vld [vmem:[#allocation15 + $0xb4] sm:$0xf]
    %v11079 = vld [vmem:[#allocation15 + $0xb8] sm:$0xf]
    %v11080 = vld [vmem:[#allocation15 + $0xbc] sm:$0xf]
    %v11081 = vld [vmem:[#allocation15 + $0xc0] sm:$0xf]
    %v11082 = vld [vmem:[#allocation15 + $0xc4] sm:$0xf]
    %v11083 = vld [vmem:[#allocation15 + $0xc8] sm:$0xf]
    %v11084 = vld [vmem:[#allocation15 + $0xcc] sm:$0xf]
    %v11085 = vld [vmem:[#allocation15 + $0xd0] sm:$0xf]
    %v11086 = vld [vmem:[#allocation15 + $0xd4] sm:$0xf]
    %v11087 = vld [vmem:[#allocation15 + $0xd8] sm:$0xf]
    %v11088 = vld [vmem:[#allocation15 + $0xdc] sm:$0xf]
    %v11089 = vld [vmem:[#allocation15 + $0xe0] sm:$0xf]
    %v11090 = vld [vmem:[#allocation15 + $0xe4] sm:$0xf]
    %v11091 = vld [vmem:[#allocation15 + $0xe8] sm:$0xf]
    %v11092 = vld [vmem:[#allocation15 + $0xec] sm:$0xf]
    %v11093 = vld [vmem:[#allocation15 + $0xf0] sm:$0xf]
    %v11094 = vld [vmem:[#allocation15 + $0xf4] sm:$0xf]
    %v11095 = vld [vmem:[#allocation15 + $0xf8] sm:$0xf]
    %v11096 = vld [vmem:[#allocation15 + $0xfc] sm:$0xf]
    %v11097 = vld [vmem:[#allocation15 + $0x100] sm:$0xf]
    %v11098 = vld [vmem:[#allocation15 + $0x104] sm:$0xf]
    %v11099 = vld [vmem:[#allocation15 + $0x108] sm:$0xf]
    %v11100 = vld [vmem:[#allocation15 + $0x10c] sm:$0xf]
    %v11101 = vld [vmem:[#allocation15 + $0x110] sm:$0xf]
    %v11102 = vld [vmem:[#allocation15 + $0x114] sm:$0xf]
    %v11103 = vld [vmem:[#allocation15 + $0x118] sm:$0xf]
    %v11104 = vld [vmem:[#allocation15 + $0x11c] sm:$0xf]
    %v11105 = vld [vmem:[#allocation15 + $0x120] sm:$0xf]
    %v11106 = vld [vmem:[#allocation15 + $0x124] sm:$0xf]
    %v11107 = vld [vmem:[#allocation15 + $0x128] sm:$0xf]
    %v11108 = vld [vmem:[#allocation15 + $0x12c] sm:$0xf]
    %v11109 = vld [vmem:[#allocation15 + $0x130] sm:$0xf]
    %v11110 = vld [vmem:[#allocation15 + $0x134] sm:$0xf]
    %v11111 = vld [vmem:[#allocation15 + $0x138] sm:$0xf]
    %v11112 = vld [vmem:[#allocation15 + $0x13c] sm:$0xf]
    %v11113 = vld [vmem:[#allocation15 + $0x140] sm:$0xf]
    %v11114 = vld [vmem:[#allocation15 + $0x144] sm:$0xf]
    %v11115 = vld [vmem:[#allocation15 + $0x148] sm:$0xf]
    %v11116 = vld [vmem:[#allocation15 + $0x14c] sm:$0xf]
    %v11117 = vld [vmem:[#allocation15 + $0x150] sm:$0xf]
    %v11118 = vld [vmem:[#allocation15 + $0x154] sm:$0xf]
    %v11119 = vld [vmem:[#allocation15 + $0x158] sm:$0xf]
    %v11120 = vld [vmem:[#allocation15 + $0x15c] sm:$0xf]
    %v11121 = vld [vmem:[#allocation15 + $0x160] sm:$0xf]
    %v11122 = vld [vmem:[#allocation15 + $0x164] sm:$0xf]
    %v11123 = vld [vmem:[#allocation15 + $0x168] sm:$0xf]
    %v11124 = vld [vmem:[#allocation15 + $0x16c] sm:$0xf]
    %v11125 = vld [vmem:[#allocation15 + $0x170] sm:$0xf]
    %v11126 = vld [vmem:[#allocation15 + $0x174] sm:$0xf]
    %v11127 = vld [vmem:[#allocation15 + $0x178] sm:$0xf]
    %v11128 = vld [vmem:[#allocation15 + $0x17c] sm:$0xf]
    %v11129 = vld [vmem:[#allocation15 + $0x180] sm:$0xf]
    %v11130 = vld [vmem:[#allocation15 + $0x184] sm:$0xf]
    %v11131 = vld [vmem:[#allocation15 + $0x188] sm:$0xf]
    %v11132 = vld [vmem:[#allocation15 + $0x18c] sm:$0xf]
    %v11133 = vld [vmem:[#allocation15 + $0x190] sm:$0xf]
    %v11134 = vld [vmem:[#allocation15 + $0x194] sm:$0xf]
    %v11135 = vld [vmem:[#allocation15 + $0x198] sm:$0xf]
    %v11136 = vld [vmem:[#allocation15 + $0x19c] sm:$0xf]
    %v11137 = vld [vmem:[#allocation15 + $0x1a0] sm:$0xf]
    %v11138 = vld [vmem:[#allocation15 + $0x1a4] sm:$0xf]
    %v11139 = vld [vmem:[#allocation15 + $0x1a8] sm:$0xf]
    %v11140 = vld [vmem:[#allocation15 + $0x1ac] sm:$0xf]
    %v11141 = vld [vmem:[#allocation15 + $0x1b0] sm:$0xf]
    %v11142 = vld [vmem:[#allocation15 + $0x1b4] sm:$0xf]
    %v11143 = vld [vmem:[#allocation15 + $0x1b8] sm:$0xf]
    %v11144 = vld [vmem:[#allocation15 + $0x1bc] sm:$0xf]
    %v11145 = vld [vmem:[#allocation15 + $0x1c0] sm:$0xf]
    %v11146 = vld [vmem:[#allocation15 + $0x1c4] sm:$0xf]
    %v11147 = vld [vmem:[#allocation15 + $0x1c8] sm:$0xf]
    %v11148 = vld [vmem:[#allocation15 + $0x1cc] sm:$0xf]
    %v11149 = vld [vmem:[#allocation15 + $0x1d0] sm:$0xf]
    %v11150 = vld [vmem:[#allocation15 + $0x1d4] sm:$0xf]
    %v11151 = vld [vmem:[#allocation15 + $0x1d8] sm:$0xf]
    %v11152 = vld [vmem:[#allocation15 + $0x1dc] sm:$0xf]
    %v11153 = vld [vmem:[#allocation15 + $0x1e0] sm:$0xf]
    %v11154 = vld [vmem:[#allocation15 + $0x1e4] sm:$0xf]
    %v11155 = vld [vmem:[#allocation15 + $0x1e8] sm:$0xf]
    %v11156 = vld [vmem:[#allocation15 + $0x1ec] sm:$0xf]
    %v11157 = vld [vmem:[#allocation15 + $0x1f0] sm:$0xf]
    %v11158 = vld [vmem:[#allocation15 + $0x1f4] sm:$0xf]
    %v11159 = vld [vmem:[#allocation15 + $0x1f8] sm:$0xf]
    %v11160 = vld [vmem:[#allocation15 + $0x1fc] sm:$0xf]
    %v11161 = vld [vmem:[#allocation16] sm:$0x1]
    %v11163 = vlaneseq
    %v11164 = vshrl.u32 %v11163, 7
    %v11165 = vsub.s32 0, %v11164
    %v11166 = vrot.slane %v11161, %v11165
    %v11296 = vunpack.c.l.b16 %v11033
    %v11297 = vunpack.c.l.b16 %v11034
    %v11298 = vunpack.c.l.b16 %v11035
    %v11299 = vunpack.c.l.b16 %v11036
    %v11300 = vunpack.c.l.b16 %v11037
    %v11301 = vunpack.c.l.b16 %v11038
    %v11302 = vunpack.c.l.b16 %v11039
    %v11303 = vunpack.c.l.b16 %v11040
    %v11304 = vunpack.c.l.b16 %v11041
    %v11305 = vunpack.c.l.b16 %v11042
    %v11306 = vunpack.c.l.b16 %v11043
    %v11307 = vunpack.c.l.b16 %v11044
    %v11308 = vunpack.c.l.b16 %v11045
    %v11309 = vunpack.c.l.b16 %v11046
    %v11310 = vunpack.c.l.b16 %v11047
    %v11311 = vunpack.c.l.b16 %v11048
    %v11312 = vunpack.c.l.b16 %v11049
    %v11313 = vunpack.c.l.b16 %v11050
    %v11314 = vunpack.c.l.b16 %v11051
    %v11315 = vunpack.c.l.b16 %v11052
    %v11316 = vunpack.c.l.b16 %v11053
    %v11317 = vunpack.c.l.b16 %v11054
    %v11318 = vunpack.c.l.b16 %v11055
    %v11319 = vunpack.c.l.b16 %v11056
    %v11320 = vunpack.c.l.b16 %v11057
    %v11321 = vunpack.c.l.b16 %v11058
    %v11322 = vunpack.c.l.b16 %v11059
    %v11323 = vunpack.c.l.b16 %v11060
    %v11324 = vunpack.c.l.b16 %v11061
    %v11325 = vunpack.c.l.b16 %v11062
    %v11326 = vunpack.c.l.b16 %v11063
    %v11327 = vunpack.c.l.b16 %v11064
    %v11328 = vunpack.c.l.b16 %v11065
    %v11329 = vunpack.c.l.b16 %v11066
    %v11330 = vunpack.c.l.b16 %v11067
    %v11331 = vunpack.c.l.b16 %v11068
    %v11332 = vunpack.c.l.b16 %v11069
    %v11333 = vunpack.c.l.b16 %v11070
    %v11334 = vunpack.c.l.b16 %v11071
    %v11335 = vunpack.c.l.b16 %v11072
    %v11336 = vunpack.c.l.b16 %v11073
    %v11337 = vunpack.c.l.b16 %v11074
    %v11338 = vunpack.c.l.b16 %v11075
    %v11339 = vunpack.c.l.b16 %v11076
    %v11340 = vunpack.c.l.b16 %v11077
    %v11341 = vunpack.c.l.b16 %v11078
    %v11342 = vunpack.c.l.b16 %v11079
    %v11343 = vunpack.c.l.b16 %v11080
    %v11344 = vunpack.c.l.b16 %v11081
    %v11345 = vunpack.c.l.b16 %v11082
    %v11346 = vunpack.c.l.b16 %v11083
    %v11347 = vunpack.c.l.b16 %v11084
    %v11348 = vunpack.c.l.b16 %v11085
    %v11349 = vunpack.c.l.b16 %v11086
    %v11350 = vunpack.c.l.b16 %v11087
    %v11351 = vunpack.c.l.b16 %v11088
    %v11352 = vunpack.c.l.b16 %v11089
    %v11353 = vunpack.c.l.b16 %v11090
    %v11354 = vunpack.c.l.b16 %v11091
    %v11355 = vunpack.c.l.b16 %v11092
    %v11356 = vunpack.c.l.b16 %v11093
    %v11357 = vunpack.c.l.b16 %v11094
    %v11358 = vunpack.c.l.b16 %v11095
    %v11359 = vunpack.c.l.b16 %v11096
    %v11360 = vunpack.c.l.b16 %v11097
    %v11361 = vunpack.c.l.b16 %v11098
    %v11362 = vunpack.c.l.b16 %v11099
    %v11363 = vunpack.c.l.b16 %v11100
    %v11364 = vunpack.c.l.b16 %v11101
    %v11365 = vunpack.c.l.b16 %v11102
    %v11366 = vunpack.c.l.b16 %v11103
    %v11367 = vunpack.c.l.b16 %v11104
    %v11368 = vunpack.c.l.b16 %v11105
    %v11369 = vunpack.c.l.b16 %v11106
    %v11370 = vunpack.c.l.b16 %v11107
    %v11371 = vunpack.c.l.b16 %v11108
    %v11372 = vunpack.c.l.b16 %v11109
    %v11373 = vunpack.c.l.b16 %v11110
    %v11374 = vunpack.c.l.b16 %v11111
    %v11375 = vunpack.c.l.b16 %v11112
    %v11376 = vunpack.c.l.b16 %v11113
    %v11377 = vunpack.c.l.b16 %v11114
    %v11378 = vunpack.c.l.b16 %v11115
    %v11379 = vunpack.c.l.b16 %v11116
    %v11380 = vunpack.c.l.b16 %v11117
    %v11381 = vunpack.c.l.b16 %v11118
    %v11382 = vunpack.c.l.b16 %v11119
    %v11383 = vunpack.c.l.b16 %v11120
    %v11384 = vunpack.c.l.b16 %v11121
    %v11385 = vunpack.c.l.b16 %v11122
    %v11386 = vunpack.c.l.b16 %v11123
    %v11387 = vunpack.c.l.b16 %v11124
    %v11388 = vunpack.c.l.b16 %v11125
    %v11389 = vunpack.c.l.b16 %v11126
    %v11390 = vunpack.c.l.b16 %v11127
    %v11391 = vunpack.c.l.b16 %v11128
    %v11392 = vunpack.c.l.b16 %v11129
    %v11393 = vunpack.c.l.b16 %v11130
    %v11394 = vunpack.c.l.b16 %v11131
    %v11395 = vunpack.c.l.b16 %v11132
    %v11396 = vunpack.c.l.b16 %v11133
    %v11397 = vunpack.c.l.b16 %v11134
    %v11398 = vunpack.c.l.b16 %v11135
    %v11399 = vunpack.c.l.b16 %v11136
    %v11400 = vunpack.c.l.b16 %v11137
    %v11401 = vunpack.c.l.b16 %v11138
    %v11402 = vunpack.c.l.b16 %v11139
    %v11403 = vunpack.c.l.b16 %v11140
    %v11404 = vunpack.c.l.b16 %v11141
    %v11405 = vunpack.c.l.b16 %v11142
    %v11406 = vunpack.c.l.b16 %v11143
    %v11407 = vunpack.c.l.b16 %v11144
    %v11408 = vunpack.c.l.b16 %v11145
    %v11409 = vunpack.c.l.b16 %v11146
    %v11410 = vunpack.c.l.b16 %v11147
    %v11411 = vunpack.c.l.b16 %v11148
    %v11412 = vunpack.c.l.b16 %v11149
    %v11413 = vunpack.c.l.b16 %v11150
    %v11414 = vunpack.c.l.b16 %v11151
    %v11415 = vunpack.c.l.b16 %v11152
    %v11416 = vunpack.c.l.b16 %v11153
    %v11417 = vunpack.c.l.b16 %v11154
    %v11418 = vunpack.c.l.b16 %v11155
    %v11419 = vunpack.c.l.b16 %v11156
    %v11420 = vunpack.c.l.b16 %v11157
    %v11421 = vunpack.c.l.b16 %v11158
    %v11422 = vunpack.c.l.b16 %v11159
    %v11423 = vunpack.c.l.b16 %v11160
    %v11424 = vpack.c.b16 %v11297, %v11296
    %v11425 = vpack.c.b16 %v11299, %v11298
    %v11426 = vpack.c.b16 %v11301, %v11300
    %v11427 = vpack.c.b16 %v11303, %v11302
    %v11428 = vpack.c.b16 %v11305, %v11304
    %v11429 = vpack.c.b16 %v11307, %v11306
    %v11430 = vpack.c.b16 %v11309, %v11308
    %v11431 = vpack.c.b16 %v11311, %v11310
    %v11432 = vpack.c.b16 %v11313, %v11312
    %v11433 = vpack.c.b16 %v11315, %v11314
    %v11434 = vpack.c.b16 %v11317, %v11316
    %v11435 = vpack.c.b16 %v11319, %v11318
    %v11436 = vpack.c.b16 %v11321, %v11320
    %v11437 = vpack.c.b16 %v11323, %v11322
    %v11438 = vpack.c.b16 %v11325, %v11324
    %v11439 = vpack.c.b16 %v11327, %v11326
    %v11440 = vpack.c.b16 %v11329, %v11328
    %v11441 = vpack.c.b16 %v11331, %v11330
    %v11442 = vpack.c.b16 %v11333, %v11332
    %v11443 = vpack.c.b16 %v11335, %v11334
    %v11444 = vpack.c.b16 %v11337, %v11336
    %v11445 = vpack.c.b16 %v11339, %v11338
    %v11446 = vpack.c.b16 %v11341, %v11340
    %v11447 = vpack.c.b16 %v11343, %v11342
    %v11448 = vpack.c.b16 %v11345, %v11344
    %v11449 = vpack.c.b16 %v11347, %v11346
    %v11450 = vpack.c.b16 %v11349, %v11348
    %v11451 = vpack.c.b16 %v11351, %v11350
    %v11452 = vpack.c.b16 %v11353, %v11352
    %v11453 = vpack.c.b16 %v11355, %v11354
    %v11454 = vpack.c.b16 %v11357, %v11356
    %v11455 = vpack.c.b16 %v11359, %v11358
    %v11456 = vpack.c.b16 %v11361, %v11360
    %v11457 = vpack.c.b16 %v11363, %v11362
    %v11458 = vpack.c.b16 %v11365, %v11364
    %v11459 = vpack.c.b16 %v11367, %v11366
    %v11460 = vpack.c.b16 %v11369, %v11368
    %v11461 = vpack.c.b16 %v11371, %v11370
    %v11462 = vpack.c.b16 %v11373, %v11372
    %v11463 = vpack.c.b16 %v11375, %v11374
    %v11464 = vpack.c.b16 %v11377, %v11376
    %v11465 = vpack.c.b16 %v11379, %v11378
    %v11466 = vpack.c.b16 %v11381, %v11380
    %v11467 = vpack.c.b16 %v11383, %v11382
    %v11468 = vpack.c.b16 %v11385, %v11384
    %v11469 = vpack.c.b16 %v11387, %v11386
    %v11470 = vpack.c.b16 %v11389, %v11388
    %v11471 = vpack.c.b16 %v11391, %v11390
    %v11472 = vpack.c.b16 %v11393, %v11392
    %v11473 = vpack.c.b16 %v11395, %v11394
    %v11474 = vpack.c.b16 %v11397, %v11396
    %v11475 = vpack.c.b16 %v11399, %v11398
    %v11476 = vpack.c.b16 %v11401, %v11400
    %v11477 = vpack.c.b16 %v11403, %v11402
    %v11478 = vpack.c.b16 %v11405, %v11404
    %v11479 = vpack.c.b16 %v11407, %v11406
    %v11480 = vpack.c.b16 %v11409, %v11408
    %v11481 = vpack.c.b16 %v11411, %v11410
    %v11482 = vpack.c.b16 %v11413, %v11412
    %v11483 = vpack.c.b16 %v11415, %v11414
    %v11484 = vpack.c.b16 %v11417, %v11416
    %v11485 = vpack.c.b16 %v11419, %v11418
    %v11486 = vpack.c.b16 %v11421, %v11420
    %v11487 = vpack.c.b16 %v11423, %v11422
    %11552 = vmatprep.subr.bf16.mxu0 0
    %11553 = vmatpush1.bf16.msra.mxu0 %v11431
    %11554 = vmatprep.subr.bf16.mxu0 0
    %11555 = vmatpush1.bf16.msra.mxu0 %v11430
    %11556 = vmatprep.subr.bf16.mxu0 0
    %11557 = vmatpush1.bf16.msra.mxu0 %v11429
    %11558 = vmatprep.subr.bf16.mxu0 0
    %11559 = vmatpush1.bf16.msra.mxu0 %v11428
    %11560 = vmatprep.subr.bf16.mxu0 0
    %11561 = vmatpush1.bf16.msra.mxu0 %v11427
    %11562 = vmatprep.subr.bf16.mxu0 0
    %11563 = vmatpush1.bf16.msra.mxu0 %v11426
    %11564 = vmatprep.subr.bf16.mxu0 0
    %11565 = vmatpush1.bf16.msra.mxu0 %v11425
    %11566 = vmatprep.subr.bf16.mxu0 0
    %11567 = vmatpush1.bf16.msra.mxu0 %v11424
    %11568 = vmatprep.subr.bf16.mxu0 0
    %11569 = vmatpush2.bf16.msra.mxu0 %v11439
    %11570 = vmatprep.subr.bf16.mxu0 0
    %11571 = vmatpush2.bf16.msra.mxu0 %v11438
    %11572 = vmatprep.subr.bf16.mxu0 0
    %11573 = vmatpush2.bf16.msra.mxu0 %v11437
    %11574 = vmatprep.subr.bf16.mxu0 0
    %11575 = vmatpush2.bf16.msra.mxu0 %v11436
    %11576 = vmatprep.subr.bf16.mxu0 0
    %11577 = vmatpush2.bf16.msra.mxu0 %v11435
    %11578 = vmatprep.subr.bf16.mxu0 0
    %11579 = vmatpush2.bf16.msra.mxu0 %v11434
    %11580 = vmatprep.subr.bf16.mxu0 0
    %11581 = vmatpush2.bf16.msra.mxu0 %v11433
    %11582 = vmatprep.subr.bf16.mxu0 0
    %11583 = vmatpush2.bf16.msra.mxu0 %v11432
    %11584 = vmatprep.mubr.bf16.mxu0 %v11026
    %11585 = vmatmul.mubr.bf16.gmra.mxu0 %v11025
    %v11586 = vpop.f32.mrf.mxu0
    %v11587 = vadd.f32 %v11166, %v11586
    %v11588 = vpop.f32.mrf.mxu0
    %v11589 = vpop.f32.mrf.mxu0
    %v11590 = vpop.f32.mrf.mxu0
    %11591 = vdwg.mxu0
    %11592 = vmatprep.subr.bf16.mxu0 0
    %11593 = vmatpush1.bf16.msra.mxu0 %v11447
    %11594 = vmatprep.subr.bf16.mxu0 0
    %11595 = vmatpush1.bf16.msra.mxu0 %v11446
    %11596 = vmatprep.subr.bf16.mxu0 0
    %11597 = vmatpush1.bf16.msra.mxu0 %v11445
    %11598 = vmatprep.subr.bf16.mxu0 0
    %11599 = vmatpush1.bf16.msra.mxu0 %v11444
    %11600 = vmatprep.subr.bf16.mxu0 0
    %11601 = vmatpush1.bf16.msra.mxu0 %v11443
    %11602 = vmatprep.subr.bf16.mxu0 0
    %11603 = vmatpush1.bf16.msra.mxu0 %v11442
    %11604 = vmatprep.subr.bf16.mxu0 0
    %11605 = vmatpush1.bf16.msra.mxu0 %v11441
    %11606 = vmatprep.subr.bf16.mxu0 0
    %11607 = vmatpush1.bf16.msra.mxu0 %v11440
    %11608 = vmatprep.subr.bf16.mxu0 0
    %11609 = vmatpush2.bf16.msra.mxu0 %v11455
    %11610 = vmatprep.subr.bf16.mxu0 0
    %11611 = vmatpush2.bf16.msra.mxu0 %v11454
    %11612 = vmatprep.subr.bf16.mxu0 0
    %11613 = vmatpush2.bf16.msra.mxu0 %v11453
    %11614 = vmatprep.subr.bf16.mxu0 0
    %11615 = vmatpush2.bf16.msra.mxu0 %v11452
    %11616 = vmatprep.subr.bf16.mxu0 0
    %11617 = vmatpush2.bf16.msra.mxu0 %v11451
    %11618 = vmatprep.subr.bf16.mxu0 0
    %11619 = vmatpush2.bf16.msra.mxu0 %v11450
    %11620 = vmatprep.subr.bf16.mxu0 0
    %11621 = vmatpush2.bf16.msra.mxu0 %v11449
    %11622 = vmatprep.subr.bf16.mxu0 0
    %11623 = vmatpush2.bf16.msra.mxu0 %v11448
    %11624 = vmatprep.mubr.bf16.mxu0 %v11028
    %11625 = vmatmul.mubr.bf16.gmra.mxu0 %v11027
    %v11626 = vpop.f32.mrf.mxu0
    %v11627 = vadd.f32 %v11587, %v11626
    %v11628 = vpop.f32.mrf.mxu0
    %v11629 = vpop.f32.mrf.mxu0
    %v11630 = vpop.f32.mrf.mxu0
    %11631 = vdwg.mxu0
    %11632 = vmatprep.subr.bf16.mxu0 0
    %11633 = vmatpush1.bf16.msra.mxu0 %v11463
    %11634 = vmatprep.subr.bf16.mxu0 0
    %11635 = vmatpush1.bf16.msra.mxu0 %v11462
    %11636 = vmatprep.subr.bf16.mxu0 0
    %11637 = vmatpush1.bf16.msra.mxu0 %v11461
    %11638 = vmatprep.subr.bf16.mxu0 0
    %11639 = vmatpush1.bf16.msra.mxu0 %v11460
    %11640 = vmatprep.subr.bf16.mxu0 0
    %11641 = vmatpush1.bf16.msra.mxu0 %v11459
    %11642 = vmatprep.subr.bf16.mxu0 0
    %11643 = vmatpush1.bf16.msra.mxu0 %v11458
    %11644 = vmatprep.subr.bf16.mxu0 0
    %11645 = vmatpush1.bf16.msra.mxu0 %v11457
    %11646 = vmatprep.subr.bf16.mxu0 0
    %11647 = vmatpush1.bf16.msra.mxu0 %v11456
    %11648 = vmatprep.subr.bf16.mxu0 0
    %11649 = vmatpush2.bf16.msra.mxu0 %v11471
    %11650 = vmatprep.subr.bf16.mxu0 0
    %11651 = vmatpush2.bf16.msra.mxu0 %v11470
    %11652 = vmatprep.subr.bf16.mxu0 0
    %11653 = vmatpush2.bf16.msra.mxu0 %v11469
    %11654 = vmatprep.subr.bf16.mxu0 0
    %11655 = vmatpush2.bf16.msra.mxu0 %v11468
    %11656 = vmatprep.subr.bf16.mxu0 0
    %11657 = vmatpush2.bf16.msra.mxu0 %v11467
    %11658 = vmatprep.subr.bf16.mxu0 0
    %11659 = vmatpush2.bf16.msra.mxu0 %v11466
    %11660 = vmatprep.subr.bf16.mxu0 0
    %11661 = vmatpush2.bf16.msra.mxu0 %v11465
    %11662 = vmatprep.subr.bf16.mxu0 0
    %11663 = vmatpush2.bf16.msra.mxu0 %v11464
    %11664 = vmatprep.mubr.bf16.mxu0 %v11030
    %11665 = vmatmul.mubr.bf16.gmra.mxu0 %v11029
    %v11666 = vpop.f32.mrf.mxu0
    %v11667 = vadd.f32 %v11627, %v11666
    %v11668 = vpop.f32.mrf.mxu0
    %v11669 = vpop.f32.mrf.mxu0
    %v11670 = vpop.f32.mrf.mxu0
    %11671 = vdwg.mxu0
    %11672 = vmatprep.subr.bf16.mxu0 0
    %11673 = vmatpush1.bf16.msra.mxu0 %v11479
    %11674 = vmatprep.subr.bf16.mxu0 0
    %11675 = vmatpush1.bf16.msra.mxu0 %v11478
    %11676 = vmatprep.subr.bf16.mxu0 0
    %11677 = vmatpush1.bf16.msra.mxu0 %v11477
    %11678 = vmatprep.subr.bf16.mxu0 0
    %11679 = vmatpush1.bf16.msra.mxu0 %v11476
    %11680 = vmatprep.subr.bf16.mxu0 0
    %11681 = vmatpush1.bf16.msra.mxu0 %v11475
    %11682 = vmatprep.subr.bf16.mxu0 0
    %11683 = vmatpush1.bf16.msra.mxu0 %v11474
    %11684 = vmatprep.subr.bf16.mxu0 0
    %11685 = vmatpush1.bf16.msra.mxu0 %v11473
    %11686 = vmatprep.subr.bf16.mxu0 0
    %11687 = vmatpush1.bf16.msra.mxu0 %v11472
    %11688 = vmatprep.subr.bf16.mxu0 0
    %11689 = vmatpush2.bf16.msra.mxu0 %v11487
    %11690 = vmatprep.subr.bf16.mxu0 0
    %11691 = vmatpush2.bf16.msra.mxu0 %v11486
    %11692 = vmatprep.subr.bf16.mxu0 0
    %11693 = vmatpush2.bf16.msra.mxu0 %v11485
    %11694 = vmatprep.subr.bf16.mxu0 0
    %11695 = vmatpush2.bf16.msra.mxu0 %v11484
    %11696 = vmatprep.subr.bf16.mxu0 0
    %11697 = vmatpush2.bf16.msra.mxu0 %v11483
    %11698 = vmatprep.subr.bf16.mxu0 0
    %11699 = vmatpush2.bf16.msra.mxu0 %v11482
    %11700 = vmatprep.subr.bf16.mxu0 0
    %11701 = vmatpush2.bf16.msra.mxu0 %v11481
    %11702 = vmatprep.subr.bf16.mxu0 0
    %11703 = vmatpush2.bf16.msra.mxu0 %v11480
    %11704 = vmatprep.mubr.bf16.mxu0 %v11032
    %11705 = vmatmul.mubr.bf16.gmra.mxu0 %v11031
    %v11706 = vpop.f32.mrf.mxu0
    %v11707 = vadd.f32 %v11667, %v11706
    %v11708 = vpop.f32.mrf.mxu0
    %v11709 = vpop.f32.mrf.mxu0
    %v11710 = vpop.f32.mrf.mxu0
    %11711 = vdwg.mxu0
    %v11712 = vsub.f32 0.0, %v11707
    %v11713 = vmul.f32 %v11712, 1.442695
    %v11714 = vpow.pop %v11713
    %v11715 = vadd.f32 %v11714, 1.0
    %v11716 = vrcp.pop %v11715
    %11717 = vst [vmem:[%s12] sm:$0xff] %v11716
    // Predicated region
    $region90: #{infogan_discriminator_forward.3} parent=1 // pred_check
      _
    $region91: #{infogan_discriminator_forward.3} parent=1 // pred_check_branch
      %11719 = sbr.rel (0) target = $region93
    $region92: #{infogan_discriminator_forward.3} parent=1 // pred_region
      _
    $region93: #{infogan_discriminator_forward.3} parent=1 // pred_fallthru
      _
    // Predicated region
    $region94: #{infogan_discriminator_forward.3} parent=1 // pred_check
      _
    $region95: #{infogan_discriminator_forward.3} parent=1 // pred_check_branch
      %11721 = sbr.rel (0) target = $region97
    $region96: #{infogan_discriminator_forward.3} parent=1 // pred_region
      _
    $region97: #{infogan_discriminator_forward.3} parent=1 // pred_fallthru
      _
    %11722 = vsyncpa [#allocation3], 1
    %11723 = vsyncpa [#allocation5], 1
    %11724 = vsyncpa [#allocation8], 1
    %11725 = vsyncpa [#allocation11], 1
    %11726 = vsyncpa [#allocation14], 1
    %11727 = vsyncpa [#allocation17], 1

</llo_original>
